<compile_context>
chip_gen: v6e
topology: v6e:2x2x1
jax: 0.10.0
libtpu: 0.0.40
codegen_flags: <defaults>
</compile_context>

<pallas_src>
import functools
import numpy as np
import jax
import jax.numpy as jnp
from jax import lax
from jax.experimental import pallas as pl
from jax.experimental.pallas import tpu as pltpu


_BN_EPS = 1e-5
TILE_N = 2048          # points per grid step (large tiles amortize per-step cost)
_OUT_PAD = 128         # fc3 output padded 9 -> 128 for a lane-dense store


# ------------------------------ in-kernel helpers ----------------------------

def _rowmax_to_8(h, rows):
    """Reduce (rows, C) -> (8, C) with elementwise maxima only (VPU, no XLU).

    rows must be a multiple of 8 (static).  Uses a halving tree while the row
    count is even, then a short linear tail, all via static sublane-aligned
    slices.
    """
    m, r = h, rows
    while r > 8 and r % 16 == 0:
        half = r // 2
        m = jnp.maximum(m[:half, :], m[half:r, :])
        r = half
    out = m[0:8, :]
    for g in range(1, r // 8):
        out = jnp.maximum(out, m[8 * g:8 * (g + 1), :])
    return out


# --------------------------------- kernel ------------------------------------

def _stn_fused_kernel(x_ref,
                      w1_ref, b1_ref, w2_ref, b2_ref, w3_ref, b3_ref,
                      w4_ref, b4_ref, w5_ref, b5_ref, w6_ref, b6_ref,
                      o_ref, acc_ref, *, n_points, tile_n):
    """conv1/2/3 (+folded BN +relu) -> max over points -> fc1/fc2/fc3 head.

    Grid = (B, ceil(N / tile_n)); the point axis ("arbitrary") is the
    reduction.  acc_ref is an (8, 1024) f32 running-max accumulator; the fc
    head runs only on the last point tile of each batch element and writes the
    padded (1, 128) transform row.
    """
    j = pl.program_id(1)
    nj = pl.num_programs(1)

    @pl.when(j == 0)
    def _init():
        acc_ref[...] = jnp.full_like(acc_ref, -jnp.inf)

    # ---- conv chain (BN scale already folded into the bf16 weights) ----
    x = x_ref[...]                                                # (tile_n, C) bf16
    h = jnp.dot(x, w1_ref[...], preferred_element_type=jnp.float32)
    h = jnp.maximum(h + b1_ref[...], 0.0)
    h = jnp.dot(h.astype(jnp.bfloat16), w2_ref[...],
                preferred_element_type=jnp.float32)
    h = jnp.maximum(h + b2_ref[...], 0.0)
    h = jnp.dot(h.astype(jnp.bfloat16), w3_ref[...],
                preferred_element_type=jnp.float32)
    h = jnp.maximum(h + b3_ref[...], 0.0)                         # (tile_n, 1024) f32

    rem = n_points % tile_n

    # ---- per-tile max folded into the (8, 1024) accumulator (VPU only) ----
    if tile_n % 8 == 0:
        if rem == 0:
            acc_ref[...] = jnp.maximum(acc_ref[...], _rowmax_to_8(h, tile_n))
        else:
            @pl.when(j < nj - 1)
            def _full_tile():
                acc_ref[...] = jnp.maximum(acc_ref[...], _rowmax_to_8(h, tile_n))

            @pl.when(j == nj - 1)
            def _partial_tile():
                # Mask rows past N (garbage from the padded edge block) only here.
                row = lax.broadcasted_iota(jnp.int32, (tile_n, 1), 0)
                hm = jnp.where(row < rem, h, -jnp.inf)
                acc_ref[...] = jnp.maximum(acc_ref[...], _rowmax_to_8(hm, tile_n))
    else:
        # N < 8-aligned fallback: single tile (tile_n == N, rem == 0).
        acc_ref[0:1, :] = jnp.maximum(acc_ref[0:1, :],
                                      jnp.max(h, axis=0, keepdims=True))

    # ---- fused fc head, once per batch element ----
    @pl.when(j == nj - 1)
    def _head():
        g = jnp.max(acc_ref[...], axis=0, keepdims=True)          # (1, 1024) f32
        g8 = jnp.broadcast_to(g, (8, g.shape[1])).astype(jnp.bfloat16)
        f = jnp.dot(g8, w4_ref[...], preferred_element_type=jnp.float32)
        f = jnp.maximum(f + b4_ref[...], 0.0)
        f = jnp.dot(f.astype(jnp.bfloat16), w5_ref[...],
                    preferred_element_type=jnp.float32)
        f = jnp.maximum(f + b5_ref[...], 0.0)
        f = jnp.dot(f.astype(jnp.bfloat16), w6_ref[...],
                    preferred_element_type=jnp.float32)            # (8, 128)
        o_ref[...] = f[0:1, :] + b6_ref[...]                       # identity in bias


# ------------------------------ kernel wrapper --------------------------------

def stn_fused(x_bnc, prep, tile_n=TILE_N):
    """x_bnc: (B, N, C) bf16 -> padded transform rows (B, 1, 128) f32."""
    B, N, C = x_bnc.shape
    tn = N if N <= tile_n else tile_n
    n_tiles = pl.cdiv(N, tn)
    c1 = prep["w1"].shape[1]
    c2 = prep["w2"].shape[1]
    c3 = prep["w3"].shape[1]
    c4 = prep["w4"].shape[1]
    c5 = prep["w5"].shape[1]
    c6 = prep["w6"].shape[1]

    const = lambda b, j: (0, 0)     # weights/biases: fetched once, never re-DMA'd
    kern = functools.partial(_stn_fused_kernel, n_points=N, tile_n=tn)

    return pl.pallas_call(
        kern,
        out_shape=jax.ShapeDtypeStruct((B, 1, c6), jnp.float32),
        grid=(B, n_tiles),
        in_specs=[
            pl.BlockSpec((None, tn, C), lambda b, j: (b, j, 0)),
            pl.BlockSpec((C, c1), const),  pl.BlockSpec((1, c1), const),
            pl.BlockSpec((c1, c2), const), pl.BlockSpec((1, c2), const),
            pl.BlockSpec((c2, c3), const), pl.BlockSpec((1, c3), const),
            pl.BlockSpec((c3, c4), const), pl.BlockSpec((1, c4), const),
            pl.BlockSpec((c4, c5), const), pl.BlockSpec((1, c5), const),
            pl.BlockSpec((c5, c6), const), pl.BlockSpec((1, c6), const),
        ],
        out_specs=pl.BlockSpec((None, 1, c6), lambda b, j: (b, 0, 0)),
        scratch_shapes=[pltpu.VMEM((8, c3), jnp.float32)],
        compiler_params=pltpu.CompilerParams(
            dimension_semantics=("parallel", "arbitrary"),
            vmem_limit_bytes=48 * 1024 * 1024),
    )(x_bnc,
      prep["w1"], prep["b1"], prep["w2"], prep["b2"], prep["w3"], prep["b3"],
      prep["w4"], prep["b4"], prep["w5"], prep["b5"], prep["w6"], prep["b6"])


# --------------------------- one-time parameter prep --------------------------

def prepare_params(p):
    """Fold BN into weights/biases, cast to bf16, pad fc3.  Call ONCE."""
    def fold(w, conv_bias, bn):
        gamma, beta, rmean, rvar = bn
        s = gamma / jnp.sqrt(rvar + _BN_EPS)
        w_f = (w * s[None, :]).astype(jnp.bfloat16)                # scale in weights
        b_f = (conv_bias * s + (beta - rmean * s)).astype(jnp.float32)
        return w_f, b_f.reshape(1, -1)

    prep = {}
    prep["w1"], prep["b1"] = fold(p["c1w"], p["c1b"], p["bn1"])
    prep["w2"], prep["b2"] = fold(p["c2w"], p["c2b"], p["bn2"])
    prep["w3"], prep["b3"] = fold(p["c3w"], p["c3b"], p["bn3"])
    prep["w4"], prep["b4"] = fold(p["f1w"], p["f1b"], p["bn4"])
    prep["w5"], prep["b5"] = fold(p["f2w"], p["f2b"], p["bn5"])

    # fc3: no BN; pad 9 -> 128 output columns (lane-dense store); identity in bias.
    iden = jnp.eye(3, dtype=jnp.float32).reshape(9)
    cin = p["f3w"].shape[0]
    prep["w6"] = (jnp.zeros((cin, _OUT_PAD), jnp.float32)
                  .at[:, :9].set(p["f3w"])).astype(jnp.bfloat16)
    prep["b6"] = (jnp.zeros((1, _OUT_PAD), jnp.float32)
                  .at[0, :9].set(p["f3b"] + iden))
    return prep


# ------------------------------ model forward ---------------------------------

def stn3d_forward(prep, x, *, tile_n=TILE_N):
    """STN3d forward.  x: (B, channel, N) f32 -> (B, 3, 3) f32."""
    B, C, N = x.shape
    x_bnc = jnp.transpose(x, (0, 2, 1)).astype(jnp.bfloat16)      # (B, N, C)
    out = stn_fused(x_bnc, prep, tile_n=tile_n)                   # (B, 1, 128)
    return out[:, 0, :9].reshape(B, 3, 3)


# -------------------------------- reference -----------------------------------

def stn3d_reference(params, x):
    """Pure-jnp reference with the same folded-BN / bf16-operand math."""
    p = params
    B, C, N = x.shape
    xr = jnp.transpose(x, (0, 2, 1)).reshape(B * N, C)

    def layer(h, w, cb, bn, relu=True):
        gamma, beta, rmean, rvar = bn
        s = gamma / jnp.sqrt(rvar + _BN_EPS)
        wf = (w * s[None, :]).astype(jnp.bfloat16)
        bf = cb * s + (beta - rmean * s)
        y = jnp.dot(h.astype(jnp.bfloat16), wf,
                    preferred_element_type=jnp.float32) + bf
        return jnp.maximum(y, 0.0) if relu else y

    h = layer(xr, p["c1w"], p["c1b"], p["bn1"])
    h = layer(h, p["c2w"], p["c2b"], p["bn2"])
    h = layer(h, p["c3w"], p["c3b"], p["bn3"])
    g = jnp.max(h.reshape(B, N, -1), axis=1)
    g = layer(g, p["f1w"], p["f1b"], p["bn4"])
    g = layer(g, p["f2w"], p["f2b"], p["bn5"])
    y = jnp.dot(g.astype(jnp.bfloat16), p["f3w"].astype(jnp.bfloat16),
                preferred_element_type=jnp.float32) + p["f3b"]
    y = y + jnp.eye(3, dtype=jnp.float32).reshape(1, 9)
    return y.reshape(B, 3, 3)


# ------------------------------ parameter init --------------------------------

def _init_linear(key, cin, cout):
    kw, kb = jax.random.split(key)
    w = jax.random.normal(kw, (cin, cout), jnp.float32) / np.sqrt(cin)
    b = 0.01 * jax.random.normal(kb, (cout,), jnp.float32)
    return w, b


def _init_bn(key, c):
    k1, k2, k3, k4 = jax.random.split(key, 4)
    gamma = 1.0 + 0.1 * jax.random.normal(k1, (c,), jnp.float32)
    beta = 0.1 * jax.random.normal(k2, (c,), jnp.float32)
    rmean = 0.1 * jax.random.normal(k3, (c,), jnp.float32)
    rvar = 1.0 + 0.1 * jax.random.uniform(k4, (c,), jnp.float32)
    return gamma, beta, rmean, rvar


def init_params(key, channel=6):
    k = jax.random.split(key, 11)
    p = {}
    p["c1w"], p["c1b"] = _init_linear(k[0], channel, 64)
    p["c2w"], p["c2b"] = _init_linear(k[1], 64, 128)
    p["c3w"], p["c3b"] = _init_linear(k[2], 128, 1024)
    p["f1w"], p["f1b"] = _init_linear(k[3], 1024, 512)
    p["f2w"], p["f2b"] = _init_linear(k[4], 512, 256)
    p["f3w"], p["f3b"] = _init_linear(k[5], 256, 9)
    p["bn1"] = _init_bn(k[6], 64)
    p["bn2"] = _init_bn(k[7], 128)
    p["bn3"] = _init_bn(k[8], 1024)
    p["bn4"] = _init_bn(k[9], 512)
    p["bn5"] = _init_bn(k[10], 256)
    return p


# ----------------------------------- main --------------------------------------

if __name__ == "__main__":
    key = jax.random.PRNGKey(0)
    kp, kx = jax.random.split(key)

    # N chosen NOT to be a multiple of the test tile so the multi-tile
    # accumulation and the masked partial last tile are both exercised.
    B, C, N = 2, 6, 1280
    test_tile = 512

    params = init_params(kp, channel=C)
    x = jax.random.normal(kx, (B, C, N), jnp.float32)

    prep = jax.block_until_ready(prepare_params(params))   # one-time weight prep

    fwd = jax.jit(functools.partial(stn3d_forward, tile_n=test_tile))
    trans = jax.block_until_ready(fwd(prep, x))

    assert trans.shape == (B, 3, 3), trans.shape
    assert np.all(np.isfinite(np.asarray(trans)))

    ref = jax.block_until_ready(stn3d_reference(params, x))
    np.testing.assert_allclose(np.asarray(trans), np.asarray(ref),
                               rtol=2e-2, atol=2e-2)
    print("KERNEL_OK")
</pallas_src>

<mosaic_0001>
module attributes {stable_mosaic.version = 11 : i64} {
  func.func @_stn_fused_kernel(%arg0: i32, %arg1: i32, %arg2: memref<1x512x6xbf16, #tpu.memory_space<vmem>>, %arg3: memref<6x64xbf16, #tpu.memory_space<vmem>>, %arg4: memref<1x64xf32, #tpu.memory_space<vmem>>, %arg5: memref<64x128xbf16, #tpu.memory_space<vmem>>, %arg6: memref<1x128xf32, #tpu.memory_space<vmem>>, %arg7: memref<128x1024xbf16, #tpu.memory_space<vmem>>, %arg8: memref<1x1024xf32, #tpu.memory_space<vmem>>, %arg9: memref<1024x512xbf16, #tpu.memory_space<vmem>>, %arg10: memref<1x512xf32, #tpu.memory_space<vmem>>, %arg11: memref<512x256xbf16, #tpu.memory_space<vmem>>, %arg12: memref<1x256xf32, #tpu.memory_space<vmem>>, %arg13: memref<256x128xbf16, #tpu.memory_space<vmem>>, %arg14: memref<1x128xf32, #tpu.memory_space<vmem>>, %arg15: memref<1x1x128xf32, #tpu.memory_space<vmem>>, %arg16: memref<8x1024xf32, #tpu.memory_space<vmem>>) attributes {dimension_semantics = [#tpu.dimension_semantics<parallel>, #tpu.dimension_semantics<arbitrary>], iteration_bounds = array<i64: 2, 3>, scalar_prefetch = 0 : i64, scratch_operands = 1 : i64, tpu.core_type = #tpu.core_type<tc>, window_params = [{transform_indices = @transform_0, window_bounds = array<i64: 1, 512, 6>}, {pipeline_mode = #tpu.pipeline_mode<synchronous>, transform_indices = @transform_1, window_bounds = array<i64: 6, 64>}, {pipeline_mode = #tpu.pipeline_mode<synchronous>, transform_indices = @transform_2, window_bounds = array<i64: 1, 64>}, {pipeline_mode = #tpu.pipeline_mode<synchronous>, transform_indices = @transform_3, window_bounds = array<i64: 64, 128>}, {pipeline_mode = #tpu.pipeline_mode<synchronous>, transform_indices = @transform_4, window_bounds = array<i64: 1, 128>}, {pipeline_mode = #tpu.pipeline_mode<synchronous>, transform_indices = @transform_5, window_bounds = array<i64: 128, 1024>}, {pipeline_mode = #tpu.pipeline_mode<synchronous>, transform_indices = @transform_6, window_bounds = array<i64: 1, 1024>}, {pipeline_mode = #tpu.pipeline_mode<synchronous>, transform_indices = @transform_7, window_bounds = array<i64: 1024, 512>}, {pipeline_mode = #tpu.pipeline_mode<synchronous>, transform_indices = @transform_8, window_bounds = array<i64: 1, 512>}, {pipeline_mode = #tpu.pipeline_mode<synchronous>, transform_indices = @transform_9, window_bounds = array<i64: 512, 256>}, {pipeline_mode = #tpu.pipeline_mode<synchronous>, transform_indices = @transform_10, window_bounds = array<i64: 1, 256>}, {pipeline_mode = #tpu.pipeline_mode<synchronous>, transform_indices = @transform_11, window_bounds = array<i64: 256, 128>}, {pipeline_mode = #tpu.pipeline_mode<synchronous>, transform_indices = @transform_12, window_bounds = array<i64: 1, 128>}, {transform_indices = @transform_13, window_bounds = array<i64: 1, 1, 128>}]} {
    %c0_i32 = arith.constant 0 : i32
    %0 = arith.cmpi eq, %arg1, %c0_i32 : i32
    %1 = arith.extui %0 : i1 to i32
    %c0_i32_0 = arith.constant 0 : i32
    %2 = arith.cmpi ne, %1, %c0_i32_0 : i32
    scf.if %2 {
      %cst_25 = arith.constant 0xFF800000 : f32
      %37 = vector.broadcast %cst_25 : f32 to vector<8x1024xf32>
      %c0_26 = arith.constant 0 : index
      %c0_27 = arith.constant 0 : index
      %38 = vector.load %arg16[%c0_26, %c0_27] : memref<8x1024xf32, #tpu.memory_space<vmem>>, vector<8x1024xf32>
      tpu.vector_store %arg16[%c0_26, %c0_27], %37 {strides = array<i32>} : memref<8x1024xf32, #tpu.memory_space<vmem>>, vector<8x1024xf32>,
    } else {
    }
    %c0 = arith.constant 0 : index
    %c0_1 = arith.constant 0 : index
    %c0_2 = arith.constant 0 : index
    %3 = vector.load %arg2[%c0, %c0_1, %c0_2] : memref<1x512x6xbf16, #tpu.memory_space<vmem>>, vector<1x512x6xbf16>
    %4 = vector.shape_cast %3 : vector<1x512x6xbf16> to vector<512x6xbf16>
    %c0_3 = arith.constant 0 : index
    %c0_4 = arith.constant 0 : index
    %5 = vector.load %arg3[%c0_3, %c0_4] : memref<6x64xbf16, #tpu.memory_space<vmem>>, vector<6x64xbf16>
    %cst = arith.constant dense<0.000000e+00> : vector<512x64xf32>
    %6 = tpu.matmul %4, %5, %cst {dimension_numbers = #tpu.dot_dimension_numbers<[1], [0], [0], [1], [0, 0, 1, 1], [], []>} : vector<512x6xbf16>, vector<6x64xbf16>, vector<512x64xf32> -> vector<512x64xf32>
    %c0_5 = arith.constant 0 : index
    %c0_6 = arith.constant 0 : index
    %7 = vector.load %arg4[%c0_5, %c0_6] : memref<1x64xf32, #tpu.memory_space<vmem>>, vector<1x64xf32>
    %8 = vector.broadcast %7 : vector<1x64xf32> to vector<512x64xf32>
    %9 = arith.addf %6, %8 : vector<512x64xf32>
    %cst_7 = arith.constant 0.000000e+00 : f32
    %10 = vector.broadcast %cst_7 : f32 to vector<512x64xf32>
    %11 = arith.maximumf %9, %10 : vector<512x64xf32>
    %12 = arith.truncf %11 : vector<512x64xf32> to vector<512x64xbf16>
    %c0_8 = arith.constant 0 : index
    %c0_9 = arith.constant 0 : index
    %13 = vector.load %arg5[%c0_8, %c0_9] : memref<64x128xbf16, #tpu.memory_space<vmem>>, vector<64x128xbf16>
    %cst_10 = arith.constant dense<0.000000e+00> : vector<512x128xf32>
    %14 = tpu.matmul %12, %13, %cst_10 {dimension_numbers = #tpu.dot_dimension_numbers<[1], [0], [0], [1], [0, 0, 1, 1], [], []>} : vector<512x64xbf16>, vector<64x128xbf16>, vector<512x128xf32> -> vector<512x128xf32>
    %c0_11 = arith.constant 0 : index
    %c0_12 = arith.constant 0 : index
    %15 = vector.load %arg6[%c0_11, %c0_12] : memref<1x128xf32, #tpu.memory_space<vmem>>, vector<1x128xf32>
    %16 = vector.broadcast %15 : vector<1x128xf32> to vector<512x128xf32>
    %17 = arith.addf %14, %16 : vector<512x128xf32>
    %cst_13 = arith.constant 0.000000e+00 : f32
    %18 = vector.broadcast %cst_13 : f32 to vector<512x128xf32>
    %19 = arith.maximumf %17, %18 : vector<512x128xf32>
    %20 = arith.truncf %19 : vector<512x128xf32> to vector<512x128xbf16>
    %c0_14 = arith.constant 0 : index
    %c0_15 = arith.constant 0 : index
    %21 = vector.load %arg7[%c0_14, %c0_15] : memref<128x1024xbf16, #tpu.memory_space<vmem>>, vector<128x1024xbf16>
    %cst_16 = arith.constant dense<0.000000e+00> : vector<512x1024xf32>
    %22 = tpu.matmul %20, %21, %cst_16 {dimension_numbers = #tpu.dot_dimension_numbers<[1], [0], [0], [1], [0, 0, 1, 1], [], []>} : vector<512x128xbf16>, vector<128x1024xbf16>, vector<512x1024xf32> -> vector<512x1024xf32>
    %c0_17 = arith.constant 0 : index
    %c0_18 = arith.constant 0 : index
    %23 = vector.load %arg8[%c0_17, %c0_18] : memref<1x1024xf32, #tpu.memory_space<vmem>>, vector<1x1024xf32>
    %24 = vector.broadcast %23 : vector<1x1024xf32> to vector<512x1024xf32>
    %25 = arith.addf %22, %24 : vector<512x1024xf32>
    %cst_19 = arith.constant 0.000000e+00 : f32
    %26 = vector.broadcast %cst_19 : f32 to vector<512x1024xf32>
    %27 = arith.maximumf %25, %26 : vector<512x1024xf32>
    %c2_i32 = arith.constant 2 : i32
    %28 = arith.cmpi slt, %arg1, %c2_i32 : i32
    %29 = arith.extui %28 : i1 to i32
    %c0_i32_20 = arith.constant 0 : i32
    %30 = arith.cmpi ne, %29, %c0_i32_20 : i32
    scf.if %30 {
      %c0_25 = arith.constant 0 : index
      %c0_26 = arith.constant 0 : index
      %37 = vector.load %arg16[%c0_25, %c0_26] : memref<8x1024xf32, #tpu.memory_space<vmem>>, vector<8x1024xf32>
      %38 = vector.extract_strided_slice %27 {offsets = [0, 0], sizes = [256, 1024], strides = [1, 1]} : vector<512x1024xf32> to vector<256x1024xf32>
      %39 = vector.extract_strided_slice %27 {offsets = [256, 0], sizes = [256, 1024], strides = [1, 1]} : vector<512x1024xf32> to vector<256x1024xf32>
      %40 = arith.maximumf %38, %39 : vector<256x1024xf32>
      %41 = vector.extract_strided_slice %40 {offsets = [0, 0], sizes = [128, 1024], strides = [1, 1]} : vector<256x1024xf32> to vector<128x1024xf32>
      %42 = vector.extract_strided_slice %40 {offsets = [128, 0], sizes = [128, 1024], strides = [1, 1]} : vector<256x1024xf32> to vector<128x1024xf32>
      %43 = arith.maximumf %41, %42 : vector<128x1024xf32>
      %44 = vector.extract_strided_slice %43 {offsets = [0, 0], sizes = [64, 1024], strides = [1, 1]} : vector<128x1024xf32> to vector<64x1024xf32>
      %45 = vector.extract_strided_slice %43 {offsets = [64, 0], sizes = [64, 1024], strides = [1, 1]} : vector<128x1024xf32> to vector<64x1024xf32>
      %46 = arith.maximumf %44, %45 : vector<64x1024xf32>
      %47 = vector.extract_strided_slice %46 {offsets = [0, 0], sizes = [32, 1024], strides = [1, 1]} : vector<64x1024xf32> to vector<32x1024xf32>
      %48 = vector.extract_strided_slice %46 {offsets = [32, 0], sizes = [32, 1024], strides = [1, 1]} : vector<64x1024xf32> to vector<32x1024xf32>
      %49 = arith.maximumf %47, %48 : vector<32x1024xf32>
      %50 = vector.extract_strided_slice %49 {offsets = [0, 0], sizes = [16, 1024], strides = [1, 1]} : vector<32x1024xf32> to vector<16x1024xf32>
      %51 = vector.extract_strided_slice %49 {offsets = [16, 0], sizes = [16, 1024], strides = [1, 1]} : vector<32x1024xf32> to vector<16x1024xf32>
      %52 = arith.maximumf %50, %51 : vector<16x1024xf32>
      %53 = vector.extract_strided_slice %52 {offsets = [0, 0], sizes = [8, 1024], strides = [1, 1]} : vector<16x1024xf32> to vector<8x1024xf32>
      %54 = vector.extract_strided_slice %52 {offsets = [8, 0], sizes = [8, 1024], strides = [1, 1]} : vector<16x1024xf32> to vector<8x1024xf32>
      %55 = arith.maximumf %53, %54 : vector<8x1024xf32>
      %56 = arith.maximumf %37, %55 : vector<8x1024xf32>
      %c0_27 = arith.constant 0 : index
      %c0_28 = arith.constant 0 : index
      %57 = vector.load %arg16[%c0_27, %c0_28] : memref<8x1024xf32, #tpu.memory_space<vmem>>, vector<8x1024xf32>
      tpu.vector_store %arg16[%c0_27, %c0_28], %56 {strides = array<i32>} : memref<8x1024xf32, #tpu.memory_space<vmem>>, vector<8x1024xf32>,
    } else {
    }
    %c2_i32_21 = arith.constant 2 : i32
    %31 = arith.cmpi eq, %arg1, %c2_i32_21 : i32
    %32 = arith.extui %31 : i1 to i32
    %c0_i32_22 = arith.constant 0 : i32
    %33 = arith.cmpi ne, %32, %c0_i32_22 : i32
    scf.if %33 {
      %37 = tpu.iota {dimensions = array<i32: 0>} : vector<512x1xi32>
      %c256_i32 = arith.constant 256 : i32
      %38 = vector.broadcast %c256_i32 : i32 to vector<512x1xi32>
      %39 = arith.cmpi slt, %37, %38 : vector<512x1xi32>
      %cst_25 = arith.constant 0xFF800000 : f32
      %40 = vector.shape_cast %39 : vector<512x1xi1> to vector<512x1xi1>
      %41 = vector.broadcast %40 : vector<512x1xi1> to vector<512x1024xi1>
      %42 = vector.broadcast %cst_25 : f32 to vector<512x1024xf32>
      %43 = arith.select %41, %27, %42 : vector<512x1024xi1>, vector<512x1024xf32>
      %c0_26 = arith.constant 0 : index
      %c0_27 = arith.constant 0 : index
      %44 = vector.load %arg16[%c0_26, %c0_27] : memref<8x1024xf32, #tpu.memory_space<vmem>>, vector<8x1024xf32>
      %45 = vector.extract_strided_slice %43 {offsets = [0, 0], sizes = [256, 1024], strides = [1, 1]} : vector<512x1024xf32> to vector<256x1024xf32>
      %46 = vector.extract_strided_slice %43 {offsets = [256, 0], sizes = [256, 1024], strides = [1, 1]} : vector<512x1024xf32> to vector<256x1024xf32>
      %47 = arith.maximumf %45, %46 : vector<256x1024xf32>
      %48 = vector.extract_strided_slice %47 {offsets = [0, 0], sizes = [128, 1024], strides = [1, 1]} : vector<256x1024xf32> to vector<128x1024xf32>
      %49 = vector.extract_strided_slice %47 {offsets = [128, 0], sizes = [128, 1024], strides = [1, 1]} : vector<256x1024xf32> to vector<128x1024xf32>
      %50 = arith.maximumf %48, %49 : vector<128x1024xf32>
      %51 = vector.extract_strided_slice %50 {offsets = [0, 0], sizes = [64, 1024], strides = [1, 1]} : vector<128x1024xf32> to vector<64x1024xf32>
      %52 = vector.extract_strided_slice %50 {offsets = [64, 0], sizes = [64, 1024], strides = [1, 1]} : vector<128x1024xf32> to vector<64x1024xf32>
      %53 = arith.maximumf %51, %52 : vector<64x1024xf32>
      %54 = vector.extract_strided_slice %53 {offsets = [0, 0], sizes = [32, 1024], strides = [1, 1]} : vector<64x1024xf32> to vector<32x1024xf32>
      %55 = vector.extract_strided_slice %53 {offsets = [32, 0], sizes = [32, 1024], strides = [1, 1]} : vector<64x1024xf32> to vector<32x1024xf32>
      %56 = arith.maximumf %54, %55 : vector<32x1024xf32>
      %57 = vector.extract_strided_slice %56 {offsets = [0, 0], sizes = [16, 1024], strides = [1, 1]} : vector<32x1024xf32> to vector<16x1024xf32>
      %58 = vector.extract_strided_slice %56 {offsets = [16, 0], sizes = [16, 1024], strides = [1, 1]} : vector<32x1024xf32> to vector<16x1024xf32>
      %59 = arith.maximumf %57, %58 : vector<16x1024xf32>
      %60 = vector.extract_strided_slice %59 {offsets = [0, 0], sizes = [8, 1024], strides = [1, 1]} : vector<16x1024xf32> to vector<8x1024xf32>
      %61 = vector.extract_strided_slice %59 {offsets = [8, 0], sizes = [8, 1024], strides = [1, 1]} : vector<16x1024xf32> to vector<8x1024xf32>
      %62 = arith.maximumf %60, %61 : vector<8x1024xf32>
      %63 = arith.maximumf %44, %62 : vector<8x1024xf32>
      %c0_28 = arith.constant 0 : index
      %c0_29 = arith.constant 0 : index
      %64 = vector.load %arg16[%c0_28, %c0_29] : memref<8x1024xf32, #tpu.memory_space<vmem>>, vector<8x1024xf32>
      tpu.vector_store %arg16[%c0_28, %c0_29], %63 {strides = array<i32>} : memref<8x1024xf32, #tpu.memory_space<vmem>>, vector<8x1024xf32>,
    } else {
    }
    %c2_i32_23 = arith.constant 2 : i32
    %34 = arith.cmpi eq, %arg1, %c2_i32_23 : i32
    %35 = arith.extui %34 : i1 to i32
    %c0_i32_24 = arith.constant 0 : i32
    %36 = arith.cmpi ne, %35, %c0_i32_24 : i32
    scf.if %36 {
      %c0_25 = arith.constant 0 : index
      %c0_26 = arith.constant 0 : index
      %37 = vector.load %arg16[%c0_25, %c0_26] : memref<8x1024xf32, #tpu.memory_space<vmem>>, vector<8x1024xf32>
      %cst_27 = arith.constant dense<0xFF800000> : vector<1024xf32>
      %38 = vector.multi_reduction <maximumf>, %37, %cst_27 [0] : vector<8x1024xf32> to vector<1024xf32>
      %39 = vector.shape_cast %38 : vector<1024xf32> to vector<1x1024xf32>
      %40 = vector.shape_cast %39 : vector<1x1024xf32> to vector<1x1024xf32>
      %41 = vector.broadcast %40 : vector<1x1024xf32> to vector<8x1024xf32>
      %42 = arith.truncf %41 : vector<8x1024xf32> to vector<8x1024xbf16>
      %c0_28 = arith.constant 0 : index
      %c0_29 = arith.constant 0 : index
      %43 = vector.load %arg9[%c0_28, %c0_29] : memref<1024x512xbf16, #tpu.memory_space<vmem>>, vector<1024x512xbf16>
      %cst_30 = arith.constant dense<0.000000e+00> : vector<8x512xf32>
      %44 = tpu.matmul %42, %43, %cst_30 {dimension_numbers = #tpu.dot_dimension_numbers<[1], [0], [0], [1], [0, 0, 1, 1], [], []>} : vector<8x1024xbf16>, vector<1024x512xbf16>, vector<8x512xf32> -> vector<8x512xf32>
      %c0_31 = arith.constant 0 : index
      %c0_32 = arith.constant 0 : index
      %45 = vector.load %arg10[%c0_31, %c0_32] : memref<1x512xf32, #tpu.memory_space<vmem>>, vector<1x512xf32>
      %46 = vector.broadcast %45 : vector<1x512xf32> to vector<8x512xf32>
      %47 = arith.addf %44, %46 : vector<8x512xf32>
      %cst_33 = arith.constant 0.000000e+00 : f32
      %48 = vector.broadcast %cst_33 : f32 to vector<8x512xf32>
      %49 = arith.maximumf %47, %48 : vector<8x512xf32>
      %50 = arith.truncf %49 : vector<8x512xf32> to vector<8x512xbf16>
      %c0_34 = arith.constant 0 : index
      %c0_35 = arith.constant 0 : index
      %51 = vector.load %arg11[%c0_34, %c0_35] : memref<512x256xbf16, #tpu.memory_space<vmem>>, vector<512x256xbf16>
      %cst_36 = arith.constant dense<0.000000e+00> : vector<8x256xf32>
      %52 = tpu.matmul %50, %51, %cst_36 {dimension_numbers = #tpu.dot_dimension_numbers<[1], [0], [0], [1], [0, 0, 1, 1], [], []>} : vector<8x512xbf16>, vector<512x256xbf16>, vector<8x256xf32> -> vector<8x256xf32>
      %c0_37 = arith.constant 0 : index
      %c0_38 = arith.constant 0 : index
      %53 = vector.load %arg12[%c0_37, %c0_38] : memref<1x256xf32, #tpu.memory_space<vmem>>, vector<1x256xf32>
      %54 = vector.broadcast %53 : vector<1x256xf32> to vector<8x256xf32>
      %55 = arith.addf %52, %54 : vector<8x256xf32>
      %cst_39 = arith.constant 0.000000e+00 : f32
      %56 = vector.broadcast %cst_39 : f32 to vector<8x256xf32>
      %57 = arith.maximumf %55, %56 : vector<8x256xf32>
      %58 = arith.truncf %57 : vector<8x256xf32> to vector<8x256xbf16>
      %c0_40 = arith.constant 0 : index
      %c0_41 = arith.constant 0 : index
      %59 = vector.load %arg13[%c0_40, %c0_41] : memref<256x128xbf16, #tpu.memory_space<vmem>>, vector<256x128xbf16>
      %cst_42 = arith.constant dense<0.000000e+00> : vector<8x128xf32>
      %60 = tpu.matmul %58, %59, %cst_42 {dimension_numbers = #tpu.dot_dimension_numbers<[1], [0], [0], [1], [0, 0, 1, 1], [], []>} : vector<8x256xbf16>, vector<256x128xbf16>, vector<8x128xf32> -> vector<8x128xf32>
      %61 = vector.extract_strided_slice %60 {offsets = [0, 0], sizes = [1, 128], strides = [1, 1]} : vector<8x128xf32> to vector<1x128xf32>
      %c0_43 = arith.constant 0 : index
      %c0_44 = arith.constant 0 : index
      %62 = vector.load %arg14[%c0_43, %c0_44] : memref<1x128xf32, #tpu.memory_space<vmem>>, vector<1x128xf32>
      %63 = arith.addf %61, %62 : vector<1x128xf32>
      %c0_45 = arith.constant 0 : index
      %c0_46 = arith.constant 0 : index
      %c0_47 = arith.constant 0 : index
      %64 = vector.load %arg15[%c0_45, %c0_46, %c0_47] : memref<1x1x128xf32, #tpu.memory_space<vmem>>, vector<1x1x128xf32>
      %65 = vector.shape_cast %64 : vector<1x1x128xf32> to vector<1x128xf32>
      %66 = vector.shape_cast %63 : vector<1x128xf32> to vector<1x1x128xf32>
      tpu.vector_store %arg15[%c0_45, %c0_46, %c0_47], %66 {strides = array<i32>} : memref<1x1x128xf32, #tpu.memory_space<vmem>>, vector<1x1x128xf32>,
    } else {
    }
    return
  }
  func.func @transform_0(%arg0: i32, %arg1: i32) -> (i32, i32, i32) {
    %c0_i32 = arith.constant 0 : i32
    %c0_i32_0 = arith.constant 0 : i32
    return %arg0, %arg1, %c0_i32 : i32, i32, i32
  }
  func.func @transform_1(%arg0: i32, %arg1: i32) -> (i32, i32) {
    %c0_i32 = arith.constant 0 : i32
    %c0_i32_0 = arith.constant 0 : i32
    %c0_i32_1 = arith.constant 0 : i32
    return %c0_i32, %c0_i32_0 : i32, i32
  }
  func.func @transform_2(%arg0: i32, %arg1: i32) -> (i32, i32) {
    %c0_i32 = arith.constant 0 : i32
    %c0_i32_0 = arith.constant 0 : i32
    %c0_i32_1 = arith.constant 0 : i32
    return %c0_i32, %c0_i32_0 : i32, i32
  }
  func.func @transform_3(%arg0: i32, %arg1: i32) -> (i32, i32) {
    %c0_i32 = arith.constant 0 : i32
    %c0_i32_0 = arith.constant 0 : i32
    %c0_i32_1 = arith.constant 0 : i32
    return %c0_i32, %c0_i32_0 : i32, i32
  }
  func.func @transform_4(%arg0: i32, %arg1: i32) -> (i32, i32) {
    %c0_i32 = arith.constant 0 : i32
    %c0_i32_0 = arith.constant 0 : i32
    %c0_i32_1 = arith.constant 0 : i32
    return %c0_i32, %c0_i32_0 : i32, i32
  }
  func.func @transform_5(%arg0: i32, %arg1: i32) -> (i32, i32) {
    %c0_i32 = arith.constant 0 : i32
    %c0_i32_0 = arith.constant 0 : i32
    %c0_i32_1 = arith.constant 0 : i32
    return %c0_i32, %c0_i32_0 : i32, i32
  }
  func.func @transform_6(%arg0: i32, %arg1: i32) -> (i32, i32) {
    %c0_i32 = arith.constant 0 : i32
    %c0_i32_0 = arith.constant 0 : i32
    %c0_i32_1 = arith.constant 0 : i32
    return %c0_i32, %c0_i32_0 : i32, i32
  }
  func.func @transform_7(%arg0: i32, %arg1: i32) -> (i32, i32) {
    %c0_i32 = arith.constant 0 : i32
    %c0_i32_0 = arith.constant 0 : i32
    %c0_i32_1 = arith.constant 0 : i32
    return %c0_i32, %c0_i32_0 : i32, i32
  }
  func.func @transform_8(%arg0: i32, %arg1: i32) -> (i32, i32) {
    %c0_i32 = arith.constant 0 : i32
    %c0_i32_0 = arith.constant 0 : i32
    %c0_i32_1 = arith.constant 0 : i32
    return %c0_i32, %c0_i32_0 : i32, i32
  }
  func.func @transform_9(%arg0: i32, %arg1: i32) -> (i32, i32) {
    %c0_i32 = arith.constant 0 : i32
    %c0_i32_0 = arith.constant 0 : i32
    %c0_i32_1 = arith.constant 0 : i32
    return %c0_i32, %c0_i32_0 : i32, i32
  }
  func.func @transform_10(%arg0: i32, %arg1: i32) -> (i32, i32) {
    %c0_i32 = arith.constant 0 : i32
    %c0_i32_0 = arith.constant 0 : i32
    %c0_i32_1 = arith.constant 0 : i32
    return %c0_i32, %c0_i32_0 : i32, i32
  }
  func.func @transform_11(%arg0: i32, %arg1: i32) -> (i32, i32) {
    %c0_i32 = arith.constant 0 : i32
    %c0_i32_0 = arith.constant 0 : i32
    %c0_i32_1 = arith.constant 0 : i32
    return %c0_i32, %c0_i32_0 : i32, i32
  }
  func.func @transform_12(%arg0: i32, %arg1: i32) -> (i32, i32) {
    %c0_i32 = arith.constant 0 : i32
    %c0_i32_0 = arith.constant 0 : i32
    %c0_i32_1 = arith.constant 0 : i32
    return %c0_i32, %c0_i32_0 : i32, i32
  }
  func.func @transform_13(%arg0: i32, %arg1: i32) -> (i32, i32, i32) {
    %c0_i32 = arith.constant 0 : i32
    %c0_i32_0 = arith.constant 0 : i32
    %c0_i32_1 = arith.constant 0 : i32
    return %arg0, %c0_i32, %c0_i32_0 : i32, i32, i32
  }
}

</mosaic_0001>

<llo_original>
// kernel: squeeze.1
$region0: #{squeeze.1}
  %s0 = inlined_call_operand.vmem [shape: f32[2,9], index: 0, kind: input, shape index: {}]
  %s1 = inlined_call_operand.vmem [shape: f32[2,3,3], index: 1, kind: output, shape index: {}]
  $region1: #{squeeze.1} parent=0
    #allocation0 [shape = 'u8[8192]{0}', space=vmem, size = 0x2000, scoped, tag = 'scoped mem for output reshape']
    #allocation1 [shape = 'u8[4096]{0}', space=vmem, size = 0x1000, scoped, tag = 'scoped mem for input reshape']
    %s3 = sshll.u32 1, 2
    %s4 = ssub.s32 %s3, 1
    %v5 = vld [vmem:[%s0] sm:%s4]
    %6 = vst [vmem:[#allocation1] sm:%s4] %v5
    %v7 = vld [vmem:[#allocation1] sm:$0x3]
    %vm8 = vcmask 23552
    %9 = vst.msk [vmem:[#allocation0] ss:$8 sm:$0x3] %vm8, %v7
    %v10 = vld [vmem:[#allocation1] sm:$0x3]
    %11 = vrot.lane.b32.xlu0 %v10, 125
    %v12 = vpop.permute.xlu0 %11
    %vm13 = vcmask 23552
    %s14 = scalar_lea.vmem [#allocation0], 1
    %15 = vst.msk [vmem:[%s14] ss:$8 sm:$0x3] %vm13, %v12
    %v16 = vld [vmem:[#allocation1] sm:$0x3]
    %17 = vrot.lane.b32.xlu0 %v16, 122
    %v18 = vpop.permute.xlu0 %17
    %vm19 = vcmask 23552
    %s20 = scalar_lea.vmem [#allocation0], 2
    %21 = vst.msk [vmem:[%s20] ss:$8 sm:$0x3] %vm19, %v18
    %s23 = sshll.u32 1, 4
    %s24 = ssub.s32 %s23, 1
    %v26 = vld [vmem:[#allocation0] sm:%s24]
    %s27 = sshll.u32 1, 4
    %s28 = ssub.s32 %s27, 1
    %29 = vst [vmem:[%s1] sm:%s28] %v26
    %s30 = scalar_lea.vmem [#allocation0], 8
    %v31 = vld [vmem:[%s30] sm:%s24]
    %s32 = sshll.u32 1, 4
    %s33 = ssub.s32 %s32, 1
    %s34 = scalar_lea.vmem %s1, 4
    %35 = vst [vmem:[%s34] sm:%s33] %v31

// kernel: stn3d_forward.1
$region0: #{stn3d_forward.1}
  #allocation0 [shape = 'u32[]', space=smem, size = 0x4, offset = 0x4, fixed_abs, tag = 'smem constant byte address 0x4 - core index']
  #allocation1 [shape = 'u32[144,128]{1,0:T(1,128)}', space=vmem, size = 0x12000, scoped, tag = 'internal scratch']
  #allocation2 [shape = 'f32[8,1024]{1,0:T(8,128)}', space=vmem, size = 0x8000, scoped, tag = 'scratch operand']
  %s0 = inlined_call_operand.vmem [shape: bf16[2,1280,6], index: 0, kind: input, shape index: {}]
  %s1 = inlined_call_operand.vmem [shape: bf16[6,64], index: 1, kind: input, shape index: {}]
  %s2 = inlined_call_operand.vmem [shape: f32[1,64], index: 2, kind: input, shape index: {}]
  %s3 = inlined_call_operand.vmem [shape: bf16[64,128], index: 3, kind: input, shape index: {}]
  %s4 = inlined_call_operand.vmem [shape: f32[1,128], index: 4, kind: input, shape index: {}]
  %s5 = inlined_call_operand.vmem [shape: bf16[128,1024], index: 5, kind: input, shape index: {}]
  %s6 = inlined_call_operand.vmem [shape: f32[1,1024], index: 6, kind: input, shape index: {}]
  %s7 = inlined_call_operand.hbm [shape: bf16[1024,512], index: 7, kind: input, shape index: {}]
  %s8 = inlined_call_operand.vmem [shape: f32[1,512], index: 8, kind: input, shape index: {}]
  %s9 = inlined_call_operand.vmem [shape: bf16[512,256], index: 9, kind: input, shape index: {}]
  %s10 = inlined_call_operand.vmem [shape: f32[1,256], index: 10, kind: input, shape index: {}]
  %s11 = inlined_call_operand.vmem [shape: bf16[256,128], index: 11, kind: input, shape index: {}]
  %s12 = inlined_call_operand.vmem [shape: f32[1,128], index: 12, kind: input, shape index: {}]
  %s13 = inlined_call_operand.vmem [shape: f32[2,1,128], index: 13, kind: output, shape index: {}]
  %s14 = sld [smem:[#allocation0]]
  $region101: #{stn3d_forward.1} parent=0
    _
  %s16 = ssub.s32 1, %s14
  %s17 = scalar_select 0, %s16, %s14
  $region1: #{stn3d_forward.1} parent=0
    #allocation3 [shape = 'u8[1048576]{0}', space=vmem, size = 0x100000, scoped, tag = 'input window, operand 7, single buffered']
    #allocation4 [shape = 's32[2]{0}', space=sflag, size = 0x8, scoped, tag = 'scoped memory for stn3d_forward.1']
    %18 = vsyncpa [#allocation4], 0
    loop: start=0, step=1, limit=8
    $region2: #{stn3d_forward.1} parent=1 // loop_pre_header
      _
    $region3: #{stn3d_forward.1} parent=1 // loop_header
      %s20 = sphi 0, %s24
      %p21 = scmp.ge.s32.totalorder %s20, 8
      %s27 = sphi 0, %s39
      %s28 = sphi 0, %s35
      %s29 = sphi 0, %s27
      %s30 = sphi 0, %s28
      %s31 = sphi 0, %s29
      %s32 = sphi 0, %s30
      %s44 = sphi 0, %s46
      %s47 = sphi 0, %s44
      %s48 = sphi 0, %s47
      %s64 = sphi 0, %s48
      %s68 = sphi 0, %s68
      %s70 = sphi 0, %s68
      %s71 = sphi 0, %s70
      %s85 = sphi 0, %s71
      %s89 = sphi 0, %s89
      %s91 = sphi 0, %s89
      %s92 = sphi 0, %s91
      %s106 = sphi 0, %s92
      %s110 = sphi 0, %s110
      %s112 = sphi 0, %s110
      %s113 = sphi 0, %s112
      %s127 = sphi 0, %s113
      %s131 = sphi 0, %s131
      %s133 = sphi 0, %s131
      %s134 = sphi 0, %s133
      %s148 = sphi 0, %s134
      %s152 = sphi 0, %s152
      %s154 = sphi 0, %s152
      %s155 = sphi 0, %s154
      %s169 = sphi 0, %s155
      %s173 = sphi 0, %s173
      %s175 = sphi 0, %s173
      %s176 = sphi 0, %s175
      %s190 = sphi 0, %s176
      %s194 = sphi 0, %s194
      %s196 = sphi 0, %s194
      %s197 = sphi 0, %s196
      %s211 = sphi 0, %s197
      %s215 = sphi 0, %s215
      %s217 = sphi 0, %s215
      %s218 = sphi 0, %s217
      %s232 = sphi 0, %s218
      %s236 = sphi 0, %s236
      %s238 = sphi 0, %s236
      %s239 = sphi 0, %s238
      %s253 = sphi 0, %s239
      %s257 = sphi 0, %s257
      %s259 = sphi 0, %s257
      %s260 = sphi 0, %s259
      %s274 = sphi 0, %s260
      %s278 = sphi 0, %s278
      %s280 = sphi 0, %s278
      %s281 = sphi 0, %s280
      %s295 = sphi 0, %s281
      %s299 = sphi 0, %s299
      %s301 = sphi 0, %s299
      %s302 = sphi 0, %s301
      %s316 = sphi 0, %s302
      %s322 = sphi 0, %s324
      %s325 = sphi 0, %s322
      %s326 = sphi 0, %s325
      %s342 = sphi 0, %s326
    $region4: #{stn3d_forward.1} parent=1 // loop_header_branch
      %23 = sbr.rel (%p21) target = $region8
    $region5: #{stn3d_forward.1} parent=1 // loop_body
      %s25 = ssub.s32 %s20, 1
      %s26 = ssub.s32 %s20, 2
      %s33 = sadd.s32 1, %s28
      %p34 = scmp.ge.s32.totalorder %s33, 3
      %s35 = scalar_select %p34, 0, %s33
      %s36 = sadd.s32 1, %s27
      %s37 = scalar_select %p34, %s36, %s27
      %p38 = scmp.ge.s32.totalorder %s37, 2
      %s39 = scalar_select %p38, 0, %s37
      %s40 = ssub.s32 %s27, %s39
      %s41 = ssub.s32 %s28, %s35
      %s42 = sor.u32 %s40, %s41
      %p43 = scmp.eq.s32.totalorder %s42, 0
      %s45 = sadd.s32 %s44, 1
      %s46 = scalar_select %p43, %s44, %s45
      %p49 = pneg %p43
      %p50 = scmp.eq.s32.totalorder %s20, 5
      %p51 = por %p49, %p50
      %p52 = scmp.ne.s32.totalorder %s44, %s47
      %p53 = scmp.eq.s32.totalorder %s20, 0
      %p54 = por %p52, %p53
      %p55 = scmp.ne.s32.totalorder %s44, %s47
      %p56 = scmp.eq.s32.totalorder %s25, 5
      %p57 = por %p55, %p56
      %p58 = scmp.ne.s32.totalorder %s47, %s48
      %p59 = scmp.eq.s32.totalorder %s25, 0
      %p60 = por %p58, %p59
      %p61 = scmp.ne.s32.totalorder %s47, %s48
      %p62 = scmp.eq.s32.totalorder %s26, 5
      %p63 = por %p61, %p62
      %p65 = scmp.ne.s32.totalorder %s48, %s64
      %p66 = scmp.eq.s32.totalorder %s26, 0
      %p67 = por %p65, %p66
      %s69 = sadd.s32 %s68, 1
      %p72 = scmp.eq.s32.totalorder %s20, 5
      %p73 = scmp.ne.s32.totalorder %s68, %s70
      %p74 = scmp.eq.s32.totalorder %s20, 0
      %p75 = por %p73, %p74
      %p76 = scmp.ne.s32.totalorder %s68, %s70
      %p77 = scmp.eq.s32.totalorder %s25, 5
      %p78 = por %p76, %p77
      %p79 = scmp.ne.s32.totalorder %s70, %s71
      %p80 = scmp.eq.s32.totalorder %s25, 0
      %p81 = por %p79, %p80
      %p82 = scmp.ne.s32.totalorder %s70, %s71
      %p83 = scmp.eq.s32.totalorder %s26, 5
      %p84 = por %p82, %p83
      %p86 = scmp.ne.s32.totalorder %s71, %s85
      %p87 = scmp.eq.s32.totalorder %s26, 0
      %p88 = por %p86, %p87
      %s90 = sadd.s32 %s89, 1
      %p93 = scmp.eq.s32.totalorder %s20, 5
      %p94 = scmp.ne.s32.totalorder %s89, %s91
      %p95 = scmp.eq.s32.totalorder %s20, 0
      %p96 = por %p94, %p95
      %p97 = scmp.ne.s32.totalorder %s89, %s91
      %p98 = scmp.eq.s32.totalorder %s25, 5
      %p99 = por %p97, %p98
      %p100 = scmp.ne.s32.totalorder %s91, %s92
      %p101 = scmp.eq.s32.totalorder %s25, 0
      %p102 = por %p100, %p101
      %p103 = scmp.ne.s32.totalorder %s91, %s92
      %p104 = scmp.eq.s32.totalorder %s26, 5
      %p105 = por %p103, %p104
      %p107 = scmp.ne.s32.totalorder %s92, %s106
      %p108 = scmp.eq.s32.totalorder %s26, 0
      %p109 = por %p107, %p108
      %s111 = sadd.s32 %s110, 1
      %p114 = scmp.eq.s32.totalorder %s20, 5
      %p115 = scmp.ne.s32.totalorder %s110, %s112
      %p116 = scmp.eq.s32.totalorder %s20, 0
      %p117 = por %p115, %p116
      %p118 = scmp.ne.s32.totalorder %s110, %s112
      %p119 = scmp.eq.s32.totalorder %s25, 5
      %p120 = por %p118, %p119
      %p121 = scmp.ne.s32.totalorder %s112, %s113
      %p122 = scmp.eq.s32.totalorder %s25, 0
      %p123 = por %p121, %p122
      %p124 = scmp.ne.s32.totalorder %s112, %s113
      %p125 = scmp.eq.s32.totalorder %s26, 5
      %p126 = por %p124, %p125
      %p128 = scmp.ne.s32.totalorder %s113, %s127
      %p129 = scmp.eq.s32.totalorder %s26, 0
      %p130 = por %p128, %p129
      %s132 = sadd.s32 %s131, 1
      %p135 = scmp.eq.s32.totalorder %s20, 5
      %p136 = scmp.ne.s32.totalorder %s131, %s133
      %p137 = scmp.eq.s32.totalorder %s20, 0
      %p138 = por %p136, %p137
      %p139 = scmp.ne.s32.totalorder %s131, %s133
      %p140 = scmp.eq.s32.totalorder %s25, 5
      %p141 = por %p139, %p140
      %p142 = scmp.ne.s32.totalorder %s133, %s134
      %p143 = scmp.eq.s32.totalorder %s25, 0
      %p144 = por %p142, %p143
      %p145 = scmp.ne.s32.totalorder %s133, %s134
      %p146 = scmp.eq.s32.totalorder %s26, 5
      %p147 = por %p145, %p146
      %p149 = scmp.ne.s32.totalorder %s134, %s148
      %p150 = scmp.eq.s32.totalorder %s26, 0
      %p151 = por %p149, %p150
      %s153 = sadd.s32 %s152, 1
      %p156 = scmp.eq.s32.totalorder %s20, 5
      %p157 = scmp.ne.s32.totalorder %s152, %s154
      %p158 = scmp.eq.s32.totalorder %s20, 0
      %p159 = por %p157, %p158
      %p160 = scmp.ne.s32.totalorder %s152, %s154
      %p161 = scmp.eq.s32.totalorder %s25, 5
      %p162 = por %p160, %p161
      %p163 = scmp.ne.s32.totalorder %s154, %s155
      %p164 = scmp.eq.s32.totalorder %s25, 0
      %p165 = por %p163, %p164
      %p166 = scmp.ne.s32.totalorder %s154, %s155
      %p167 = scmp.eq.s32.totalorder %s26, 5
      %p168 = por %p166, %p167
      %p170 = scmp.ne.s32.totalorder %s155, %s169
      %p171 = scmp.eq.s32.totalorder %s26, 0
      %p172 = por %p170, %p171
      %s174 = sadd.s32 %s173, 1
      %p177 = scmp.eq.s32.totalorder %s20, 5
      %p178 = scmp.ne.s32.totalorder %s173, %s175
      %p179 = scmp.eq.s32.totalorder %s20, 0
      %p180 = por %p178, %p179
      %p181 = scmp.ne.s32.totalorder %s173, %s175
      %p182 = scmp.eq.s32.totalorder %s25, 5
      %p183 = por %p181, %p182
      %p184 = scmp.ne.s32.totalorder %s175, %s176
      %p185 = scmp.eq.s32.totalorder %s25, 0
      %p186 = por %p184, %p185
      %p187 = scmp.ne.s32.totalorder %s175, %s176
      %p188 = scmp.eq.s32.totalorder %s26, 5
      %p189 = por %p187, %p188
      %p191 = scmp.ne.s32.totalorder %s176, %s190
      %p192 = scmp.eq.s32.totalorder %s26, 0
      %p193 = por %p191, %p192
      %s195 = sadd.s32 %s194, 1
      %p198 = scmp.eq.s32.totalorder %s20, 5
      %p199 = scmp.ne.s32.totalorder %s194, %s196
      %p200 = scmp.eq.s32.totalorder %s20, 0
      %p201 = por %p199, %p200
      %p202 = scmp.ne.s32.totalorder %s194, %s196
      %p203 = scmp.eq.s32.totalorder %s25, 5
      %p204 = por %p202, %p203
      %p205 = scmp.ne.s32.totalorder %s196, %s197
      %p206 = scmp.eq.s32.totalorder %s25, 0
      %p207 = por %p205, %p206
      %p208 = scmp.ne.s32.totalorder %s196, %s197
      %p209 = scmp.eq.s32.totalorder %s26, 5
      %p210 = por %p208, %p209
      %p212 = scmp.ne.s32.totalorder %s197, %s211
      %p213 = scmp.eq.s32.totalorder %s26, 0
      %p214 = por %p212, %p213
      %s216 = sadd.s32 %s215, 1
      %p219 = scmp.eq.s32.totalorder %s20, 5
      %p220 = scmp.ne.s32.totalorder %s215, %s217
      %p221 = scmp.eq.s32.totalorder %s20, 0
      %p222 = por %p220, %p221
      %p223 = scmp.ne.s32.totalorder %s215, %s217
      %p224 = scmp.eq.s32.totalorder %s25, 5
      %p225 = por %p223, %p224
      %p226 = scmp.ne.s32.totalorder %s217, %s218
      %p227 = scmp.eq.s32.totalorder %s25, 0
      %p228 = por %p226, %p227
      %p229 = scmp.ne.s32.totalorder %s217, %s218
      %p230 = scmp.eq.s32.totalorder %s26, 5
      %p231 = por %p229, %p230
      %p233 = scmp.ne.s32.totalorder %s218, %s232
      %p234 = scmp.eq.s32.totalorder %s26, 0
      %p235 = por %p233, %p234
      %s237 = sadd.s32 %s236, 1
      %p240 = scmp.eq.s32.totalorder %s20, 5
      %p241 = scmp.ne.s32.totalorder %s236, %s238
      %p242 = scmp.eq.s32.totalorder %s20, 0
      %p243 = por %p241, %p242
      %p244 = scmp.ne.s32.totalorder %s236, %s238
      %p245 = scmp.eq.s32.totalorder %s25, 5
      %p246 = por %p244, %p245
      %p247 = scmp.ne.s32.totalorder %s238, %s239
      %p248 = scmp.eq.s32.totalorder %s25, 0
      %p249 = por %p247, %p248
      %p250 = scmp.ne.s32.totalorder %s238, %s239
      %p251 = scmp.eq.s32.totalorder %s26, 5
      %p252 = por %p250, %p251
      %p254 = scmp.ne.s32.totalorder %s239, %s253
      %p255 = scmp.eq.s32.totalorder %s26, 0
      %p256 = por %p254, %p255
      %s258 = sadd.s32 %s257, 1
      %p261 = scmp.eq.s32.totalorder %s20, 5
      %p262 = scmp.ne.s32.totalorder %s257, %s259
      %p263 = scmp.eq.s32.totalorder %s20, 0
      %p264 = por %p262, %p263
      %p265 = scmp.ne.s32.totalorder %s257, %s259
      %p266 = scmp.eq.s32.totalorder %s25, 5
      %p267 = por %p265, %p266
      %p268 = scmp.ne.s32.totalorder %s259, %s260
      %p269 = scmp.eq.s32.totalorder %s25, 0
      %p270 = por %p268, %p269
      %p271 = scmp.ne.s32.totalorder %s259, %s260
      %p272 = scmp.eq.s32.totalorder %s26, 5
      %p273 = por %p271, %p272
      %p275 = scmp.ne.s32.totalorder %s260, %s274
      %p276 = scmp.eq.s32.totalorder %s26, 0
      %p277 = por %p275, %p276
      %s279 = sadd.s32 %s278, 1
      %p282 = scmp.eq.s32.totalorder %s20, 5
      %p283 = scmp.ne.s32.totalorder %s278, %s280
      %p284 = scmp.eq.s32.totalorder %s20, 0
      %p285 = por %p283, %p284
      %p286 = scmp.ne.s32.totalorder %s278, %s280
      %p287 = scmp.eq.s32.totalorder %s25, 5
      %p288 = por %p286, %p287
      %p289 = scmp.ne.s32.totalorder %s280, %s281
      %p290 = scmp.eq.s32.totalorder %s25, 0
      %p291 = por %p289, %p290
      %p292 = scmp.ne.s32.totalorder %s280, %s281
      %p293 = scmp.eq.s32.totalorder %s26, 5
      %p294 = por %p292, %p293
      %p296 = scmp.ne.s32.totalorder %s281, %s295
      %p297 = scmp.eq.s32.totalorder %s26, 0
      %p298 = por %p296, %p297
      %s300 = sadd.s32 %s299, 1
      %p303 = scmp.eq.s32.totalorder %s20, 5
      %p304 = scmp.ne.s32.totalorder %s299, %s301
      %p305 = scmp.eq.s32.totalorder %s20, 0
      %p306 = por %p304, %p305
      %p307 = scmp.ne.s32.totalorder %s299, %s301
      %p308 = scmp.eq.s32.totalorder %s25, 5
      %p309 = por %p307, %p308
      %p310 = scmp.ne.s32.totalorder %s301, %s302
      %p311 = scmp.eq.s32.totalorder %s25, 0
      %p312 = por %p310, %p311
      %p313 = scmp.ne.s32.totalorder %s301, %s302
      %p314 = scmp.eq.s32.totalorder %s26, 5
      %p315 = por %p313, %p314
      %p317 = scmp.ne.s32.totalorder %s302, %s316
      %p318 = scmp.eq.s32.totalorder %s26, 0
      %p319 = por %p317, %p318
      %s320 = ssub.s32 %s27, %s39
      %p321 = scmp.eq.s32.totalorder %s320, 0
      %s323 = sadd.s32 %s322, 1
      %s324 = scalar_select %p321, %s322, %s323
      %p327 = pneg %p321
      %p328 = scmp.eq.s32.totalorder %s20, 5
      %p329 = por %p327, %p328
      %p330 = scmp.ne.s32.totalorder %s322, %s325
      %p331 = scmp.eq.s32.totalorder %s20, 0
      %p332 = por %p330, %p331
      %p333 = scmp.ne.s32.totalorder %s322, %s325
      %p334 = scmp.eq.s32.totalorder %s25, 5
      %p335 = por %p333, %p334
      %p336 = scmp.ne.s32.totalorder %s325, %s326
      %p337 = scmp.eq.s32.totalorder %s25, 0
      %p338 = por %p336, %p337
      %p339 = scmp.ne.s32.totalorder %s325, %s326
      %p340 = scmp.eq.s32.totalorder %s26, 5
      %p341 = por %p339, %p340
      %p343 = scmp.ne.s32.totalorder %s326, %s342
      %p344 = scmp.eq.s32.totalorder %s26, 0
      %p345 = por %p343, %p344
      %p346 = scmp.le.s32.totalorder 1, %s20
      %p347 = scmp.lt.s32.totalorder %s20, 7
      %p348 = pnand %p346, %p347
      %p349 = pneg %p348
      // Predicated region
      $region9: #{stn3d_forward.1} parent=5 // pred_check
        _
      $region10: #{stn3d_forward.1} parent=5 // pred_check_branch
        %351 = sbr.rel (%p348) target = $region12
      $region11: #{stn3d_forward.1} parent=5 // pred_region
        %s352 = ssub.s32 %s20, 1
        // Predicated region
        $region13: #{stn3d_forward.1} parent=11 // pred_check
          %p353 = pneg %p81
        $region14: #{stn3d_forward.1} parent=11 // pred_check_branch
          %355 = sbr.rel (%p353) target = $region16
        $region15: #{stn3d_forward.1} parent=11 // pred_region
          _
        $region16: #{stn3d_forward.1} parent=11 // pred_fallthru
          _
        // Predicated region
        $region17: #{stn3d_forward.1} parent=11 // pred_check
          %p356 = pneg %p102
        $region18: #{stn3d_forward.1} parent=11 // pred_check_branch
          %358 = sbr.rel (%p356) target = $region20
        $region19: #{stn3d_forward.1} parent=11 // pred_region
          _
        $region20: #{stn3d_forward.1} parent=11 // pred_fallthru
          _
        // Predicated region
        $region21: #{stn3d_forward.1} parent=11 // pred_check
          %p359 = pneg %p123
        $region22: #{stn3d_forward.1} parent=11 // pred_check_branch
          %361 = sbr.rel (%p359) target = $region24
        $region23: #{stn3d_forward.1} parent=11 // pred_region
          _
        $region24: #{stn3d_forward.1} parent=11 // pred_fallthru
          _
        // Predicated region
        $region25: #{stn3d_forward.1} parent=11 // pred_check
          %p362 = pneg %p144
        $region26: #{stn3d_forward.1} parent=11 // pred_check_branch
          %364 = sbr.rel (%p362) target = $region28
        $region27: #{stn3d_forward.1} parent=11 // pred_region
          _
        $region28: #{stn3d_forward.1} parent=11 // pred_fallthru
          _
        // Predicated region
        $region29: #{stn3d_forward.1} parent=11 // pred_check
          %p365 = pneg %p165
        $region30: #{stn3d_forward.1} parent=11 // pred_check_branch
          %367 = sbr.rel (%p365) target = $region32
        $region31: #{stn3d_forward.1} parent=11 // pred_region
          _
        $region32: #{stn3d_forward.1} parent=11 // pred_fallthru
          _
        // Predicated region
        $region33: #{stn3d_forward.1} parent=11 // pred_check
          %p368 = pneg %p186
        $region34: #{stn3d_forward.1} parent=11 // pred_check_branch
          %370 = sbr.rel (%p368) target = $region36
        $region35: #{stn3d_forward.1} parent=11 // pred_region
          _
        $region36: #{stn3d_forward.1} parent=11 // pred_fallthru
          _
        // Predicated region
        $region37: #{stn3d_forward.1} parent=11 // pred_check
          %p371 = pneg %p207
        $region38: #{stn3d_forward.1} parent=11 // pred_check_branch
          %373 = sbr.rel (%p371) target = $region40
        $region39: #{stn3d_forward.1} parent=11 // pred_region
          %s375 = ssub.s32 32768, 32768
          %376 = vsyncadd [#allocation4], %s375
          %s377 = sshll.u32 [#allocation3], 4
          %s378 = int_to_ptr.vmem [resolvable:$true] %s377
          %383 = dma.hbm_to_vmem [thread:$0]  %s7, 32768, %s378, [#allocation4], 256, 256, 16
        $region40: #{stn3d_forward.1} parent=11 // pred_fallthru
          _
        // Predicated region
        $region41: #{stn3d_forward.1} parent=11 // pred_check
          %p384 = pneg %p228
        $region42: #{stn3d_forward.1} parent=11 // pred_check_branch
          %386 = sbr.rel (%p384) target = $region44
        $region43: #{stn3d_forward.1} parent=11 // pred_region
          _
        $region44: #{stn3d_forward.1} parent=11 // pred_fallthru
          _
        // Predicated region
        $region45: #{stn3d_forward.1} parent=11 // pred_check
          %p387 = pneg %p249
        $region46: #{stn3d_forward.1} parent=11 // pred_check_branch
          %389 = sbr.rel (%p387) target = $region48
        $region47: #{stn3d_forward.1} parent=11 // pred_region
          _
        $region48: #{stn3d_forward.1} parent=11 // pred_fallthru
          _
        // Predicated region
        $region49: #{stn3d_forward.1} parent=11 // pred_check
          %p390 = pneg %p270
        $region50: #{stn3d_forward.1} parent=11 // pred_check_branch
          %392 = sbr.rel (%p390) target = $region52
        $region51: #{stn3d_forward.1} parent=11 // pred_region
          _
        $region52: #{stn3d_forward.1} parent=11 // pred_fallthru
          _
        // Predicated region
        $region53: #{stn3d_forward.1} parent=11 // pred_check
          %p393 = pneg %p291
        $region54: #{stn3d_forward.1} parent=11 // pred_check_branch
          %395 = sbr.rel (%p393) target = $region56
        $region55: #{stn3d_forward.1} parent=11 // pred_region
          _
        $region56: #{stn3d_forward.1} parent=11 // pred_fallthru
          _
        // Predicated region
        $region57: #{stn3d_forward.1} parent=11 // pred_check
          %p396 = pneg %p312
        $region58: #{stn3d_forward.1} parent=11 // pred_check_branch
          %398 = sbr.rel (%p396) target = $region60
        $region59: #{stn3d_forward.1} parent=11 // pred_region
          _
        $region60: #{stn3d_forward.1} parent=11 // pred_fallthru
          _
      $region12: #{stn3d_forward.1} parent=5 // pred_fallthru
        _
      %p399 = scmp.lt.s32.totalorder %s20, 6
      // Predicated region
      $region61: #{stn3d_forward.1} parent=5 // pred_check
        %p400 = pneg %p399
      $region62: #{stn3d_forward.1} parent=5 // pred_check_branch
        %402 = sbr.rel (%p400) target = $region64
      $region63: #{stn3d_forward.1} parent=5 // pred_region
        // Predicated region
        $region65: #{stn3d_forward.1} parent=63 // pred_check
          %p403 = pneg %p54
        $region66: #{stn3d_forward.1} parent=63 // pred_check_branch
          %405 = sbr.rel (%p403) target = $region68
        $region67: #{stn3d_forward.1} parent=63 // pred_region
          %s406 = smul.u32 64, %s28
          %s407 = ssub.s32 160, %s406
          %p408 = scmp.lt.s32.totalorder %s407, 64
          %s409 = scalar_select %p408, %s407, 64
          %s410 = smul.u32 64, %s409
          %p411 = scmp.lt.s32.totalorder %s27, 1
          %s412 = scalar_select %p411, %s27, 1
          %p413 = scmp.lt.s32.totalorder %s406, 159
          %s414 = scalar_select %p413, %s406, 159
          %s415 = smul.addr %s412, 160
          %s416 = sadd.s32 %s414, %s415
          %s417 = smul.addr %s416, 4
          %s418 = scalar_lea.vmem %s0, %s417
          %s419 = smul.u32 64, %s28
          %s420 = ssub.s32 160, %s419
          %p421 = scmp.lt.s32.totalorder %s420, 64
          %s422 = scalar_select %p421, %s420, 64
          %s423 = smul.u32 64, %s422
        $region68: #{stn3d_forward.1} parent=63 // pred_fallthru
          _
      $region64: #{stn3d_forward.1} parent=5 // pred_fallthru
        _
      %p424 = scmp.le.s32.totalorder 1, %s20
      %p425 = scmp.lt.s32.totalorder %s20, 7
      %p426 = pnand %p424, %p425
      %p427 = pneg %p426
      // Predicated region
      $region69: #{stn3d_forward.1} parent=5 // pred_check
        _
      $region70: #{stn3d_forward.1} parent=5 // pred_check_branch
        %429 = sbr.rel (%p426) target = $region72
      $region71: #{stn3d_forward.1} parent=5 // pred_region
        %s430 = ssub.s32 %s20, 1
        // Predicated region
        $region73: #{stn3d_forward.1} parent=71 // pred_check
          %p431 = pneg %p207
        $region74: #{stn3d_forward.1} parent=71 // pred_check_branch
          %433 = sbr.rel (%p431) target = $region76
        $region75: #{stn3d_forward.1} parent=71 // pred_region
          %434 = dma.done [#allocation4], 32768
        $region76: #{stn3d_forward.1} parent=71 // pred_fallthru
          _
        %s435 = smul.u32 64, %s30
        %s436 = ssub.s32 160, %s435
        %p437 = scmp.lt.s32.totalorder %s436, 64
        %s438 = scalar_select %p437, %s436, 64
        %s439 = smul.u32 64, %s438
        %p440 = scmp.lt.s32.totalorder %s29, 1
        %s441 = scalar_select %p440, %s29, 1
        %p442 = scmp.lt.s32.totalorder %s435, 159
        %s443 = scalar_select %p442, %s435, 159
        %s444 = smul.addr %s441, 160
        %s445 = sadd.s32 %s443, %s444
        %s446 = smul.addr %s445, 4
        %s447 = scalar_lea.vmem %s0, %s446
        %p448 = pneg %p60
        %p449 = pneg %p57
        %p450 = pneg %p81
        %p451 = pneg %p78
        %p452 = pneg %p102
        %p453 = pneg %p99
        %p454 = pneg %p123
        %p455 = pneg %p120
        %p456 = pneg %p144
        %p457 = pneg %p141
        %p458 = pneg %p165
        %p459 = pneg %p162
        %p460 = pneg %p186
        %p461 = pneg %p183
        %p462 = pneg %p207
        %p463 = pneg %p204
        %p464 = pneg %p228
        %p465 = pneg %p225
        %p466 = pneg %p249
        %p467 = pneg %p246
        %p468 = pneg %p270
        %p469 = pneg %p267
        %p470 = pneg %p291
        %p471 = pneg %p288
        %p472 = pneg %p312
        %p473 = pneg %p309
        %p474 = pneg %p338
        %p475 = pneg %p335
        %p476 = scmp.lt.s32.totalorder %s29, 1
        %s477 = scalar_select %p476, %s29, 1
        %s478 = scalar_lea.vmem %s13, %s477
        %s479 = smul.u32 64, %s30
        %s480 = ssub.s32 160, %s479
        %p481 = scmp.lt.s32.totalorder %s480, 64
        %s482 = scalar_select %p481, %s480, 64
        %s483 = smul.u32 64, %s482
        %p484 = scmp.lt.s32.totalorder %s29, 1
        %s485 = scalar_select %p484, %s29, 1
        %p486 = scmp.lt.s32.totalorder %s479, 159
        %s487 = scalar_select %p486, %s479, 159
        %s488 = smul.addr %s485, 160
        %s489 = sadd.s32 %s487, %s488
        %s490 = smul.addr %s489, 4
        %s491 = scalar_lea.vmem %s0, %s490
        %s492 = smul.u32 64, %s30
        %s493 = ssub.s32 160, %s492
        %p494 = scmp.lt.s32.totalorder %s493, 64
        %s495 = scalar_select %p494, %s493, 64
        %s496 = smul.u32 64, %s495
        %p497 = scmp.lt.s32.totalorder %s29, 1
        %s498 = scalar_select %p497, %s29, 1
        %s499 = scalar_lea.vmem %s13, %s498
        %p501 = scmp.eq.s32.totalorder %s30, 0
        // Predicated region
        $region77: #{stn3d_forward.1} parent=71 // pred_check
          %p502 = pneg %p501
        $region78: #{stn3d_forward.1} parent=71 // pred_check_branch
          %504 = sbr.rel (%p502) target = $region80
        $region79: #{stn3d_forward.1} parent=71 // pred_region
          %505 = vst [vmem:[#allocation2] sm:$0xff] -inf
          %506 = vst [vmem:[#allocation2 + $0x8] sm:$0xff] -inf
          %507 = vst [vmem:[#allocation2 + $0x10] sm:$0xff] -inf
          %508 = vst [vmem:[#allocation2 + $0x18] sm:$0xff] -inf
          %509 = vst [vmem:[#allocation2 + $0x20] sm:$0xff] -inf
          %510 = vst [vmem:[#allocation2 + $0x28] sm:$0xff] -inf
          %511 = vst [vmem:[#allocation2 + $0x30] sm:$0xff] -inf
          %512 = vst [vmem:[#allocation2 + $0x38] sm:$0xff] -inf
        $region80: #{stn3d_forward.1} parent=71 // pred_fallthru
          _
        %v513 = vld [vmem:[%s491] sm:$0xf]
        %v514 = vld [vmem:[%s491 + $0x4] sm:$0xf]
        %v515 = vld [vmem:[%s491 + $0x8] sm:$0xf]
        %v516 = vld [vmem:[%s491 + $0xc] sm:$0xf]
        %v517 = vld [vmem:[%s491 + $0x10] sm:$0xf]
        %v518 = vld [vmem:[%s491 + $0x14] sm:$0xf]
        %v519 = vld [vmem:[%s491 + $0x18] sm:$0xf]
        %v520 = vld [vmem:[%s491 + $0x1c] sm:$0xf]
        %v521 = vld [vmem:[%s491 + $0x20] sm:$0xf]
        %v522 = vld [vmem:[%s491 + $0x24] sm:$0xf]
        %v523 = vld [vmem:[%s491 + $0x28] sm:$0xf]
        %v524 = vld [vmem:[%s491 + $0x2c] sm:$0xf]
        %v525 = vld [vmem:[%s491 + $0x30] sm:$0xf]
        %v526 = vld [vmem:[%s491 + $0x34] sm:$0xf]
        %v527 = vld [vmem:[%s491 + $0x38] sm:$0xf]
        %v528 = vld [vmem:[%s491 + $0x3c] sm:$0xf]
        %v529 = vld [vmem:[%s491 + $0x40] sm:$0xf]
        %v530 = vld [vmem:[%s491 + $0x44] sm:$0xf]
        %v531 = vld [vmem:[%s491 + $0x48] sm:$0xf]
        %v532 = vld [vmem:[%s491 + $0x4c] sm:$0xf]
        %v533 = vld [vmem:[%s491 + $0x50] sm:$0xf]
        %v534 = vld [vmem:[%s491 + $0x54] sm:$0xf]
        %v535 = vld [vmem:[%s491 + $0x58] sm:$0xf]
        %v536 = vld [vmem:[%s491 + $0x5c] sm:$0xf]
        %v537 = vld [vmem:[%s491 + $0x60] sm:$0xf]
        %v538 = vld [vmem:[%s491 + $0x64] sm:$0xf]
        %v539 = vld [vmem:[%s491 + $0x68] sm:$0xf]
        %v540 = vld [vmem:[%s491 + $0x6c] sm:$0xf]
        %v541 = vld [vmem:[%s491 + $0x70] sm:$0xf]
        %v542 = vld [vmem:[%s491 + $0x74] sm:$0xf]
        %v543 = vld [vmem:[%s491 + $0x78] sm:$0xf]
        %v544 = vld [vmem:[%s491 + $0x7c] sm:$0xf]
        %v545 = vld [vmem:[%s491 + $0x80] sm:$0xf]
        %v546 = vld [vmem:[%s491 + $0x84] sm:$0xf]
        %v547 = vld [vmem:[%s491 + $0x88] sm:$0xf]
        %v548 = vld [vmem:[%s491 + $0x8c] sm:$0xf]
        %v549 = vld [vmem:[%s491 + $0x90] sm:$0xf]
        %v550 = vld [vmem:[%s491 + $0x94] sm:$0xf]
        %v551 = vld [vmem:[%s491 + $0x98] sm:$0xf]
        %v552 = vld [vmem:[%s491 + $0x9c] sm:$0xf]
        %v553 = vld [vmem:[%s491 + $0xa0] sm:$0xf]
        %v554 = vld [vmem:[%s491 + $0xa4] sm:$0xf]
        %v555 = vld [vmem:[%s491 + $0xa8] sm:$0xf]
        %v556 = vld [vmem:[%s491 + $0xac] sm:$0xf]
        %v557 = vld [vmem:[%s491 + $0xb0] sm:$0xf]
        %v558 = vld [vmem:[%s491 + $0xb4] sm:$0xf]
        %v559 = vld [vmem:[%s491 + $0xb8] sm:$0xf]
        %v560 = vld [vmem:[%s491 + $0xbc] sm:$0xf]
        %v561 = vld [vmem:[%s491 + $0xc0] sm:$0xf]
        %v562 = vld [vmem:[%s491 + $0xc4] sm:$0xf]
        %v563 = vld [vmem:[%s491 + $0xc8] sm:$0xf]
        %v564 = vld [vmem:[%s491 + $0xcc] sm:$0xf]
        %v565 = vld [vmem:[%s491 + $0xd0] sm:$0xf]
        %v566 = vld [vmem:[%s491 + $0xd4] sm:$0xf]
        %v567 = vld [vmem:[%s491 + $0xd8] sm:$0xf]
        %v568 = vld [vmem:[%s491 + $0xdc] sm:$0xf]
        %v569 = vld [vmem:[%s491 + $0xe0] sm:$0xf]
        %v570 = vld [vmem:[%s491 + $0xe4] sm:$0xf]
        %v571 = vld [vmem:[%s491 + $0xe8] sm:$0xf]
        %v572 = vld [vmem:[%s491 + $0xec] sm:$0xf]
        %v573 = vld [vmem:[%s491 + $0xf0] sm:$0xf]
        %v574 = vld [vmem:[%s491 + $0xf4] sm:$0xf]
        %v575 = vld [vmem:[%s491 + $0xf8] sm:$0xf]
        %v576 = vld [vmem:[%s491 + $0xfc] sm:$0xf]
        %v577 = vld [vmem:[%s1] sm:$0x7]
        %v578 = vld [vmem:[%s2] sm:$0x1]
        %v580 = vlaneseq
        %v581 = vshrl.u32 %v580, 7
        %v582 = vsub.s32 0, %v581
        %v583 = vrot.slane %v578, %v582
        %v649 = vunpack.c.l.b16 %v513
        %v650 = vunpack.c.l.b16 %v514
        %v651 = vunpack.c.l.b16 %v515
        %v652 = vunpack.c.l.b16 %v516
        %v653 = vunpack.c.l.b16 %v517
        %v654 = vunpack.c.l.b16 %v518
        %v655 = vunpack.c.l.b16 %v519
        %v656 = vunpack.c.l.b16 %v520
        %v657 = vunpack.c.l.b16 %v521
        %v658 = vunpack.c.l.b16 %v522
        %v659 = vunpack.c.l.b16 %v523
        %v660 = vunpack.c.l.b16 %v524
        %v661 = vunpack.c.l.b16 %v525
        %v662 = vunpack.c.l.b16 %v526
        %v663 = vunpack.c.l.b16 %v527
        %v664 = vunpack.c.l.b16 %v528
        %v665 = vunpack.c.l.b16 %v529
        %v666 = vunpack.c.l.b16 %v530
        %v667 = vunpack.c.l.b16 %v531
        %v668 = vunpack.c.l.b16 %v532
        %v669 = vunpack.c.l.b16 %v533
        %v670 = vunpack.c.l.b16 %v534
        %v671 = vunpack.c.l.b16 %v535
        %v672 = vunpack.c.l.b16 %v536
        %v673 = vunpack.c.l.b16 %v537
        %v674 = vunpack.c.l.b16 %v538
        %v675 = vunpack.c.l.b16 %v539
        %v676 = vunpack.c.l.b16 %v540
        %v677 = vunpack.c.l.b16 %v541
        %v678 = vunpack.c.l.b16 %v542
        %v679 = vunpack.c.l.b16 %v543
        %v680 = vunpack.c.l.b16 %v544
        %v681 = vunpack.c.l.b16 %v545
        %v682 = vunpack.c.l.b16 %v546
        %v683 = vunpack.c.l.b16 %v547
        %v684 = vunpack.c.l.b16 %v548
        %v685 = vunpack.c.l.b16 %v549
        %v686 = vunpack.c.l.b16 %v550
        %v687 = vunpack.c.l.b16 %v551
        %v688 = vunpack.c.l.b16 %v552
        %v689 = vunpack.c.l.b16 %v553
        %v690 = vunpack.c.l.b16 %v554
        %v691 = vunpack.c.l.b16 %v555
        %v692 = vunpack.c.l.b16 %v556
        %v693 = vunpack.c.l.b16 %v557
        %v694 = vunpack.c.l.b16 %v558
        %v695 = vunpack.c.l.b16 %v559
        %v696 = vunpack.c.l.b16 %v560
        %v697 = vunpack.c.l.b16 %v561
        %v698 = vunpack.c.l.b16 %v562
        %v699 = vunpack.c.l.b16 %v563
        %v700 = vunpack.c.l.b16 %v564
        %v701 = vunpack.c.l.b16 %v565
        %v702 = vunpack.c.l.b16 %v566
        %v703 = vunpack.c.l.b16 %v567
        %v704 = vunpack.c.l.b16 %v568
        %v705 = vunpack.c.l.b16 %v569
        %v706 = vunpack.c.l.b16 %v570
        %v707 = vunpack.c.l.b16 %v571
        %v708 = vunpack.c.l.b16 %v572
        %v709 = vunpack.c.l.b16 %v573
        %v710 = vunpack.c.l.b16 %v574
        %v711 = vunpack.c.l.b16 %v575
        %v712 = vunpack.c.l.b16 %v576
        %v713 = vpack.c.b16 %v650, %v649
        %v714 = vpack.c.b16 %v652, %v651
        %v715 = vpack.c.b16 %v654, %v653
        %v716 = vpack.c.b16 %v656, %v655
        %v717 = vpack.c.b16 %v658, %v657
        %v718 = vpack.c.b16 %v660, %v659
        %v719 = vpack.c.b16 %v662, %v661
        %v720 = vpack.c.b16 %v664, %v663
        %v721 = vpack.c.b16 %v666, %v665
        %v722 = vpack.c.b16 %v668, %v667
        %v723 = vpack.c.b16 %v670, %v669
        %v724 = vpack.c.b16 %v672, %v671
        %v725 = vpack.c.b16 %v674, %v673
        %v726 = vpack.c.b16 %v676, %v675
        %v727 = vpack.c.b16 %v678, %v677
        %v728 = vpack.c.b16 %v680, %v679
        %v729 = vpack.c.b16 %v682, %v681
        %v730 = vpack.c.b16 %v684, %v683
        %v731 = vpack.c.b16 %v686, %v685
        %v732 = vpack.c.b16 %v688, %v687
        %v733 = vpack.c.b16 %v690, %v689
        %v734 = vpack.c.b16 %v692, %v691
        %v735 = vpack.c.b16 %v694, %v693
        %v736 = vpack.c.b16 %v696, %v695
        %v737 = vpack.c.b16 %v698, %v697
        %v738 = vpack.c.b16 %v700, %v699
        %v739 = vpack.c.b16 %v702, %v701
        %v740 = vpack.c.b16 %v704, %v703
        %v741 = vpack.c.b16 %v706, %v705
        %v742 = vpack.c.b16 %v708, %v707
        %v743 = vpack.c.b16 %v710, %v709
        %v744 = vpack.c.b16 %v712, %v711
        %vm745 = vcmask 48128
        %v747 = vsel %vm745, %v713, 0
        %v750 = vsel %vm745, %v714, 0
        %v753 = vsel %vm745, %v715, 0
        %v756 = vsel %vm745, %v716, 0
        %v759 = vsel %vm745, %v717, 0
        %v762 = vsel %vm745, %v718, 0
        %v765 = vsel %vm745, %v719, 0
        %v768 = vsel %vm745, %v720, 0
        %v771 = vsel %vm745, %v721, 0
        %v774 = vsel %vm745, %v722, 0
        %v777 = vsel %vm745, %v723, 0
        %v780 = vsel %vm745, %v724, 0
        %v783 = vsel %vm745, %v725, 0
        %v786 = vsel %vm745, %v726, 0
        %v789 = vsel %vm745, %v727, 0
        %v792 = vsel %vm745, %v728, 0
        %v795 = vsel %vm745, %v729, 0
        %v798 = vsel %vm745, %v730, 0
        %v801 = vsel %vm745, %v731, 0
        %v804 = vsel %vm745, %v732, 0
        %v807 = vsel %vm745, %v733, 0
        %v810 = vsel %vm745, %v734, 0
        %v813 = vsel %vm745, %v735, 0
        %v816 = vsel %vm745, %v736, 0
        %v819 = vsel %vm745, %v737, 0
        %v822 = vsel %vm745, %v738, 0
        %v825 = vsel %vm745, %v739, 0
        %v828 = vsel %vm745, %v740, 0
        %v831 = vsel %vm745, %v741, 0
        %v834 = vsel %vm745, %v742, 0
        %v837 = vsel %vm745, %v743, 0
        %v840 = vsel %vm745, %v744, 0
        %vm842 = vcmask 1042432
        %v844 = vsel %vm842, %v577, 0
        %846 = vmatprep.subr.bf16.mxu0 0
        %847 = vmatpush1.bf16.msra.mxu0 0
        %848 = vmatprep.subr.bf16.mxu0 0
        %849 = vmatpush1.bf16.msra.mxu0 0
        %850 = vmatprep.subr.bf16.mxu0 0
        %851 = vmatpush1.bf16.msra.mxu0 0
        %852 = vmatprep.subr.bf16.mxu0 0
        %853 = vmatpush1.bf16.msra.mxu0 0
        %854 = vmatprep.subr.bf16.mxu0 0
        %855 = vmatpush1.bf16.msra.mxu0 0
        %856 = vmatprep.subr.bf16.mxu0 0
        %857 = vmatpush1.bf16.msra.mxu0 0
        %858 = vmatprep.subr.bf16.mxu0 0
        %859 = vmatpush1.bf16.msra.mxu0 0
        %860 = vmatprep.subr.bf16.mxu0 0
        %861 = vmatpush1.bf16.msra.mxu0 %v844
        %862 = vmatprep.subr.bf16.mxu0 0
        %863 = vmatpush2.bf16.msra.mxu0 0
        %864 = vmatprep.subr.bf16.mxu0 0
        %865 = vmatpush2.bf16.msra.mxu0 0
        %866 = vmatprep.subr.bf16.mxu0 0
        %867 = vmatpush2.bf16.msra.mxu0 0
        %868 = vmatprep.subr.bf16.mxu0 0
        %869 = vmatpush2.bf16.msra.mxu0 0
        %870 = vmatprep.subr.bf16.mxu0 0
        %871 = vmatpush2.bf16.msra.mxu0 0
        %872 = vmatprep.subr.bf16.mxu0 0
        %873 = vmatpush2.bf16.msra.mxu0 0
        %874 = vmatprep.subr.bf16.mxu0 0
        %875 = vmatpush2.bf16.msra.mxu0 0
        %876 = vmatprep.subr.bf16.mxu0 0
        %877 = vmatpush2.bf16.msra.mxu0 0
        %878 = vmatprep.mubr.bf16.mxu0 0
        %879 = vmatmul.mubr.bf16.gmra.mxu0 %v747
        %v880 = vpop.f32.mrf.mxu0
        %v881 = vadd.f32 %v583, %v880
        %v882 = vpop.f32.mrf.mxu0
        %v883 = vpop.f32.mrf.mxu0
        %v884 = vadd.f32 %v583, %v883
        %v885 = vpop.f32.mrf.mxu0
        %886 = vmatprep.mubr.bf16.mxu0 0
        %887 = vmatmul.mubr.bf16.gmra.mxu0 %v750
        %v888 = vpop.f32.mrf.mxu0
        %v889 = vadd.f32 %v583, %v888
        %v890 = vpop.f32.mrf.mxu0
        %v891 = vpop.f32.mrf.mxu0
        %v892 = vadd.f32 %v583, %v891
        %v893 = vpop.f32.mrf.mxu0
        %894 = vmatprep.mubr.bf16.mxu0 0
        %895 = vmatmul.mubr.bf16.gmra.mxu0 %v753
        %v896 = vpop.f32.mrf.mxu0
        %v897 = vadd.f32 %v583, %v896
        %v898 = vpop.f32.mrf.mxu0
        %v899 = vpop.f32.mrf.mxu0
        %v900 = vadd.f32 %v583, %v899
        %v901 = vpop.f32.mrf.mxu0
        %902 = vmatprep.mubr.bf16.mxu0 0
        %903 = vmatmul.mubr.bf16.gmra.mxu0 %v756
        %v904 = vpop.f32.mrf.mxu0
        %v905 = vadd.f32 %v583, %v904
        %v906 = vpop.f32.mrf.mxu0
        %v907 = vpop.f32.mrf.mxu0
        %v908 = vadd.f32 %v583, %v907
        %v909 = vpop.f32.mrf.mxu0
        %910 = vmatprep.mubr.bf16.mxu0 0
        %911 = vmatmul.mubr.bf16.gmra.mxu0 %v759
        %v912 = vpop.f32.mrf.mxu0
        %v913 = vadd.f32 %v583, %v912
        %v914 = vpop.f32.mrf.mxu0
        %v915 = vpop.f32.mrf.mxu0
        %v916 = vadd.f32 %v583, %v915
        %v917 = vpop.f32.mrf.mxu0
        %918 = vmatprep.mubr.bf16.mxu0 0
        %919 = vmatmul.mubr.bf16.gmra.mxu0 %v762
        %v920 = vpop.f32.mrf.mxu0
        %v921 = vadd.f32 %v583, %v920
        %v922 = vpop.f32.mrf.mxu0
        %v923 = vpop.f32.mrf.mxu0
        %v924 = vadd.f32 %v583, %v923
        %v925 = vpop.f32.mrf.mxu0
        %926 = vmatprep.mubr.bf16.mxu0 0
        %927 = vmatmul.mubr.bf16.gmra.mxu0 %v765
        %v928 = vpop.f32.mrf.mxu0
        %v929 = vadd.f32 %v583, %v928
        %v930 = vpop.f32.mrf.mxu0
        %v931 = vpop.f32.mrf.mxu0
        %v932 = vadd.f32 %v583, %v931
        %v933 = vpop.f32.mrf.mxu0
        %934 = vmatprep.mubr.bf16.mxu0 0
        %935 = vmatmul.mubr.bf16.gmra.mxu0 %v768
        %v936 = vpop.f32.mrf.mxu0
        %v937 = vadd.f32 %v583, %v936
        %v938 = vpop.f32.mrf.mxu0
        %v939 = vpop.f32.mrf.mxu0
        %v940 = vadd.f32 %v583, %v939
        %v941 = vpop.f32.mrf.mxu0
        %942 = vmatprep.mubr.bf16.mxu0 0
        %943 = vmatmul.mubr.bf16.gmra.mxu0 %v771
        %v944 = vpop.f32.mrf.mxu0
        %v945 = vadd.f32 %v583, %v944
        %v946 = vpop.f32.mrf.mxu0
        %v947 = vpop.f32.mrf.mxu0
        %v948 = vadd.f32 %v583, %v947
        %v949 = vpop.f32.mrf.mxu0
        %950 = vmatprep.mubr.bf16.mxu0 0
        %951 = vmatmul.mubr.bf16.gmra.mxu0 %v774
        %v952 = vpop.f32.mrf.mxu0
        %v953 = vadd.f32 %v583, %v952
        %v954 = vpop.f32.mrf.mxu0
        %v955 = vpop.f32.mrf.mxu0
        %v956 = vadd.f32 %v583, %v955
        %v957 = vpop.f32.mrf.mxu0
        %958 = vmatprep.mubr.bf16.mxu0 0
        %959 = vmatmul.mubr.bf16.gmra.mxu0 %v777
        %v960 = vpop.f32.mrf.mxu0
        %v961 = vadd.f32 %v583, %v960
        %v962 = vpop.f32.mrf.mxu0
        %v963 = vpop.f32.mrf.mxu0
        %v964 = vadd.f32 %v583, %v963
        %v965 = vpop.f32.mrf.mxu0
        %966 = vmatprep.mubr.bf16.mxu0 0
        %967 = vmatmul.mubr.bf16.gmra.mxu0 %v780
        %v968 = vpop.f32.mrf.mxu0
        %v969 = vadd.f32 %v583, %v968
        %v970 = vpop.f32.mrf.mxu0
        %v971 = vpop.f32.mrf.mxu0
        %v972 = vadd.f32 %v583, %v971
        %v973 = vpop.f32.mrf.mxu0
        %974 = vmatprep.mubr.bf16.mxu0 0
        %975 = vmatmul.mubr.bf16.gmra.mxu0 %v783
        %v976 = vpop.f32.mrf.mxu0
        %v977 = vadd.f32 %v583, %v976
        %v978 = vpop.f32.mrf.mxu0
        %v979 = vpop.f32.mrf.mxu0
        %v980 = vadd.f32 %v583, %v979
        %v981 = vpop.f32.mrf.mxu0
        %982 = vmatprep.mubr.bf16.mxu0 0
        %983 = vmatmul.mubr.bf16.gmra.mxu0 %v786
        %v984 = vpop.f32.mrf.mxu0
        %v985 = vadd.f32 %v583, %v984
        %v986 = vpop.f32.mrf.mxu0
        %v987 = vpop.f32.mrf.mxu0
        %v988 = vadd.f32 %v583, %v987
        %v989 = vpop.f32.mrf.mxu0
        %990 = vmatprep.mubr.bf16.mxu0 0
        %991 = vmatmul.mubr.bf16.gmra.mxu0 %v789
        %v992 = vpop.f32.mrf.mxu0
        %v993 = vadd.f32 %v583, %v992
        %v994 = vpop.f32.mrf.mxu0
        %v995 = vpop.f32.mrf.mxu0
        %v996 = vadd.f32 %v583, %v995
        %v997 = vpop.f32.mrf.mxu0
        %998 = vmatprep.mubr.bf16.mxu0 0
        %999 = vmatmul.mubr.bf16.gmra.mxu0 %v792
        %v1000 = vpop.f32.mrf.mxu0
        %v1001 = vadd.f32 %v583, %v1000
        %v1002 = vpop.f32.mrf.mxu0
        %v1003 = vpop.f32.mrf.mxu0
        %v1004 = vadd.f32 %v583, %v1003
        %v1005 = vpop.f32.mrf.mxu0
        %1006 = vmatprep.mubr.bf16.mxu0 0
        %1007 = vmatmul.mubr.bf16.gmra.mxu0 %v795
        %v1008 = vpop.f32.mrf.mxu0
        %v1009 = vadd.f32 %v583, %v1008
        %v1010 = vpop.f32.mrf.mxu0
        %v1011 = vpop.f32.mrf.mxu0
        %v1012 = vadd.f32 %v583, %v1011
        %v1013 = vpop.f32.mrf.mxu0
        %1014 = vmatprep.mubr.bf16.mxu0 0
        %1015 = vmatmul.mubr.bf16.gmra.mxu0 %v798
        %v1016 = vpop.f32.mrf.mxu0
        %v1017 = vadd.f32 %v583, %v1016
        %v1018 = vpop.f32.mrf.mxu0
        %v1019 = vpop.f32.mrf.mxu0
        %v1020 = vadd.f32 %v583, %v1019
        %v1021 = vpop.f32.mrf.mxu0
        %1022 = vmatprep.mubr.bf16.mxu0 0
        %1023 = vmatmul.mubr.bf16.gmra.mxu0 %v801
        %v1024 = vpop.f32.mrf.mxu0
        %v1025 = vadd.f32 %v583, %v1024
        %v1026 = vpop.f32.mrf.mxu0
        %v1027 = vpop.f32.mrf.mxu0
        %v1028 = vadd.f32 %v583, %v1027
        %v1029 = vpop.f32.mrf.mxu0
        %1030 = vmatprep.mubr.bf16.mxu0 0
        %1031 = vmatmul.mubr.bf16.gmra.mxu0 %v804
        %v1032 = vpop.f32.mrf.mxu0
        %v1033 = vadd.f32 %v583, %v1032
        %v1034 = vpop.f32.mrf.mxu0
        %v1035 = vpop.f32.mrf.mxu0
        %v1036 = vadd.f32 %v583, %v1035
        %v1037 = vpop.f32.mrf.mxu0
        %1038 = vmatprep.mubr.bf16.mxu0 0
        %1039 = vmatmul.mubr.bf16.gmra.mxu0 %v807
        %v1040 = vpop.f32.mrf.mxu0
        %v1041 = vadd.f32 %v583, %v1040
        %v1042 = vpop.f32.mrf.mxu0
        %v1043 = vpop.f32.mrf.mxu0
        %v1044 = vadd.f32 %v583, %v1043
        %v1045 = vpop.f32.mrf.mxu0
        %1046 = vmatprep.mubr.bf16.mxu0 0
        %1047 = vmatmul.mubr.bf16.gmra.mxu0 %v810
        %v1048 = vpop.f32.mrf.mxu0
        %v1049 = vadd.f32 %v583, %v1048
        %v1050 = vpop.f32.mrf.mxu0
        %v1051 = vpop.f32.mrf.mxu0
        %v1052 = vadd.f32 %v583, %v1051
        %v1053 = vpop.f32.mrf.mxu0
        %1054 = vmatprep.mubr.bf16.mxu0 0
        %1055 = vmatmul.mubr.bf16.gmra.mxu0 %v813
        %v1056 = vpop.f32.mrf.mxu0
        %v1057 = vadd.f32 %v583, %v1056
        %v1058 = vpop.f32.mrf.mxu0
        %v1059 = vpop.f32.mrf.mxu0
        %v1060 = vadd.f32 %v583, %v1059
        %v1061 = vpop.f32.mrf.mxu0
        %1062 = vmatprep.mubr.bf16.mxu0 0
        %1063 = vmatmul.mubr.bf16.gmra.mxu0 %v816
        %v1064 = vpop.f32.mrf.mxu0
        %v1065 = vadd.f32 %v583, %v1064
        %v1066 = vpop.f32.mrf.mxu0
        %v1067 = vpop.f32.mrf.mxu0
        %v1068 = vadd.f32 %v583, %v1067
        %v1069 = vpop.f32.mrf.mxu0
        %1070 = vmatprep.mubr.bf16.mxu0 0
        %1071 = vmatmul.mubr.bf16.gmra.mxu0 %v819
        %v1072 = vpop.f32.mrf.mxu0
        %v1073 = vadd.f32 %v583, %v1072
        %v1074 = vpop.f32.mrf.mxu0
        %v1075 = vpop.f32.mrf.mxu0
        %v1076 = vadd.f32 %v583, %v1075
        %v1077 = vpop.f32.mrf.mxu0
        %1078 = vmatprep.mubr.bf16.mxu0 0
        %1079 = vmatmul.mubr.bf16.gmra.mxu0 %v822
        %v1080 = vpop.f32.mrf.mxu0
        %v1081 = vadd.f32 %v583, %v1080
        %v1082 = vpop.f32.mrf.mxu0
        %v1083 = vpop.f32.mrf.mxu0
        %v1084 = vadd.f32 %v583, %v1083
        %v1085 = vpop.f32.mrf.mxu0
        %1086 = vmatprep.mubr.bf16.mxu0 0
        %1087 = vmatmul.mubr.bf16.gmra.mxu0 %v825
        %v1088 = vpop.f32.mrf.mxu0
        %v1089 = vadd.f32 %v583, %v1088
        %v1090 = vpop.f32.mrf.mxu0
        %v1091 = vpop.f32.mrf.mxu0
        %v1092 = vadd.f32 %v583, %v1091
        %v1093 = vpop.f32.mrf.mxu0
        %1094 = vmatprep.mubr.bf16.mxu0 0
        %1095 = vmatmul.mubr.bf16.gmra.mxu0 %v828
        %v1096 = vpop.f32.mrf.mxu0
        %v1097 = vadd.f32 %v583, %v1096
        %v1098 = vpop.f32.mrf.mxu0
        %v1099 = vpop.f32.mrf.mxu0
        %v1100 = vadd.f32 %v583, %v1099
        %v1101 = vpop.f32.mrf.mxu0
        %1102 = vmatprep.mubr.bf16.mxu0 0
        %1103 = vmatmul.mubr.bf16.gmra.mxu0 %v831
        %v1104 = vpop.f32.mrf.mxu0
        %v1105 = vadd.f32 %v583, %v1104
        %v1106 = vpop.f32.mrf.mxu0
        %v1107 = vpop.f32.mrf.mxu0
        %v1108 = vadd.f32 %v583, %v1107
        %v1109 = vpop.f32.mrf.mxu0
        %1110 = vmatprep.mubr.bf16.mxu0 0
        %1111 = vmatmul.mubr.bf16.gmra.mxu0 %v834
        %v1112 = vpop.f32.mrf.mxu0
        %v1113 = vadd.f32 %v583, %v1112
        %v1114 = vpop.f32.mrf.mxu0
        %v1115 = vpop.f32.mrf.mxu0
        %v1116 = vadd.f32 %v583, %v1115
        %v1117 = vpop.f32.mrf.mxu0
        %1118 = vmatprep.mubr.bf16.mxu0 0
        %1119 = vmatmul.mubr.bf16.gmra.mxu0 %v837
        %v1120 = vpop.f32.mrf.mxu0
        %v1121 = vadd.f32 %v583, %v1120
        %v1122 = vpop.f32.mrf.mxu0
        %v1123 = vpop.f32.mrf.mxu0
        %v1124 = vadd.f32 %v583, %v1123
        %v1125 = vpop.f32.mrf.mxu0
        %1126 = vmatprep.mubr.bf16.mxu0 0
        %1127 = vmatmul.mubr.bf16.gmra.mxu0 %v840
        %v1128 = vpop.f32.mrf.mxu0
        %v1129 = vadd.f32 %v583, %v1128
        %v1130 = vpop.f32.mrf.mxu0
        %v1131 = vpop.f32.mrf.mxu0
        %v1132 = vadd.f32 %v583, %v1131
        %v1133 = vpop.f32.mrf.mxu0
        %1134 = vdwg.mxu0
        %v1135 = vmax.f32 %v881, 0.0
        %v1136 = vmax.f32 %v884, 0.0
        %v1137 = vmax.f32 %v889, 0.0
        %v1138 = vmax.f32 %v892, 0.0
        %v1139 = vmax.f32 %v897, 0.0
        %v1140 = vmax.f32 %v900, 0.0
        %v1141 = vmax.f32 %v905, 0.0
        %v1142 = vmax.f32 %v908, 0.0
        %v1143 = vmax.f32 %v913, 0.0
        %v1144 = vmax.f32 %v916, 0.0
        %v1145 = vmax.f32 %v921, 0.0
        %v1146 = vmax.f32 %v924, 0.0
        %v1147 = vmax.f32 %v929, 0.0
        %v1148 = vmax.f32 %v932, 0.0
        %v1149 = vmax.f32 %v937, 0.0
        %v1150 = vmax.f32 %v940, 0.0
        %v1151 = vmax.f32 %v945, 0.0
        %v1152 = vmax.f32 %v948, 0.0
        %v1153 = vmax.f32 %v953, 0.0
        %v1154 = vmax.f32 %v956, 0.0
        %v1155 = vmax.f32 %v961, 0.0
        %v1156 = vmax.f32 %v964, 0.0
        %v1157 = vmax.f32 %v969, 0.0
        %v1158 = vmax.f32 %v972, 0.0
        %v1159 = vmax.f32 %v977, 0.0
        %v1160 = vmax.f32 %v980, 0.0
        %v1161 = vmax.f32 %v985, 0.0
        %v1162 = vmax.f32 %v988, 0.0
        %v1163 = vmax.f32 %v993, 0.0
        %v1164 = vmax.f32 %v996, 0.0
        %v1165 = vmax.f32 %v1001, 0.0
        %v1166 = vmax.f32 %v1004, 0.0
        %v1167 = vmax.f32 %v1009, 0.0
        %v1168 = vmax.f32 %v1012, 0.0
        %v1169 = vmax.f32 %v1017, 0.0
        %v1170 = vmax.f32 %v1020, 0.0
        %v1171 = vmax.f32 %v1025, 0.0
        %v1172 = vmax.f32 %v1028, 0.0
        %v1173 = vmax.f32 %v1033, 0.0
        %v1174 = vmax.f32 %v1036, 0.0
        %v1175 = vmax.f32 %v1041, 0.0
        %v1176 = vmax.f32 %v1044, 0.0
        %v1177 = vmax.f32 %v1049, 0.0
        %v1178 = vmax.f32 %v1052, 0.0
        %v1179 = vmax.f32 %v1057, 0.0
        %v1180 = vmax.f32 %v1060, 0.0
        %v1181 = vmax.f32 %v1065, 0.0
        %v1182 = vmax.f32 %v1068, 0.0
        %v1183 = vmax.f32 %v1073, 0.0
        %v1184 = vmax.f32 %v1076, 0.0
        %v1185 = vmax.f32 %v1081, 0.0
        %v1186 = vmax.f32 %v1084, 0.0
        %v1187 = vmax.f32 %v1089, 0.0
        %v1188 = vmax.f32 %v1092, 0.0
        %v1189 = vmax.f32 %v1097, 0.0
        %v1190 = vmax.f32 %v1100, 0.0
        %v1191 = vmax.f32 %v1105, 0.0
        %v1192 = vmax.f32 %v1108, 0.0
        %v1193 = vmax.f32 %v1113, 0.0
        %v1194 = vmax.f32 %v1116, 0.0
        %v1195 = vmax.f32 %v1121, 0.0
        %v1196 = vmax.f32 %v1124, 0.0
        %v1197 = vmax.f32 %v1129, 0.0
        %v1198 = vmax.f32 %v1132, 0.0
        %v1199 = vpack.c.bf16 %v1136, %v1135
        %v1200 = vpack.c.bf16 %v1138, %v1137
        %v1201 = vpack.c.bf16 %v1140, %v1139
        %v1202 = vpack.c.bf16 %v1142, %v1141
        %v1203 = vpack.c.bf16 %v1144, %v1143
        %v1204 = vpack.c.bf16 %v1146, %v1145
        %v1205 = vpack.c.bf16 %v1148, %v1147
        %v1206 = vpack.c.bf16 %v1150, %v1149
        %v1207 = vpack.c.bf16 %v1152, %v1151
        %v1208 = vpack.c.bf16 %v1154, %v1153
        %v1209 = vpack.c.bf16 %v1156, %v1155
        %v1210 = vpack.c.bf16 %v1158, %v1157
        %v1211 = vpack.c.bf16 %v1160, %v1159
        %v1212 = vpack.c.bf16 %v1162, %v1161
        %v1213 = vpack.c.bf16 %v1164, %v1163
        %v1214 = vpack.c.bf16 %v1166, %v1165
        %v1215 = vpack.c.bf16 %v1168, %v1167
        %v1216 = vpack.c.bf16 %v1170, %v1169
        %v1217 = vpack.c.bf16 %v1172, %v1171
        %v1218 = vpack.c.bf16 %v1174, %v1173
        %v1219 = vpack.c.bf16 %v1176, %v1175
        %v1220 = vpack.c.bf16 %v1178, %v1177
        %v1221 = vpack.c.bf16 %v1180, %v1179
        %v1222 = vpack.c.bf16 %v1182, %v1181
        %v1223 = vpack.c.bf16 %v1184, %v1183
        %v1224 = vpack.c.bf16 %v1186, %v1185
        %v1225 = vpack.c.bf16 %v1188, %v1187
        %v1226 = vpack.c.bf16 %v1190, %v1189
        %v1227 = vpack.c.bf16 %v1192, %v1191
        %v1228 = vpack.c.bf16 %v1194, %v1193
        %v1229 = vpack.c.bf16 %v1196, %v1195
        %v1230 = vpack.c.bf16 %v1198, %v1197
        %v1231 = vld [vmem:[%s3] sm:$0xf]
        %v1232 = vld [vmem:[%s3 + $0x4] sm:$0xf]
        %v1233 = vld [vmem:[%s3 + $0x8] sm:$0xf]
        %v1234 = vld [vmem:[%s3 + $0xc] sm:$0xf]
        %v1235 = vld [vmem:[%s3 + $0x10] sm:$0xf]
        %v1236 = vld [vmem:[%s3 + $0x14] sm:$0xf]
        %v1237 = vld [vmem:[%s3 + $0x18] sm:$0xf]
        %v1238 = vld [vmem:[%s3 + $0x1c] sm:$0xf]
        %v1239 = vld [vmem:[%s4] sm:$0x1]
        %v1241 = vlaneseq
        %v1242 = vshrl.u32 %v1241, 7
        %v1243 = vsub.s32 0, %v1242
        %v1244 = vrot.slane %v1239, %v1243
        %v1254 = vunpack.c.l.b16 %v1231
        %v1255 = vunpack.c.l.b16 %v1232
        %v1256 = vunpack.c.l.b16 %v1233
        %v1257 = vunpack.c.l.b16 %v1234
        %v1258 = vunpack.c.l.b16 %v1235
        %v1259 = vunpack.c.l.b16 %v1236
        %v1260 = vunpack.c.l.b16 %v1237
        %v1261 = vunpack.c.l.b16 %v1238
        %v1262 = vpack.c.b16 %v1255, %v1254
        %v1263 = vpack.c.b16 %v1257, %v1256
        %v1264 = vpack.c.b16 %v1259, %v1258
        %v1265 = vpack.c.b16 %v1261, %v1260
        %vm1270 = vcmask 523264
        %v1272 = vsel %vm1270, %v1199, 0
        %v1275 = vsel %vm1270, %v1200, 0
        %v1278 = vsel %vm1270, %v1201, 0
        %v1281 = vsel %vm1270, %v1202, 0
        %v1284 = vsel %vm1270, %v1203, 0
        %v1287 = vsel %vm1270, %v1204, 0
        %v1290 = vsel %vm1270, %v1205, 0
        %v1293 = vsel %vm1270, %v1206, 0
        %v1296 = vsel %vm1270, %v1207, 0
        %v1299 = vsel %vm1270, %v1208, 0
        %v1302 = vsel %vm1270, %v1209, 0
        %v1305 = vsel %vm1270, %v1210, 0
        %v1308 = vsel %vm1270, %v1211, 0
        %v1311 = vsel %vm1270, %v1212, 0
        %v1314 = vsel %vm1270, %v1213, 0
        %v1317 = vsel %vm1270, %v1214, 0
        %v1320 = vsel %vm1270, %v1215, 0
        %v1323 = vsel %vm1270, %v1216, 0
        %v1326 = vsel %vm1270, %v1217, 0
        %v1329 = vsel %vm1270, %v1218, 0
        %v1332 = vsel %vm1270, %v1219, 0
        %v1335 = vsel %vm1270, %v1220, 0
        %v1338 = vsel %vm1270, %v1221, 0
        %v1341 = vsel %vm1270, %v1222, 0
        %v1344 = vsel %vm1270, %v1223, 0
        %v1347 = vsel %vm1270, %v1224, 0
        %v1350 = vsel %vm1270, %v1225, 0
        %v1353 = vsel %vm1270, %v1226, 0
        %v1356 = vsel %vm1270, %v1227, 0
        %v1359 = vsel %vm1270, %v1228, 0
        %v1362 = vsel %vm1270, %v1229, 0
        %v1365 = vsel %vm1270, %v1230, 0
        %1367 = vmatprep.subr.bf16.mxu0 0
        %1368 = vmatpush1.bf16.msra.mxu0 0
        %1369 = vmatprep.subr.bf16.mxu0 0
        %1370 = vmatpush1.bf16.msra.mxu0 0
        %1371 = vmatprep.subr.bf16.mxu0 0
        %1372 = vmatpush1.bf16.msra.mxu0 0
        %1373 = vmatprep.subr.bf16.mxu0 0
        %1374 = vmatpush1.bf16.msra.mxu0 0
        %1375 = vmatprep.subr.bf16.mxu0 0
        %1376 = vmatpush1.bf16.msra.mxu0 %v1265
        %1377 = vmatprep.subr.bf16.mxu0 0
        %1378 = vmatpush1.bf16.msra.mxu0 %v1264
        %1379 = vmatprep.subr.bf16.mxu0 0
        %1380 = vmatpush1.bf16.msra.mxu0 %v1263
        %1381 = vmatprep.subr.bf16.mxu0 0
        %1382 = vmatpush1.bf16.msra.mxu0 %v1262
        %1383 = vmatprep.subr.bf16.mxu0 0
        %1384 = vmatpush2.bf16.msra.mxu0 0
        %1385 = vmatprep.subr.bf16.mxu0 0
        %1386 = vmatpush2.bf16.msra.mxu0 0
        %1387 = vmatprep.subr.bf16.mxu0 0
        %1388 = vmatpush2.bf16.msra.mxu0 0
        %1389 = vmatprep.subr.bf16.mxu0 0
        %1390 = vmatpush2.bf16.msra.mxu0 0
        %1391 = vmatprep.subr.bf16.mxu0 0
        %1392 = vmatpush2.bf16.msra.mxu0 0
        %1393 = vmatprep.subr.bf16.mxu0 0
        %1394 = vmatpush2.bf16.msra.mxu0 0
        %1395 = vmatprep.subr.bf16.mxu0 0
        %1396 = vmatpush2.bf16.msra.mxu0 0
        %1397 = vmatprep.subr.bf16.mxu0 0
        %1398 = vmatpush2.bf16.msra.mxu0 0
        %1399 = vmatprep.mubr.bf16.mxu0 0
        %1400 = vmatmul.mubr.bf16.gmra.mxu0 %v1272
        %v1401 = vpop.f32.mrf.mxu0
        %v1402 = vadd.f32 %v1244, %v1401
        %v1403 = vpop.f32.mrf.mxu0
        %v1404 = vpop.f32.mrf.mxu0
        %v1405 = vadd.f32 %v1244, %v1404
        %v1406 = vpop.f32.mrf.mxu0
        %1407 = vmatprep.mubr.bf16.mxu0 0
        %1408 = vmatmul.mubr.bf16.gmra.mxu0 %v1275
        %v1409 = vpop.f32.mrf.mxu0
        %v1410 = vadd.f32 %v1244, %v1409
        %v1411 = vpop.f32.mrf.mxu0
        %v1412 = vpop.f32.mrf.mxu0
        %v1413 = vadd.f32 %v1244, %v1412
        %v1414 = vpop.f32.mrf.mxu0
        %1415 = vmatprep.mubr.bf16.mxu0 0
        %1416 = vmatmul.mubr.bf16.gmra.mxu0 %v1278
        %v1417 = vpop.f32.mrf.mxu0
        %v1418 = vadd.f32 %v1244, %v1417
        %v1419 = vpop.f32.mrf.mxu0
        %v1420 = vpop.f32.mrf.mxu0
        %v1421 = vadd.f32 %v1244, %v1420
        %v1422 = vpop.f32.mrf.mxu0
        %1423 = vmatprep.mubr.bf16.mxu0 0
        %1424 = vmatmul.mubr.bf16.gmra.mxu0 %v1281
        %v1425 = vpop.f32.mrf.mxu0
        %v1426 = vadd.f32 %v1244, %v1425
        %v1427 = vpop.f32.mrf.mxu0
        %v1428 = vpop.f32.mrf.mxu0
        %v1429 = vadd.f32 %v1244, %v1428
        %v1430 = vpop.f32.mrf.mxu0
        %1431 = vmatprep.mubr.bf16.mxu0 0
        %1432 = vmatmul.mubr.bf16.gmra.mxu0 %v1284
        %v1433 = vpop.f32.mrf.mxu0
        %v1434 = vadd.f32 %v1244, %v1433
        %v1435 = vpop.f32.mrf.mxu0
        %v1436 = vpop.f32.mrf.mxu0
        %v1437 = vadd.f32 %v1244, %v1436
        %v1438 = vpop.f32.mrf.mxu0
        %1439 = vmatprep.mubr.bf16.mxu0 0
        %1440 = vmatmul.mubr.bf16.gmra.mxu0 %v1287
        %v1441 = vpop.f32.mrf.mxu0
        %v1442 = vadd.f32 %v1244, %v1441
        %v1443 = vpop.f32.mrf.mxu0
        %v1444 = vpop.f32.mrf.mxu0
        %v1445 = vadd.f32 %v1244, %v1444
        %v1446 = vpop.f32.mrf.mxu0
        %1447 = vmatprep.mubr.bf16.mxu0 0
        %1448 = vmatmul.mubr.bf16.gmra.mxu0 %v1290
        %v1449 = vpop.f32.mrf.mxu0
        %v1450 = vadd.f32 %v1244, %v1449
        %v1451 = vpop.f32.mrf.mxu0
        %v1452 = vpop.f32.mrf.mxu0
        %v1453 = vadd.f32 %v1244, %v1452
        %v1454 = vpop.f32.mrf.mxu0
        %1455 = vmatprep.mubr.bf16.mxu0 0
        %1456 = vmatmul.mubr.bf16.gmra.mxu0 %v1293
        %v1457 = vpop.f32.mrf.mxu0
        %v1458 = vadd.f32 %v1244, %v1457
        %v1459 = vpop.f32.mrf.mxu0
        %v1460 = vpop.f32.mrf.mxu0
        %v1461 = vadd.f32 %v1244, %v1460
        %v1462 = vpop.f32.mrf.mxu0
        %1463 = vmatprep.mubr.bf16.mxu0 0
        %1464 = vmatmul.mubr.bf16.gmra.mxu0 %v1296
        %v1465 = vpop.f32.mrf.mxu0
        %v1466 = vadd.f32 %v1244, %v1465
        %v1467 = vpop.f32.mrf.mxu0
        %v1468 = vpop.f32.mrf.mxu0
        %v1469 = vadd.f32 %v1244, %v1468
        %v1470 = vpop.f32.mrf.mxu0
        %1471 = vmatprep.mubr.bf16.mxu0 0
        %1472 = vmatmul.mubr.bf16.gmra.mxu0 %v1299
        %v1473 = vpop.f32.mrf.mxu0
        %v1474 = vadd.f32 %v1244, %v1473
        %v1475 = vpop.f32.mrf.mxu0
        %v1476 = vpop.f32.mrf.mxu0
        %v1477 = vadd.f32 %v1244, %v1476
        %v1478 = vpop.f32.mrf.mxu0
        %1479 = vmatprep.mubr.bf16.mxu0 0
        %1480 = vmatmul.mubr.bf16.gmra.mxu0 %v1302
        %v1481 = vpop.f32.mrf.mxu0
        %v1482 = vadd.f32 %v1244, %v1481
        %v1483 = vpop.f32.mrf.mxu0
        %v1484 = vpop.f32.mrf.mxu0
        %v1485 = vadd.f32 %v1244, %v1484
        %v1486 = vpop.f32.mrf.mxu0
        %1487 = vmatprep.mubr.bf16.mxu0 0
        %1488 = vmatmul.mubr.bf16.gmra.mxu0 %v1305
        %v1489 = vpop.f32.mrf.mxu0
        %v1490 = vadd.f32 %v1244, %v1489
        %v1491 = vpop.f32.mrf.mxu0
        %v1492 = vpop.f32.mrf.mxu0
        %v1493 = vadd.f32 %v1244, %v1492
        %v1494 = vpop.f32.mrf.mxu0
        %1495 = vmatprep.mubr.bf16.mxu0 0
        %1496 = vmatmul.mubr.bf16.gmra.mxu0 %v1308
        %v1497 = vpop.f32.mrf.mxu0
        %v1498 = vadd.f32 %v1244, %v1497
        %v1499 = vpop.f32.mrf.mxu0
        %v1500 = vpop.f32.mrf.mxu0
        %v1501 = vadd.f32 %v1244, %v1500
        %v1502 = vpop.f32.mrf.mxu0
        %1503 = vmatprep.mubr.bf16.mxu0 0
        %1504 = vmatmul.mubr.bf16.gmra.mxu0 %v1311
        %v1505 = vpop.f32.mrf.mxu0
        %v1506 = vadd.f32 %v1244, %v1505
        %v1507 = vpop.f32.mrf.mxu0
        %v1508 = vpop.f32.mrf.mxu0
        %v1509 = vadd.f32 %v1244, %v1508
        %v1510 = vpop.f32.mrf.mxu0
        %1511 = vmatprep.mubr.bf16.mxu0 0
        %1512 = vmatmul.mubr.bf16.gmra.mxu0 %v1314
        %v1513 = vpop.f32.mrf.mxu0
        %v1514 = vadd.f32 %v1244, %v1513
        %v1515 = vpop.f32.mrf.mxu0
        %v1516 = vpop.f32.mrf.mxu0
        %v1517 = vadd.f32 %v1244, %v1516
        %v1518 = vpop.f32.mrf.mxu0
        %1519 = vmatprep.mubr.bf16.mxu0 0
        %1520 = vmatmul.mubr.bf16.gmra.mxu0 %v1317
        %v1521 = vpop.f32.mrf.mxu0
        %v1522 = vadd.f32 %v1244, %v1521
        %v1523 = vpop.f32.mrf.mxu0
        %v1524 = vpop.f32.mrf.mxu0
        %v1525 = vadd.f32 %v1244, %v1524
        %v1526 = vpop.f32.mrf.mxu0
        %1527 = vmatprep.mubr.bf16.mxu0 0
        %1528 = vmatmul.mubr.bf16.gmra.mxu0 %v1320
        %v1529 = vpop.f32.mrf.mxu0
        %v1530 = vadd.f32 %v1244, %v1529
        %v1531 = vpop.f32.mrf.mxu0
        %v1532 = vpop.f32.mrf.mxu0
        %v1533 = vadd.f32 %v1244, %v1532
        %v1534 = vpop.f32.mrf.mxu0
        %1535 = vmatprep.mubr.bf16.mxu0 0
        %1536 = vmatmul.mubr.bf16.gmra.mxu0 %v1323
        %v1537 = vpop.f32.mrf.mxu0
        %v1538 = vadd.f32 %v1244, %v1537
        %v1539 = vpop.f32.mrf.mxu0
        %v1540 = vpop.f32.mrf.mxu0
        %v1541 = vadd.f32 %v1244, %v1540
        %v1542 = vpop.f32.mrf.mxu0
        %1543 = vmatprep.mubr.bf16.mxu0 0
        %1544 = vmatmul.mubr.bf16.gmra.mxu0 %v1326
        %v1545 = vpop.f32.mrf.mxu0
        %v1546 = vadd.f32 %v1244, %v1545
        %v1547 = vpop.f32.mrf.mxu0
        %v1548 = vpop.f32.mrf.mxu0
        %v1549 = vadd.f32 %v1244, %v1548
        %v1550 = vpop.f32.mrf.mxu0
        %1551 = vmatprep.mubr.bf16.mxu0 0
        %1552 = vmatmul.mubr.bf16.gmra.mxu0 %v1329
        %v1553 = vpop.f32.mrf.mxu0
        %v1554 = vadd.f32 %v1244, %v1553
        %v1555 = vpop.f32.mrf.mxu0
        %v1556 = vpop.f32.mrf.mxu0
        %v1557 = vadd.f32 %v1244, %v1556
        %v1558 = vpop.f32.mrf.mxu0
        %1559 = vmatprep.mubr.bf16.mxu0 0
        %1560 = vmatmul.mubr.bf16.gmra.mxu0 %v1332
        %v1561 = vpop.f32.mrf.mxu0
        %v1562 = vadd.f32 %v1244, %v1561
        %v1563 = vpop.f32.mrf.mxu0
        %v1564 = vpop.f32.mrf.mxu0
        %v1565 = vadd.f32 %v1244, %v1564
        %v1566 = vpop.f32.mrf.mxu0
        %1567 = vmatprep.mubr.bf16.mxu0 0
        %1568 = vmatmul.mubr.bf16.gmra.mxu0 %v1335
        %v1569 = vpop.f32.mrf.mxu0
        %v1570 = vadd.f32 %v1244, %v1569
        %v1571 = vpop.f32.mrf.mxu0
        %v1572 = vpop.f32.mrf.mxu0
        %v1573 = vadd.f32 %v1244, %v1572
        %v1574 = vpop.f32.mrf.mxu0
        %1575 = vmatprep.mubr.bf16.mxu0 0
        %1576 = vmatmul.mubr.bf16.gmra.mxu0 %v1338
        %v1577 = vpop.f32.mrf.mxu0
        %v1578 = vadd.f32 %v1244, %v1577
        %v1579 = vpop.f32.mrf.mxu0
        %v1580 = vpop.f32.mrf.mxu0
        %v1581 = vadd.f32 %v1244, %v1580
        %v1582 = vpop.f32.mrf.mxu0
        %1583 = vmatprep.mubr.bf16.mxu0 0
        %1584 = vmatmul.mubr.bf16.gmra.mxu0 %v1341
        %v1585 = vpop.f32.mrf.mxu0
        %v1586 = vadd.f32 %v1244, %v1585
        %v1587 = vpop.f32.mrf.mxu0
        %v1588 = vpop.f32.mrf.mxu0
        %v1589 = vadd.f32 %v1244, %v1588
        %v1590 = vpop.f32.mrf.mxu0
        %1591 = vmatprep.mubr.bf16.mxu0 0
        %1592 = vmatmul.mubr.bf16.gmra.mxu0 %v1344
        %v1593 = vpop.f32.mrf.mxu0
        %v1594 = vadd.f32 %v1244, %v1593
        %v1595 = vpop.f32.mrf.mxu0
        %v1596 = vpop.f32.mrf.mxu0
        %v1597 = vadd.f32 %v1244, %v1596
        %v1598 = vpop.f32.mrf.mxu0
        %1599 = vmatprep.mubr.bf16.mxu0 0
        %1600 = vmatmul.mubr.bf16.gmra.mxu0 %v1347
        %v1601 = vpop.f32.mrf.mxu0
        %v1602 = vadd.f32 %v1244, %v1601
        %v1603 = vpop.f32.mrf.mxu0
        %v1604 = vpop.f32.mrf.mxu0
        %v1605 = vadd.f32 %v1244, %v1604
        %v1606 = vpop.f32.mrf.mxu0
        %1607 = vmatprep.mubr.bf16.mxu0 0
        %1608 = vmatmul.mubr.bf16.gmra.mxu0 %v1350
        %v1609 = vpop.f32.mrf.mxu0
        %v1610 = vadd.f32 %v1244, %v1609
        %v1611 = vpop.f32.mrf.mxu0
        %v1612 = vpop.f32.mrf.mxu0
        %v1613 = vadd.f32 %v1244, %v1612
        %v1614 = vpop.f32.mrf.mxu0
        %1615 = vmatprep.mubr.bf16.mxu0 0
        %1616 = vmatmul.mubr.bf16.gmra.mxu0 %v1353
        %v1617 = vpop.f32.mrf.mxu0
        %v1618 = vadd.f32 %v1244, %v1617
        %v1619 = vpop.f32.mrf.mxu0
        %v1620 = vpop.f32.mrf.mxu0
        %v1621 = vadd.f32 %v1244, %v1620
        %v1622 = vpop.f32.mrf.mxu0
        %1623 = vmatprep.mubr.bf16.mxu0 0
        %1624 = vmatmul.mubr.bf16.gmra.mxu0 %v1356
        %v1625 = vpop.f32.mrf.mxu0
        %v1626 = vadd.f32 %v1244, %v1625
        %v1627 = vpop.f32.mrf.mxu0
        %v1628 = vpop.f32.mrf.mxu0
        %v1629 = vadd.f32 %v1244, %v1628
        %v1630 = vpop.f32.mrf.mxu0
        %1631 = vmatprep.mubr.bf16.mxu0 0
        %1632 = vmatmul.mubr.bf16.gmra.mxu0 %v1359
        %v1633 = vpop.f32.mrf.mxu0
        %v1634 = vadd.f32 %v1244, %v1633
        %v1635 = vpop.f32.mrf.mxu0
        %v1636 = vpop.f32.mrf.mxu0
        %v1637 = vadd.f32 %v1244, %v1636
        %v1638 = vpop.f32.mrf.mxu0
        %1639 = vmatprep.mubr.bf16.mxu0 0
        %1640 = vmatmul.mubr.bf16.gmra.mxu0 %v1362
        %v1641 = vpop.f32.mrf.mxu0
        %v1642 = vadd.f32 %v1244, %v1641
        %v1643 = vpop.f32.mrf.mxu0
        %v1644 = vpop.f32.mrf.mxu0
        %v1645 = vadd.f32 %v1244, %v1644
        %v1646 = vpop.f32.mrf.mxu0
        %1647 = vmatprep.mubr.bf16.mxu0 0
        %1648 = vmatmul.mubr.bf16.gmra.mxu0 %v1365
        %v1649 = vpop.f32.mrf.mxu0
        %v1650 = vadd.f32 %v1244, %v1649
        %v1651 = vpop.f32.mrf.mxu0
        %v1652 = vpop.f32.mrf.mxu0
        %v1653 = vadd.f32 %v1244, %v1652
        %v1654 = vpop.f32.mrf.mxu0
        %1655 = vdwg.mxu0
        %v1656 = vmax.f32 %v1402, 0.0
        %v1657 = vmax.f32 %v1405, 0.0
        %v1658 = vmax.f32 %v1410, 0.0
        %v1659 = vmax.f32 %v1413, 0.0
        %v1660 = vmax.f32 %v1418, 0.0
        %v1661 = vmax.f32 %v1421, 0.0
        %v1662 = vmax.f32 %v1426, 0.0
        %v1663 = vmax.f32 %v1429, 0.0
        %v1664 = vmax.f32 %v1434, 0.0
        %v1665 = vmax.f32 %v1437, 0.0
        %v1666 = vmax.f32 %v1442, 0.0
        %v1667 = vmax.f32 %v1445, 0.0
        %v1668 = vmax.f32 %v1450, 0.0
        %v1669 = vmax.f32 %v1453, 0.0
        %v1670 = vmax.f32 %v1458, 0.0
        %v1671 = vmax.f32 %v1461, 0.0
        %v1672 = vmax.f32 %v1466, 0.0
        %v1673 = vmax.f32 %v1469, 0.0
        %v1674 = vmax.f32 %v1474, 0.0
        %v1675 = vmax.f32 %v1477, 0.0
        %v1676 = vmax.f32 %v1482, 0.0
        %v1677 = vmax.f32 %v1485, 0.0
        %v1678 = vmax.f32 %v1490, 0.0
        %v1679 = vmax.f32 %v1493, 0.0
        %v1680 = vmax.f32 %v1498, 0.0
        %v1681 = vmax.f32 %v1501, 0.0
        %v1682 = vmax.f32 %v1506, 0.0
        %v1683 = vmax.f32 %v1509, 0.0
        %v1684 = vmax.f32 %v1514, 0.0
        %v1685 = vmax.f32 %v1517, 0.0
        %v1686 = vmax.f32 %v1522, 0.0
        %v1687 = vmax.f32 %v1525, 0.0
        %v1688 = vmax.f32 %v1530, 0.0
        %v1689 = vmax.f32 %v1533, 0.0
        %v1690 = vmax.f32 %v1538, 0.0
        %v1691 = vmax.f32 %v1541, 0.0
        %v1692 = vmax.f32 %v1546, 0.0
        %v1693 = vmax.f32 %v1549, 0.0
        %v1694 = vmax.f32 %v1554, 0.0
        %v1695 = vmax.f32 %v1557, 0.0
        %v1696 = vmax.f32 %v1562, 0.0
        %v1697 = vmax.f32 %v1565, 0.0
        %v1698 = vmax.f32 %v1570, 0.0
        %v1699 = vmax.f32 %v1573, 0.0
        %v1700 = vmax.f32 %v1578, 0.0
        %v1701 = vmax.f32 %v1581, 0.0
        %v1702 = vmax.f32 %v1586, 0.0
        %v1703 = vmax.f32 %v1589, 0.0
        %v1704 = vmax.f32 %v1594, 0.0
        %v1705 = vmax.f32 %v1597, 0.0
        %v1706 = vmax.f32 %v1602, 0.0
        %v1707 = vmax.f32 %v1605, 0.0
        %v1708 = vmax.f32 %v1610, 0.0
        %v1709 = vmax.f32 %v1613, 0.0
        %v1710 = vmax.f32 %v1618, 0.0
        %v1711 = vmax.f32 %v1621, 0.0
        %v1712 = vmax.f32 %v1626, 0.0
        %v1713 = vmax.f32 %v1629, 0.0
        %v1714 = vmax.f32 %v1634, 0.0
        %v1715 = vmax.f32 %v1637, 0.0
        %v1716 = vmax.f32 %v1642, 0.0
        %v1717 = vmax.f32 %v1645, 0.0
        %v1718 = vmax.f32 %v1650, 0.0
        %v1719 = vmax.f32 %v1653, 0.0
        %v1720 = vpack.c.bf16 %v1657, %v1656
        %v1721 = vpack.c.bf16 %v1659, %v1658
        %v1722 = vpack.c.bf16 %v1661, %v1660
        %v1723 = vpack.c.bf16 %v1663, %v1662
        %v1724 = vpack.c.bf16 %v1665, %v1664
        %v1725 = vpack.c.bf16 %v1667, %v1666
        %v1726 = vpack.c.bf16 %v1669, %v1668
        %v1727 = vpack.c.bf16 %v1671, %v1670
        %v1728 = vpack.c.bf16 %v1673, %v1672
        %v1729 = vpack.c.bf16 %v1675, %v1674
        %v1730 = vpack.c.bf16 %v1677, %v1676
        %v1731 = vpack.c.bf16 %v1679, %v1678
        %v1732 = vpack.c.bf16 %v1681, %v1680
        %v1733 = vpack.c.bf16 %v1683, %v1682
        %v1734 = vpack.c.bf16 %v1685, %v1684
        %v1735 = vpack.c.bf16 %v1687, %v1686
        %v1736 = vpack.c.bf16 %v1689, %v1688
        %v1737 = vpack.c.bf16 %v1691, %v1690
        %v1738 = vpack.c.bf16 %v1693, %v1692
        %v1739 = vpack.c.bf16 %v1695, %v1694
        %v1740 = vpack.c.bf16 %v1697, %v1696
        %v1741 = vpack.c.bf16 %v1699, %v1698
        %v1742 = vpack.c.bf16 %v1701, %v1700
        %v1743 = vpack.c.bf16 %v1703, %v1702
        %v1744 = vpack.c.bf16 %v1705, %v1704
        %v1745 = vpack.c.bf16 %v1707, %v1706
        %v1746 = vpack.c.bf16 %v1709, %v1708
        %v1747 = vpack.c.bf16 %v1711, %v1710
        %v1748 = vpack.c.bf16 %v1713, %v1712
        %v1749 = vpack.c.bf16 %v1715, %v1714
        %v1750 = vpack.c.bf16 %v1717, %v1716
        %v1751 = vpack.c.bf16 %v1719, %v1718
        %v1752 = vld [vmem:[%s5] sm:$0xff]
        %v1753 = vld [vmem:[%s5 + $0x8] sm:$0xff]
        %v1754 = vld [vmem:[%s5 + $0x10] sm:$0xff]
        %v1755 = vld [vmem:[%s5 + $0x18] sm:$0xff]
        %v1756 = vld [vmem:[%s5 + $0x20] sm:$0xff]
        %v1757 = vld [vmem:[%s5 + $0x28] sm:$0xff]
        %v1758 = vld [vmem:[%s5 + $0x30] sm:$0xff]
        %v1759 = vld [vmem:[%s5 + $0x38] sm:$0xff]
        %v1760 = vld [vmem:[%s5 + $0x40] sm:$0xff]
        %v1761 = vld [vmem:[%s5 + $0x48] sm:$0xff]
        %v1762 = vld [vmem:[%s5 + $0x50] sm:$0xff]
        %v1763 = vld [vmem:[%s5 + $0x58] sm:$0xff]
        %v1764 = vld [vmem:[%s5 + $0x60] sm:$0xff]
        %v1765 = vld [vmem:[%s5 + $0x68] sm:$0xff]
        %v1766 = vld [vmem:[%s5 + $0x70] sm:$0xff]
        %v1767 = vld [vmem:[%s5 + $0x78] sm:$0xff]
        %v1768 = vld [vmem:[%s5 + $0x80] sm:$0xff]
        %v1769 = vld [vmem:[%s5 + $0x88] sm:$0xff]
        %v1770 = vld [vmem:[%s5 + $0x90] sm:$0xff]
        %v1771 = vld [vmem:[%s5 + $0x98] sm:$0xff]
        %v1772 = vld [vmem:[%s5 + $0xa0] sm:$0xff]
        %v1773 = vld [vmem:[%s5 + $0xa8] sm:$0xff]
        %v1774 = vld [vmem:[%s5 + $0xb0] sm:$0xff]
        %v1775 = vld [vmem:[%s5 + $0xb8] sm:$0xff]
        %v1776 = vld [vmem:[%s5 + $0xc0] sm:$0xff]
        %v1777 = vld [vmem:[%s5 + $0xc8] sm:$0xff]
        %v1778 = vld [vmem:[%s5 + $0xd0] sm:$0xff]
        %v1779 = vld [vmem:[%s5 + $0xd8] sm:$0xff]
        %v1780 = vld [vmem:[%s5 + $0xe0] sm:$0xff]
        %v1781 = vld [vmem:[%s5 + $0xe8] sm:$0xff]
        %v1782 = vld [vmem:[%s5 + $0xf0] sm:$0xff]
        %v1783 = vld [vmem:[%s5 + $0xf8] sm:$0xff]
        %v1784 = vld [vmem:[%s5 + $0x100] sm:$0xff]
        %v1785 = vld [vmem:[%s5 + $0x108] sm:$0xff]
        %v1786 = vld [vmem:[%s5 + $0x110] sm:$0xff]
        %v1787 = vld [vmem:[%s5 + $0x118] sm:$0xff]
        %v1788 = vld [vmem:[%s5 + $0x120] sm:$0xff]
        %v1789 = vld [vmem:[%s5 + $0x128] sm:$0xff]
        %v1790 = vld [vmem:[%s5 + $0x130] sm:$0xff]
        %v1791 = vld [vmem:[%s5 + $0x138] sm:$0xff]
        %v1792 = vld [vmem:[%s5 + $0x140] sm:$0xff]
        %v1793 = vld [vmem:[%s5 + $0x148] sm:$0xff]
        %v1794 = vld [vmem:[%s5 + $0x150] sm:$0xff]
        %v1795 = vld [vmem:[%s5 + $0x158] sm:$0xff]
        %v1796 = vld [vmem:[%s5 + $0x160] sm:$0xff]
        %v1797 = vld [vmem:[%s5 + $0x168] sm:$0xff]
        %v1798 = vld [vmem:[%s5 + $0x170] sm:$0xff]
        %v1799 = vld [vmem:[%s5 + $0x178] sm:$0xff]
        %v1800 = vld [vmem:[%s5 + $0x180] sm:$0xff]
        %v1801 = vld [vmem:[%s5 + $0x188] sm:$0xff]
        %v1802 = vld [vmem:[%s5 + $0x190] sm:$0xff]
        %v1803 = vld [vmem:[%s5 + $0x198] sm:$0xff]
        %v1804 = vld [vmem:[%s5 + $0x1a0] sm:$0xff]
        %v1805 = vld [vmem:[%s5 + $0x1a8] sm:$0xff]
        %v1806 = vld [vmem:[%s5 + $0x1b0] sm:$0xff]
        %v1807 = vld [vmem:[%s5 + $0x1b8] sm:$0xff]
        %v1808 = vld [vmem:[%s5 + $0x1c0] sm:$0xff]
        %v1809 = vld [vmem:[%s5 + $0x1c8] sm:$0xff]
        %v1810 = vld [vmem:[%s5 + $0x1d0] sm:$0xff]
        %v1811 = vld [vmem:[%s5 + $0x1d8] sm:$0xff]
        %v1812 = vld [vmem:[%s5 + $0x1e0] sm:$0xff]
        %v1813 = vld [vmem:[%s5 + $0x1e8] sm:$0xff]
        %v1814 = vld [vmem:[%s5 + $0x1f0] sm:$0xff]
        %v1815 = vld [vmem:[%s5 + $0x1f8] sm:$0xff]
        %v1816 = vld [vmem:[%s6] sm:$0xff]
        %v1818 = vlaneseq
        %v1819 = vshrl.u32 %v1818, 7
        %v1820 = vsub.s32 0, %v1819
        %v1821 = vrot.slane %v1816, %v1820
        %v1822 = vlaneseq
        %v1823 = vshrl.u32 %v1822, 7
        %v1824 = vsub.s32 1, %v1823
        %v1825 = vrot.slane %v1816, %v1824
        %v1826 = vlaneseq
        %v1827 = vshrl.u32 %v1826, 7
        %v1828 = vsub.s32 2, %v1827
        %v1829 = vrot.slane %v1816, %v1828
        %v1830 = vlaneseq
        %v1831 = vshrl.u32 %v1830, 7
        %v1832 = vsub.s32 3, %v1831
        %v1833 = vrot.slane %v1816, %v1832
        %v1834 = vlaneseq
        %v1835 = vshrl.u32 %v1834, 7
        %v1836 = vsub.s32 4, %v1835
        %v1837 = vrot.slane %v1816, %v1836
        %v1838 = vlaneseq
        %v1839 = vshrl.u32 %v1838, 7
        %v1840 = vsub.s32 5, %v1839
        %v1841 = vrot.slane %v1816, %v1840
        %v1842 = vlaneseq
        %v1843 = vshrl.u32 %v1842, 7
        %v1844 = vsub.s32 6, %v1843
        %v1845 = vrot.slane %v1816, %v1844
        %v1846 = vlaneseq
        %v1847 = vshrl.u32 %v1846, 7
        %v1848 = vsub.s32 7, %v1847
        %v1849 = vrot.slane %v1816, %v1848
        %v1922 = vunpack.c.l.b16 %v1752
        %v1923 = vunpack.c.h.b16 %v1752
        %v1924 = vunpack.c.l.b16 %v1753
        %v1925 = vunpack.c.h.b16 %v1753
        %v1926 = vunpack.c.l.b16 %v1754
        %v1927 = vunpack.c.h.b16 %v1754
        %v1928 = vunpack.c.l.b16 %v1755
        %v1929 = vunpack.c.h.b16 %v1755
        %v1930 = vunpack.c.l.b16 %v1756
        %v1931 = vunpack.c.h.b16 %v1756
        %v1932 = vunpack.c.l.b16 %v1757
        %v1933 = vunpack.c.h.b16 %v1757
        %v1934 = vunpack.c.l.b16 %v1758
        %v1935 = vunpack.c.h.b16 %v1758
        %v1936 = vunpack.c.l.b16 %v1759
        %v1937 = vunpack.c.h.b16 %v1759
        %v1938 = vunpack.c.l.b16 %v1760
        %v1939 = vunpack.c.h.b16 %v1760
        %v1940 = vunpack.c.l.b16 %v1761
        %v1941 = vunpack.c.h.b16 %v1761
        %v1942 = vunpack.c.l.b16 %v1762
        %v1943 = vunpack.c.h.b16 %v1762
        %v1944 = vunpack.c.l.b16 %v1763
        %v1945 = vunpack.c.h.b16 %v1763
        %v1946 = vunpack.c.l.b16 %v1764
        %v1947 = vunpack.c.h.b16 %v1764
        %v1948 = vunpack.c.l.b16 %v1765
        %v1949 = vunpack.c.h.b16 %v1765
        %v1950 = vunpack.c.l.b16 %v1766
        %v1951 = vunpack.c.h.b16 %v1766
        %v1952 = vunpack.c.l.b16 %v1767
        %v1953 = vunpack.c.h.b16 %v1767
        %v1954 = vunpack.c.l.b16 %v1768
        %v1955 = vunpack.c.h.b16 %v1768
        %v1956 = vunpack.c.l.b16 %v1769
        %v1957 = vunpack.c.h.b16 %v1769
        %v1958 = vunpack.c.l.b16 %v1770
        %v1959 = vunpack.c.h.b16 %v1770
        %v1960 = vunpack.c.l.b16 %v1771
        %v1961 = vunpack.c.h.b16 %v1771
        %v1962 = vunpack.c.l.b16 %v1772
        %v1963 = vunpack.c.h.b16 %v1772
        %v1964 = vunpack.c.l.b16 %v1773
        %v1965 = vunpack.c.h.b16 %v1773
        %v1966 = vunpack.c.l.b16 %v1774
        %v1967 = vunpack.c.h.b16 %v1774
        %v1968 = vunpack.c.l.b16 %v1775
        %v1969 = vunpack.c.h.b16 %v1775
        %v1970 = vunpack.c.l.b16 %v1776
        %v1971 = vunpack.c.h.b16 %v1776
        %v1972 = vunpack.c.l.b16 %v1777
        %v1973 = vunpack.c.h.b16 %v1777
        %v1974 = vunpack.c.l.b16 %v1778
        %v1975 = vunpack.c.h.b16 %v1778
        %v1976 = vunpack.c.l.b16 %v1779
        %v1977 = vunpack.c.h.b16 %v1779
        %v1978 = vunpack.c.l.b16 %v1780
        %v1979 = vunpack.c.h.b16 %v1780
        %v1980 = vunpack.c.l.b16 %v1781
        %v1981 = vunpack.c.h.b16 %v1781
        %v1982 = vunpack.c.l.b16 %v1782
        %v1983 = vunpack.c.h.b16 %v1782
        %v1984 = vunpack.c.l.b16 %v1783
        %v1985 = vunpack.c.h.b16 %v1783
        %v1986 = vunpack.c.l.b16 %v1784
        %v1987 = vunpack.c.h.b16 %v1784
        %v1988 = vunpack.c.l.b16 %v1785
        %v1989 = vunpack.c.h.b16 %v1785
        %v1990 = vunpack.c.l.b16 %v1786
        %v1991 = vunpack.c.h.b16 %v1786
        %v1992 = vunpack.c.l.b16 %v1787
        %v1993 = vunpack.c.h.b16 %v1787
        %v1994 = vunpack.c.l.b16 %v1788
        %v1995 = vunpack.c.h.b16 %v1788
        %v1996 = vunpack.c.l.b16 %v1789
        %v1997 = vunpack.c.h.b16 %v1789
        %v1998 = vunpack.c.l.b16 %v1790
        %v1999 = vunpack.c.h.b16 %v1790
        %v2000 = vunpack.c.l.b16 %v1791
        %v2001 = vunpack.c.h.b16 %v1791
        %v2002 = vunpack.c.l.b16 %v1792
        %v2003 = vunpack.c.h.b16 %v1792
        %v2004 = vunpack.c.l.b16 %v1793
        %v2005 = vunpack.c.h.b16 %v1793
        %v2006 = vunpack.c.l.b16 %v1794
        %v2007 = vunpack.c.h.b16 %v1794
        %v2008 = vunpack.c.l.b16 %v1795
        %v2009 = vunpack.c.h.b16 %v1795
        %v2010 = vunpack.c.l.b16 %v1796
        %v2011 = vunpack.c.h.b16 %v1796
        %v2012 = vunpack.c.l.b16 %v1797
        %v2013 = vunpack.c.h.b16 %v1797
        %v2014 = vunpack.c.l.b16 %v1798
        %v2015 = vunpack.c.h.b16 %v1798
        %v2016 = vunpack.c.l.b16 %v1799
        %v2017 = vunpack.c.h.b16 %v1799
        %v2018 = vunpack.c.l.b16 %v1800
        %v2019 = vunpack.c.h.b16 %v1800
        %v2020 = vunpack.c.l.b16 %v1801
        %v2021 = vunpack.c.h.b16 %v1801
        %v2022 = vunpack.c.l.b16 %v1802
        %v2023 = vunpack.c.h.b16 %v1802
        %v2024 = vunpack.c.l.b16 %v1803
        %v2025 = vunpack.c.h.b16 %v1803
        %v2026 = vunpack.c.l.b16 %v1804
        %v2027 = vunpack.c.h.b16 %v1804
        %v2028 = vunpack.c.l.b16 %v1805
        %v2029 = vunpack.c.h.b16 %v1805
        %v2030 = vunpack.c.l.b16 %v1806
        %v2031 = vunpack.c.h.b16 %v1806
        %v2032 = vunpack.c.l.b16 %v1807
        %v2033 = vunpack.c.h.b16 %v1807
        %v2034 = vunpack.c.l.b16 %v1808
        %v2035 = vunpack.c.h.b16 %v1808
        %v2036 = vunpack.c.l.b16 %v1809
        %v2037 = vunpack.c.h.b16 %v1809
        %v2038 = vunpack.c.l.b16 %v1810
        %v2039 = vunpack.c.h.b16 %v1810
        %v2040 = vunpack.c.l.b16 %v1811
        %v2041 = vunpack.c.h.b16 %v1811
        %v2042 = vunpack.c.l.b16 %v1812
        %v2043 = vunpack.c.h.b16 %v1812
        %v2044 = vunpack.c.l.b16 %v1813
        %v2045 = vunpack.c.h.b16 %v1813
        %v2046 = vunpack.c.l.b16 %v1814
        %v2047 = vunpack.c.h.b16 %v1814
        %v2048 = vunpack.c.l.b16 %v1815
        %v2049 = vunpack.c.h.b16 %v1815
        %v2050 = vpack.c.b16 %v1930, %v1922
        %v2051 = vpack.c.b16 %v1931, %v1923
        %v2052 = vpack.c.b16 %v1932, %v1924
        %v2053 = vpack.c.b16 %v1933, %v1925
        %v2054 = vpack.c.b16 %v1934, %v1926
        %v2055 = vpack.c.b16 %v1935, %v1927
        %v2056 = vpack.c.b16 %v1936, %v1928
        %v2057 = vpack.c.b16 %v1937, %v1929
        %v2058 = vpack.c.b16 %v1946, %v1938
        %v2059 = vpack.c.b16 %v1947, %v1939
        %v2060 = vpack.c.b16 %v1948, %v1940
        %v2061 = vpack.c.b16 %v1949, %v1941
        %v2062 = vpack.c.b16 %v1950, %v1942
        %v2063 = vpack.c.b16 %v1951, %v1943
        %v2064 = vpack.c.b16 %v1952, %v1944
        %v2065 = vpack.c.b16 %v1953, %v1945
        %v2066 = vpack.c.b16 %v1962, %v1954
        %v2067 = vpack.c.b16 %v1963, %v1955
        %v2068 = vpack.c.b16 %v1964, %v1956
        %v2069 = vpack.c.b16 %v1965, %v1957
        %v2070 = vpack.c.b16 %v1966, %v1958
        %v2071 = vpack.c.b16 %v1967, %v1959
        %v2072 = vpack.c.b16 %v1968, %v1960
        %v2073 = vpack.c.b16 %v1969, %v1961
        %v2074 = vpack.c.b16 %v1978, %v1970
        %v2075 = vpack.c.b16 %v1979, %v1971
        %v2076 = vpack.c.b16 %v1980, %v1972
        %v2077 = vpack.c.b16 %v1981, %v1973
        %v2078 = vpack.c.b16 %v1982, %v1974
        %v2079 = vpack.c.b16 %v1983, %v1975
        %v2080 = vpack.c.b16 %v1984, %v1976
        %v2081 = vpack.c.b16 %v1985, %v1977
        %v2082 = vpack.c.b16 %v1994, %v1986
        %v2083 = vpack.c.b16 %v1995, %v1987
        %v2084 = vpack.c.b16 %v1996, %v1988
        %v2085 = vpack.c.b16 %v1997, %v1989
        %v2086 = vpack.c.b16 %v1998, %v1990
        %v2087 = vpack.c.b16 %v1999, %v1991
        %v2088 = vpack.c.b16 %v2000, %v1992
        %v2089 = vpack.c.b16 %v2001, %v1993
        %v2090 = vpack.c.b16 %v2010, %v2002
        %v2091 = vpack.c.b16 %v2011, %v2003
        %v2092 = vpack.c.b16 %v2012, %v2004
        %v2093 = vpack.c.b16 %v2013, %v2005
        %v2094 = vpack.c.b16 %v2014, %v2006
        %v2095 = vpack.c.b16 %v2015, %v2007
        %v2096 = vpack.c.b16 %v2016, %v2008
        %v2097 = vpack.c.b16 %v2017, %v2009
        %v2098 = vpack.c.b16 %v2026, %v2018
        %v2099 = vpack.c.b16 %v2027, %v2019
        %v2100 = vpack.c.b16 %v2028, %v2020
        %v2101 = vpack.c.b16 %v2029, %v2021
        %v2102 = vpack.c.b16 %v2030, %v2022
        %v2103 = vpack.c.b16 %v2031, %v2023
        %v2104 = vpack.c.b16 %v2032, %v2024
        %v2105 = vpack.c.b16 %v2033, %v2025
        %v2106 = vpack.c.b16 %v2042, %v2034
        %v2107 = vpack.c.b16 %v2043, %v2035
        %v2108 = vpack.c.b16 %v2044, %v2036
        %v2109 = vpack.c.b16 %v2045, %v2037
        %v2110 = vpack.c.b16 %v2046, %v2038
        %v2111 = vpack.c.b16 %v2047, %v2039
        %v2112 = vpack.c.b16 %v2048, %v2040
        %v2113 = vpack.c.b16 %v2049, %v2041
        %2178 = vmatprep.subr.bf16.mxu0 %v2107
        %2179 = vmatpush1.bf16.msra.mxu0 %v2106
        %2180 = vmatprep.subr.bf16.mxu0 %v2099
        %2181 = vmatpush1.bf16.msra.mxu0 %v2098
        %2182 = vmatprep.subr.bf16.mxu0 %v2091
        %2183 = vmatpush1.bf16.msra.mxu0 %v2090
        %2184 = vmatprep.subr.bf16.mxu0 %v2083
        %2185 = vmatpush1.bf16.msra.mxu0 %v2082
        %2186 = vmatprep.subr.bf16.mxu0 %v2075
        %2187 = vmatpush1.bf16.msra.mxu0 %v2074
        %2188 = vmatprep.subr.bf16.mxu0 %v2067
        %2189 = vmatpush1.bf16.msra.mxu0 %v2066
        %2190 = vmatprep.subr.bf16.mxu0 %v2059
        %2191 = vmatpush1.bf16.msra.mxu0 %v2058
        %2192 = vmatprep.subr.bf16.mxu0 %v2051
        %2193 = vmatpush1.bf16.msra.mxu0 %v2050
        %2194 = vmatprep.subr.bf16.mxu0 0
        %2195 = vmatpush2.bf16.msra.mxu0 0
        %2196 = vmatprep.subr.bf16.mxu0 0
        %2197 = vmatpush2.bf16.msra.mxu0 0
        %2198 = vmatprep.subr.bf16.mxu0 0
        %2199 = vmatpush2.bf16.msra.mxu0 0
        %2200 = vmatprep.subr.bf16.mxu0 0
        %2201 = vmatpush2.bf16.msra.mxu0 0
        %2202 = vmatprep.subr.bf16.mxu0 0
        %2203 = vmatpush2.bf16.msra.mxu0 0
        %2204 = vmatprep.subr.bf16.mxu0 0
        %2205 = vmatpush2.bf16.msra.mxu0 0
        %2206 = vmatprep.subr.bf16.mxu0 0
        %2207 = vmatpush2.bf16.msra.mxu0 0
        %2208 = vmatprep.subr.bf16.mxu0 0
        %2209 = vmatpush2.bf16.msra.mxu0 0
        %2210 = vmatprep.mubr.bf16.mxu0 0
        %2211 = vmatmul.mubr.bf16.gmra.mxu0 %v1720
        %v2212 = vpop.f32.mrf.mxu0
        %v2213 = vadd.f32 %v1821, %v2212
        %v2214 = vpop.f32.mrf.mxu0
        %v2215 = vadd.f32 %v1825, %v2214
        %v2216 = vpop.f32.mrf.mxu0
        %v2217 = vadd.f32 %v1821, %v2216
        %v2218 = vpop.f32.mrf.mxu0
        %v2219 = vadd.f32 %v1825, %v2218
        %2220 = vmatprep.mubr.bf16.mxu0 0
        %2221 = vmatmul.mubr.bf16.gmra.mxu0 %v1721
        %v2222 = vpop.f32.mrf.mxu0
        %v2223 = vadd.f32 %v1821, %v2222
        %v2224 = vpop.f32.mrf.mxu0
        %v2225 = vadd.f32 %v1825, %v2224
        %v2226 = vpop.f32.mrf.mxu0
        %v2227 = vadd.f32 %v1821, %v2226
        %v2228 = vpop.f32.mrf.mxu0
        %v2229 = vadd.f32 %v1825, %v2228
        %2230 = vmatprep.mubr.bf16.mxu0 0
        %2231 = vmatmul.mubr.bf16.gmra.mxu0 %v1722
        %v2232 = vpop.f32.mrf.mxu0
        %v2233 = vadd.f32 %v1821, %v2232
        %v2234 = vpop.f32.mrf.mxu0
        %v2235 = vadd.f32 %v1825, %v2234
        %v2236 = vpop.f32.mrf.mxu0
        %v2237 = vadd.f32 %v1821, %v2236
        %v2238 = vpop.f32.mrf.mxu0
        %v2239 = vadd.f32 %v1825, %v2238
        %2240 = vmatprep.mubr.bf16.mxu0 0
        %2241 = vmatmul.mubr.bf16.gmra.mxu0 %v1723
        %v2242 = vpop.f32.mrf.mxu0
        %v2243 = vadd.f32 %v1821, %v2242
        %v2244 = vpop.f32.mrf.mxu0
        %v2245 = vadd.f32 %v1825, %v2244
        %v2246 = vpop.f32.mrf.mxu0
        %v2247 = vadd.f32 %v1821, %v2246
        %v2248 = vpop.f32.mrf.mxu0
        %v2249 = vadd.f32 %v1825, %v2248
        %2250 = vmatprep.mubr.bf16.mxu0 0
        %2251 = vmatmul.mubr.bf16.gmra.mxu0 %v1724
        %v2252 = vpop.f32.mrf.mxu0
        %v2253 = vadd.f32 %v1821, %v2252
        %v2254 = vpop.f32.mrf.mxu0
        %v2255 = vadd.f32 %v1825, %v2254
        %v2256 = vpop.f32.mrf.mxu0
        %v2257 = vadd.f32 %v1821, %v2256
        %v2258 = vpop.f32.mrf.mxu0
        %v2259 = vadd.f32 %v1825, %v2258
        %2260 = vmatprep.mubr.bf16.mxu0 0
        %2261 = vmatmul.mubr.bf16.gmra.mxu0 %v1725
        %v2262 = vpop.f32.mrf.mxu0
        %v2263 = vadd.f32 %v1821, %v2262
        %v2264 = vpop.f32.mrf.mxu0
        %v2265 = vadd.f32 %v1825, %v2264
        %v2266 = vpop.f32.mrf.mxu0
        %v2267 = vadd.f32 %v1821, %v2266
        %v2268 = vpop.f32.mrf.mxu0
        %v2269 = vadd.f32 %v1825, %v2268
        %2270 = vmatprep.mubr.bf16.mxu0 0
        %2271 = vmatmul.mubr.bf16.gmra.mxu0 %v1726
        %v2272 = vpop.f32.mrf.mxu0
        %v2273 = vadd.f32 %v1821, %v2272
        %v2274 = vpop.f32.mrf.mxu0
        %v2275 = vadd.f32 %v1825, %v2274
        %v2276 = vpop.f32.mrf.mxu0
        %v2277 = vadd.f32 %v1821, %v2276
        %v2278 = vpop.f32.mrf.mxu0
        %v2279 = vadd.f32 %v1825, %v2278
        %2280 = vmatprep.mubr.bf16.mxu0 0
        %2281 = vmatmul.mubr.bf16.gmra.mxu0 %v1727
        %v2282 = vpop.f32.mrf.mxu0
        %v2283 = vadd.f32 %v1821, %v2282
        %v2284 = vpop.f32.mrf.mxu0
        %v2285 = vadd.f32 %v1825, %v2284
        %v2286 = vpop.f32.mrf.mxu0
        %v2287 = vadd.f32 %v1821, %v2286
        %v2288 = vpop.f32.mrf.mxu0
        %v2289 = vadd.f32 %v1825, %v2288
        %2290 = vmatprep.mubr.bf16.mxu0 0
        %2291 = vmatmul.mubr.bf16.gmra.mxu0 %v1728
        %v2292 = vpop.f32.mrf.mxu0
        %v2293 = vadd.f32 %v1821, %v2292
        %v2294 = vpop.f32.mrf.mxu0
        %v2295 = vadd.f32 %v1825, %v2294
        %v2296 = vpop.f32.mrf.mxu0
        %v2297 = vadd.f32 %v1821, %v2296
        %v2298 = vpop.f32.mrf.mxu0
        %v2299 = vadd.f32 %v1825, %v2298
        %2300 = vmatprep.mubr.bf16.mxu0 0
        %2301 = vmatmul.mubr.bf16.gmra.mxu0 %v1729
        %v2302 = vpop.f32.mrf.mxu0
        %v2303 = vadd.f32 %v1821, %v2302
        %v2304 = vpop.f32.mrf.mxu0
        %v2305 = vadd.f32 %v1825, %v2304
        %v2306 = vpop.f32.mrf.mxu0
        %v2307 = vadd.f32 %v1821, %v2306
        %v2308 = vpop.f32.mrf.mxu0
        %v2309 = vadd.f32 %v1825, %v2308
        %2310 = vmatprep.mubr.bf16.mxu0 0
        %2311 = vmatmul.mubr.bf16.gmra.mxu0 %v1730
        %v2312 = vpop.f32.mrf.mxu0
        %v2313 = vadd.f32 %v1821, %v2312
        %v2314 = vpop.f32.mrf.mxu0
        %v2315 = vadd.f32 %v1825, %v2314
        %v2316 = vpop.f32.mrf.mxu0
        %v2317 = vadd.f32 %v1821, %v2316
        %v2318 = vpop.f32.mrf.mxu0
        %v2319 = vadd.f32 %v1825, %v2318
        %2320 = vmatprep.mubr.bf16.mxu0 0
        %2321 = vmatmul.mubr.bf16.gmra.mxu0 %v1731
        %v2322 = vpop.f32.mrf.mxu0
        %v2323 = vadd.f32 %v1821, %v2322
        %v2324 = vpop.f32.mrf.mxu0
        %v2325 = vadd.f32 %v1825, %v2324
        %v2326 = vpop.f32.mrf.mxu0
        %v2327 = vadd.f32 %v1821, %v2326
        %v2328 = vpop.f32.mrf.mxu0
        %v2329 = vadd.f32 %v1825, %v2328
        %2330 = vmatprep.mubr.bf16.mxu0 0
        %2331 = vmatmul.mubr.bf16.gmra.mxu0 %v1732
        %v2332 = vpop.f32.mrf.mxu0
        %v2333 = vadd.f32 %v1821, %v2332
        %v2334 = vpop.f32.mrf.mxu0
        %v2335 = vadd.f32 %v1825, %v2334
        %v2336 = vpop.f32.mrf.mxu0
        %v2337 = vadd.f32 %v1821, %v2336
        %v2338 = vpop.f32.mrf.mxu0
        %v2339 = vadd.f32 %v1825, %v2338
        %2340 = vmatprep.mubr.bf16.mxu0 0
        %2341 = vmatmul.mubr.bf16.gmra.mxu0 %v1733
        %v2342 = vpop.f32.mrf.mxu0
        %v2343 = vadd.f32 %v1821, %v2342
        %v2344 = vpop.f32.mrf.mxu0
        %v2345 = vadd.f32 %v1825, %v2344
        %v2346 = vpop.f32.mrf.mxu0
        %v2347 = vadd.f32 %v1821, %v2346
        %v2348 = vpop.f32.mrf.mxu0
        %v2349 = vadd.f32 %v1825, %v2348
        %2350 = vmatprep.mubr.bf16.mxu0 0
        %2351 = vmatmul.mubr.bf16.gmra.mxu0 %v1734
        %v2352 = vpop.f32.mrf.mxu0
        %v2353 = vadd.f32 %v1821, %v2352
        %v2354 = vpop.f32.mrf.mxu0
        %v2355 = vadd.f32 %v1825, %v2354
        %v2356 = vpop.f32.mrf.mxu0
        %v2357 = vadd.f32 %v1821, %v2356
        %v2358 = vpop.f32.mrf.mxu0
        %v2359 = vadd.f32 %v1825, %v2358
        %2360 = vmatprep.mubr.bf16.mxu0 0
        %2361 = vmatmul.mubr.bf16.gmra.mxu0 %v1735
        %v2362 = vpop.f32.mrf.mxu0
        %v2363 = vadd.f32 %v1821, %v2362
        %v2364 = vpop.f32.mrf.mxu0
        %v2365 = vadd.f32 %v1825, %v2364
        %v2366 = vpop.f32.mrf.mxu0
        %v2367 = vadd.f32 %v1821, %v2366
        %v2368 = vpop.f32.mrf.mxu0
        %v2369 = vadd.f32 %v1825, %v2368
        %2370 = vmatprep.mubr.bf16.mxu0 0
        %2371 = vmatmul.mubr.bf16.gmra.mxu0 %v1736
        %v2372 = vpop.f32.mrf.mxu0
        %v2373 = vadd.f32 %v1821, %v2372
        %v2374 = vpop.f32.mrf.mxu0
        %v2375 = vadd.f32 %v1825, %v2374
        %v2376 = vpop.f32.mrf.mxu0
        %v2377 = vadd.f32 %v1821, %v2376
        %v2378 = vpop.f32.mrf.mxu0
        %v2379 = vadd.f32 %v1825, %v2378
        %2380 = vmatprep.mubr.bf16.mxu0 0
        %2381 = vmatmul.mubr.bf16.gmra.mxu0 %v1737
        %v2382 = vpop.f32.mrf.mxu0
        %v2383 = vadd.f32 %v1821, %v2382
        %v2384 = vpop.f32.mrf.mxu0
        %v2385 = vadd.f32 %v1825, %v2384
        %v2386 = vpop.f32.mrf.mxu0
        %v2387 = vadd.f32 %v1821, %v2386
        %v2388 = vpop.f32.mrf.mxu0
        %v2389 = vadd.f32 %v1825, %v2388
        %2390 = vmatprep.mubr.bf16.mxu0 0
        %2391 = vmatmul.mubr.bf16.gmra.mxu0 %v1738
        %v2392 = vpop.f32.mrf.mxu0
        %v2393 = vadd.f32 %v1821, %v2392
        %v2394 = vpop.f32.mrf.mxu0
        %v2395 = vadd.f32 %v1825, %v2394
        %v2396 = vpop.f32.mrf.mxu0
        %v2397 = vadd.f32 %v1821, %v2396
        %v2398 = vpop.f32.mrf.mxu0
        %v2399 = vadd.f32 %v1825, %v2398
        %2400 = vmatprep.mubr.bf16.mxu0 0
        %2401 = vmatmul.mubr.bf16.gmra.mxu0 %v1739
        %v2402 = vpop.f32.mrf.mxu0
        %v2403 = vadd.f32 %v1821, %v2402
        %v2404 = vpop.f32.mrf.mxu0
        %v2405 = vadd.f32 %v1825, %v2404
        %v2406 = vpop.f32.mrf.mxu0
        %v2407 = vadd.f32 %v1821, %v2406
        %v2408 = vpop.f32.mrf.mxu0
        %v2409 = vadd.f32 %v1825, %v2408
        %2410 = vmatprep.mubr.bf16.mxu0 0
        %2411 = vmatmul.mubr.bf16.gmra.mxu0 %v1740
        %v2412 = vpop.f32.mrf.mxu0
        %v2413 = vadd.f32 %v1821, %v2412
        %v2414 = vpop.f32.mrf.mxu0
        %v2415 = vadd.f32 %v1825, %v2414
        %v2416 = vpop.f32.mrf.mxu0
        %v2417 = vadd.f32 %v1821, %v2416
        %v2418 = vpop.f32.mrf.mxu0
        %v2419 = vadd.f32 %v1825, %v2418
        %2420 = vmatprep.mubr.bf16.mxu0 0
        %2421 = vmatmul.mubr.bf16.gmra.mxu0 %v1741
        %v2422 = vpop.f32.mrf.mxu0
        %v2423 = vadd.f32 %v1821, %v2422
        %v2424 = vpop.f32.mrf.mxu0
        %v2425 = vadd.f32 %v1825, %v2424
        %v2426 = vpop.f32.mrf.mxu0
        %v2427 = vadd.f32 %v1821, %v2426
        %v2428 = vpop.f32.mrf.mxu0
        %v2429 = vadd.f32 %v1825, %v2428
        %2430 = vmatprep.mubr.bf16.mxu0 0
        %2431 = vmatmul.mubr.bf16.gmra.mxu0 %v1742
        %v2432 = vpop.f32.mrf.mxu0
        %v2433 = vadd.f32 %v1821, %v2432
        %v2434 = vpop.f32.mrf.mxu0
        %v2435 = vadd.f32 %v1825, %v2434
        %v2436 = vpop.f32.mrf.mxu0
        %v2437 = vadd.f32 %v1821, %v2436
        %v2438 = vpop.f32.mrf.mxu0
        %v2439 = vadd.f32 %v1825, %v2438
        %2440 = vmatprep.mubr.bf16.mxu0 0
        %2441 = vmatmul.mubr.bf16.gmra.mxu0 %v1743
        %v2442 = vpop.f32.mrf.mxu0
        %v2443 = vadd.f32 %v1821, %v2442
        %v2444 = vpop.f32.mrf.mxu0
        %v2445 = vadd.f32 %v1825, %v2444
        %v2446 = vpop.f32.mrf.mxu0
        %v2447 = vadd.f32 %v1821, %v2446
        %v2448 = vpop.f32.mrf.mxu0
        %v2449 = vadd.f32 %v1825, %v2448
        %2450 = vmatprep.mubr.bf16.mxu0 0
        %2451 = vmatmul.mubr.bf16.gmra.mxu0 %v1744
        %v2452 = vpop.f32.mrf.mxu0
        %v2453 = vadd.f32 %v1821, %v2452
        %v2454 = vpop.f32.mrf.mxu0
        %v2455 = vadd.f32 %v1825, %v2454
        %v2456 = vpop.f32.mrf.mxu0
        %v2457 = vadd.f32 %v1821, %v2456
        %v2458 = vpop.f32.mrf.mxu0
        %v2459 = vadd.f32 %v1825, %v2458
        %2460 = vmatprep.mubr.bf16.mxu0 0
        %2461 = vmatmul.mubr.bf16.gmra.mxu0 %v1745
        %v2462 = vpop.f32.mrf.mxu0
        %v2463 = vadd.f32 %v1821, %v2462
        %v2464 = vpop.f32.mrf.mxu0
        %v2465 = vadd.f32 %v1825, %v2464
        %v2466 = vpop.f32.mrf.mxu0
        %v2467 = vadd.f32 %v1821, %v2466
        %v2468 = vpop.f32.mrf.mxu0
        %v2469 = vadd.f32 %v1825, %v2468
        %2470 = vmatprep.mubr.bf16.mxu0 0
        %2471 = vmatmul.mubr.bf16.gmra.mxu0 %v1746
        %v2472 = vpop.f32.mrf.mxu0
        %v2473 = vadd.f32 %v1821, %v2472
        %v2474 = vpop.f32.mrf.mxu0
        %v2475 = vadd.f32 %v1825, %v2474
        %v2476 = vpop.f32.mrf.mxu0
        %v2477 = vadd.f32 %v1821, %v2476
        %v2478 = vpop.f32.mrf.mxu0
        %v2479 = vadd.f32 %v1825, %v2478
        %2480 = vmatprep.mubr.bf16.mxu0 0
        %2481 = vmatmul.mubr.bf16.gmra.mxu0 %v1747
        %v2482 = vpop.f32.mrf.mxu0
        %v2483 = vadd.f32 %v1821, %v2482
        %v2484 = vpop.f32.mrf.mxu0
        %v2485 = vadd.f32 %v1825, %v2484
        %v2486 = vpop.f32.mrf.mxu0
        %v2487 = vadd.f32 %v1821, %v2486
        %v2488 = vpop.f32.mrf.mxu0
        %v2489 = vadd.f32 %v1825, %v2488
        %2490 = vmatprep.mubr.bf16.mxu0 0
        %2491 = vmatmul.mubr.bf16.gmra.mxu0 %v1748
        %v2492 = vpop.f32.mrf.mxu0
        %v2493 = vadd.f32 %v1821, %v2492
        %v2494 = vpop.f32.mrf.mxu0
        %v2495 = vadd.f32 %v1825, %v2494
        %v2496 = vpop.f32.mrf.mxu0
        %v2497 = vadd.f32 %v1821, %v2496
        %v2498 = vpop.f32.mrf.mxu0
        %v2499 = vadd.f32 %v1825, %v2498
        %2500 = vmatprep.mubr.bf16.mxu0 0
        %2501 = vmatmul.mubr.bf16.gmra.mxu0 %v1749
        %v2502 = vpop.f32.mrf.mxu0
        %v2503 = vadd.f32 %v1821, %v2502
        %v2504 = vpop.f32.mrf.mxu0
        %v2505 = vadd.f32 %v1825, %v2504
        %v2506 = vpop.f32.mrf.mxu0
        %v2507 = vadd.f32 %v1821, %v2506
        %v2508 = vpop.f32.mrf.mxu0
        %v2509 = vadd.f32 %v1825, %v2508
        %2510 = vmatprep.mubr.bf16.mxu0 0
        %2511 = vmatmul.mubr.bf16.gmra.mxu0 %v1750
        %v2512 = vpop.f32.mrf.mxu0
        %v2513 = vadd.f32 %v1821, %v2512
        %v2514 = vpop.f32.mrf.mxu0
        %v2515 = vadd.f32 %v1825, %v2514
        %v2516 = vpop.f32.mrf.mxu0
        %v2517 = vadd.f32 %v1821, %v2516
        %v2518 = vpop.f32.mrf.mxu0
        %v2519 = vadd.f32 %v1825, %v2518
        %2520 = vmatprep.mubr.bf16.mxu0 0
        %2521 = vmatmul.mubr.bf16.gmra.mxu0 %v1751
        %v2522 = vpop.f32.mrf.mxu0
        %v2523 = vadd.f32 %v1821, %v2522
        %v2524 = vpop.f32.mrf.mxu0
        %v2525 = vadd.f32 %v1825, %v2524
        %v2526 = vpop.f32.mrf.mxu0
        %v2527 = vadd.f32 %v1821, %v2526
        %v2528 = vpop.f32.mrf.mxu0
        %v2529 = vadd.f32 %v1825, %v2528
        %2530 = vdwg.mxu0
        %2531 = vmatprep.subr.bf16.mxu0 %v2109
        %2532 = vmatpush1.bf16.msra.mxu0 %v2108
        %2533 = vmatprep.subr.bf16.mxu0 %v2101
        %2534 = vmatpush1.bf16.msra.mxu0 %v2100
        %2535 = vmatprep.subr.bf16.mxu0 %v2093
        %2536 = vmatpush1.bf16.msra.mxu0 %v2092
        %2537 = vmatprep.subr.bf16.mxu0 %v2085
        %2538 = vmatpush1.bf16.msra.mxu0 %v2084
        %2539 = vmatprep.subr.bf16.mxu0 %v2077
        %2540 = vmatpush1.bf16.msra.mxu0 %v2076
        %2541 = vmatprep.subr.bf16.mxu0 %v2069
        %2542 = vmatpush1.bf16.msra.mxu0 %v2068
        %2543 = vmatprep.subr.bf16.mxu0 %v2061
        %2544 = vmatpush1.bf16.msra.mxu0 %v2060
        %2545 = vmatprep.subr.bf16.mxu0 %v2053
        %2546 = vmatpush1.bf16.msra.mxu0 %v2052
        %2547 = vmatprep.subr.bf16.mxu0 0
        %2548 = vmatpush2.bf16.msra.mxu0 0
        %2549 = vmatprep.subr.bf16.mxu0 0
        %2550 = vmatpush2.bf16.msra.mxu0 0
        %2551 = vmatprep.subr.bf16.mxu0 0
        %2552 = vmatpush2.bf16.msra.mxu0 0
        %2553 = vmatprep.subr.bf16.mxu0 0
        %2554 = vmatpush2.bf16.msra.mxu0 0
        %2555 = vmatprep.subr.bf16.mxu0 0
        %2556 = vmatpush2.bf16.msra.mxu0 0
        %2557 = vmatprep.subr.bf16.mxu0 0
        %2558 = vmatpush2.bf16.msra.mxu0 0
        %2559 = vmatprep.subr.bf16.mxu0 0
        %2560 = vmatpush2.bf16.msra.mxu0 0
        %2561 = vmatprep.subr.bf16.mxu0 0
        %2562 = vmatpush2.bf16.msra.mxu0 0
        %2563 = vmatprep.mubr.bf16.mxu0 0
        %2564 = vmatmul.mubr.bf16.gmra.mxu0 %v1720
        %v2565 = vpop.f32.mrf.mxu0
        %v2566 = vadd.f32 %v1829, %v2565
        %v2567 = vpop.f32.mrf.mxu0
        %v2568 = vadd.f32 %v1833, %v2567
        %v2569 = vpop.f32.mrf.mxu0
        %v2570 = vadd.f32 %v1829, %v2569
        %v2571 = vpop.f32.mrf.mxu0
        %v2572 = vadd.f32 %v1833, %v2571
        %2573 = vmatprep.mubr.bf16.mxu0 0
        %2574 = vmatmul.mubr.bf16.gmra.mxu0 %v1721
        %v2575 = vpop.f32.mrf.mxu0
        %v2576 = vadd.f32 %v1829, %v2575
        %v2577 = vpop.f32.mrf.mxu0
        %v2578 = vadd.f32 %v1833, %v2577
        %v2579 = vpop.f32.mrf.mxu0
        %v2580 = vadd.f32 %v1829, %v2579
        %v2581 = vpop.f32.mrf.mxu0
        %v2582 = vadd.f32 %v1833, %v2581
        %2583 = vmatprep.mubr.bf16.mxu0 0
        %2584 = vmatmul.mubr.bf16.gmra.mxu0 %v1722
        %v2585 = vpop.f32.mrf.mxu0
        %v2586 = vadd.f32 %v1829, %v2585
        %v2587 = vpop.f32.mrf.mxu0
        %v2588 = vadd.f32 %v1833, %v2587
        %v2589 = vpop.f32.mrf.mxu0
        %v2590 = vadd.f32 %v1829, %v2589
        %v2591 = vpop.f32.mrf.mxu0
        %v2592 = vadd.f32 %v1833, %v2591
        %2593 = vmatprep.mubr.bf16.mxu0 0
        %2594 = vmatmul.mubr.bf16.gmra.mxu0 %v1723
        %v2595 = vpop.f32.mrf.mxu0
        %v2596 = vadd.f32 %v1829, %v2595
        %v2597 = vpop.f32.mrf.mxu0
        %v2598 = vadd.f32 %v1833, %v2597
        %v2599 = vpop.f32.mrf.mxu0
        %v2600 = vadd.f32 %v1829, %v2599
        %v2601 = vpop.f32.mrf.mxu0
        %v2602 = vadd.f32 %v1833, %v2601
        %2603 = vmatprep.mubr.bf16.mxu0 0
        %2604 = vmatmul.mubr.bf16.gmra.mxu0 %v1724
        %v2605 = vpop.f32.mrf.mxu0
        %v2606 = vadd.f32 %v1829, %v2605
        %v2607 = vpop.f32.mrf.mxu0
        %v2608 = vadd.f32 %v1833, %v2607
        %v2609 = vpop.f32.mrf.mxu0
        %v2610 = vadd.f32 %v1829, %v2609
        %v2611 = vpop.f32.mrf.mxu0
        %v2612 = vadd.f32 %v1833, %v2611
        %2613 = vmatprep.mubr.bf16.mxu0 0
        %2614 = vmatmul.mubr.bf16.gmra.mxu0 %v1725
        %v2615 = vpop.f32.mrf.mxu0
        %v2616 = vadd.f32 %v1829, %v2615
        %v2617 = vpop.f32.mrf.mxu0
        %v2618 = vadd.f32 %v1833, %v2617
        %v2619 = vpop.f32.mrf.mxu0
        %v2620 = vadd.f32 %v1829, %v2619
        %v2621 = vpop.f32.mrf.mxu0
        %v2622 = vadd.f32 %v1833, %v2621
        %2623 = vmatprep.mubr.bf16.mxu0 0
        %2624 = vmatmul.mubr.bf16.gmra.mxu0 %v1726
        %v2625 = vpop.f32.mrf.mxu0
        %v2626 = vadd.f32 %v1829, %v2625
        %v2627 = vpop.f32.mrf.mxu0
        %v2628 = vadd.f32 %v1833, %v2627
        %v2629 = vpop.f32.mrf.mxu0
        %v2630 = vadd.f32 %v1829, %v2629
        %v2631 = vpop.f32.mrf.mxu0
        %v2632 = vadd.f32 %v1833, %v2631
        %2633 = vmatprep.mubr.bf16.mxu0 0
        %2634 = vmatmul.mubr.bf16.gmra.mxu0 %v1727
        %v2635 = vpop.f32.mrf.mxu0
        %v2636 = vadd.f32 %v1829, %v2635
        %v2637 = vpop.f32.mrf.mxu0
        %v2638 = vadd.f32 %v1833, %v2637
        %v2639 = vpop.f32.mrf.mxu0
        %v2640 = vadd.f32 %v1829, %v2639
        %v2641 = vpop.f32.mrf.mxu0
        %v2642 = vadd.f32 %v1833, %v2641
        %2643 = vmatprep.mubr.bf16.mxu0 0
        %2644 = vmatmul.mubr.bf16.gmra.mxu0 %v1728
        %v2645 = vpop.f32.mrf.mxu0
        %v2646 = vadd.f32 %v1829, %v2645
        %v2647 = vpop.f32.mrf.mxu0
        %v2648 = vadd.f32 %v1833, %v2647
        %v2649 = vpop.f32.mrf.mxu0
        %v2650 = vadd.f32 %v1829, %v2649
        %v2651 = vpop.f32.mrf.mxu0
        %v2652 = vadd.f32 %v1833, %v2651
        %2653 = vmatprep.mubr.bf16.mxu0 0
        %2654 = vmatmul.mubr.bf16.gmra.mxu0 %v1729
        %v2655 = vpop.f32.mrf.mxu0
        %v2656 = vadd.f32 %v1829, %v2655
        %v2657 = vpop.f32.mrf.mxu0
        %v2658 = vadd.f32 %v1833, %v2657
        %v2659 = vpop.f32.mrf.mxu0
        %v2660 = vadd.f32 %v1829, %v2659
        %v2661 = vpop.f32.mrf.mxu0
        %v2662 = vadd.f32 %v1833, %v2661
        %2663 = vmatprep.mubr.bf16.mxu0 0
        %2664 = vmatmul.mubr.bf16.gmra.mxu0 %v1730
        %v2665 = vpop.f32.mrf.mxu0
        %v2666 = vadd.f32 %v1829, %v2665
        %v2667 = vpop.f32.mrf.mxu0
        %v2668 = vadd.f32 %v1833, %v2667
        %v2669 = vpop.f32.mrf.mxu0
        %v2670 = vadd.f32 %v1829, %v2669
        %v2671 = vpop.f32.mrf.mxu0
        %v2672 = vadd.f32 %v1833, %v2671
        %2673 = vmatprep.mubr.bf16.mxu0 0
        %2674 = vmatmul.mubr.bf16.gmra.mxu0 %v1731
        %v2675 = vpop.f32.mrf.mxu0
        %v2676 = vadd.f32 %v1829, %v2675
        %v2677 = vpop.f32.mrf.mxu0
        %v2678 = vadd.f32 %v1833, %v2677
        %v2679 = vpop.f32.mrf.mxu0
        %v2680 = vadd.f32 %v1829, %v2679
        %v2681 = vpop.f32.mrf.mxu0
        %v2682 = vadd.f32 %v1833, %v2681
        %2683 = vmatprep.mubr.bf16.mxu0 0
        %2684 = vmatmul.mubr.bf16.gmra.mxu0 %v1732
        %v2685 = vpop.f32.mrf.mxu0
        %v2686 = vadd.f32 %v1829, %v2685
        %v2687 = vpop.f32.mrf.mxu0
        %v2688 = vadd.f32 %v1833, %v2687
        %v2689 = vpop.f32.mrf.mxu0
        %v2690 = vadd.f32 %v1829, %v2689
        %v2691 = vpop.f32.mrf.mxu0
        %v2692 = vadd.f32 %v1833, %v2691
        %2693 = vmatprep.mubr.bf16.mxu0 0
        %2694 = vmatmul.mubr.bf16.gmra.mxu0 %v1733
        %v2695 = vpop.f32.mrf.mxu0
        %v2696 = vadd.f32 %v1829, %v2695
        %v2697 = vpop.f32.mrf.mxu0
        %v2698 = vadd.f32 %v1833, %v2697
        %v2699 = vpop.f32.mrf.mxu0
        %v2700 = vadd.f32 %v1829, %v2699
        %v2701 = vpop.f32.mrf.mxu0
        %v2702 = vadd.f32 %v1833, %v2701
        %2703 = vmatprep.mubr.bf16.mxu0 0
        %2704 = vmatmul.mubr.bf16.gmra.mxu0 %v1734
        %v2705 = vpop.f32.mrf.mxu0
        %v2706 = vadd.f32 %v1829, %v2705
        %v2707 = vpop.f32.mrf.mxu0
        %v2708 = vadd.f32 %v1833, %v2707
        %v2709 = vpop.f32.mrf.mxu0
        %v2710 = vadd.f32 %v1829, %v2709
        %v2711 = vpop.f32.mrf.mxu0
        %v2712 = vadd.f32 %v1833, %v2711
        %2713 = vmatprep.mubr.bf16.mxu0 0
        %2714 = vmatmul.mubr.bf16.gmra.mxu0 %v1735
        %v2715 = vpop.f32.mrf.mxu0
        %v2716 = vadd.f32 %v1829, %v2715
        %v2717 = vpop.f32.mrf.mxu0
        %v2718 = vadd.f32 %v1833, %v2717
        %v2719 = vpop.f32.mrf.mxu0
        %v2720 = vadd.f32 %v1829, %v2719
        %v2721 = vpop.f32.mrf.mxu0
        %v2722 = vadd.f32 %v1833, %v2721
        %2723 = vmatprep.mubr.bf16.mxu0 0
        %2724 = vmatmul.mubr.bf16.gmra.mxu0 %v1736
        %v2725 = vpop.f32.mrf.mxu0
        %v2726 = vadd.f32 %v1829, %v2725
        %v2727 = vpop.f32.mrf.mxu0
        %v2728 = vadd.f32 %v1833, %v2727
        %v2729 = vpop.f32.mrf.mxu0
        %v2730 = vadd.f32 %v1829, %v2729
        %v2731 = vpop.f32.mrf.mxu0
        %v2732 = vadd.f32 %v1833, %v2731
        %2733 = vmatprep.mubr.bf16.mxu0 0
        %2734 = vmatmul.mubr.bf16.gmra.mxu0 %v1737
        %v2735 = vpop.f32.mrf.mxu0
        %v2736 = vadd.f32 %v1829, %v2735
        %v2737 = vpop.f32.mrf.mxu0
        %v2738 = vadd.f32 %v1833, %v2737
        %v2739 = vpop.f32.mrf.mxu0
        %v2740 = vadd.f32 %v1829, %v2739
        %v2741 = vpop.f32.mrf.mxu0
        %v2742 = vadd.f32 %v1833, %v2741
        %2743 = vmatprep.mubr.bf16.mxu0 0
        %2744 = vmatmul.mubr.bf16.gmra.mxu0 %v1738
        %v2745 = vpop.f32.mrf.mxu0
        %v2746 = vadd.f32 %v1829, %v2745
        %v2747 = vpop.f32.mrf.mxu0
        %v2748 = vadd.f32 %v1833, %v2747
        %v2749 = vpop.f32.mrf.mxu0
        %v2750 = vadd.f32 %v1829, %v2749
        %v2751 = vpop.f32.mrf.mxu0
        %v2752 = vadd.f32 %v1833, %v2751
        %2753 = vmatprep.mubr.bf16.mxu0 0
        %2754 = vmatmul.mubr.bf16.gmra.mxu0 %v1739
        %v2755 = vpop.f32.mrf.mxu0
        %v2756 = vadd.f32 %v1829, %v2755
        %v2757 = vpop.f32.mrf.mxu0
        %v2758 = vadd.f32 %v1833, %v2757
        %v2759 = vpop.f32.mrf.mxu0
        %v2760 = vadd.f32 %v1829, %v2759
        %v2761 = vpop.f32.mrf.mxu0
        %v2762 = vadd.f32 %v1833, %v2761
        %2763 = vmatprep.mubr.bf16.mxu0 0
        %2764 = vmatmul.mubr.bf16.gmra.mxu0 %v1740
        %v2765 = vpop.f32.mrf.mxu0
        %v2766 = vadd.f32 %v1829, %v2765
        %v2767 = vpop.f32.mrf.mxu0
        %v2768 = vadd.f32 %v1833, %v2767
        %v2769 = vpop.f32.mrf.mxu0
        %v2770 = vadd.f32 %v1829, %v2769
        %v2771 = vpop.f32.mrf.mxu0
        %v2772 = vadd.f32 %v1833, %v2771
        %2773 = vmatprep.mubr.bf16.mxu0 0
        %2774 = vmatmul.mubr.bf16.gmra.mxu0 %v1741
        %v2775 = vpop.f32.mrf.mxu0
        %v2776 = vadd.f32 %v1829, %v2775
        %v2777 = vpop.f32.mrf.mxu0
        %v2778 = vadd.f32 %v1833, %v2777
        %v2779 = vpop.f32.mrf.mxu0
        %v2780 = vadd.f32 %v1829, %v2779
        %v2781 = vpop.f32.mrf.mxu0
        %v2782 = vadd.f32 %v1833, %v2781
        %2783 = vmatprep.mubr.bf16.mxu0 0
        %2784 = vmatmul.mubr.bf16.gmra.mxu0 %v1742
        %v2785 = vpop.f32.mrf.mxu0
        %v2786 = vadd.f32 %v1829, %v2785
        %v2787 = vpop.f32.mrf.mxu0
        %v2788 = vadd.f32 %v1833, %v2787
        %v2789 = vpop.f32.mrf.mxu0
        %v2790 = vadd.f32 %v1829, %v2789
        %v2791 = vpop.f32.mrf.mxu0
        %v2792 = vadd.f32 %v1833, %v2791
        %2793 = vmatprep.mubr.bf16.mxu0 0
        %2794 = vmatmul.mubr.bf16.gmra.mxu0 %v1743
        %v2795 = vpop.f32.mrf.mxu0
        %v2796 = vadd.f32 %v1829, %v2795
        %v2797 = vpop.f32.mrf.mxu0
        %v2798 = vadd.f32 %v1833, %v2797
        %v2799 = vpop.f32.mrf.mxu0
        %v2800 = vadd.f32 %v1829, %v2799
        %v2801 = vpop.f32.mrf.mxu0
        %v2802 = vadd.f32 %v1833, %v2801
        %2803 = vmatprep.mubr.bf16.mxu0 0
        %2804 = vmatmul.mubr.bf16.gmra.mxu0 %v1744
        %v2805 = vpop.f32.mrf.mxu0
        %v2806 = vadd.f32 %v1829, %v2805
        %v2807 = vpop.f32.mrf.mxu0
        %v2808 = vadd.f32 %v1833, %v2807
        %v2809 = vpop.f32.mrf.mxu0
        %v2810 = vadd.f32 %v1829, %v2809
        %v2811 = vpop.f32.mrf.mxu0
        %v2812 = vadd.f32 %v1833, %v2811
        %2813 = vmatprep.mubr.bf16.mxu0 0
        %2814 = vmatmul.mubr.bf16.gmra.mxu0 %v1745
        %v2815 = vpop.f32.mrf.mxu0
        %v2816 = vadd.f32 %v1829, %v2815
        %v2817 = vpop.f32.mrf.mxu0
        %v2818 = vadd.f32 %v1833, %v2817
        %v2819 = vpop.f32.mrf.mxu0
        %v2820 = vadd.f32 %v1829, %v2819
        %v2821 = vpop.f32.mrf.mxu0
        %v2822 = vadd.f32 %v1833, %v2821
        %2823 = vmatprep.mubr.bf16.mxu0 0
        %2824 = vmatmul.mubr.bf16.gmra.mxu0 %v1746
        %v2825 = vpop.f32.mrf.mxu0
        %v2826 = vadd.f32 %v1829, %v2825
        %v2827 = vpop.f32.mrf.mxu0
        %v2828 = vadd.f32 %v1833, %v2827
        %v2829 = vpop.f32.mrf.mxu0
        %v2830 = vadd.f32 %v1829, %v2829
        %v2831 = vpop.f32.mrf.mxu0
        %v2832 = vadd.f32 %v1833, %v2831
        %2833 = vmatprep.mubr.bf16.mxu0 0
        %2834 = vmatmul.mubr.bf16.gmra.mxu0 %v1747
        %v2835 = vpop.f32.mrf.mxu0
        %v2836 = vadd.f32 %v1829, %v2835
        %v2837 = vpop.f32.mrf.mxu0
        %v2838 = vadd.f32 %v1833, %v2837
        %v2839 = vpop.f32.mrf.mxu0
        %v2840 = vadd.f32 %v1829, %v2839
        %v2841 = vpop.f32.mrf.mxu0
        %v2842 = vadd.f32 %v1833, %v2841
        %2843 = vmatprep.mubr.bf16.mxu0 0
        %2844 = vmatmul.mubr.bf16.gmra.mxu0 %v1748
        %v2845 = vpop.f32.mrf.mxu0
        %v2846 = vadd.f32 %v1829, %v2845
        %v2847 = vpop.f32.mrf.mxu0
        %v2848 = vadd.f32 %v1833, %v2847
        %v2849 = vpop.f32.mrf.mxu0
        %v2850 = vadd.f32 %v1829, %v2849
        %v2851 = vpop.f32.mrf.mxu0
        %v2852 = vadd.f32 %v1833, %v2851
        %2853 = vmatprep.mubr.bf16.mxu0 0
        %2854 = vmatmul.mubr.bf16.gmra.mxu0 %v1749
        %v2855 = vpop.f32.mrf.mxu0
        %v2856 = vadd.f32 %v1829, %v2855
        %v2857 = vpop.f32.mrf.mxu0
        %v2858 = vadd.f32 %v1833, %v2857
        %v2859 = vpop.f32.mrf.mxu0
        %v2860 = vadd.f32 %v1829, %v2859
        %v2861 = vpop.f32.mrf.mxu0
        %v2862 = vadd.f32 %v1833, %v2861
        %2863 = vmatprep.mubr.bf16.mxu0 0
        %2864 = vmatmul.mubr.bf16.gmra.mxu0 %v1750
        %v2865 = vpop.f32.mrf.mxu0
        %v2866 = vadd.f32 %v1829, %v2865
        %v2867 = vpop.f32.mrf.mxu0
        %v2868 = vadd.f32 %v1833, %v2867
        %v2869 = vpop.f32.mrf.mxu0
        %v2870 = vadd.f32 %v1829, %v2869
        %v2871 = vpop.f32.mrf.mxu0
        %v2872 = vadd.f32 %v1833, %v2871
        %2873 = vmatprep.mubr.bf16.mxu0 0
        %2874 = vmatmul.mubr.bf16.gmra.mxu0 %v1751
        %v2875 = vpop.f32.mrf.mxu0
        %v2876 = vadd.f32 %v1829, %v2875
        %v2877 = vpop.f32.mrf.mxu0
        %v2878 = vadd.f32 %v1833, %v2877
        %v2879 = vpop.f32.mrf.mxu0
        %v2880 = vadd.f32 %v1829, %v2879
        %v2881 = vpop.f32.mrf.mxu0
        %v2882 = vadd.f32 %v1833, %v2881
        %2883 = vdwg.mxu0
        %2884 = vmatprep.subr.bf16.mxu0 %v2111
        %2885 = vmatpush1.bf16.msra.mxu0 %v2110
        %2886 = vmatprep.subr.bf16.mxu0 %v2103
        %2887 = vmatpush1.bf16.msra.mxu0 %v2102
        %2888 = vmatprep.subr.bf16.mxu0 %v2095
        %2889 = vmatpush1.bf16.msra.mxu0 %v2094
        %2890 = vmatprep.subr.bf16.mxu0 %v2087
        %2891 = vmatpush1.bf16.msra.mxu0 %v2086
        %2892 = vmatprep.subr.bf16.mxu0 %v2079
        %2893 = vmatpush1.bf16.msra.mxu0 %v2078
        %2894 = vmatprep.subr.bf16.mxu0 %v2071
        %2895 = vmatpush1.bf16.msra.mxu0 %v2070
        %2896 = vmatprep.subr.bf16.mxu0 %v2063
        %2897 = vmatpush1.bf16.msra.mxu0 %v2062
        %2898 = vmatprep.subr.bf16.mxu0 %v2055
        %2899 = vmatpush1.bf16.msra.mxu0 %v2054
        %2900 = vmatprep.subr.bf16.mxu0 0
        %2901 = vmatpush2.bf16.msra.mxu0 0
        %2902 = vmatprep.subr.bf16.mxu0 0
        %2903 = vmatpush2.bf16.msra.mxu0 0
        %2904 = vmatprep.subr.bf16.mxu0 0
        %2905 = vmatpush2.bf16.msra.mxu0 0
        %2906 = vmatprep.subr.bf16.mxu0 0
        %2907 = vmatpush2.bf16.msra.mxu0 0
        %2908 = vmatprep.subr.bf16.mxu0 0
        %2909 = vmatpush2.bf16.msra.mxu0 0
        %2910 = vmatprep.subr.bf16.mxu0 0
        %2911 = vmatpush2.bf16.msra.mxu0 0
        %2912 = vmatprep.subr.bf16.mxu0 0
        %2913 = vmatpush2.bf16.msra.mxu0 0
        %2914 = vmatprep.subr.bf16.mxu0 0
        %2915 = vmatpush2.bf16.msra.mxu0 0
        %2916 = vmatprep.mubr.bf16.mxu0 0
        %2917 = vmatmul.mubr.bf16.gmra.mxu0 %v1720
        %v2918 = vpop.f32.mrf.mxu0
        %v2919 = vadd.f32 %v1837, %v2918
        %v2920 = vpop.f32.mrf.mxu0
        %v2921 = vadd.f32 %v1841, %v2920
        %v2922 = vpop.f32.mrf.mxu0
        %v2923 = vadd.f32 %v1837, %v2922
        %v2924 = vpop.f32.mrf.mxu0
        %v2925 = vadd.f32 %v1841, %v2924
        %2926 = vmatprep.mubr.bf16.mxu0 0
        %2927 = vmatmul.mubr.bf16.gmra.mxu0 %v1721
        %v2928 = vpop.f32.mrf.mxu0
        %v2929 = vadd.f32 %v1837, %v2928
        %v2930 = vpop.f32.mrf.mxu0
        %v2931 = vadd.f32 %v1841, %v2930
        %v2932 = vpop.f32.mrf.mxu0
        %v2933 = vadd.f32 %v1837, %v2932
        %v2934 = vpop.f32.mrf.mxu0
        %v2935 = vadd.f32 %v1841, %v2934
        %2936 = vmatprep.mubr.bf16.mxu0 0
        %2937 = vmatmul.mubr.bf16.gmra.mxu0 %v1722
        %v2938 = vpop.f32.mrf.mxu0
        %v2939 = vadd.f32 %v1837, %v2938
        %v2940 = vpop.f32.mrf.mxu0
        %v2941 = vadd.f32 %v1841, %v2940
        %v2942 = vpop.f32.mrf.mxu0
        %v2943 = vadd.f32 %v1837, %v2942
        %v2944 = vpop.f32.mrf.mxu0
        %v2945 = vadd.f32 %v1841, %v2944
        %2946 = vmatprep.mubr.bf16.mxu0 0
        %2947 = vmatmul.mubr.bf16.gmra.mxu0 %v1723
        %v2948 = vpop.f32.mrf.mxu0
        %v2949 = vadd.f32 %v1837, %v2948
        %v2950 = vpop.f32.mrf.mxu0
        %v2951 = vadd.f32 %v1841, %v2950
        %v2952 = vpop.f32.mrf.mxu0
        %v2953 = vadd.f32 %v1837, %v2952
        %v2954 = vpop.f32.mrf.mxu0
        %v2955 = vadd.f32 %v1841, %v2954
        %2956 = vmatprep.mubr.bf16.mxu0 0
        %2957 = vmatmul.mubr.bf16.gmra.mxu0 %v1724
        %v2958 = vpop.f32.mrf.mxu0
        %v2959 = vadd.f32 %v1837, %v2958
        %v2960 = vpop.f32.mrf.mxu0
        %v2961 = vadd.f32 %v1841, %v2960
        %v2962 = vpop.f32.mrf.mxu0
        %v2963 = vadd.f32 %v1837, %v2962
        %v2964 = vpop.f32.mrf.mxu0
        %v2965 = vadd.f32 %v1841, %v2964
        %2966 = vmatprep.mubr.bf16.mxu0 0
        %2967 = vmatmul.mubr.bf16.gmra.mxu0 %v1725
        %v2968 = vpop.f32.mrf.mxu0
        %v2969 = vadd.f32 %v1837, %v2968
        %v2970 = vpop.f32.mrf.mxu0
        %v2971 = vadd.f32 %v1841, %v2970
        %v2972 = vpop.f32.mrf.mxu0
        %v2973 = vadd.f32 %v1837, %v2972
        %v2974 = vpop.f32.mrf.mxu0
        %v2975 = vadd.f32 %v1841, %v2974
        %2976 = vmatprep.mubr.bf16.mxu0 0
        %2977 = vmatmul.mubr.bf16.gmra.mxu0 %v1726
        %v2978 = vpop.f32.mrf.mxu0
        %v2979 = vadd.f32 %v1837, %v2978
        %v2980 = vpop.f32.mrf.mxu0
        %v2981 = vadd.f32 %v1841, %v2980
        %v2982 = vpop.f32.mrf.mxu0
        %v2983 = vadd.f32 %v1837, %v2982
        %v2984 = vpop.f32.mrf.mxu0
        %v2985 = vadd.f32 %v1841, %v2984
        %2986 = vmatprep.mubr.bf16.mxu0 0
        %2987 = vmatmul.mubr.bf16.gmra.mxu0 %v1727
        %v2988 = vpop.f32.mrf.mxu0
        %v2989 = vadd.f32 %v1837, %v2988
        %v2990 = vpop.f32.mrf.mxu0
        %v2991 = vadd.f32 %v1841, %v2990
        %v2992 = vpop.f32.mrf.mxu0
        %v2993 = vadd.f32 %v1837, %v2992
        %v2994 = vpop.f32.mrf.mxu0
        %v2995 = vadd.f32 %v1841, %v2994
        %2996 = vmatprep.mubr.bf16.mxu0 0
        %2997 = vmatmul.mubr.bf16.gmra.mxu0 %v1728
        %v2998 = vpop.f32.mrf.mxu0
        %v2999 = vadd.f32 %v1837, %v2998
        %v3000 = vpop.f32.mrf.mxu0
        %v3001 = vadd.f32 %v1841, %v3000
        %v3002 = vpop.f32.mrf.mxu0
        %v3003 = vadd.f32 %v1837, %v3002
        %v3004 = vpop.f32.mrf.mxu0
        %v3005 = vadd.f32 %v1841, %v3004
        %3006 = vmatprep.mubr.bf16.mxu0 0
        %3007 = vmatmul.mubr.bf16.gmra.mxu0 %v1729
        %v3008 = vpop.f32.mrf.mxu0
        %v3009 = vadd.f32 %v1837, %v3008
        %v3010 = vpop.f32.mrf.mxu0
        %v3011 = vadd.f32 %v1841, %v3010
        %v3012 = vpop.f32.mrf.mxu0
        %v3013 = vadd.f32 %v1837, %v3012
        %v3014 = vpop.f32.mrf.mxu0
        %v3015 = vadd.f32 %v1841, %v3014
        %3016 = vmatprep.mubr.bf16.mxu0 0
        %3017 = vmatmul.mubr.bf16.gmra.mxu0 %v1730
        %v3018 = vpop.f32.mrf.mxu0
        %v3019 = vadd.f32 %v1837, %v3018
        %v3020 = vpop.f32.mrf.mxu0
        %v3021 = vadd.f32 %v1841, %v3020
        %v3022 = vpop.f32.mrf.mxu0
        %v3023 = vadd.f32 %v1837, %v3022
        %v3024 = vpop.f32.mrf.mxu0
        %v3025 = vadd.f32 %v1841, %v3024
        %3026 = vmatprep.mubr.bf16.mxu0 0
        %3027 = vmatmul.mubr.bf16.gmra.mxu0 %v1731
        %v3028 = vpop.f32.mrf.mxu0
        %v3029 = vadd.f32 %v1837, %v3028
        %v3030 = vpop.f32.mrf.mxu0
        %v3031 = vadd.f32 %v1841, %v3030
        %v3032 = vpop.f32.mrf.mxu0
        %v3033 = vadd.f32 %v1837, %v3032
        %v3034 = vpop.f32.mrf.mxu0
        %v3035 = vadd.f32 %v1841, %v3034
        %3036 = vmatprep.mubr.bf16.mxu0 0
        %3037 = vmatmul.mubr.bf16.gmra.mxu0 %v1732
        %v3038 = vpop.f32.mrf.mxu0
        %v3039 = vadd.f32 %v1837, %v3038
        %v3040 = vpop.f32.mrf.mxu0
        %v3041 = vadd.f32 %v1841, %v3040
        %v3042 = vpop.f32.mrf.mxu0
        %v3043 = vadd.f32 %v1837, %v3042
        %v3044 = vpop.f32.mrf.mxu0
        %v3045 = vadd.f32 %v1841, %v3044
        %3046 = vmatprep.mubr.bf16.mxu0 0
        %3047 = vmatmul.mubr.bf16.gmra.mxu0 %v1733
        %v3048 = vpop.f32.mrf.mxu0
        %v3049 = vadd.f32 %v1837, %v3048
        %v3050 = vpop.f32.mrf.mxu0
        %v3051 = vadd.f32 %v1841, %v3050
        %v3052 = vpop.f32.mrf.mxu0
        %v3053 = vadd.f32 %v1837, %v3052
        %v3054 = vpop.f32.mrf.mxu0
        %v3055 = vadd.f32 %v1841, %v3054
        %3056 = vmatprep.mubr.bf16.mxu0 0
        %3057 = vmatmul.mubr.bf16.gmra.mxu0 %v1734
        %v3058 = vpop.f32.mrf.mxu0
        %v3059 = vadd.f32 %v1837, %v3058
        %v3060 = vpop.f32.mrf.mxu0
        %v3061 = vadd.f32 %v1841, %v3060
        %v3062 = vpop.f32.mrf.mxu0
        %v3063 = vadd.f32 %v1837, %v3062
        %v3064 = vpop.f32.mrf.mxu0
        %v3065 = vadd.f32 %v1841, %v3064
        %3066 = vmatprep.mubr.bf16.mxu0 0
        %3067 = vmatmul.mubr.bf16.gmra.mxu0 %v1735
        %v3068 = vpop.f32.mrf.mxu0
        %v3069 = vadd.f32 %v1837, %v3068
        %v3070 = vpop.f32.mrf.mxu0
        %v3071 = vadd.f32 %v1841, %v3070
        %v3072 = vpop.f32.mrf.mxu0
        %v3073 = vadd.f32 %v1837, %v3072
        %v3074 = vpop.f32.mrf.mxu0
        %v3075 = vadd.f32 %v1841, %v3074
        %3076 = vmatprep.mubr.bf16.mxu0 0
        %3077 = vmatmul.mubr.bf16.gmra.mxu0 %v1736
        %v3078 = vpop.f32.mrf.mxu0
        %v3079 = vadd.f32 %v1837, %v3078
        %v3080 = vpop.f32.mrf.mxu0
        %v3081 = vadd.f32 %v1841, %v3080
        %v3082 = vpop.f32.mrf.mxu0
        %v3083 = vadd.f32 %v1837, %v3082
        %v3084 = vpop.f32.mrf.mxu0
        %v3085 = vadd.f32 %v1841, %v3084
        %3086 = vmatprep.mubr.bf16.mxu0 0
        %3087 = vmatmul.mubr.bf16.gmra.mxu0 %v1737
        %v3088 = vpop.f32.mrf.mxu0
        %v3089 = vadd.f32 %v1837, %v3088
        %v3090 = vpop.f32.mrf.mxu0
        %v3091 = vadd.f32 %v1841, %v3090
        %v3092 = vpop.f32.mrf.mxu0
        %v3093 = vadd.f32 %v1837, %v3092
        %v3094 = vpop.f32.mrf.mxu0
        %v3095 = vadd.f32 %v1841, %v3094
        %3096 = vmatprep.mubr.bf16.mxu0 0
        %3097 = vmatmul.mubr.bf16.gmra.mxu0 %v1738
        %v3098 = vpop.f32.mrf.mxu0
        %v3099 = vadd.f32 %v1837, %v3098
        %v3100 = vpop.f32.mrf.mxu0
        %v3101 = vadd.f32 %v1841, %v3100
        %v3102 = vpop.f32.mrf.mxu0
        %v3103 = vadd.f32 %v1837, %v3102
        %v3104 = vpop.f32.mrf.mxu0
        %v3105 = vadd.f32 %v1841, %v3104
        %3106 = vmatprep.mubr.bf16.mxu0 0
        %3107 = vmatmul.mubr.bf16.gmra.mxu0 %v1739
        %v3108 = vpop.f32.mrf.mxu0
        %v3109 = vadd.f32 %v1837, %v3108
        %v3110 = vpop.f32.mrf.mxu0
        %v3111 = vadd.f32 %v1841, %v3110
        %v3112 = vpop.f32.mrf.mxu0
        %v3113 = vadd.f32 %v1837, %v3112
        %v3114 = vpop.f32.mrf.mxu0
        %v3115 = vadd.f32 %v1841, %v3114
        %3116 = vmatprep.mubr.bf16.mxu0 0
        %3117 = vmatmul.mubr.bf16.gmra.mxu0 %v1740
        %v3118 = vpop.f32.mrf.mxu0
        %v3119 = vadd.f32 %v1837, %v3118
        %v3120 = vpop.f32.mrf.mxu0
        %v3121 = vadd.f32 %v1841, %v3120
        %v3122 = vpop.f32.mrf.mxu0
        %v3123 = vadd.f32 %v1837, %v3122
        %v3124 = vpop.f32.mrf.mxu0
        %v3125 = vadd.f32 %v1841, %v3124
        %3126 = vmatprep.mubr.bf16.mxu0 0
        %3127 = vmatmul.mubr.bf16.gmra.mxu0 %v1741
        %v3128 = vpop.f32.mrf.mxu0
        %v3129 = vadd.f32 %v1837, %v3128
        %v3130 = vpop.f32.mrf.mxu0
        %v3131 = vadd.f32 %v1841, %v3130
        %v3132 = vpop.f32.mrf.mxu0
        %v3133 = vadd.f32 %v1837, %v3132
        %v3134 = vpop.f32.mrf.mxu0
        %v3135 = vadd.f32 %v1841, %v3134
        %3136 = vmatprep.mubr.bf16.mxu0 0
        %3137 = vmatmul.mubr.bf16.gmra.mxu0 %v1742
        %v3138 = vpop.f32.mrf.mxu0
        %v3139 = vadd.f32 %v1837, %v3138
        %v3140 = vpop.f32.mrf.mxu0
        %v3141 = vadd.f32 %v1841, %v3140
        %v3142 = vpop.f32.mrf.mxu0
        %v3143 = vadd.f32 %v1837, %v3142
        %v3144 = vpop.f32.mrf.mxu0
        %v3145 = vadd.f32 %v1841, %v3144
        %3146 = vmatprep.mubr.bf16.mxu0 0
        %3147 = vmatmul.mubr.bf16.gmra.mxu0 %v1743
        %v3148 = vpop.f32.mrf.mxu0
        %v3149 = vadd.f32 %v1837, %v3148
        %v3150 = vpop.f32.mrf.mxu0
        %v3151 = vadd.f32 %v1841, %v3150
        %v3152 = vpop.f32.mrf.mxu0
        %v3153 = vadd.f32 %v1837, %v3152
        %v3154 = vpop.f32.mrf.mxu0
        %v3155 = vadd.f32 %v1841, %v3154
        %3156 = vmatprep.mubr.bf16.mxu0 0
        %3157 = vmatmul.mubr.bf16.gmra.mxu0 %v1744
        %v3158 = vpop.f32.mrf.mxu0
        %v3159 = vadd.f32 %v1837, %v3158
        %v3160 = vpop.f32.mrf.mxu0
        %v3161 = vadd.f32 %v1841, %v3160
        %v3162 = vpop.f32.mrf.mxu0
        %v3163 = vadd.f32 %v1837, %v3162
        %v3164 = vpop.f32.mrf.mxu0
        %v3165 = vadd.f32 %v1841, %v3164
        %3166 = vmatprep.mubr.bf16.mxu0 0
        %3167 = vmatmul.mubr.bf16.gmra.mxu0 %v1745
        %v3168 = vpop.f32.mrf.mxu0
        %v3169 = vadd.f32 %v1837, %v3168
        %v3170 = vpop.f32.mrf.mxu0
        %v3171 = vadd.f32 %v1841, %v3170
        %v3172 = vpop.f32.mrf.mxu0
        %v3173 = vadd.f32 %v1837, %v3172
        %v3174 = vpop.f32.mrf.mxu0
        %v3175 = vadd.f32 %v1841, %v3174
        %3176 = vmatprep.mubr.bf16.mxu0 0
        %3177 = vmatmul.mubr.bf16.gmra.mxu0 %v1746
        %v3178 = vpop.f32.mrf.mxu0
        %v3179 = vadd.f32 %v1837, %v3178
        %v3180 = vpop.f32.mrf.mxu0
        %v3181 = vadd.f32 %v1841, %v3180
        %v3182 = vpop.f32.mrf.mxu0
        %v3183 = vadd.f32 %v1837, %v3182
        %v3184 = vpop.f32.mrf.mxu0
        %v3185 = vadd.f32 %v1841, %v3184
        %3186 = vmatprep.mubr.bf16.mxu0 0
        %3187 = vmatmul.mubr.bf16.gmra.mxu0 %v1747
        %v3188 = vpop.f32.mrf.mxu0
        %v3189 = vadd.f32 %v1837, %v3188
        %v3190 = vpop.f32.mrf.mxu0
        %v3191 = vadd.f32 %v1841, %v3190
        %v3192 = vpop.f32.mrf.mxu0
        %v3193 = vadd.f32 %v1837, %v3192
        %v3194 = vpop.f32.mrf.mxu0
        %v3195 = vadd.f32 %v1841, %v3194
        %3196 = vmatprep.mubr.bf16.mxu0 0
        %3197 = vmatmul.mubr.bf16.gmra.mxu0 %v1748
        %v3198 = vpop.f32.mrf.mxu0
        %v3199 = vadd.f32 %v1837, %v3198
        %v3200 = vpop.f32.mrf.mxu0
        %v3201 = vadd.f32 %v1841, %v3200
        %v3202 = vpop.f32.mrf.mxu0
        %v3203 = vadd.f32 %v1837, %v3202
        %v3204 = vpop.f32.mrf.mxu0
        %v3205 = vadd.f32 %v1841, %v3204
        %3206 = vmatprep.mubr.bf16.mxu0 0
        %3207 = vmatmul.mubr.bf16.gmra.mxu0 %v1749
        %v3208 = vpop.f32.mrf.mxu0
        %v3209 = vadd.f32 %v1837, %v3208
        %v3210 = vpop.f32.mrf.mxu0
        %v3211 = vadd.f32 %v1841, %v3210
        %v3212 = vpop.f32.mrf.mxu0
        %v3213 = vadd.f32 %v1837, %v3212
        %v3214 = vpop.f32.mrf.mxu0
        %v3215 = vadd.f32 %v1841, %v3214
        %3216 = vmatprep.mubr.bf16.mxu0 0
        %3217 = vmatmul.mubr.bf16.gmra.mxu0 %v1750
        %v3218 = vpop.f32.mrf.mxu0
        %v3219 = vadd.f32 %v1837, %v3218
        %v3220 = vpop.f32.mrf.mxu0
        %v3221 = vadd.f32 %v1841, %v3220
        %v3222 = vpop.f32.mrf.mxu0
        %v3223 = vadd.f32 %v1837, %v3222
        %v3224 = vpop.f32.mrf.mxu0
        %v3225 = vadd.f32 %v1841, %v3224
        %3226 = vmatprep.mubr.bf16.mxu0 0
        %3227 = vmatmul.mubr.bf16.gmra.mxu0 %v1751
        %v3228 = vpop.f32.mrf.mxu0
        %v3229 = vadd.f32 %v1837, %v3228
        %v3230 = vpop.f32.mrf.mxu0
        %v3231 = vadd.f32 %v1841, %v3230
        %v3232 = vpop.f32.mrf.mxu0
        %v3233 = vadd.f32 %v1837, %v3232
        %v3234 = vpop.f32.mrf.mxu0
        %v3235 = vadd.f32 %v1841, %v3234
        %3236 = vdwg.mxu0
        %3237 = vmatprep.subr.bf16.mxu0 %v2113
        %3238 = vmatpush1.bf16.msra.mxu0 %v2112
        %3239 = vmatprep.subr.bf16.mxu0 %v2105
        %3240 = vmatpush1.bf16.msra.mxu0 %v2104
        %3241 = vmatprep.subr.bf16.mxu0 %v2097
        %3242 = vmatpush1.bf16.msra.mxu0 %v2096
        %3243 = vmatprep.subr.bf16.mxu0 %v2089
        %3244 = vmatpush1.bf16.msra.mxu0 %v2088
        %3245 = vmatprep.subr.bf16.mxu0 %v2081
        %3246 = vmatpush1.bf16.msra.mxu0 %v2080
        %3247 = vmatprep.subr.bf16.mxu0 %v2073
        %3248 = vmatpush1.bf16.msra.mxu0 %v2072
        %3249 = vmatprep.subr.bf16.mxu0 %v2065
        %3250 = vmatpush1.bf16.msra.mxu0 %v2064
        %3251 = vmatprep.subr.bf16.mxu0 %v2057
        %3252 = vmatpush1.bf16.msra.mxu0 %v2056
        %3253 = vmatprep.subr.bf16.mxu0 0
        %3254 = vmatpush2.bf16.msra.mxu0 0
        %3255 = vmatprep.subr.bf16.mxu0 0
        %3256 = vmatpush2.bf16.msra.mxu0 0
        %3257 = vmatprep.subr.bf16.mxu0 0
        %3258 = vmatpush2.bf16.msra.mxu0 0
        %3259 = vmatprep.subr.bf16.mxu0 0
        %3260 = vmatpush2.bf16.msra.mxu0 0
        %3261 = vmatprep.subr.bf16.mxu0 0
        %3262 = vmatpush2.bf16.msra.mxu0 0
        %3263 = vmatprep.subr.bf16.mxu0 0
        %3264 = vmatpush2.bf16.msra.mxu0 0
        %3265 = vmatprep.subr.bf16.mxu0 0
        %3266 = vmatpush2.bf16.msra.mxu0 0
        %3267 = vmatprep.subr.bf16.mxu0 0
        %3268 = vmatpush2.bf16.msra.mxu0 0
        %3269 = vmatprep.mubr.bf16.mxu0 0
        %3270 = vmatmul.mubr.bf16.gmra.mxu0 %v1720
        %v3271 = vpop.f32.mrf.mxu0
        %v3272 = vadd.f32 %v1845, %v3271
        %v3273 = vpop.f32.mrf.mxu0
        %v3274 = vadd.f32 %v1849, %v3273
        %v3275 = vpop.f32.mrf.mxu0
        %v3276 = vadd.f32 %v1845, %v3275
        %v3277 = vpop.f32.mrf.mxu0
        %v3278 = vadd.f32 %v1849, %v3277
        %3279 = vmatprep.mubr.bf16.mxu0 0
        %3280 = vmatmul.mubr.bf16.gmra.mxu0 %v1721
        %v3281 = vpop.f32.mrf.mxu0
        %v3282 = vadd.f32 %v1845, %v3281
        %v3283 = vpop.f32.mrf.mxu0
        %v3284 = vadd.f32 %v1849, %v3283
        %v3285 = vpop.f32.mrf.mxu0
        %v3286 = vadd.f32 %v1845, %v3285
        %v3287 = vpop.f32.mrf.mxu0
        %v3288 = vadd.f32 %v1849, %v3287
        %3289 = vmatprep.mubr.bf16.mxu0 0
        %3290 = vmatmul.mubr.bf16.gmra.mxu0 %v1722
        %v3291 = vpop.f32.mrf.mxu0
        %v3292 = vadd.f32 %v1845, %v3291
        %v3293 = vpop.f32.mrf.mxu0
        %v3294 = vadd.f32 %v1849, %v3293
        %v3295 = vpop.f32.mrf.mxu0
        %v3296 = vadd.f32 %v1845, %v3295
        %v3297 = vpop.f32.mrf.mxu0
        %v3298 = vadd.f32 %v1849, %v3297
        %3299 = vmatprep.mubr.bf16.mxu0 0
        %3300 = vmatmul.mubr.bf16.gmra.mxu0 %v1723
        %v3301 = vpop.f32.mrf.mxu0
        %v3302 = vadd.f32 %v1845, %v3301
        %v3303 = vpop.f32.mrf.mxu0
        %v3304 = vadd.f32 %v1849, %v3303
        %v3305 = vpop.f32.mrf.mxu0
        %v3306 = vadd.f32 %v1845, %v3305
        %v3307 = vpop.f32.mrf.mxu0
        %v3308 = vadd.f32 %v1849, %v3307
        %3309 = vmatprep.mubr.bf16.mxu0 0
        %3310 = vmatmul.mubr.bf16.gmra.mxu0 %v1724
        %v3311 = vpop.f32.mrf.mxu0
        %v3312 = vadd.f32 %v1845, %v3311
        %v3313 = vpop.f32.mrf.mxu0
        %v3314 = vadd.f32 %v1849, %v3313
        %v3315 = vpop.f32.mrf.mxu0
        %v3316 = vadd.f32 %v1845, %v3315
        %v3317 = vpop.f32.mrf.mxu0
        %v3318 = vadd.f32 %v1849, %v3317
        %3319 = vmatprep.mubr.bf16.mxu0 0
        %3320 = vmatmul.mubr.bf16.gmra.mxu0 %v1725
        %v3321 = vpop.f32.mrf.mxu0
        %v3322 = vadd.f32 %v1845, %v3321
        %v3323 = vpop.f32.mrf.mxu0
        %v3324 = vadd.f32 %v1849, %v3323
        %v3325 = vpop.f32.mrf.mxu0
        %v3326 = vadd.f32 %v1845, %v3325
        %v3327 = vpop.f32.mrf.mxu0
        %v3328 = vadd.f32 %v1849, %v3327
        %3329 = vmatprep.mubr.bf16.mxu0 0
        %3330 = vmatmul.mubr.bf16.gmra.mxu0 %v1726
        %v3331 = vpop.f32.mrf.mxu0
        %v3332 = vadd.f32 %v1845, %v3331
        %v3333 = vpop.f32.mrf.mxu0
        %v3334 = vadd.f32 %v1849, %v3333
        %v3335 = vpop.f32.mrf.mxu0
        %v3336 = vadd.f32 %v1845, %v3335
        %v3337 = vpop.f32.mrf.mxu0
        %v3338 = vadd.f32 %v1849, %v3337
        %3339 = vmatprep.mubr.bf16.mxu0 0
        %3340 = vmatmul.mubr.bf16.gmra.mxu0 %v1727
        %v3341 = vpop.f32.mrf.mxu0
        %v3342 = vadd.f32 %v1845, %v3341
        %v3343 = vpop.f32.mrf.mxu0
        %v3344 = vadd.f32 %v1849, %v3343
        %v3345 = vpop.f32.mrf.mxu0
        %v3346 = vadd.f32 %v1845, %v3345
        %v3347 = vpop.f32.mrf.mxu0
        %v3348 = vadd.f32 %v1849, %v3347
        %3349 = vmatprep.mubr.bf16.mxu0 0
        %3350 = vmatmul.mubr.bf16.gmra.mxu0 %v1728
        %v3351 = vpop.f32.mrf.mxu0
        %v3352 = vadd.f32 %v1845, %v3351
        %v3353 = vpop.f32.mrf.mxu0
        %v3354 = vadd.f32 %v1849, %v3353
        %v3355 = vpop.f32.mrf.mxu0
        %v3356 = vadd.f32 %v1845, %v3355
        %v3357 = vpop.f32.mrf.mxu0
        %v3358 = vadd.f32 %v1849, %v3357
        %3359 = vmatprep.mubr.bf16.mxu0 0
        %3360 = vmatmul.mubr.bf16.gmra.mxu0 %v1729
        %v3361 = vpop.f32.mrf.mxu0
        %v3362 = vadd.f32 %v1845, %v3361
        %v3363 = vpop.f32.mrf.mxu0
        %v3364 = vadd.f32 %v1849, %v3363
        %v3365 = vpop.f32.mrf.mxu0
        %v3366 = vadd.f32 %v1845, %v3365
        %v3367 = vpop.f32.mrf.mxu0
        %v3368 = vadd.f32 %v1849, %v3367
        %3369 = vmatprep.mubr.bf16.mxu0 0
        %3370 = vmatmul.mubr.bf16.gmra.mxu0 %v1730
        %v3371 = vpop.f32.mrf.mxu0
        %v3372 = vadd.f32 %v1845, %v3371
        %v3373 = vpop.f32.mrf.mxu0
        %v3374 = vadd.f32 %v1849, %v3373
        %v3375 = vpop.f32.mrf.mxu0
        %v3376 = vadd.f32 %v1845, %v3375
        %v3377 = vpop.f32.mrf.mxu0
        %v3378 = vadd.f32 %v1849, %v3377
        %3379 = vmatprep.mubr.bf16.mxu0 0
        %3380 = vmatmul.mubr.bf16.gmra.mxu0 %v1731
        %v3381 = vpop.f32.mrf.mxu0
        %v3382 = vadd.f32 %v1845, %v3381
        %v3383 = vpop.f32.mrf.mxu0
        %v3384 = vadd.f32 %v1849, %v3383
        %v3385 = vpop.f32.mrf.mxu0
        %v3386 = vadd.f32 %v1845, %v3385
        %v3387 = vpop.f32.mrf.mxu0
        %v3388 = vadd.f32 %v1849, %v3387
        %3389 = vmatprep.mubr.bf16.mxu0 0
        %3390 = vmatmul.mubr.bf16.gmra.mxu0 %v1732
        %v3391 = vpop.f32.mrf.mxu0
        %v3392 = vadd.f32 %v1845, %v3391
        %v3393 = vpop.f32.mrf.mxu0
        %v3394 = vadd.f32 %v1849, %v3393
        %v3395 = vpop.f32.mrf.mxu0
        %v3396 = vadd.f32 %v1845, %v3395
        %v3397 = vpop.f32.mrf.mxu0
        %v3398 = vadd.f32 %v1849, %v3397
        %3399 = vmatprep.mubr.bf16.mxu0 0
        %3400 = vmatmul.mubr.bf16.gmra.mxu0 %v1733
        %v3401 = vpop.f32.mrf.mxu0
        %v3402 = vadd.f32 %v1845, %v3401
        %v3403 = vpop.f32.mrf.mxu0
        %v3404 = vadd.f32 %v1849, %v3403
        %v3405 = vpop.f32.mrf.mxu0
        %v3406 = vadd.f32 %v1845, %v3405
        %v3407 = vpop.f32.mrf.mxu0
        %v3408 = vadd.f32 %v1849, %v3407
        %3409 = vmatprep.mubr.bf16.mxu0 0
        %3410 = vmatmul.mubr.bf16.gmra.mxu0 %v1734
        %v3411 = vpop.f32.mrf.mxu0
        %v3412 = vadd.f32 %v1845, %v3411
        %v3413 = vpop.f32.mrf.mxu0
        %v3414 = vadd.f32 %v1849, %v3413
        %v3415 = vpop.f32.mrf.mxu0
        %v3416 = vadd.f32 %v1845, %v3415
        %v3417 = vpop.f32.mrf.mxu0
        %v3418 = vadd.f32 %v1849, %v3417
        %3419 = vmatprep.mubr.bf16.mxu0 0
        %3420 = vmatmul.mubr.bf16.gmra.mxu0 %v1735
        %v3421 = vpop.f32.mrf.mxu0
        %v3422 = vadd.f32 %v1845, %v3421
        %v3423 = vpop.f32.mrf.mxu0
        %v3424 = vadd.f32 %v1849, %v3423
        %v3425 = vpop.f32.mrf.mxu0
        %v3426 = vadd.f32 %v1845, %v3425
        %v3427 = vpop.f32.mrf.mxu0
        %v3428 = vadd.f32 %v1849, %v3427
        %3429 = vmatprep.mubr.bf16.mxu0 0
        %3430 = vmatmul.mubr.bf16.gmra.mxu0 %v1736
        %v3431 = vpop.f32.mrf.mxu0
        %v3432 = vadd.f32 %v1845, %v3431
        %v3433 = vpop.f32.mrf.mxu0
        %v3434 = vadd.f32 %v1849, %v3433
        %v3435 = vpop.f32.mrf.mxu0
        %v3436 = vadd.f32 %v1845, %v3435
        %v3437 = vpop.f32.mrf.mxu0
        %v3438 = vadd.f32 %v1849, %v3437
        %3439 = vmatprep.mubr.bf16.mxu0 0
        %3440 = vmatmul.mubr.bf16.gmra.mxu0 %v1737
        %v3441 = vpop.f32.mrf.mxu0
        %v3442 = vadd.f32 %v1845, %v3441
        %v3443 = vpop.f32.mrf.mxu0
        %v3444 = vadd.f32 %v1849, %v3443
        %v3445 = vpop.f32.mrf.mxu0
        %v3446 = vadd.f32 %v1845, %v3445
        %v3447 = vpop.f32.mrf.mxu0
        %v3448 = vadd.f32 %v1849, %v3447
        %3449 = vmatprep.mubr.bf16.mxu0 0
        %3450 = vmatmul.mubr.bf16.gmra.mxu0 %v1738
        %v3451 = vpop.f32.mrf.mxu0
        %v3452 = vadd.f32 %v1845, %v3451
        %v3453 = vpop.f32.mrf.mxu0
        %v3454 = vadd.f32 %v1849, %v3453
        %v3455 = vpop.f32.mrf.mxu0
        %v3456 = vadd.f32 %v1845, %v3455
        %v3457 = vpop.f32.mrf.mxu0
        %v3458 = vadd.f32 %v1849, %v3457
        %3459 = vmatprep.mubr.bf16.mxu0 0
        %3460 = vmatmul.mubr.bf16.gmra.mxu0 %v1739
        %v3461 = vpop.f32.mrf.mxu0
        %v3462 = vadd.f32 %v1845, %v3461
        %v3463 = vpop.f32.mrf.mxu0
        %v3464 = vadd.f32 %v1849, %v3463
        %v3465 = vpop.f32.mrf.mxu0
        %v3466 = vadd.f32 %v1845, %v3465
        %v3467 = vpop.f32.mrf.mxu0
        %v3468 = vadd.f32 %v1849, %v3467
        %3469 = vmatprep.mubr.bf16.mxu0 0
        %3470 = vmatmul.mubr.bf16.gmra.mxu0 %v1740
        %v3471 = vpop.f32.mrf.mxu0
        %v3472 = vadd.f32 %v1845, %v3471
        %v3473 = vpop.f32.mrf.mxu0
        %v3474 = vadd.f32 %v1849, %v3473
        %v3475 = vpop.f32.mrf.mxu0
        %v3476 = vadd.f32 %v1845, %v3475
        %v3477 = vpop.f32.mrf.mxu0
        %v3478 = vadd.f32 %v1849, %v3477
        %3479 = vmatprep.mubr.bf16.mxu0 0
        %3480 = vmatmul.mubr.bf16.gmra.mxu0 %v1741
        %v3481 = vpop.f32.mrf.mxu0
        %v3482 = vadd.f32 %v1845, %v3481
        %v3483 = vpop.f32.mrf.mxu0
        %v3484 = vadd.f32 %v1849, %v3483
        %v3485 = vpop.f32.mrf.mxu0
        %v3486 = vadd.f32 %v1845, %v3485
        %v3487 = vpop.f32.mrf.mxu0
        %v3488 = vadd.f32 %v1849, %v3487
        %3489 = vmatprep.mubr.bf16.mxu0 0
        %3490 = vmatmul.mubr.bf16.gmra.mxu0 %v1742
        %v3491 = vpop.f32.mrf.mxu0
        %v3492 = vadd.f32 %v1845, %v3491
        %v3493 = vpop.f32.mrf.mxu0
        %v3494 = vadd.f32 %v1849, %v3493
        %v3495 = vpop.f32.mrf.mxu0
        %v3496 = vadd.f32 %v1845, %v3495
        %v3497 = vpop.f32.mrf.mxu0
        %v3498 = vadd.f32 %v1849, %v3497
        %3499 = vmatprep.mubr.bf16.mxu0 0
        %3500 = vmatmul.mubr.bf16.gmra.mxu0 %v1743
        %v3501 = vpop.f32.mrf.mxu0
        %v3502 = vadd.f32 %v1845, %v3501
        %v3503 = vpop.f32.mrf.mxu0
        %v3504 = vadd.f32 %v1849, %v3503
        %v3505 = vpop.f32.mrf.mxu0
        %v3506 = vadd.f32 %v1845, %v3505
        %v3507 = vpop.f32.mrf.mxu0
        %v3508 = vadd.f32 %v1849, %v3507
        %3509 = vmatprep.mubr.bf16.mxu0 0
        %3510 = vmatmul.mubr.bf16.gmra.mxu0 %v1744
        %v3511 = vpop.f32.mrf.mxu0
        %v3512 = vadd.f32 %v1845, %v3511
        %v3513 = vpop.f32.mrf.mxu0
        %v3514 = vadd.f32 %v1849, %v3513
        %v3515 = vpop.f32.mrf.mxu0
        %v3516 = vadd.f32 %v1845, %v3515
        %v3517 = vpop.f32.mrf.mxu0
        %v3518 = vadd.f32 %v1849, %v3517
        %3519 = vmatprep.mubr.bf16.mxu0 0
        %3520 = vmatmul.mubr.bf16.gmra.mxu0 %v1745
        %v3521 = vpop.f32.mrf.mxu0
        %v3522 = vadd.f32 %v1845, %v3521
        %v3523 = vpop.f32.mrf.mxu0
        %v3524 = vadd.f32 %v1849, %v3523
        %v3525 = vpop.f32.mrf.mxu0
        %v3526 = vadd.f32 %v1845, %v3525
        %v3527 = vpop.f32.mrf.mxu0
        %v3528 = vadd.f32 %v1849, %v3527
        %3529 = vmatprep.mubr.bf16.mxu0 0
        %3530 = vmatmul.mubr.bf16.gmra.mxu0 %v1746
        %v3531 = vpop.f32.mrf.mxu0
        %v3532 = vadd.f32 %v1845, %v3531
        %v3533 = vpop.f32.mrf.mxu0
        %v3534 = vadd.f32 %v1849, %v3533
        %v3535 = vpop.f32.mrf.mxu0
        %v3536 = vadd.f32 %v1845, %v3535
        %v3537 = vpop.f32.mrf.mxu0
        %v3538 = vadd.f32 %v1849, %v3537
        %3539 = vmatprep.mubr.bf16.mxu0 0
        %3540 = vmatmul.mubr.bf16.gmra.mxu0 %v1747
        %v3541 = vpop.f32.mrf.mxu0
        %v3542 = vadd.f32 %v1845, %v3541
        %v3543 = vpop.f32.mrf.mxu0
        %v3544 = vadd.f32 %v1849, %v3543
        %v3545 = vpop.f32.mrf.mxu0
        %v3546 = vadd.f32 %v1845, %v3545
        %v3547 = vpop.f32.mrf.mxu0
        %v3548 = vadd.f32 %v1849, %v3547
        %3549 = vmatprep.mubr.bf16.mxu0 0
        %3550 = vmatmul.mubr.bf16.gmra.mxu0 %v1748
        %v3551 = vpop.f32.mrf.mxu0
        %v3552 = vadd.f32 %v1845, %v3551
        %v3553 = vpop.f32.mrf.mxu0
        %v3554 = vadd.f32 %v1849, %v3553
        %v3555 = vpop.f32.mrf.mxu0
        %v3556 = vadd.f32 %v1845, %v3555
        %v3557 = vpop.f32.mrf.mxu0
        %v3558 = vadd.f32 %v1849, %v3557
        %3559 = vmatprep.mubr.bf16.mxu0 0
        %3560 = vmatmul.mubr.bf16.gmra.mxu0 %v1749
        %v3561 = vpop.f32.mrf.mxu0
        %v3562 = vadd.f32 %v1845, %v3561
        %v3563 = vpop.f32.mrf.mxu0
        %v3564 = vadd.f32 %v1849, %v3563
        %v3565 = vpop.f32.mrf.mxu0
        %v3566 = vadd.f32 %v1845, %v3565
        %v3567 = vpop.f32.mrf.mxu0
        %v3568 = vadd.f32 %v1849, %v3567
        %3569 = vmatprep.mubr.bf16.mxu0 0
        %3570 = vmatmul.mubr.bf16.gmra.mxu0 %v1750
        %v3571 = vpop.f32.mrf.mxu0
        %v3572 = vadd.f32 %v1845, %v3571
        %v3573 = vpop.f32.mrf.mxu0
        %v3574 = vadd.f32 %v1849, %v3573
        %v3575 = vpop.f32.mrf.mxu0
        %v3576 = vadd.f32 %v1845, %v3575
        %v3577 = vpop.f32.mrf.mxu0
        %v3578 = vadd.f32 %v1849, %v3577
        %3579 = vmatprep.mubr.bf16.mxu0 0
        %3580 = vmatmul.mubr.bf16.gmra.mxu0 %v1751
        %v3581 = vpop.f32.mrf.mxu0
        %v3582 = vadd.f32 %v1845, %v3581
        %v3583 = vpop.f32.mrf.mxu0
        %v3584 = vadd.f32 %v1849, %v3583
        %v3585 = vpop.f32.mrf.mxu0
        %v3586 = vadd.f32 %v1845, %v3585
        %v3587 = vpop.f32.mrf.mxu0
        %v3588 = vadd.f32 %v1849, %v3587
        %3589 = vdwg.mxu0
        %v3590 = vmax.f32 %v2213, 0.0
        %v3591 = vmax.f32 %v2215, 0.0
        %v3592 = vmax.f32 %v2566, 0.0
        %v3593 = vmax.f32 %v2568, 0.0
        %v3594 = vmax.f32 %v2919, 0.0
        %v3595 = vmax.f32 %v2921, 0.0
        %v3596 = vmax.f32 %v3272, 0.0
        %v3597 = vmax.f32 %v3274, 0.0
        %v3598 = vmax.f32 %v2217, 0.0
        %v3599 = vmax.f32 %v2219, 0.0
        %v3600 = vmax.f32 %v2570, 0.0
        %v3601 = vmax.f32 %v2572, 0.0
        %v3602 = vmax.f32 %v2923, 0.0
        %v3603 = vmax.f32 %v2925, 0.0
        %v3604 = vmax.f32 %v3276, 0.0
        %v3605 = vmax.f32 %v3278, 0.0
        %v3606 = vmax.f32 %v2223, 0.0
        %v3607 = vmax.f32 %v2225, 0.0
        %v3608 = vmax.f32 %v2576, 0.0
        %v3609 = vmax.f32 %v2578, 0.0
        %v3610 = vmax.f32 %v2929, 0.0
        %v3611 = vmax.f32 %v2931, 0.0
        %v3612 = vmax.f32 %v3282, 0.0
        %v3613 = vmax.f32 %v3284, 0.0
        %v3614 = vmax.f32 %v2227, 0.0
        %v3615 = vmax.f32 %v2229, 0.0
        %v3616 = vmax.f32 %v2580, 0.0
        %v3617 = vmax.f32 %v2582, 0.0
        %v3618 = vmax.f32 %v2933, 0.0
        %v3619 = vmax.f32 %v2935, 0.0
        %v3620 = vmax.f32 %v3286, 0.0
        %v3621 = vmax.f32 %v3288, 0.0
        %v3622 = vmax.f32 %v2233, 0.0
        %v3623 = vmax.f32 %v2235, 0.0
        %v3624 = vmax.f32 %v2586, 0.0
        %v3625 = vmax.f32 %v2588, 0.0
        %v3626 = vmax.f32 %v2939, 0.0
        %v3627 = vmax.f32 %v2941, 0.0
        %v3628 = vmax.f32 %v3292, 0.0
        %v3629 = vmax.f32 %v3294, 0.0
        %v3630 = vmax.f32 %v2237, 0.0
        %v3631 = vmax.f32 %v2239, 0.0
        %v3632 = vmax.f32 %v2590, 0.0
        %v3633 = vmax.f32 %v2592, 0.0
        %v3634 = vmax.f32 %v2943, 0.0
        %v3635 = vmax.f32 %v2945, 0.0
        %v3636 = vmax.f32 %v3296, 0.0
        %v3637 = vmax.f32 %v3298, 0.0
        %v3638 = vmax.f32 %v2243, 0.0
        %v3639 = vmax.f32 %v2245, 0.0
        %v3640 = vmax.f32 %v2596, 0.0
        %v3641 = vmax.f32 %v2598, 0.0
        %v3642 = vmax.f32 %v2949, 0.0
        %v3643 = vmax.f32 %v2951, 0.0
        %v3644 = vmax.f32 %v3302, 0.0
        %v3645 = vmax.f32 %v3304, 0.0
        %v3646 = vmax.f32 %v2247, 0.0
        %v3647 = vmax.f32 %v2249, 0.0
        %v3648 = vmax.f32 %v2600, 0.0
        %v3649 = vmax.f32 %v2602, 0.0
        %v3650 = vmax.f32 %v2953, 0.0
        %v3651 = vmax.f32 %v2955, 0.0
        %v3652 = vmax.f32 %v3306, 0.0
        %v3653 = vmax.f32 %v3308, 0.0
        %v3654 = vmax.f32 %v2253, 0.0
        %v3655 = vmax.f32 %v2255, 0.0
        %v3656 = vmax.f32 %v2606, 0.0
        %v3657 = vmax.f32 %v2608, 0.0
        %v3658 = vmax.f32 %v2959, 0.0
        %v3659 = vmax.f32 %v2961, 0.0
        %v3660 = vmax.f32 %v3312, 0.0
        %v3661 = vmax.f32 %v3314, 0.0
        %v3662 = vmax.f32 %v2257, 0.0
        %v3663 = vmax.f32 %v2259, 0.0
        %v3664 = vmax.f32 %v2610, 0.0
        %v3665 = vmax.f32 %v2612, 0.0
        %v3666 = vmax.f32 %v2963, 0.0
        %v3667 = vmax.f32 %v2965, 0.0
        %v3668 = vmax.f32 %v3316, 0.0
        %v3669 = vmax.f32 %v3318, 0.0
        %v3670 = vmax.f32 %v2263, 0.0
        %v3671 = vmax.f32 %v2265, 0.0
        %v3672 = vmax.f32 %v2616, 0.0
        %v3673 = vmax.f32 %v2618, 0.0
        %v3674 = vmax.f32 %v2969, 0.0
        %v3675 = vmax.f32 %v2971, 0.0
        %v3676 = vmax.f32 %v3322, 0.0
        %v3677 = vmax.f32 %v3324, 0.0
        %v3678 = vmax.f32 %v2267, 0.0
        %v3679 = vmax.f32 %v2269, 0.0
        %v3680 = vmax.f32 %v2620, 0.0
        %v3681 = vmax.f32 %v2622, 0.0
        %v3682 = vmax.f32 %v2973, 0.0
        %v3683 = vmax.f32 %v2975, 0.0
        %v3684 = vmax.f32 %v3326, 0.0
        %v3685 = vmax.f32 %v3328, 0.0
        %v3686 = vmax.f32 %v2273, 0.0
        %v3687 = vmax.f32 %v2275, 0.0
        %v3688 = vmax.f32 %v2626, 0.0
        %v3689 = vmax.f32 %v2628, 0.0
        %v3690 = vmax.f32 %v2979, 0.0
        %v3691 = vmax.f32 %v2981, 0.0
        %v3692 = vmax.f32 %v3332, 0.0
        %v3693 = vmax.f32 %v3334, 0.0
        %v3694 = vmax.f32 %v2277, 0.0
        %v3695 = vmax.f32 %v2279, 0.0
        %v3696 = vmax.f32 %v2630, 0.0
        %v3697 = vmax.f32 %v2632, 0.0
        %v3698 = vmax.f32 %v2983, 0.0
        %v3699 = vmax.f32 %v2985, 0.0
        %v3700 = vmax.f32 %v3336, 0.0
        %v3701 = vmax.f32 %v3338, 0.0
        %v3702 = vmax.f32 %v2283, 0.0
        %v3703 = vmax.f32 %v2285, 0.0
        %v3704 = vmax.f32 %v2636, 0.0
        %v3705 = vmax.f32 %v2638, 0.0
        %v3706 = vmax.f32 %v2989, 0.0
        %v3707 = vmax.f32 %v2991, 0.0
        %v3708 = vmax.f32 %v3342, 0.0
        %v3709 = vmax.f32 %v3344, 0.0
        %v3710 = vmax.f32 %v2287, 0.0
        %v3711 = vmax.f32 %v2289, 0.0
        %v3712 = vmax.f32 %v2640, 0.0
        %v3713 = vmax.f32 %v2642, 0.0
        %v3714 = vmax.f32 %v2993, 0.0
        %v3715 = vmax.f32 %v2995, 0.0
        %v3716 = vmax.f32 %v3346, 0.0
        %v3717 = vmax.f32 %v3348, 0.0
        %v3718 = vmax.f32 %v2293, 0.0
        %v3719 = vmax.f32 %v2295, 0.0
        %v3720 = vmax.f32 %v2646, 0.0
        %v3721 = vmax.f32 %v2648, 0.0
        %v3722 = vmax.f32 %v2999, 0.0
        %v3723 = vmax.f32 %v3001, 0.0
        %v3724 = vmax.f32 %v3352, 0.0
        %v3725 = vmax.f32 %v3354, 0.0
        %v3726 = vmax.f32 %v2297, 0.0
        %v3727 = vmax.f32 %v2299, 0.0
        %v3728 = vmax.f32 %v2650, 0.0
        %v3729 = vmax.f32 %v2652, 0.0
        %v3730 = vmax.f32 %v3003, 0.0
        %v3731 = vmax.f32 %v3005, 0.0
        %v3732 = vmax.f32 %v3356, 0.0
        %v3733 = vmax.f32 %v3358, 0.0
        %v3734 = vmax.f32 %v2303, 0.0
        %v3735 = vmax.f32 %v2305, 0.0
        %v3736 = vmax.f32 %v2656, 0.0
        %v3737 = vmax.f32 %v2658, 0.0
        %v3738 = vmax.f32 %v3009, 0.0
        %v3739 = vmax.f32 %v3011, 0.0
        %v3740 = vmax.f32 %v3362, 0.0
        %v3741 = vmax.f32 %v3364, 0.0
        %v3742 = vmax.f32 %v2307, 0.0
        %v3743 = vmax.f32 %v2309, 0.0
        %v3744 = vmax.f32 %v2660, 0.0
        %v3745 = vmax.f32 %v2662, 0.0
        %v3746 = vmax.f32 %v3013, 0.0
        %v3747 = vmax.f32 %v3015, 0.0
        %v3748 = vmax.f32 %v3366, 0.0
        %v3749 = vmax.f32 %v3368, 0.0
        %v3750 = vmax.f32 %v2313, 0.0
        %v3751 = vmax.f32 %v2315, 0.0
        %v3752 = vmax.f32 %v2666, 0.0
        %v3753 = vmax.f32 %v2668, 0.0
        %v3754 = vmax.f32 %v3019, 0.0
        %v3755 = vmax.f32 %v3021, 0.0
        %v3756 = vmax.f32 %v3372, 0.0
        %v3757 = vmax.f32 %v3374, 0.0
        %v3758 = vmax.f32 %v2317, 0.0
        %v3759 = vmax.f32 %v2319, 0.0
        %v3760 = vmax.f32 %v2670, 0.0
        %v3761 = vmax.f32 %v2672, 0.0
        %v3762 = vmax.f32 %v3023, 0.0
        %v3763 = vmax.f32 %v3025, 0.0
        %v3764 = vmax.f32 %v3376, 0.0
        %v3765 = vmax.f32 %v3378, 0.0
        %v3766 = vmax.f32 %v2323, 0.0
        %v3767 = vmax.f32 %v2325, 0.0
        %v3768 = vmax.f32 %v2676, 0.0
        %v3769 = vmax.f32 %v2678, 0.0
        %v3770 = vmax.f32 %v3029, 0.0
        %v3771 = vmax.f32 %v3031, 0.0
        %v3772 = vmax.f32 %v3382, 0.0
        %v3773 = vmax.f32 %v3384, 0.0
        %v3774 = vmax.f32 %v2327, 0.0
        %v3775 = vmax.f32 %v2329, 0.0
        %v3776 = vmax.f32 %v2680, 0.0
        %v3777 = vmax.f32 %v2682, 0.0
        %v3778 = vmax.f32 %v3033, 0.0
        %v3779 = vmax.f32 %v3035, 0.0
        %v3780 = vmax.f32 %v3386, 0.0
        %v3781 = vmax.f32 %v3388, 0.0
        %v3782 = vmax.f32 %v2333, 0.0
        %v3783 = vmax.f32 %v2335, 0.0
        %v3784 = vmax.f32 %v2686, 0.0
        %v3785 = vmax.f32 %v2688, 0.0
        %v3786 = vmax.f32 %v3039, 0.0
        %v3787 = vmax.f32 %v3041, 0.0
        %v3788 = vmax.f32 %v3392, 0.0
        %v3789 = vmax.f32 %v3394, 0.0
        %v3790 = vmax.f32 %v2337, 0.0
        %v3791 = vmax.f32 %v2339, 0.0
        %v3792 = vmax.f32 %v2690, 0.0
        %v3793 = vmax.f32 %v2692, 0.0
        %v3794 = vmax.f32 %v3043, 0.0
        %v3795 = vmax.f32 %v3045, 0.0
        %v3796 = vmax.f32 %v3396, 0.0
        %v3797 = vmax.f32 %v3398, 0.0
        %v3798 = vmax.f32 %v2343, 0.0
        %v3799 = vmax.f32 %v2345, 0.0
        %v3800 = vmax.f32 %v2696, 0.0
        %v3801 = vmax.f32 %v2698, 0.0
        %v3802 = vmax.f32 %v3049, 0.0
        %v3803 = vmax.f32 %v3051, 0.0
        %v3804 = vmax.f32 %v3402, 0.0
        %v3805 = vmax.f32 %v3404, 0.0
        %v3806 = vmax.f32 %v2347, 0.0
        %v3807 = vmax.f32 %v2349, 0.0
        %v3808 = vmax.f32 %v2700, 0.0
        %v3809 = vmax.f32 %v2702, 0.0
        %v3810 = vmax.f32 %v3053, 0.0
        %v3811 = vmax.f32 %v3055, 0.0
        %v3812 = vmax.f32 %v3406, 0.0
        %v3813 = vmax.f32 %v3408, 0.0
        %v3814 = vmax.f32 %v2353, 0.0
        %v3815 = vmax.f32 %v2355, 0.0
        %v3816 = vmax.f32 %v2706, 0.0
        %v3817 = vmax.f32 %v2708, 0.0
        %v3818 = vmax.f32 %v3059, 0.0
        %v3819 = vmax.f32 %v3061, 0.0
        %v3820 = vmax.f32 %v3412, 0.0
        %v3821 = vmax.f32 %v3414, 0.0
        %v3822 = vmax.f32 %v2357, 0.0
        %v3823 = vmax.f32 %v2359, 0.0
        %v3824 = vmax.f32 %v2710, 0.0
        %v3825 = vmax.f32 %v2712, 0.0
        %v3826 = vmax.f32 %v3063, 0.0
        %v3827 = vmax.f32 %v3065, 0.0
        %v3828 = vmax.f32 %v3416, 0.0
        %v3829 = vmax.f32 %v3418, 0.0
        %v3830 = vmax.f32 %v2363, 0.0
        %v3831 = vmax.f32 %v2365, 0.0
        %v3832 = vmax.f32 %v2716, 0.0
        %v3833 = vmax.f32 %v2718, 0.0
        %v3834 = vmax.f32 %v3069, 0.0
        %v3835 = vmax.f32 %v3071, 0.0
        %v3836 = vmax.f32 %v3422, 0.0
        %v3837 = vmax.f32 %v3424, 0.0
        %v3838 = vmax.f32 %v2367, 0.0
        %v3839 = vmax.f32 %v2369, 0.0
        %v3840 = vmax.f32 %v2720, 0.0
        %v3841 = vmax.f32 %v2722, 0.0
        %v3842 = vmax.f32 %v3073, 0.0
        %v3843 = vmax.f32 %v3075, 0.0
        %v3844 = vmax.f32 %v3426, 0.0
        %v3845 = vmax.f32 %v3428, 0.0
        %v3846 = vmax.f32 %v2373, 0.0
        %v3847 = vmax.f32 %v2375, 0.0
        %v3848 = vmax.f32 %v2726, 0.0
        %v3849 = vmax.f32 %v2728, 0.0
        %v3850 = vmax.f32 %v3079, 0.0
        %v3851 = vmax.f32 %v3081, 0.0
        %v3852 = vmax.f32 %v3432, 0.0
        %v3853 = vmax.f32 %v3434, 0.0
        %v3854 = vmax.f32 %v2377, 0.0
        %v3855 = vmax.f32 %v2379, 0.0
        %v3856 = vmax.f32 %v2730, 0.0
        %v3857 = vmax.f32 %v2732, 0.0
        %v3858 = vmax.f32 %v3083, 0.0
        %v3859 = vmax.f32 %v3085, 0.0
        %v3860 = vmax.f32 %v3436, 0.0
        %v3861 = vmax.f32 %v3438, 0.0
        %v3862 = vmax.f32 %v2383, 0.0
        %v3863 = vmax.f32 %v2385, 0.0
        %v3864 = vmax.f32 %v2736, 0.0
        %v3865 = vmax.f32 %v2738, 0.0
        %v3866 = vmax.f32 %v3089, 0.0
        %v3867 = vmax.f32 %v3091, 0.0
        %v3868 = vmax.f32 %v3442, 0.0
        %v3869 = vmax.f32 %v3444, 0.0
        %v3870 = vmax.f32 %v2387, 0.0
        %v3871 = vmax.f32 %v2389, 0.0
        %v3872 = vmax.f32 %v2740, 0.0
        %v3873 = vmax.f32 %v2742, 0.0
        %v3874 = vmax.f32 %v3093, 0.0
        %v3875 = vmax.f32 %v3095, 0.0
        %v3876 = vmax.f32 %v3446, 0.0
        %v3877 = vmax.f32 %v3448, 0.0
        %v3878 = vmax.f32 %v2393, 0.0
        %v3879 = vmax.f32 %v2395, 0.0
        %v3880 = vmax.f32 %v2746, 0.0
        %v3881 = vmax.f32 %v2748, 0.0
        %v3882 = vmax.f32 %v3099, 0.0
        %v3883 = vmax.f32 %v3101, 0.0
        %v3884 = vmax.f32 %v3452, 0.0
        %v3885 = vmax.f32 %v3454, 0.0
        %v3886 = vmax.f32 %v2397, 0.0
        %v3887 = vmax.f32 %v2399, 0.0
        %v3888 = vmax.f32 %v2750, 0.0
        %v3889 = vmax.f32 %v2752, 0.0
        %v3890 = vmax.f32 %v3103, 0.0
        %v3891 = vmax.f32 %v3105, 0.0
        %v3892 = vmax.f32 %v3456, 0.0
        %v3893 = vmax.f32 %v3458, 0.0
        %v3894 = vmax.f32 %v2403, 0.0
        %v3895 = vmax.f32 %v2405, 0.0
        %v3896 = vmax.f32 %v2756, 0.0
        %v3897 = vmax.f32 %v2758, 0.0
        %v3898 = vmax.f32 %v3109, 0.0
        %v3899 = vmax.f32 %v3111, 0.0
        %v3900 = vmax.f32 %v3462, 0.0
        %v3901 = vmax.f32 %v3464, 0.0
        %v3902 = vmax.f32 %v2407, 0.0
        %v3903 = vmax.f32 %v2409, 0.0
        %v3904 = vmax.f32 %v2760, 0.0
        %v3905 = vmax.f32 %v2762, 0.0
        %v3906 = vmax.f32 %v3113, 0.0
        %v3907 = vmax.f32 %v3115, 0.0
        %v3908 = vmax.f32 %v3466, 0.0
        %v3909 = vmax.f32 %v3468, 0.0
        %v3910 = vmax.f32 %v2413, 0.0
        %v3911 = vmax.f32 %v2415, 0.0
        %v3912 = vmax.f32 %v2766, 0.0
        %v3913 = vmax.f32 %v2768, 0.0
        %v3914 = vmax.f32 %v3119, 0.0
        %v3915 = vmax.f32 %v3121, 0.0
        %v3916 = vmax.f32 %v3472, 0.0
        %v3917 = vmax.f32 %v3474, 0.0
        %v3918 = vmax.f32 %v2417, 0.0
        %v3919 = vmax.f32 %v2419, 0.0
        %v3920 = vmax.f32 %v2770, 0.0
        %v3921 = vmax.f32 %v2772, 0.0
        %v3922 = vmax.f32 %v3123, 0.0
        %v3923 = vmax.f32 %v3125, 0.0
        %v3924 = vmax.f32 %v3476, 0.0
        %v3925 = vmax.f32 %v3478, 0.0
        %v3926 = vmax.f32 %v2423, 0.0
        %v3927 = vmax.f32 %v2425, 0.0
        %v3928 = vmax.f32 %v2776, 0.0
        %v3929 = vmax.f32 %v2778, 0.0
        %v3930 = vmax.f32 %v3129, 0.0
        %v3931 = vmax.f32 %v3131, 0.0
        %v3932 = vmax.f32 %v3482, 0.0
        %v3933 = vmax.f32 %v3484, 0.0
        %v3934 = vmax.f32 %v2427, 0.0
        %v3935 = vmax.f32 %v2429, 0.0
        %v3936 = vmax.f32 %v2780, 0.0
        %v3937 = vmax.f32 %v2782, 0.0
        %v3938 = vmax.f32 %v3133, 0.0
        %v3939 = vmax.f32 %v3135, 0.0
        %v3940 = vmax.f32 %v3486, 0.0
        %v3941 = vmax.f32 %v3488, 0.0
        %v3942 = vmax.f32 %v2433, 0.0
        %v3943 = vmax.f32 %v2435, 0.0
        %v3944 = vmax.f32 %v2786, 0.0
        %v3945 = vmax.f32 %v2788, 0.0
        %v3946 = vmax.f32 %v3139, 0.0
        %v3947 = vmax.f32 %v3141, 0.0
        %v3948 = vmax.f32 %v3492, 0.0
        %v3949 = vmax.f32 %v3494, 0.0
        %v3950 = vmax.f32 %v2437, 0.0
        %v3951 = vmax.f32 %v2439, 0.0
        %v3952 = vmax.f32 %v2790, 0.0
        %v3953 = vmax.f32 %v2792, 0.0
        %v3954 = vmax.f32 %v3143, 0.0
        %v3955 = vmax.f32 %v3145, 0.0
        %v3956 = vmax.f32 %v3496, 0.0
        %v3957 = vmax.f32 %v3498, 0.0
        %v3958 = vmax.f32 %v2443, 0.0
        %v3959 = vmax.f32 %v2445, 0.0
        %v3960 = vmax.f32 %v2796, 0.0
        %v3961 = vmax.f32 %v2798, 0.0
        %v3962 = vmax.f32 %v3149, 0.0
        %v3963 = vmax.f32 %v3151, 0.0
        %v3964 = vmax.f32 %v3502, 0.0
        %v3965 = vmax.f32 %v3504, 0.0
        %v3966 = vmax.f32 %v2447, 0.0
        %v3967 = vmax.f32 %v2449, 0.0
        %v3968 = vmax.f32 %v2800, 0.0
        %v3969 = vmax.f32 %v2802, 0.0
        %v3970 = vmax.f32 %v3153, 0.0
        %v3971 = vmax.f32 %v3155, 0.0
        %v3972 = vmax.f32 %v3506, 0.0
        %v3973 = vmax.f32 %v3508, 0.0
        %v3974 = vmax.f32 %v2453, 0.0
        %v3975 = vmax.f32 %v2455, 0.0
        %v3976 = vmax.f32 %v2806, 0.0
        %v3977 = vmax.f32 %v2808, 0.0
        %v3978 = vmax.f32 %v3159, 0.0
        %v3979 = vmax.f32 %v3161, 0.0
        %v3980 = vmax.f32 %v3512, 0.0
        %v3981 = vmax.f32 %v3514, 0.0
        %v3982 = vmax.f32 %v2457, 0.0
        %v3983 = vmax.f32 %v2459, 0.0
        %v3984 = vmax.f32 %v2810, 0.0
        %v3985 = vmax.f32 %v2812, 0.0
        %v3986 = vmax.f32 %v3163, 0.0
        %v3987 = vmax.f32 %v3165, 0.0
        %v3988 = vmax.f32 %v3516, 0.0
        %v3989 = vmax.f32 %v3518, 0.0
        %v3990 = vmax.f32 %v2463, 0.0
        %v3991 = vmax.f32 %v2465, 0.0
        %v3992 = vmax.f32 %v2816, 0.0
        %v3993 = vmax.f32 %v2818, 0.0
        %v3994 = vmax.f32 %v3169, 0.0
        %v3995 = vmax.f32 %v3171, 0.0
        %v3996 = vmax.f32 %v3522, 0.0
        %v3997 = vmax.f32 %v3524, 0.0
        %v3998 = vmax.f32 %v2467, 0.0
        %v3999 = vmax.f32 %v2469, 0.0
        %v4000 = vmax.f32 %v2820, 0.0
        %v4001 = vmax.f32 %v2822, 0.0
        %v4002 = vmax.f32 %v3173, 0.0
        %v4003 = vmax.f32 %v3175, 0.0
        %v4004 = vmax.f32 %v3526, 0.0
        %v4005 = vmax.f32 %v3528, 0.0
        %v4006 = vmax.f32 %v2473, 0.0
        %v4007 = vmax.f32 %v2475, 0.0
        %v4008 = vmax.f32 %v2826, 0.0
        %v4009 = vmax.f32 %v2828, 0.0
        %v4010 = vmax.f32 %v3179, 0.0
        %v4011 = vmax.f32 %v3181, 0.0
        %v4012 = vmax.f32 %v3532, 0.0
        %v4013 = vmax.f32 %v3534, 0.0
        %v4014 = vmax.f32 %v2477, 0.0
        %v4015 = vmax.f32 %v2479, 0.0
        %v4016 = vmax.f32 %v2830, 0.0
        %v4017 = vmax.f32 %v2832, 0.0
        %v4018 = vmax.f32 %v3183, 0.0
        %v4019 = vmax.f32 %v3185, 0.0
        %v4020 = vmax.f32 %v3536, 0.0
        %v4021 = vmax.f32 %v3538, 0.0
        %v4022 = vmax.f32 %v2483, 0.0
        %v4023 = vmax.f32 %v2485, 0.0
        %v4024 = vmax.f32 %v2836, 0.0
        %v4025 = vmax.f32 %v2838, 0.0
        %v4026 = vmax.f32 %v3189, 0.0
        %v4027 = vmax.f32 %v3191, 0.0
        %v4028 = vmax.f32 %v3542, 0.0
        %v4029 = vmax.f32 %v3544, 0.0
        %v4030 = vmax.f32 %v2487, 0.0
        %v4031 = vmax.f32 %v2489, 0.0
        %v4032 = vmax.f32 %v2840, 0.0
        %v4033 = vmax.f32 %v2842, 0.0
        %v4034 = vmax.f32 %v3193, 0.0
        %v4035 = vmax.f32 %v3195, 0.0
        %v4036 = vmax.f32 %v3546, 0.0
        %v4037 = vmax.f32 %v3548, 0.0
        %v4038 = vmax.f32 %v2493, 0.0
        %v4039 = vmax.f32 %v2495, 0.0
        %v4040 = vmax.f32 %v2846, 0.0
        %v4041 = vmax.f32 %v2848, 0.0
        %v4042 = vmax.f32 %v3199, 0.0
        %v4043 = vmax.f32 %v3201, 0.0
        %v4044 = vmax.f32 %v3552, 0.0
        %v4045 = vmax.f32 %v3554, 0.0
        %v4046 = vmax.f32 %v2497, 0.0
        %v4047 = vmax.f32 %v2499, 0.0
        %v4048 = vmax.f32 %v2850, 0.0
        %v4049 = vmax.f32 %v2852, 0.0
        %v4050 = vmax.f32 %v3203, 0.0
        %v4051 = vmax.f32 %v3205, 0.0
        %v4052 = vmax.f32 %v3556, 0.0
        %v4053 = vmax.f32 %v3558, 0.0
        %v4054 = vmax.f32 %v2503, 0.0
        %v4055 = vmax.f32 %v2505, 0.0
        %v4056 = vmax.f32 %v2856, 0.0
        %v4057 = vmax.f32 %v2858, 0.0
        %v4058 = vmax.f32 %v3209, 0.0
        %v4059 = vmax.f32 %v3211, 0.0
        %v4060 = vmax.f32 %v3562, 0.0
        %v4061 = vmax.f32 %v3564, 0.0
        %v4062 = vmax.f32 %v2507, 0.0
        %v4063 = vmax.f32 %v2509, 0.0
        %v4064 = vmax.f32 %v2860, 0.0
        %v4065 = vmax.f32 %v2862, 0.0
        %v4066 = vmax.f32 %v3213, 0.0
        %v4067 = vmax.f32 %v3215, 0.0
        %v4068 = vmax.f32 %v3566, 0.0
        %v4069 = vmax.f32 %v3568, 0.0
        %v4070 = vmax.f32 %v2513, 0.0
        %v4071 = vmax.f32 %v2515, 0.0
        %v4072 = vmax.f32 %v2866, 0.0
        %v4073 = vmax.f32 %v2868, 0.0
        %v4074 = vmax.f32 %v3219, 0.0
        %v4075 = vmax.f32 %v3221, 0.0
        %v4076 = vmax.f32 %v3572, 0.0
        %v4077 = vmax.f32 %v3574, 0.0
        %v4078 = vmax.f32 %v2517, 0.0
        %v4079 = vmax.f32 %v2519, 0.0
        %v4080 = vmax.f32 %v2870, 0.0
        %v4081 = vmax.f32 %v2872, 0.0
        %v4082 = vmax.f32 %v3223, 0.0
        %v4083 = vmax.f32 %v3225, 0.0
        %v4084 = vmax.f32 %v3576, 0.0
        %v4085 = vmax.f32 %v3578, 0.0
        %v4086 = vmax.f32 %v2523, 0.0
        %v4087 = vmax.f32 %v2525, 0.0
        %v4088 = vmax.f32 %v2876, 0.0
        %v4089 = vmax.f32 %v2878, 0.0
        %v4090 = vmax.f32 %v3229, 0.0
        %v4091 = vmax.f32 %v3231, 0.0
        %v4092 = vmax.f32 %v3582, 0.0
        %v4093 = vmax.f32 %v3584, 0.0
        %v4094 = vmax.f32 %v2527, 0.0
        %v4095 = vmax.f32 %v2529, 0.0
        %v4096 = vmax.f32 %v2880, 0.0
        %v4097 = vmax.f32 %v2882, 0.0
        %v4098 = vmax.f32 %v3233, 0.0
        %v4099 = vmax.f32 %v3235, 0.0
        %v4100 = vmax.f32 %v3586, 0.0
        %v4101 = vmax.f32 %v3588, 0.0
        %p4102 = scmp.lt.s32.totalorder %s30, 2
        // Predicated region
        $region81: #{stn3d_forward.1} parent=71 // pred_check
          %p4103 = pneg %p4102
        $region82: #{stn3d_forward.1} parent=71 // pred_check_branch
          %4105 = sbr.rel (%p4103) target = $region84
        $region83: #{stn3d_forward.1} parent=71 // pred_region
          %v4106 = vld [vmem:[#allocation2] sm:$0xff]
          %v4107 = vld [vmem:[#allocation2 + $0x8] sm:$0xff]
          %v4108 = vld [vmem:[#allocation2 + $0x10] sm:$0xff]
          %v4109 = vld [vmem:[#allocation2 + $0x18] sm:$0xff]
          %v4110 = vld [vmem:[#allocation2 + $0x20] sm:$0xff]
          %v4111 = vld [vmem:[#allocation2 + $0x28] sm:$0xff]
          %v4112 = vld [vmem:[#allocation2 + $0x30] sm:$0xff]
          %v4113 = vld [vmem:[#allocation2 + $0x38] sm:$0xff]
          %v4114 = vmax.f32 %v3590, %v3846
          %v4115 = vmax.f32 %v3591, %v3847
          %v4116 = vmax.f32 %v3592, %v3848
          %v4117 = vmax.f32 %v3593, %v3849
          %v4118 = vmax.f32 %v3594, %v3850
          %v4119 = vmax.f32 %v3595, %v3851
          %v4120 = vmax.f32 %v3596, %v3852
          %v4121 = vmax.f32 %v3597, %v3853
          %v4122 = vmax.f32 %v3598, %v3854
          %v4123 = vmax.f32 %v3599, %v3855
          %v4124 = vmax.f32 %v3600, %v3856
          %v4125 = vmax.f32 %v3601, %v3857
          %v4126 = vmax.f32 %v3602, %v3858
          %v4127 = vmax.f32 %v3603, %v3859
          %v4128 = vmax.f32 %v3604, %v3860
          %v4129 = vmax.f32 %v3605, %v3861
          %v4130 = vmax.f32 %v3606, %v3862
          %v4131 = vmax.f32 %v3607, %v3863
          %v4132 = vmax.f32 %v3608, %v3864
          %v4133 = vmax.f32 %v3609, %v3865
          %v4134 = vmax.f32 %v3610, %v3866
          %v4135 = vmax.f32 %v3611, %v3867
          %v4136 = vmax.f32 %v3612, %v3868
          %v4137 = vmax.f32 %v3613, %v3869
          %v4138 = vmax.f32 %v3614, %v3870
          %v4139 = vmax.f32 %v3615, %v3871
          %v4140 = vmax.f32 %v3616, %v3872
          %v4141 = vmax.f32 %v3617, %v3873
          %v4142 = vmax.f32 %v3618, %v3874
          %v4143 = vmax.f32 %v3619, %v3875
          %v4144 = vmax.f32 %v3620, %v3876
          %v4145 = vmax.f32 %v3621, %v3877
          %v4146 = vmax.f32 %v3622, %v3878
          %v4147 = vmax.f32 %v3623, %v3879
          %v4148 = vmax.f32 %v3624, %v3880
          %v4149 = vmax.f32 %v3625, %v3881
          %v4150 = vmax.f32 %v3626, %v3882
          %v4151 = vmax.f32 %v3627, %v3883
          %v4152 = vmax.f32 %v3628, %v3884
          %v4153 = vmax.f32 %v3629, %v3885
          %v4154 = vmax.f32 %v3630, %v3886
          %v4155 = vmax.f32 %v3631, %v3887
          %v4156 = vmax.f32 %v3632, %v3888
          %v4157 = vmax.f32 %v3633, %v3889
          %v4158 = vmax.f32 %v3634, %v3890
          %v4159 = vmax.f32 %v3635, %v3891
          %v4160 = vmax.f32 %v3636, %v3892
          %v4161 = vmax.f32 %v3637, %v3893
          %v4162 = vmax.f32 %v3638, %v3894
          %v4163 = vmax.f32 %v3639, %v3895
          %v4164 = vmax.f32 %v3640, %v3896
          %v4165 = vmax.f32 %v3641, %v3897
          %v4166 = vmax.f32 %v3642, %v3898
          %v4167 = vmax.f32 %v3643, %v3899
          %v4168 = vmax.f32 %v3644, %v3900
          %v4169 = vmax.f32 %v3645, %v3901
          %v4170 = vmax.f32 %v3646, %v3902
          %v4171 = vmax.f32 %v3647, %v3903
          %v4172 = vmax.f32 %v3648, %v3904
          %v4173 = vmax.f32 %v3649, %v3905
          %v4174 = vmax.f32 %v3650, %v3906
          %v4175 = vmax.f32 %v3651, %v3907
          %v4176 = vmax.f32 %v3652, %v3908
          %v4177 = vmax.f32 %v3653, %v3909
          %v4178 = vmax.f32 %v3654, %v3910
          %v4179 = vmax.f32 %v3655, %v3911
          %v4180 = vmax.f32 %v3656, %v3912
          %v4181 = vmax.f32 %v3657, %v3913
          %v4182 = vmax.f32 %v3658, %v3914
          %v4183 = vmax.f32 %v3659, %v3915
          %v4184 = vmax.f32 %v3660, %v3916
          %v4185 = vmax.f32 %v3661, %v3917
          %v4186 = vmax.f32 %v3662, %v3918
          %v4187 = vmax.f32 %v3663, %v3919
          %v4188 = vmax.f32 %v3664, %v3920
          %v4189 = vmax.f32 %v3665, %v3921
          %v4190 = vmax.f32 %v3666, %v3922
          %v4191 = vmax.f32 %v3667, %v3923
          %v4192 = vmax.f32 %v3668, %v3924
          %v4193 = vmax.f32 %v3669, %v3925
          %v4194 = vmax.f32 %v3670, %v3926
          %v4195 = vmax.f32 %v3671, %v3927
          %v4196 = vmax.f32 %v3672, %v3928
          %v4197 = vmax.f32 %v3673, %v3929
          %v4198 = vmax.f32 %v3674, %v3930
          %v4199 = vmax.f32 %v3675, %v3931
          %v4200 = vmax.f32 %v3676, %v3932
          %v4201 = vmax.f32 %v3677, %v3933
          %v4202 = vmax.f32 %v3678, %v3934
          %v4203 = vmax.f32 %v3679, %v3935
          %v4204 = vmax.f32 %v3680, %v3936
          %v4205 = vmax.f32 %v3681, %v3937
          %v4206 = vmax.f32 %v3682, %v3938
          %v4207 = vmax.f32 %v3683, %v3939
          %v4208 = vmax.f32 %v3684, %v3940
          %v4209 = vmax.f32 %v3685, %v3941
          %v4210 = vmax.f32 %v3686, %v3942
          %v4211 = vmax.f32 %v3687, %v3943
          %v4212 = vmax.f32 %v3688, %v3944
          %v4213 = vmax.f32 %v3689, %v3945
          %v4214 = vmax.f32 %v3690, %v3946
          %v4215 = vmax.f32 %v3691, %v3947
          %v4216 = vmax.f32 %v3692, %v3948
          %v4217 = vmax.f32 %v3693, %v3949
          %v4218 = vmax.f32 %v3694, %v3950
          %v4219 = vmax.f32 %v3695, %v3951
          %v4220 = vmax.f32 %v3696, %v3952
          %v4221 = vmax.f32 %v3697, %v3953
          %v4222 = vmax.f32 %v3698, %v3954
          %v4223 = vmax.f32 %v3699, %v3955
          %v4224 = vmax.f32 %v3700, %v3956
          %v4225 = vmax.f32 %v3701, %v3957
          %v4226 = vmax.f32 %v3702, %v3958
          %v4227 = vmax.f32 %v3703, %v3959
          %v4228 = vmax.f32 %v3704, %v3960
          %v4229 = vmax.f32 %v3705, %v3961
          %v4230 = vmax.f32 %v3706, %v3962
          %v4231 = vmax.f32 %v3707, %v3963
          %v4232 = vmax.f32 %v3708, %v3964
          %v4233 = vmax.f32 %v3709, %v3965
          %v4234 = vmax.f32 %v3710, %v3966
          %v4235 = vmax.f32 %v3711, %v3967
          %v4236 = vmax.f32 %v3712, %v3968
          %v4237 = vmax.f32 %v3713, %v3969
          %v4238 = vmax.f32 %v3714, %v3970
          %v4239 = vmax.f32 %v3715, %v3971
          %v4240 = vmax.f32 %v3716, %v3972
          %v4241 = vmax.f32 %v3717, %v3973
          %v4242 = vmax.f32 %v3718, %v3974
          %v4243 = vmax.f32 %v3719, %v3975
          %v4244 = vmax.f32 %v3720, %v3976
          %v4245 = vmax.f32 %v3721, %v3977
          %v4246 = vmax.f32 %v3722, %v3978
          %v4247 = vmax.f32 %v3723, %v3979
          %v4248 = vmax.f32 %v3724, %v3980
          %v4249 = vmax.f32 %v3725, %v3981
          %v4250 = vmax.f32 %v3726, %v3982
          %v4251 = vmax.f32 %v3727, %v3983
          %v4252 = vmax.f32 %v3728, %v3984
          %v4253 = vmax.f32 %v3729, %v3985
          %v4254 = vmax.f32 %v3730, %v3986
          %v4255 = vmax.f32 %v3731, %v3987
          %v4256 = vmax.f32 %v3732, %v3988
          %v4257 = vmax.f32 %v3733, %v3989
          %v4258 = vmax.f32 %v3734, %v3990
          %v4259 = vmax.f32 %v3735, %v3991
          %v4260 = vmax.f32 %v3736, %v3992
          %v4261 = vmax.f32 %v3737, %v3993
          %v4262 = vmax.f32 %v3738, %v3994
          %v4263 = vmax.f32 %v3739, %v3995
          %v4264 = vmax.f32 %v3740, %v3996
          %v4265 = vmax.f32 %v3741, %v3997
          %v4266 = vmax.f32 %v3742, %v3998
          %v4267 = vmax.f32 %v3743, %v3999
          %v4268 = vmax.f32 %v3744, %v4000
          %v4269 = vmax.f32 %v3745, %v4001
          %v4270 = vmax.f32 %v3746, %v4002
          %v4271 = vmax.f32 %v3747, %v4003
          %v4272 = vmax.f32 %v3748, %v4004
          %v4273 = vmax.f32 %v3749, %v4005
          %v4274 = vmax.f32 %v3750, %v4006
          %v4275 = vmax.f32 %v3751, %v4007
          %v4276 = vmax.f32 %v3752, %v4008
          %v4277 = vmax.f32 %v3753, %v4009
          %v4278 = vmax.f32 %v3754, %v4010
          %v4279 = vmax.f32 %v3755, %v4011
          %v4280 = vmax.f32 %v3756, %v4012
          %v4281 = vmax.f32 %v3757, %v4013
          %v4282 = vmax.f32 %v3758, %v4014
          %v4283 = vmax.f32 %v3759, %v4015
          %v4284 = vmax.f32 %v3760, %v4016
          %v4285 = vmax.f32 %v3761, %v4017
          %v4286 = vmax.f32 %v3762, %v4018
          %v4287 = vmax.f32 %v3763, %v4019
          %v4288 = vmax.f32 %v3764, %v4020
          %v4289 = vmax.f32 %v3765, %v4021
          %v4290 = vmax.f32 %v3766, %v4022
          %v4291 = vmax.f32 %v3767, %v4023
          %v4292 = vmax.f32 %v3768, %v4024
          %v4293 = vmax.f32 %v3769, %v4025
          %v4294 = vmax.f32 %v3770, %v4026
          %v4295 = vmax.f32 %v3771, %v4027
          %v4296 = vmax.f32 %v3772, %v4028
          %v4297 = vmax.f32 %v3773, %v4029
          %v4298 = vmax.f32 %v3774, %v4030
          %v4299 = vmax.f32 %v3775, %v4031
          %v4300 = vmax.f32 %v3776, %v4032
          %v4301 = vmax.f32 %v3777, %v4033
          %v4302 = vmax.f32 %v3778, %v4034
          %v4303 = vmax.f32 %v3779, %v4035
          %v4304 = vmax.f32 %v3780, %v4036
          %v4305 = vmax.f32 %v3781, %v4037
          %v4306 = vmax.f32 %v3782, %v4038
          %v4307 = vmax.f32 %v3783, %v4039
          %v4308 = vmax.f32 %v3784, %v4040
          %v4309 = vmax.f32 %v3785, %v4041
          %v4310 = vmax.f32 %v3786, %v4042
          %v4311 = vmax.f32 %v3787, %v4043
          %v4312 = vmax.f32 %v3788, %v4044
          %v4313 = vmax.f32 %v3789, %v4045
          %v4314 = vmax.f32 %v3790, %v4046
          %v4315 = vmax.f32 %v3791, %v4047
          %v4316 = vmax.f32 %v3792, %v4048
          %v4317 = vmax.f32 %v3793, %v4049
          %v4318 = vmax.f32 %v3794, %v4050
          %v4319 = vmax.f32 %v3795, %v4051
          %v4320 = vmax.f32 %v3796, %v4052
          %v4321 = vmax.f32 %v3797, %v4053
          %v4322 = vmax.f32 %v3798, %v4054
          %v4323 = vmax.f32 %v3799, %v4055
          %v4324 = vmax.f32 %v3800, %v4056
          %v4325 = vmax.f32 %v3801, %v4057
          %v4326 = vmax.f32 %v3802, %v4058
          %v4327 = vmax.f32 %v3803, %v4059
          %v4328 = vmax.f32 %v3804, %v4060
          %v4329 = vmax.f32 %v3805, %v4061
          %v4330 = vmax.f32 %v3806, %v4062
          %v4331 = vmax.f32 %v3807, %v4063
          %v4332 = vmax.f32 %v3808, %v4064
          %v4333 = vmax.f32 %v3809, %v4065
          %v4334 = vmax.f32 %v3810, %v4066
          %v4335 = vmax.f32 %v3811, %v4067
          %v4336 = vmax.f32 %v3812, %v4068
          %v4337 = vmax.f32 %v3813, %v4069
          %v4338 = vmax.f32 %v3814, %v4070
          %v4339 = vmax.f32 %v3815, %v4071
          %v4340 = vmax.f32 %v3816, %v4072
          %v4341 = vmax.f32 %v3817, %v4073
          %v4342 = vmax.f32 %v3818, %v4074
          %v4343 = vmax.f32 %v3819, %v4075
          %v4344 = vmax.f32 %v3820, %v4076
          %v4345 = vmax.f32 %v3821, %v4077
          %v4346 = vmax.f32 %v3822, %v4078
          %v4347 = vmax.f32 %v3823, %v4079
          %v4348 = vmax.f32 %v3824, %v4080
          %v4349 = vmax.f32 %v3825, %v4081
          %v4350 = vmax.f32 %v3826, %v4082
          %v4351 = vmax.f32 %v3827, %v4083
          %v4352 = vmax.f32 %v3828, %v4084
          %v4353 = vmax.f32 %v3829, %v4085
          %v4354 = vmax.f32 %v3830, %v4086
          %v4355 = vmax.f32 %v3831, %v4087
          %v4356 = vmax.f32 %v3832, %v4088
          %v4357 = vmax.f32 %v3833, %v4089
          %v4358 = vmax.f32 %v3834, %v4090
          %v4359 = vmax.f32 %v3835, %v4091
          %v4360 = vmax.f32 %v3836, %v4092
          %v4361 = vmax.f32 %v3837, %v4093
          %v4362 = vmax.f32 %v3838, %v4094
          %v4363 = vmax.f32 %v3839, %v4095
          %v4364 = vmax.f32 %v3840, %v4096
          %v4365 = vmax.f32 %v3841, %v4097
          %v4366 = vmax.f32 %v3842, %v4098
          %v4367 = vmax.f32 %v3843, %v4099
          %v4368 = vmax.f32 %v3844, %v4100
          %v4369 = vmax.f32 %v3845, %v4101
          %v4370 = vmax.f32 %v4114, %v4242
          %v4371 = vmax.f32 %v4115, %v4243
          %v4372 = vmax.f32 %v4116, %v4244
          %v4373 = vmax.f32 %v4117, %v4245
          %v4374 = vmax.f32 %v4118, %v4246
          %v4375 = vmax.f32 %v4119, %v4247
          %v4376 = vmax.f32 %v4120, %v4248
          %v4377 = vmax.f32 %v4121, %v4249
          %v4378 = vmax.f32 %v4122, %v4250
          %v4379 = vmax.f32 %v4123, %v4251
          %v4380 = vmax.f32 %v4124, %v4252
          %v4381 = vmax.f32 %v4125, %v4253
          %v4382 = vmax.f32 %v4126, %v4254
          %v4383 = vmax.f32 %v4127, %v4255
          %v4384 = vmax.f32 %v4128, %v4256
          %v4385 = vmax.f32 %v4129, %v4257
          %v4386 = vmax.f32 %v4130, %v4258
          %v4387 = vmax.f32 %v4131, %v4259
          %v4388 = vmax.f32 %v4132, %v4260
          %v4389 = vmax.f32 %v4133, %v4261
          %v4390 = vmax.f32 %v4134, %v4262
          %v4391 = vmax.f32 %v4135, %v4263
          %v4392 = vmax.f32 %v4136, %v4264
          %v4393 = vmax.f32 %v4137, %v4265
          %v4394 = vmax.f32 %v4138, %v4266
          %v4395 = vmax.f32 %v4139, %v4267
          %v4396 = vmax.f32 %v4140, %v4268
          %v4397 = vmax.f32 %v4141, %v4269
          %v4398 = vmax.f32 %v4142, %v4270
          %v4399 = vmax.f32 %v4143, %v4271
          %v4400 = vmax.f32 %v4144, %v4272
          %v4401 = vmax.f32 %v4145, %v4273
          %v4402 = vmax.f32 %v4146, %v4274
          %v4403 = vmax.f32 %v4147, %v4275
          %v4404 = vmax.f32 %v4148, %v4276
          %v4405 = vmax.f32 %v4149, %v4277
          %v4406 = vmax.f32 %v4150, %v4278
          %v4407 = vmax.f32 %v4151, %v4279
          %v4408 = vmax.f32 %v4152, %v4280
          %v4409 = vmax.f32 %v4153, %v4281
          %v4410 = vmax.f32 %v4154, %v4282
          %v4411 = vmax.f32 %v4155, %v4283
          %v4412 = vmax.f32 %v4156, %v4284
          %v4413 = vmax.f32 %v4157, %v4285
          %v4414 = vmax.f32 %v4158, %v4286
          %v4415 = vmax.f32 %v4159, %v4287
          %v4416 = vmax.f32 %v4160, %v4288
          %v4417 = vmax.f32 %v4161, %v4289
          %v4418 = vmax.f32 %v4162, %v4290
          %v4419 = vmax.f32 %v4163, %v4291
          %v4420 = vmax.f32 %v4164, %v4292
          %v4421 = vmax.f32 %v4165, %v4293
          %v4422 = vmax.f32 %v4166, %v4294
          %v4423 = vmax.f32 %v4167, %v4295
          %v4424 = vmax.f32 %v4168, %v4296
          %v4425 = vmax.f32 %v4169, %v4297
          %v4426 = vmax.f32 %v4170, %v4298
          %v4427 = vmax.f32 %v4171, %v4299
          %v4428 = vmax.f32 %v4172, %v4300
          %v4429 = vmax.f32 %v4173, %v4301
          %v4430 = vmax.f32 %v4174, %v4302
          %v4431 = vmax.f32 %v4175, %v4303
          %v4432 = vmax.f32 %v4176, %v4304
          %v4433 = vmax.f32 %v4177, %v4305
          %v4434 = vmax.f32 %v4178, %v4306
          %v4435 = vmax.f32 %v4179, %v4307
          %v4436 = vmax.f32 %v4180, %v4308
          %v4437 = vmax.f32 %v4181, %v4309
          %v4438 = vmax.f32 %v4182, %v4310
          %v4439 = vmax.f32 %v4183, %v4311
          %v4440 = vmax.f32 %v4184, %v4312
          %v4441 = vmax.f32 %v4185, %v4313
          %v4442 = vmax.f32 %v4186, %v4314
          %v4443 = vmax.f32 %v4187, %v4315
          %v4444 = vmax.f32 %v4188, %v4316
          %v4445 = vmax.f32 %v4189, %v4317
          %v4446 = vmax.f32 %v4190, %v4318
          %v4447 = vmax.f32 %v4191, %v4319
          %v4448 = vmax.f32 %v4192, %v4320
          %v4449 = vmax.f32 %v4193, %v4321
          %v4450 = vmax.f32 %v4194, %v4322
          %v4451 = vmax.f32 %v4195, %v4323
          %v4452 = vmax.f32 %v4196, %v4324
          %v4453 = vmax.f32 %v4197, %v4325
          %v4454 = vmax.f32 %v4198, %v4326
          %v4455 = vmax.f32 %v4199, %v4327
          %v4456 = vmax.f32 %v4200, %v4328
          %v4457 = vmax.f32 %v4201, %v4329
          %v4458 = vmax.f32 %v4202, %v4330
          %v4459 = vmax.f32 %v4203, %v4331
          %v4460 = vmax.f32 %v4204, %v4332
          %v4461 = vmax.f32 %v4205, %v4333
          %v4462 = vmax.f32 %v4206, %v4334
          %v4463 = vmax.f32 %v4207, %v4335
          %v4464 = vmax.f32 %v4208, %v4336
          %v4465 = vmax.f32 %v4209, %v4337
          %v4466 = vmax.f32 %v4210, %v4338
          %v4467 = vmax.f32 %v4211, %v4339
          %v4468 = vmax.f32 %v4212, %v4340
          %v4469 = vmax.f32 %v4213, %v4341
          %v4470 = vmax.f32 %v4214, %v4342
          %v4471 = vmax.f32 %v4215, %v4343
          %v4472 = vmax.f32 %v4216, %v4344
          %v4473 = vmax.f32 %v4217, %v4345
          %v4474 = vmax.f32 %v4218, %v4346
          %v4475 = vmax.f32 %v4219, %v4347
          %v4476 = vmax.f32 %v4220, %v4348
          %v4477 = vmax.f32 %v4221, %v4349
          %v4478 = vmax.f32 %v4222, %v4350
          %v4479 = vmax.f32 %v4223, %v4351
          %v4480 = vmax.f32 %v4224, %v4352
          %v4481 = vmax.f32 %v4225, %v4353
          %v4482 = vmax.f32 %v4226, %v4354
          %v4483 = vmax.f32 %v4227, %v4355
          %v4484 = vmax.f32 %v4228, %v4356
          %v4485 = vmax.f32 %v4229, %v4357
          %v4486 = vmax.f32 %v4230, %v4358
          %v4487 = vmax.f32 %v4231, %v4359
          %v4488 = vmax.f32 %v4232, %v4360
          %v4489 = vmax.f32 %v4233, %v4361
          %v4490 = vmax.f32 %v4234, %v4362
          %v4491 = vmax.f32 %v4235, %v4363
          %v4492 = vmax.f32 %v4236, %v4364
          %v4493 = vmax.f32 %v4237, %v4365
          %v4494 = vmax.f32 %v4238, %v4366
          %v4495 = vmax.f32 %v4239, %v4367
          %v4496 = vmax.f32 %v4240, %v4368
          %v4497 = vmax.f32 %v4241, %v4369
          %v4498 = vmax.f32 %v4370, %v4434
          %v4499 = vmax.f32 %v4371, %v4435
          %v4500 = vmax.f32 %v4372, %v4436
          %v4501 = vmax.f32 %v4373, %v4437
          %v4502 = vmax.f32 %v4374, %v4438
          %v4503 = vmax.f32 %v4375, %v4439
          %v4504 = vmax.f32 %v4376, %v4440
          %v4505 = vmax.f32 %v4377, %v4441
          %v4506 = vmax.f32 %v4378, %v4442
          %v4507 = vmax.f32 %v4379, %v4443
          %v4508 = vmax.f32 %v4380, %v4444
          %v4509 = vmax.f32 %v4381, %v4445
          %v4510 = vmax.f32 %v4382, %v4446
          %v4511 = vmax.f32 %v4383, %v4447
          %v4512 = vmax.f32 %v4384, %v4448
          %v4513 = vmax.f32 %v4385, %v4449
          %v4514 = vmax.f32 %v4386, %v4450
          %v4515 = vmax.f32 %v4387, %v4451
          %v4516 = vmax.f32 %v4388, %v4452
          %v4517 = vmax.f32 %v4389, %v4453
          %v4518 = vmax.f32 %v4390, %v4454
          %v4519 = vmax.f32 %v4391, %v4455
          %v4520 = vmax.f32 %v4392, %v4456
          %v4521 = vmax.f32 %v4393, %v4457
          %v4522 = vmax.f32 %v4394, %v4458
          %v4523 = vmax.f32 %v4395, %v4459
          %v4524 = vmax.f32 %v4396, %v4460
          %v4525 = vmax.f32 %v4397, %v4461
          %v4526 = vmax.f32 %v4398, %v4462
          %v4527 = vmax.f32 %v4399, %v4463
          %v4528 = vmax.f32 %v4400, %v4464
          %v4529 = vmax.f32 %v4401, %v4465
          %v4530 = vmax.f32 %v4402, %v4466
          %v4531 = vmax.f32 %v4403, %v4467
          %v4532 = vmax.f32 %v4404, %v4468
          %v4533 = vmax.f32 %v4405, %v4469
          %v4534 = vmax.f32 %v4406, %v4470
          %v4535 = vmax.f32 %v4407, %v4471
          %v4536 = vmax.f32 %v4408, %v4472
          %v4537 = vmax.f32 %v4409, %v4473
          %v4538 = vmax.f32 %v4410, %v4474
          %v4539 = vmax.f32 %v4411, %v4475
          %v4540 = vmax.f32 %v4412, %v4476
          %v4541 = vmax.f32 %v4413, %v4477
          %v4542 = vmax.f32 %v4414, %v4478
          %v4543 = vmax.f32 %v4415, %v4479
          %v4544 = vmax.f32 %v4416, %v4480
          %v4545 = vmax.f32 %v4417, %v4481
          %v4546 = vmax.f32 %v4418, %v4482
          %v4547 = vmax.f32 %v4419, %v4483
          %v4548 = vmax.f32 %v4420, %v4484
          %v4549 = vmax.f32 %v4421, %v4485
          %v4550 = vmax.f32 %v4422, %v4486
          %v4551 = vmax.f32 %v4423, %v4487
          %v4552 = vmax.f32 %v4424, %v4488
          %v4553 = vmax.f32 %v4425, %v4489
          %v4554 = vmax.f32 %v4426, %v4490
          %v4555 = vmax.f32 %v4427, %v4491
          %v4556 = vmax.f32 %v4428, %v4492
          %v4557 = vmax.f32 %v4429, %v4493
          %v4558 = vmax.f32 %v4430, %v4494
          %v4559 = vmax.f32 %v4431, %v4495
          %v4560 = vmax.f32 %v4432, %v4496
          %v4561 = vmax.f32 %v4433, %v4497
          %v4562 = vmax.f32 %v4498, %v4530
          %v4563 = vmax.f32 %v4499, %v4531
          %v4564 = vmax.f32 %v4500, %v4532
          %v4565 = vmax.f32 %v4501, %v4533
          %v4566 = vmax.f32 %v4502, %v4534
          %v4567 = vmax.f32 %v4503, %v4535
          %v4568 = vmax.f32 %v4504, %v4536
          %v4569 = vmax.f32 %v4505, %v4537
          %v4570 = vmax.f32 %v4506, %v4538
          %v4571 = vmax.f32 %v4507, %v4539
          %v4572 = vmax.f32 %v4508, %v4540
          %v4573 = vmax.f32 %v4509, %v4541
          %v4574 = vmax.f32 %v4510, %v4542
          %v4575 = vmax.f32 %v4511, %v4543
          %v4576 = vmax.f32 %v4512, %v4544
          %v4577 = vmax.f32 %v4513, %v4545
          %v4578 = vmax.f32 %v4514, %v4546
          %v4579 = vmax.f32 %v4515, %v4547
          %v4580 = vmax.f32 %v4516, %v4548
          %v4581 = vmax.f32 %v4517, %v4549
          %v4582 = vmax.f32 %v4518, %v4550
          %v4583 = vmax.f32 %v4519, %v4551
          %v4584 = vmax.f32 %v4520, %v4552
          %v4585 = vmax.f32 %v4521, %v4553
          %v4586 = vmax.f32 %v4522, %v4554
          %v4587 = vmax.f32 %v4523, %v4555
          %v4588 = vmax.f32 %v4524, %v4556
          %v4589 = vmax.f32 %v4525, %v4557
          %v4590 = vmax.f32 %v4526, %v4558
          %v4591 = vmax.f32 %v4527, %v4559
          %v4592 = vmax.f32 %v4528, %v4560
          %v4593 = vmax.f32 %v4529, %v4561
          %v4594 = vmax.f32 %v4562, %v4578
          %v4595 = vmax.f32 %v4563, %v4579
          %v4596 = vmax.f32 %v4564, %v4580
          %v4597 = vmax.f32 %v4565, %v4581
          %v4598 = vmax.f32 %v4566, %v4582
          %v4599 = vmax.f32 %v4567, %v4583
          %v4600 = vmax.f32 %v4568, %v4584
          %v4601 = vmax.f32 %v4569, %v4585
          %v4602 = vmax.f32 %v4570, %v4586
          %v4603 = vmax.f32 %v4571, %v4587
          %v4604 = vmax.f32 %v4572, %v4588
          %v4605 = vmax.f32 %v4573, %v4589
          %v4606 = vmax.f32 %v4574, %v4590
          %v4607 = vmax.f32 %v4575, %v4591
          %v4608 = vmax.f32 %v4576, %v4592
          %v4609 = vmax.f32 %v4577, %v4593
          %v4610 = vmax.f32 %v4594, %v4602
          %v4611 = vmax.f32 %v4595, %v4603
          %v4612 = vmax.f32 %v4596, %v4604
          %v4613 = vmax.f32 %v4597, %v4605
          %v4614 = vmax.f32 %v4598, %v4606
          %v4615 = vmax.f32 %v4599, %v4607
          %v4616 = vmax.f32 %v4600, %v4608
          %v4617 = vmax.f32 %v4601, %v4609
          %v4618 = vmax.f32 %v4106, %v4610
          %v4619 = vmax.f32 %v4107, %v4611
          %v4620 = vmax.f32 %v4108, %v4612
          %v4621 = vmax.f32 %v4109, %v4613
          %v4622 = vmax.f32 %v4110, %v4614
          %v4623 = vmax.f32 %v4111, %v4615
          %v4624 = vmax.f32 %v4112, %v4616
          %v4625 = vmax.f32 %v4113, %v4617
          %4626 = vst [vmem:[#allocation2] sm:$0xff] %v4618
          %4627 = vst [vmem:[#allocation2 + $0x8] sm:$0xff] %v4619
          %4628 = vst [vmem:[#allocation2 + $0x10] sm:$0xff] %v4620
          %4629 = vst [vmem:[#allocation2 + $0x18] sm:$0xff] %v4621
          %4630 = vst [vmem:[#allocation2 + $0x20] sm:$0xff] %v4622
          %4631 = vst [vmem:[#allocation2 + $0x28] sm:$0xff] %v4623
          %4632 = vst [vmem:[#allocation2 + $0x30] sm:$0xff] %v4624
          %4633 = vst [vmem:[#allocation2 + $0x38] sm:$0xff] %v4625
        $region84: #{stn3d_forward.1} parent=71 // pred_fallthru
          _
        %p4634 = scmp.eq.s32.totalorder %s30, 2
        // Predicated region
        $region85: #{stn3d_forward.1} parent=71 // pred_check
          %p4635 = pneg %p4634
        $region86: #{stn3d_forward.1} parent=71 // pred_check_branch
          %4637 = sbr.rel (%p4635) target = $region88
        $region87: #{stn3d_forward.1} parent=71 // pred_region
          %v4638 = vlaneseq
          %v4639 = vshrl.u32 %v4638, 7
          %v4640 = vadd.s32 %v4639, 8
          %v4641 = vadd.s32 %v4639, 16
          %v4642 = vadd.s32 %v4639, 24
          %v4643 = vadd.s32 %v4639, 32
          %v4644 = vadd.s32 %v4639, 40
          %v4645 = vadd.s32 %v4639, 48
          %v4646 = vadd.s32 %v4639, 56
          %v4647 = vadd.s32 %v4639, 64
          %v4648 = vadd.s32 %v4639, 72
          %v4649 = vadd.s32 %v4639, 80
          %v4650 = vadd.s32 %v4639, 88
          %v4651 = vadd.s32 %v4639, 96
          %v4652 = vadd.s32 %v4639, 104
          %v4653 = vadd.s32 %v4639, 112
          %v4654 = vadd.s32 %v4639, 120
          %v4655 = vadd.s32 %v4639, 128
          %v4656 = vadd.s32 %v4639, 136
          %v4657 = vadd.s32 %v4639, 144
          %v4658 = vadd.s32 %v4639, 152
          %v4659 = vadd.s32 %v4639, 160
          %v4660 = vadd.s32 %v4639, 168
          %v4661 = vadd.s32 %v4639, 176
          %v4662 = vadd.s32 %v4639, 184
          %v4663 = vadd.s32 %v4639, 192
          %v4664 = vadd.s32 %v4639, 200
          %v4665 = vadd.s32 %v4639, 208
          %v4666 = vadd.s32 %v4639, 216
          %v4667 = vadd.s32 %v4639, 224
          %v4668 = vadd.s32 %v4639, 232
          %v4669 = vadd.s32 %v4639, 240
          %v4670 = vadd.s32 %v4639, 248
          %v4671 = vadd.s32 %v4639, 256
          %v4672 = vadd.s32 %v4639, 264
          %v4673 = vadd.s32 %v4639, 272
          %v4674 = vadd.s32 %v4639, 280
          %v4675 = vadd.s32 %v4639, 288
          %v4676 = vadd.s32 %v4639, 296
          %v4677 = vadd.s32 %v4639, 304
          %v4678 = vadd.s32 %v4639, 312
          %v4679 = vadd.s32 %v4639, 320
          %v4680 = vadd.s32 %v4639, 328
          %v4681 = vadd.s32 %v4639, 336
          %v4682 = vadd.s32 %v4639, 344
          %v4683 = vadd.s32 %v4639, 352
          %v4684 = vadd.s32 %v4639, 360
          %v4685 = vadd.s32 %v4639, 368
          %v4686 = vadd.s32 %v4639, 376
          %v4687 = vadd.s32 %v4639, 384
          %v4688 = vadd.s32 %v4639, 392
          %v4689 = vadd.s32 %v4639, 400
          %v4690 = vadd.s32 %v4639, 408
          %v4691 = vadd.s32 %v4639, 416
          %v4692 = vadd.s32 %v4639, 424
          %v4693 = vadd.s32 %v4639, 432
          %v4694 = vadd.s32 %v4639, 440
          %v4695 = vadd.s32 %v4639, 448
          %v4696 = vadd.s32 %v4639, 456
          %v4697 = vadd.s32 %v4639, 464
          %v4698 = vadd.s32 %v4639, 472
          %v4699 = vadd.s32 %v4639, 480
          %v4700 = vadd.s32 %v4639, 488
          %v4701 = vadd.s32 %v4639, 496
          %v4702 = vadd.s32 %v4639, 504
          %vm4703 = vcmp.lt.s32.totalorder %v4639, 256
          %vm4704 = vcmp.lt.s32.totalorder %v4640, 256
          %vm4705 = vcmp.lt.s32.totalorder %v4641, 256
          %vm4706 = vcmp.lt.s32.totalorder %v4642, 256
          %vm4707 = vcmp.lt.s32.totalorder %v4643, 256
          %vm4708 = vcmp.lt.s32.totalorder %v4644, 256
          %vm4709 = vcmp.lt.s32.totalorder %v4645, 256
          %vm4710 = vcmp.lt.s32.totalorder %v4646, 256
          %vm4711 = vcmp.lt.s32.totalorder %v4647, 256
          %vm4712 = vcmp.lt.s32.totalorder %v4648, 256
          %vm4713 = vcmp.lt.s32.totalorder %v4649, 256
          %vm4714 = vcmp.lt.s32.totalorder %v4650, 256
          %vm4715 = vcmp.lt.s32.totalorder %v4651, 256
          %vm4716 = vcmp.lt.s32.totalorder %v4652, 256
          %vm4717 = vcmp.lt.s32.totalorder %v4653, 256
          %vm4718 = vcmp.lt.s32.totalorder %v4654, 256
          %vm4719 = vcmp.lt.s32.totalorder %v4655, 256
          %vm4720 = vcmp.lt.s32.totalorder %v4656, 256
          %vm4721 = vcmp.lt.s32.totalorder %v4657, 256
          %vm4722 = vcmp.lt.s32.totalorder %v4658, 256
          %vm4723 = vcmp.lt.s32.totalorder %v4659, 256
          %vm4724 = vcmp.lt.s32.totalorder %v4660, 256
          %vm4725 = vcmp.lt.s32.totalorder %v4661, 256
          %vm4726 = vcmp.lt.s32.totalorder %v4662, 256
          %vm4727 = vcmp.lt.s32.totalorder %v4663, 256
          %vm4728 = vcmp.lt.s32.totalorder %v4664, 256
          %vm4729 = vcmp.lt.s32.totalorder %v4665, 256
          %vm4730 = vcmp.lt.s32.totalorder %v4666, 256
          %vm4731 = vcmp.lt.s32.totalorder %v4667, 256
          %vm4732 = vcmp.lt.s32.totalorder %v4668, 256
          %vm4733 = vcmp.lt.s32.totalorder %v4669, 256
          %vm4734 = vcmp.lt.s32.totalorder %v4670, 256
          %vm4735 = vcmp.lt.s32.totalorder %v4671, 256
          %vm4736 = vcmp.lt.s32.totalorder %v4672, 256
          %vm4737 = vcmp.lt.s32.totalorder %v4673, 256
          %vm4738 = vcmp.lt.s32.totalorder %v4674, 256
          %vm4739 = vcmp.lt.s32.totalorder %v4675, 256
          %vm4740 = vcmp.lt.s32.totalorder %v4676, 256
          %vm4741 = vcmp.lt.s32.totalorder %v4677, 256
          %vm4742 = vcmp.lt.s32.totalorder %v4678, 256
          %vm4743 = vcmp.lt.s32.totalorder %v4679, 256
          %vm4744 = vcmp.lt.s32.totalorder %v4680, 256
          %vm4745 = vcmp.lt.s32.totalorder %v4681, 256
          %vm4746 = vcmp.lt.s32.totalorder %v4682, 256
          %vm4747 = vcmp.lt.s32.totalorder %v4683, 256
          %vm4748 = vcmp.lt.s32.totalorder %v4684, 256
          %vm4749 = vcmp.lt.s32.totalorder %v4685, 256
          %vm4750 = vcmp.lt.s32.totalorder %v4686, 256
          %vm4751 = vcmp.lt.s32.totalorder %v4687, 256
          %vm4752 = vcmp.lt.s32.totalorder %v4688, 256
          %vm4753 = vcmp.lt.s32.totalorder %v4689, 256
          %vm4754 = vcmp.lt.s32.totalorder %v4690, 256
          %vm4755 = vcmp.lt.s32.totalorder %v4691, 256
          %vm4756 = vcmp.lt.s32.totalorder %v4692, 256
          %vm4757 = vcmp.lt.s32.totalorder %v4693, 256
          %vm4758 = vcmp.lt.s32.totalorder %v4694, 256
          %vm4759 = vcmp.lt.s32.totalorder %v4695, 256
          %vm4760 = vcmp.lt.s32.totalorder %v4696, 256
          %vm4761 = vcmp.lt.s32.totalorder %v4697, 256
          %vm4762 = vcmp.lt.s32.totalorder %v4698, 256
          %vm4763 = vcmp.lt.s32.totalorder %v4699, 256
          %vm4764 = vcmp.lt.s32.totalorder %v4700, 256
          %vm4765 = vcmp.lt.s32.totalorder %v4701, 256
          %vm4766 = vcmp.lt.s32.totalorder %v4702, 256
          %v4767 = vsel %vm4703, 1, 0
          %v4768 = vsel %vm4704, 1, 0
          %v4769 = vsel %vm4705, 1, 0
          %v4770 = vsel %vm4706, 1, 0
          %v4771 = vsel %vm4707, 1, 0
          %v4772 = vsel %vm4708, 1, 0
          %v4773 = vsel %vm4709, 1, 0
          %v4774 = vsel %vm4710, 1, 0
          %v4775 = vsel %vm4711, 1, 0
          %v4776 = vsel %vm4712, 1, 0
          %v4777 = vsel %vm4713, 1, 0
          %v4778 = vsel %vm4714, 1, 0
          %v4779 = vsel %vm4715, 1, 0
          %v4780 = vsel %vm4716, 1, 0
          %v4781 = vsel %vm4717, 1, 0
          %v4782 = vsel %vm4718, 1, 0
          %v4783 = vsel %vm4719, 1, 0
          %v4784 = vsel %vm4720, 1, 0
          %v4785 = vsel %vm4721, 1, 0
          %v4786 = vsel %vm4722, 1, 0
          %v4787 = vsel %vm4723, 1, 0
          %v4788 = vsel %vm4724, 1, 0
          %v4789 = vsel %vm4725, 1, 0
          %v4790 = vsel %vm4726, 1, 0
          %v4791 = vsel %vm4727, 1, 0
          %v4792 = vsel %vm4728, 1, 0
          %v4793 = vsel %vm4729, 1, 0
          %v4794 = vsel %vm4730, 1, 0
          %v4795 = vsel %vm4731, 1, 0
          %v4796 = vsel %vm4732, 1, 0
          %v4797 = vsel %vm4733, 1, 0
          %v4798 = vsel %vm4734, 1, 0
          %v4799 = vsel %vm4735, 1, 0
          %v4800 = vsel %vm4736, 1, 0
          %v4801 = vsel %vm4737, 1, 0
          %v4802 = vsel %vm4738, 1, 0
          %v4803 = vsel %vm4739, 1, 0
          %v4804 = vsel %vm4740, 1, 0
          %v4805 = vsel %vm4741, 1, 0
          %v4806 = vsel %vm4742, 1, 0
          %v4807 = vsel %vm4743, 1, 0
          %v4808 = vsel %vm4744, 1, 0
          %v4809 = vsel %vm4745, 1, 0
          %v4810 = vsel %vm4746, 1, 0
          %v4811 = vsel %vm4747, 1, 0
          %v4812 = vsel %vm4748, 1, 0
          %v4813 = vsel %vm4749, 1, 0
          %v4814 = vsel %vm4750, 1, 0
          %v4815 = vsel %vm4751, 1, 0
          %v4816 = vsel %vm4752, 1, 0
          %v4817 = vsel %vm4753, 1, 0
          %v4818 = vsel %vm4754, 1, 0
          %v4819 = vsel %vm4755, 1, 0
          %v4820 = vsel %vm4756, 1, 0
          %v4821 = vsel %vm4757, 1, 0
          %v4822 = vsel %vm4758, 1, 0
          %v4823 = vsel %vm4759, 1, 0
          %v4824 = vsel %vm4760, 1, 0
          %v4825 = vsel %vm4761, 1, 0
          %v4826 = vsel %vm4762, 1, 0
          %v4827 = vsel %vm4763, 1, 0
          %v4828 = vsel %vm4764, 1, 0
          %v4829 = vsel %vm4765, 1, 0
          %v4830 = vsel %vm4766, 1, 0
          %vm4831 = vcmp.eq.s32.totalorder %v4767, 1
          %vm4832 = vcmp.eq.s32.totalorder %v4768, 1
          %vm4833 = vcmp.eq.s32.totalorder %v4769, 1
          %vm4834 = vcmp.eq.s32.totalorder %v4770, 1
          %vm4835 = vcmp.eq.s32.totalorder %v4771, 1
          %vm4836 = vcmp.eq.s32.totalorder %v4772, 1
          %vm4837 = vcmp.eq.s32.totalorder %v4773, 1
          %vm4838 = vcmp.eq.s32.totalorder %v4774, 1
          %vm4839 = vcmp.eq.s32.totalorder %v4775, 1
          %vm4840 = vcmp.eq.s32.totalorder %v4776, 1
          %vm4841 = vcmp.eq.s32.totalorder %v4777, 1
          %vm4842 = vcmp.eq.s32.totalorder %v4778, 1
          %vm4843 = vcmp.eq.s32.totalorder %v4779, 1
          %vm4844 = vcmp.eq.s32.totalorder %v4780, 1
          %vm4845 = vcmp.eq.s32.totalorder %v4781, 1
          %vm4846 = vcmp.eq.s32.totalorder %v4782, 1
          %vm4847 = vcmp.eq.s32.totalorder %v4783, 1
          %vm4848 = vcmp.eq.s32.totalorder %v4784, 1
          %vm4849 = vcmp.eq.s32.totalorder %v4785, 1
          %vm4850 = vcmp.eq.s32.totalorder %v4786, 1
          %vm4851 = vcmp.eq.s32.totalorder %v4787, 1
          %vm4852 = vcmp.eq.s32.totalorder %v4788, 1
          %vm4853 = vcmp.eq.s32.totalorder %v4789, 1
          %vm4854 = vcmp.eq.s32.totalorder %v4790, 1
          %vm4855 = vcmp.eq.s32.totalorder %v4791, 1
          %vm4856 = vcmp.eq.s32.totalorder %v4792, 1
          %vm4857 = vcmp.eq.s32.totalorder %v4793, 1
          %vm4858 = vcmp.eq.s32.totalorder %v4794, 1
          %vm4859 = vcmp.eq.s32.totalorder %v4795, 1
          %vm4860 = vcmp.eq.s32.totalorder %v4796, 1
          %vm4861 = vcmp.eq.s32.totalorder %v4797, 1
          %vm4862 = vcmp.eq.s32.totalorder %v4798, 1
          %vm4863 = vcmp.eq.s32.totalorder %v4799, 1
          %vm4864 = vcmp.eq.s32.totalorder %v4800, 1
          %vm4865 = vcmp.eq.s32.totalorder %v4801, 1
          %vm4866 = vcmp.eq.s32.totalorder %v4802, 1
          %vm4867 = vcmp.eq.s32.totalorder %v4803, 1
          %vm4868 = vcmp.eq.s32.totalorder %v4804, 1
          %vm4869 = vcmp.eq.s32.totalorder %v4805, 1
          %vm4870 = vcmp.eq.s32.totalorder %v4806, 1
          %vm4871 = vcmp.eq.s32.totalorder %v4807, 1
          %vm4872 = vcmp.eq.s32.totalorder %v4808, 1
          %vm4873 = vcmp.eq.s32.totalorder %v4809, 1
          %vm4874 = vcmp.eq.s32.totalorder %v4810, 1
          %vm4875 = vcmp.eq.s32.totalorder %v4811, 1
          %vm4876 = vcmp.eq.s32.totalorder %v4812, 1
          %vm4877 = vcmp.eq.s32.totalorder %v4813, 1
          %vm4878 = vcmp.eq.s32.totalorder %v4814, 1
          %vm4879 = vcmp.eq.s32.totalorder %v4815, 1
          %vm4880 = vcmp.eq.s32.totalorder %v4816, 1
          %vm4881 = vcmp.eq.s32.totalorder %v4817, 1
          %vm4882 = vcmp.eq.s32.totalorder %v4818, 1
          %vm4883 = vcmp.eq.s32.totalorder %v4819, 1
          %vm4884 = vcmp.eq.s32.totalorder %v4820, 1
          %vm4885 = vcmp.eq.s32.totalorder %v4821, 1
          %vm4886 = vcmp.eq.s32.totalorder %v4822, 1
          %vm4887 = vcmp.eq.s32.totalorder %v4823, 1
          %vm4888 = vcmp.eq.s32.totalorder %v4824, 1
          %vm4889 = vcmp.eq.s32.totalorder %v4825, 1
          %vm4890 = vcmp.eq.s32.totalorder %v4826, 1
          %vm4891 = vcmp.eq.s32.totalorder %v4827, 1
          %vm4892 = vcmp.eq.s32.totalorder %v4828, 1
          %vm4893 = vcmp.eq.s32.totalorder %v4829, 1
          %vm4894 = vcmp.eq.s32.totalorder %v4830, 1
          %v4895 = vsel %vm4831, %v3590, -inf
          %v4896 = vsel %vm4831, %v3591, -inf
          %v4897 = vsel %vm4831, %v3592, -inf
          %v4898 = vsel %vm4831, %v3593, -inf
          %v4899 = vsel %vm4831, %v3594, -inf
          %v4900 = vsel %vm4831, %v3595, -inf
          %v4901 = vsel %vm4831, %v3596, -inf
          %v4902 = vsel %vm4831, %v3597, -inf
          %v4903 = vsel %vm4832, %v3598, -inf
          %v4904 = vsel %vm4832, %v3599, -inf
          %v4905 = vsel %vm4832, %v3600, -inf
          %v4906 = vsel %vm4832, %v3601, -inf
          %v4907 = vsel %vm4832, %v3602, -inf
          %v4908 = vsel %vm4832, %v3603, -inf
          %v4909 = vsel %vm4832, %v3604, -inf
          %v4910 = vsel %vm4832, %v3605, -inf
          %v4911 = vsel %vm4833, %v3606, -inf
          %v4912 = vsel %vm4833, %v3607, -inf
          %v4913 = vsel %vm4833, %v3608, -inf
          %v4914 = vsel %vm4833, %v3609, -inf
          %v4915 = vsel %vm4833, %v3610, -inf
          %v4916 = vsel %vm4833, %v3611, -inf
          %v4917 = vsel %vm4833, %v3612, -inf
          %v4918 = vsel %vm4833, %v3613, -inf
          %v4919 = vsel %vm4834, %v3614, -inf
          %v4920 = vsel %vm4834, %v3615, -inf
          %v4921 = vsel %vm4834, %v3616, -inf
          %v4922 = vsel %vm4834, %v3617, -inf
          %v4923 = vsel %vm4834, %v3618, -inf
          %v4924 = vsel %vm4834, %v3619, -inf
          %v4925 = vsel %vm4834, %v3620, -inf
          %v4926 = vsel %vm4834, %v3621, -inf
          %v4927 = vsel %vm4835, %v3622, -inf
          %v4928 = vsel %vm4835, %v3623, -inf
          %v4929 = vsel %vm4835, %v3624, -inf
          %v4930 = vsel %vm4835, %v3625, -inf
          %v4931 = vsel %vm4835, %v3626, -inf
          %v4932 = vsel %vm4835, %v3627, -inf
          %v4933 = vsel %vm4835, %v3628, -inf
          %v4934 = vsel %vm4835, %v3629, -inf
          %v4935 = vsel %vm4836, %v3630, -inf
          %v4936 = vsel %vm4836, %v3631, -inf
          %v4937 = vsel %vm4836, %v3632, -inf
          %v4938 = vsel %vm4836, %v3633, -inf
          %v4939 = vsel %vm4836, %v3634, -inf
          %v4940 = vsel %vm4836, %v3635, -inf
          %v4941 = vsel %vm4836, %v3636, -inf
          %v4942 = vsel %vm4836, %v3637, -inf
          %v4943 = vsel %vm4837, %v3638, -inf
          %v4944 = vsel %vm4837, %v3639, -inf
          %v4945 = vsel %vm4837, %v3640, -inf
          %v4946 = vsel %vm4837, %v3641, -inf
          %v4947 = vsel %vm4837, %v3642, -inf
          %v4948 = vsel %vm4837, %v3643, -inf
          %v4949 = vsel %vm4837, %v3644, -inf
          %v4950 = vsel %vm4837, %v3645, -inf
          %v4951 = vsel %vm4838, %v3646, -inf
          %v4952 = vsel %vm4838, %v3647, -inf
          %v4953 = vsel %vm4838, %v3648, -inf
          %v4954 = vsel %vm4838, %v3649, -inf
          %v4955 = vsel %vm4838, %v3650, -inf
          %v4956 = vsel %vm4838, %v3651, -inf
          %v4957 = vsel %vm4838, %v3652, -inf
          %v4958 = vsel %vm4838, %v3653, -inf
          %v4959 = vsel %vm4839, %v3654, -inf
          %v4960 = vsel %vm4839, %v3655, -inf
          %v4961 = vsel %vm4839, %v3656, -inf
          %v4962 = vsel %vm4839, %v3657, -inf
          %v4963 = vsel %vm4839, %v3658, -inf
          %v4964 = vsel %vm4839, %v3659, -inf
          %v4965 = vsel %vm4839, %v3660, -inf
          %v4966 = vsel %vm4839, %v3661, -inf
          %v4967 = vsel %vm4840, %v3662, -inf
          %v4968 = vsel %vm4840, %v3663, -inf
          %v4969 = vsel %vm4840, %v3664, -inf
          %v4970 = vsel %vm4840, %v3665, -inf
          %v4971 = vsel %vm4840, %v3666, -inf
          %v4972 = vsel %vm4840, %v3667, -inf
          %v4973 = vsel %vm4840, %v3668, -inf
          %v4974 = vsel %vm4840, %v3669, -inf
          %v4975 = vsel %vm4841, %v3670, -inf
          %v4976 = vsel %vm4841, %v3671, -inf
          %v4977 = vsel %vm4841, %v3672, -inf
          %v4978 = vsel %vm4841, %v3673, -inf
          %v4979 = vsel %vm4841, %v3674, -inf
          %v4980 = vsel %vm4841, %v3675, -inf
          %v4981 = vsel %vm4841, %v3676, -inf
          %v4982 = vsel %vm4841, %v3677, -inf
          %v4983 = vsel %vm4842, %v3678, -inf
          %v4984 = vsel %vm4842, %v3679, -inf
          %v4985 = vsel %vm4842, %v3680, -inf
          %v4986 = vsel %vm4842, %v3681, -inf
          %v4987 = vsel %vm4842, %v3682, -inf
          %v4988 = vsel %vm4842, %v3683, -inf
          %v4989 = vsel %vm4842, %v3684, -inf
          %v4990 = vsel %vm4842, %v3685, -inf
          %v4991 = vsel %vm4843, %v3686, -inf
          %v4992 = vsel %vm4843, %v3687, -inf
          %v4993 = vsel %vm4843, %v3688, -inf
          %v4994 = vsel %vm4843, %v3689, -inf
          %v4995 = vsel %vm4843, %v3690, -inf
          %v4996 = vsel %vm4843, %v3691, -inf
          %v4997 = vsel %vm4843, %v3692, -inf
          %v4998 = vsel %vm4843, %v3693, -inf
          %v4999 = vsel %vm4844, %v3694, -inf
          %v5000 = vsel %vm4844, %v3695, -inf
          %v5001 = vsel %vm4844, %v3696, -inf
          %v5002 = vsel %vm4844, %v3697, -inf
          %v5003 = vsel %vm4844, %v3698, -inf
          %v5004 = vsel %vm4844, %v3699, -inf
          %v5005 = vsel %vm4844, %v3700, -inf
          %v5006 = vsel %vm4844, %v3701, -inf
          %v5007 = vsel %vm4845, %v3702, -inf
          %v5008 = vsel %vm4845, %v3703, -inf
          %v5009 = vsel %vm4845, %v3704, -inf
          %v5010 = vsel %vm4845, %v3705, -inf
          %v5011 = vsel %vm4845, %v3706, -inf
          %v5012 = vsel %vm4845, %v3707, -inf
          %v5013 = vsel %vm4845, %v3708, -inf
          %v5014 = vsel %vm4845, %v3709, -inf
          %v5015 = vsel %vm4846, %v3710, -inf
          %v5016 = vsel %vm4846, %v3711, -inf
          %v5017 = vsel %vm4846, %v3712, -inf
          %v5018 = vsel %vm4846, %v3713, -inf
          %v5019 = vsel %vm4846, %v3714, -inf
          %v5020 = vsel %vm4846, %v3715, -inf
          %v5021 = vsel %vm4846, %v3716, -inf
          %v5022 = vsel %vm4846, %v3717, -inf
          %v5023 = vsel %vm4847, %v3718, -inf
          %v5024 = vsel %vm4847, %v3719, -inf
          %v5025 = vsel %vm4847, %v3720, -inf
          %v5026 = vsel %vm4847, %v3721, -inf
          %v5027 = vsel %vm4847, %v3722, -inf
          %v5028 = vsel %vm4847, %v3723, -inf
          %v5029 = vsel %vm4847, %v3724, -inf
          %v5030 = vsel %vm4847, %v3725, -inf
          %v5031 = vsel %vm4848, %v3726, -inf
          %v5032 = vsel %vm4848, %v3727, -inf
          %v5033 = vsel %vm4848, %v3728, -inf
          %v5034 = vsel %vm4848, %v3729, -inf
          %v5035 = vsel %vm4848, %v3730, -inf
          %v5036 = vsel %vm4848, %v3731, -inf
          %v5037 = vsel %vm4848, %v3732, -inf
          %v5038 = vsel %vm4848, %v3733, -inf
          %v5039 = vsel %vm4849, %v3734, -inf
          %v5040 = vsel %vm4849, %v3735, -inf
          %v5041 = vsel %vm4849, %v3736, -inf
          %v5042 = vsel %vm4849, %v3737, -inf
          %v5043 = vsel %vm4849, %v3738, -inf
          %v5044 = vsel %vm4849, %v3739, -inf
          %v5045 = vsel %vm4849, %v3740, -inf
          %v5046 = vsel %vm4849, %v3741, -inf
          %v5047 = vsel %vm4850, %v3742, -inf
          %v5048 = vsel %vm4850, %v3743, -inf
          %v5049 = vsel %vm4850, %v3744, -inf
          %v5050 = vsel %vm4850, %v3745, -inf
          %v5051 = vsel %vm4850, %v3746, -inf
          %v5052 = vsel %vm4850, %v3747, -inf
          %v5053 = vsel %vm4850, %v3748, -inf
          %v5054 = vsel %vm4850, %v3749, -inf
          %v5055 = vsel %vm4851, %v3750, -inf
          %v5056 = vsel %vm4851, %v3751, -inf
          %v5057 = vsel %vm4851, %v3752, -inf
          %v5058 = vsel %vm4851, %v3753, -inf
          %v5059 = vsel %vm4851, %v3754, -inf
          %v5060 = vsel %vm4851, %v3755, -inf
          %v5061 = vsel %vm4851, %v3756, -inf
          %v5062 = vsel %vm4851, %v3757, -inf
          %v5063 = vsel %vm4852, %v3758, -inf
          %v5064 = vsel %vm4852, %v3759, -inf
          %v5065 = vsel %vm4852, %v3760, -inf
          %v5066 = vsel %vm4852, %v3761, -inf
          %v5067 = vsel %vm4852, %v3762, -inf
          %v5068 = vsel %vm4852, %v3763, -inf
          %v5069 = vsel %vm4852, %v3764, -inf
          %v5070 = vsel %vm4852, %v3765, -inf
          %v5071 = vsel %vm4853, %v3766, -inf
          %v5072 = vsel %vm4853, %v3767, -inf
          %v5073 = vsel %vm4853, %v3768, -inf
          %v5074 = vsel %vm4853, %v3769, -inf
          %v5075 = vsel %vm4853, %v3770, -inf
          %v5076 = vsel %vm4853, %v3771, -inf
          %v5077 = vsel %vm4853, %v3772, -inf
          %v5078 = vsel %vm4853, %v3773, -inf
          %v5079 = vsel %vm4854, %v3774, -inf
          %v5080 = vsel %vm4854, %v3775, -inf
          %v5081 = vsel %vm4854, %v3776, -inf
          %v5082 = vsel %vm4854, %v3777, -inf
          %v5083 = vsel %vm4854, %v3778, -inf
          %v5084 = vsel %vm4854, %v3779, -inf
          %v5085 = vsel %vm4854, %v3780, -inf
          %v5086 = vsel %vm4854, %v3781, -inf
          %v5087 = vsel %vm4855, %v3782, -inf
          %v5088 = vsel %vm4855, %v3783, -inf
          %v5089 = vsel %vm4855, %v3784, -inf
          %v5090 = vsel %vm4855, %v3785, -inf
          %v5091 = vsel %vm4855, %v3786, -inf
          %v5092 = vsel %vm4855, %v3787, -inf
          %v5093 = vsel %vm4855, %v3788, -inf
          %v5094 = vsel %vm4855, %v3789, -inf
          %v5095 = vsel %vm4856, %v3790, -inf
          %v5096 = vsel %vm4856, %v3791, -inf
          %v5097 = vsel %vm4856, %v3792, -inf
          %v5098 = vsel %vm4856, %v3793, -inf
          %v5099 = vsel %vm4856, %v3794, -inf
          %v5100 = vsel %vm4856, %v3795, -inf
          %v5101 = vsel %vm4856, %v3796, -inf
          %v5102 = vsel %vm4856, %v3797, -inf
          %v5103 = vsel %vm4857, %v3798, -inf
          %v5104 = vsel %vm4857, %v3799, -inf
          %v5105 = vsel %vm4857, %v3800, -inf
          %v5106 = vsel %vm4857, %v3801, -inf
          %v5107 = vsel %vm4857, %v3802, -inf
          %v5108 = vsel %vm4857, %v3803, -inf
          %v5109 = vsel %vm4857, %v3804, -inf
          %v5110 = vsel %vm4857, %v3805, -inf
          %v5111 = vsel %vm4858, %v3806, -inf
          %v5112 = vsel %vm4858, %v3807, -inf
          %v5113 = vsel %vm4858, %v3808, -inf
          %v5114 = vsel %vm4858, %v3809, -inf
          %v5115 = vsel %vm4858, %v3810, -inf
          %v5116 = vsel %vm4858, %v3811, -inf
          %v5117 = vsel %vm4858, %v3812, -inf
          %v5118 = vsel %vm4858, %v3813, -inf
          %v5119 = vsel %vm4859, %v3814, -inf
          %v5120 = vsel %vm4859, %v3815, -inf
          %v5121 = vsel %vm4859, %v3816, -inf
          %v5122 = vsel %vm4859, %v3817, -inf
          %v5123 = vsel %vm4859, %v3818, -inf
          %v5124 = vsel %vm4859, %v3819, -inf
          %v5125 = vsel %vm4859, %v3820, -inf
          %v5126 = vsel %vm4859, %v3821, -inf
          %v5127 = vsel %vm4860, %v3822, -inf
          %v5128 = vsel %vm4860, %v3823, -inf
          %v5129 = vsel %vm4860, %v3824, -inf
          %v5130 = vsel %vm4860, %v3825, -inf
          %v5131 = vsel %vm4860, %v3826, -inf
          %v5132 = vsel %vm4860, %v3827, -inf
          %v5133 = vsel %vm4860, %v3828, -inf
          %v5134 = vsel %vm4860, %v3829, -inf
          %v5135 = vsel %vm4861, %v3830, -inf
          %v5136 = vsel %vm4861, %v3831, -inf
          %v5137 = vsel %vm4861, %v3832, -inf
          %v5138 = vsel %vm4861, %v3833, -inf
          %v5139 = vsel %vm4861, %v3834, -inf
          %v5140 = vsel %vm4861, %v3835, -inf
          %v5141 = vsel %vm4861, %v3836, -inf
          %v5142 = vsel %vm4861, %v3837, -inf
          %v5143 = vsel %vm4862, %v3838, -inf
          %v5144 = vsel %vm4862, %v3839, -inf
          %v5145 = vsel %vm4862, %v3840, -inf
          %v5146 = vsel %vm4862, %v3841, -inf
          %v5147 = vsel %vm4862, %v3842, -inf
          %v5148 = vsel %vm4862, %v3843, -inf
          %v5149 = vsel %vm4862, %v3844, -inf
          %v5150 = vsel %vm4862, %v3845, -inf
          %v5151 = vsel %vm4863, %v3846, -inf
          %v5152 = vsel %vm4863, %v3847, -inf
          %v5153 = vsel %vm4863, %v3848, -inf
          %v5154 = vsel %vm4863, %v3849, -inf
          %v5155 = vsel %vm4863, %v3850, -inf
          %v5156 = vsel %vm4863, %v3851, -inf
          %v5157 = vsel %vm4863, %v3852, -inf
          %v5158 = vsel %vm4863, %v3853, -inf
          %v5159 = vsel %vm4864, %v3854, -inf
          %v5160 = vsel %vm4864, %v3855, -inf
          %v5161 = vsel %vm4864, %v3856, -inf
          %v5162 = vsel %vm4864, %v3857, -inf
          %v5163 = vsel %vm4864, %v3858, -inf
          %v5164 = vsel %vm4864, %v3859, -inf
          %v5165 = vsel %vm4864, %v3860, -inf
          %v5166 = vsel %vm4864, %v3861, -inf
          %v5167 = vsel %vm4865, %v3862, -inf
          %v5168 = vsel %vm4865, %v3863, -inf
          %v5169 = vsel %vm4865, %v3864, -inf
          %v5170 = vsel %vm4865, %v3865, -inf
          %v5171 = vsel %vm4865, %v3866, -inf
          %v5172 = vsel %vm4865, %v3867, -inf
          %v5173 = vsel %vm4865, %v3868, -inf
          %v5174 = vsel %vm4865, %v3869, -inf
          %v5175 = vsel %vm4866, %v3870, -inf
          %v5176 = vsel %vm4866, %v3871, -inf
          %v5177 = vsel %vm4866, %v3872, -inf
          %v5178 = vsel %vm4866, %v3873, -inf
          %v5179 = vsel %vm4866, %v3874, -inf
          %v5180 = vsel %vm4866, %v3875, -inf
          %v5181 = vsel %vm4866, %v3876, -inf
          %v5182 = vsel %vm4866, %v3877, -inf
          %v5183 = vsel %vm4867, %v3878, -inf
          %v5184 = vsel %vm4867, %v3879, -inf
          %v5185 = vsel %vm4867, %v3880, -inf
          %v5186 = vsel %vm4867, %v3881, -inf
          %v5187 = vsel %vm4867, %v3882, -inf
          %v5188 = vsel %vm4867, %v3883, -inf
          %v5189 = vsel %vm4867, %v3884, -inf
          %v5190 = vsel %vm4867, %v3885, -inf
          %v5191 = vsel %vm4868, %v3886, -inf
          %v5192 = vsel %vm4868, %v3887, -inf
          %v5193 = vsel %vm4868, %v3888, -inf
          %v5194 = vsel %vm4868, %v3889, -inf
          %v5195 = vsel %vm4868, %v3890, -inf
          %v5196 = vsel %vm4868, %v3891, -inf
          %v5197 = vsel %vm4868, %v3892, -inf
          %v5198 = vsel %vm4868, %v3893, -inf
          %v5199 = vsel %vm4869, %v3894, -inf
          %v5200 = vsel %vm4869, %v3895, -inf
          %v5201 = vsel %vm4869, %v3896, -inf
          %v5202 = vsel %vm4869, %v3897, -inf
          %v5203 = vsel %vm4869, %v3898, -inf
          %v5204 = vsel %vm4869, %v3899, -inf
          %v5205 = vsel %vm4869, %v3900, -inf
          %v5206 = vsel %vm4869, %v3901, -inf
          %v5207 = vsel %vm4870, %v3902, -inf
          %v5208 = vsel %vm4870, %v3903, -inf
          %v5209 = vsel %vm4870, %v3904, -inf
          %v5210 = vsel %vm4870, %v3905, -inf
          %v5211 = vsel %vm4870, %v3906, -inf
          %v5212 = vsel %vm4870, %v3907, -inf
          %v5213 = vsel %vm4870, %v3908, -inf
          %v5214 = vsel %vm4870, %v3909, -inf
          %v5215 = vsel %vm4871, %v3910, -inf
          %v5216 = vsel %vm4871, %v3911, -inf
          %v5217 = vsel %vm4871, %v3912, -inf
          %v5218 = vsel %vm4871, %v3913, -inf
          %v5219 = vsel %vm4871, %v3914, -inf
          %v5220 = vsel %vm4871, %v3915, -inf
          %v5221 = vsel %vm4871, %v3916, -inf
          %v5222 = vsel %vm4871, %v3917, -inf
          %v5223 = vsel %vm4872, %v3918, -inf
          %v5224 = vsel %vm4872, %v3919, -inf
          %v5225 = vsel %vm4872, %v3920, -inf
          %v5226 = vsel %vm4872, %v3921, -inf
          %v5227 = vsel %vm4872, %v3922, -inf
          %v5228 = vsel %vm4872, %v3923, -inf
          %v5229 = vsel %vm4872, %v3924, -inf
          %v5230 = vsel %vm4872, %v3925, -inf
          %v5231 = vsel %vm4873, %v3926, -inf
          %v5232 = vsel %vm4873, %v3927, -inf
          %v5233 = vsel %vm4873, %v3928, -inf
          %v5234 = vsel %vm4873, %v3929, -inf
          %v5235 = vsel %vm4873, %v3930, -inf
          %v5236 = vsel %vm4873, %v3931, -inf
          %v5237 = vsel %vm4873, %v3932, -inf
          %v5238 = vsel %vm4873, %v3933, -inf
          %v5239 = vsel %vm4874, %v3934, -inf
          %v5240 = vsel %vm4874, %v3935, -inf
          %v5241 = vsel %vm4874, %v3936, -inf
          %v5242 = vsel %vm4874, %v3937, -inf
          %v5243 = vsel %vm4874, %v3938, -inf
          %v5244 = vsel %vm4874, %v3939, -inf
          %v5245 = vsel %vm4874, %v3940, -inf
          %v5246 = vsel %vm4874, %v3941, -inf
          %v5247 = vsel %vm4875, %v3942, -inf
          %v5248 = vsel %vm4875, %v3943, -inf
          %v5249 = vsel %vm4875, %v3944, -inf
          %v5250 = vsel %vm4875, %v3945, -inf
          %v5251 = vsel %vm4875, %v3946, -inf
          %v5252 = vsel %vm4875, %v3947, -inf
          %v5253 = vsel %vm4875, %v3948, -inf
          %v5254 = vsel %vm4875, %v3949, -inf
          %v5255 = vsel %vm4876, %v3950, -inf
          %v5256 = vsel %vm4876, %v3951, -inf
          %v5257 = vsel %vm4876, %v3952, -inf
          %v5258 = vsel %vm4876, %v3953, -inf
          %v5259 = vsel %vm4876, %v3954, -inf
          %v5260 = vsel %vm4876, %v3955, -inf
          %v5261 = vsel %vm4876, %v3956, -inf
          %v5262 = vsel %vm4876, %v3957, -inf
          %v5263 = vsel %vm4877, %v3958, -inf
          %v5264 = vsel %vm4877, %v3959, -inf
          %v5265 = vsel %vm4877, %v3960, -inf
          %v5266 = vsel %vm4877, %v3961, -inf
          %v5267 = vsel %vm4877, %v3962, -inf
          %v5268 = vsel %vm4877, %v3963, -inf
          %v5269 = vsel %vm4877, %v3964, -inf
          %v5270 = vsel %vm4877, %v3965, -inf
          %v5271 = vsel %vm4878, %v3966, -inf
          %v5272 = vsel %vm4878, %v3967, -inf
          %v5273 = vsel %vm4878, %v3968, -inf
          %v5274 = vsel %vm4878, %v3969, -inf
          %v5275 = vsel %vm4878, %v3970, -inf
          %v5276 = vsel %vm4878, %v3971, -inf
          %v5277 = vsel %vm4878, %v3972, -inf
          %v5278 = vsel %vm4878, %v3973, -inf
          %v5279 = vsel %vm4879, %v3974, -inf
          %v5280 = vsel %vm4879, %v3975, -inf
          %v5281 = vsel %vm4879, %v3976, -inf
          %v5282 = vsel %vm4879, %v3977, -inf
          %v5283 = vsel %vm4879, %v3978, -inf
          %v5284 = vsel %vm4879, %v3979, -inf
          %v5285 = vsel %vm4879, %v3980, -inf
          %v5286 = vsel %vm4879, %v3981, -inf
          %v5287 = vsel %vm4880, %v3982, -inf
          %v5288 = vsel %vm4880, %v3983, -inf
          %v5289 = vsel %vm4880, %v3984, -inf
          %v5290 = vsel %vm4880, %v3985, -inf
          %v5291 = vsel %vm4880, %v3986, -inf
          %v5292 = vsel %vm4880, %v3987, -inf
          %v5293 = vsel %vm4880, %v3988, -inf
          %v5294 = vsel %vm4880, %v3989, -inf
          %v5295 = vsel %vm4881, %v3990, -inf
          %v5296 = vsel %vm4881, %v3991, -inf
          %v5297 = vsel %vm4881, %v3992, -inf
          %v5298 = vsel %vm4881, %v3993, -inf
          %v5299 = vsel %vm4881, %v3994, -inf
          %v5300 = vsel %vm4881, %v3995, -inf
          %v5301 = vsel %vm4881, %v3996, -inf
          %v5302 = vsel %vm4881, %v3997, -inf
          %v5303 = vsel %vm4882, %v3998, -inf
          %v5304 = vsel %vm4882, %v3999, -inf
          %v5305 = vsel %vm4882, %v4000, -inf
          %v5306 = vsel %vm4882, %v4001, -inf
          %v5307 = vsel %vm4882, %v4002, -inf
          %v5308 = vsel %vm4882, %v4003, -inf
          %v5309 = vsel %vm4882, %v4004, -inf
          %v5310 = vsel %vm4882, %v4005, -inf
          %v5311 = vsel %vm4883, %v4006, -inf
          %v5312 = vsel %vm4883, %v4007, -inf
          %v5313 = vsel %vm4883, %v4008, -inf
          %v5314 = vsel %vm4883, %v4009, -inf
          %v5315 = vsel %vm4883, %v4010, -inf
          %v5316 = vsel %vm4883, %v4011, -inf
          %v5317 = vsel %vm4883, %v4012, -inf
          %v5318 = vsel %vm4883, %v4013, -inf
          %v5319 = vsel %vm4884, %v4014, -inf
          %v5320 = vsel %vm4884, %v4015, -inf
          %v5321 = vsel %vm4884, %v4016, -inf
          %v5322 = vsel %vm4884, %v4017, -inf
          %v5323 = vsel %vm4884, %v4018, -inf
          %v5324 = vsel %vm4884, %v4019, -inf
          %v5325 = vsel %vm4884, %v4020, -inf
          %v5326 = vsel %vm4884, %v4021, -inf
          %v5327 = vsel %vm4885, %v4022, -inf
          %v5328 = vsel %vm4885, %v4023, -inf
          %v5329 = vsel %vm4885, %v4024, -inf
          %v5330 = vsel %vm4885, %v4025, -inf
          %v5331 = vsel %vm4885, %v4026, -inf
          %v5332 = vsel %vm4885, %v4027, -inf
          %v5333 = vsel %vm4885, %v4028, -inf
          %v5334 = vsel %vm4885, %v4029, -inf
          %v5335 = vsel %vm4886, %v4030, -inf
          %v5336 = vsel %vm4886, %v4031, -inf
          %v5337 = vsel %vm4886, %v4032, -inf
          %v5338 = vsel %vm4886, %v4033, -inf
          %v5339 = vsel %vm4886, %v4034, -inf
          %v5340 = vsel %vm4886, %v4035, -inf
          %v5341 = vsel %vm4886, %v4036, -inf
          %v5342 = vsel %vm4886, %v4037, -inf
          %v5343 = vsel %vm4887, %v4038, -inf
          %v5344 = vsel %vm4887, %v4039, -inf
          %v5345 = vsel %vm4887, %v4040, -inf
          %v5346 = vsel %vm4887, %v4041, -inf
          %v5347 = vsel %vm4887, %v4042, -inf
          %v5348 = vsel %vm4887, %v4043, -inf
          %v5349 = vsel %vm4887, %v4044, -inf
          %v5350 = vsel %vm4887, %v4045, -inf
          %v5351 = vsel %vm4888, %v4046, -inf
          %v5352 = vsel %vm4888, %v4047, -inf
          %v5353 = vsel %vm4888, %v4048, -inf
          %v5354 = vsel %vm4888, %v4049, -inf
          %v5355 = vsel %vm4888, %v4050, -inf
          %v5356 = vsel %vm4888, %v4051, -inf
          %v5357 = vsel %vm4888, %v4052, -inf
          %v5358 = vsel %vm4888, %v4053, -inf
          %v5359 = vsel %vm4889, %v4054, -inf
          %v5360 = vsel %vm4889, %v4055, -inf
          %v5361 = vsel %vm4889, %v4056, -inf
          %v5362 = vsel %vm4889, %v4057, -inf
          %v5363 = vsel %vm4889, %v4058, -inf
          %v5364 = vsel %vm4889, %v4059, -inf
          %v5365 = vsel %vm4889, %v4060, -inf
          %v5366 = vsel %vm4889, %v4061, -inf
          %v5367 = vsel %vm4890, %v4062, -inf
          %v5368 = vsel %vm4890, %v4063, -inf
          %v5369 = vsel %vm4890, %v4064, -inf
          %v5370 = vsel %vm4890, %v4065, -inf
          %v5371 = vsel %vm4890, %v4066, -inf
          %v5372 = vsel %vm4890, %v4067, -inf
          %v5373 = vsel %vm4890, %v4068, -inf
          %v5374 = vsel %vm4890, %v4069, -inf
          %v5375 = vsel %vm4891, %v4070, -inf
          %v5376 = vsel %vm4891, %v4071, -inf
          %v5377 = vsel %vm4891, %v4072, -inf
          %v5378 = vsel %vm4891, %v4073, -inf
          %v5379 = vsel %vm4891, %v4074, -inf
          %v5380 = vsel %vm4891, %v4075, -inf
          %v5381 = vsel %vm4891, %v4076, -inf
          %v5382 = vsel %vm4891, %v4077, -inf
          %v5383 = vsel %vm4892, %v4078, -inf
          %v5384 = vsel %vm4892, %v4079, -inf
          %v5385 = vsel %vm4892, %v4080, -inf
          %v5386 = vsel %vm4892, %v4081, -inf
          %v5387 = vsel %vm4892, %v4082, -inf
          %v5388 = vsel %vm4892, %v4083, -inf
          %v5389 = vsel %vm4892, %v4084, -inf
          %v5390 = vsel %vm4892, %v4085, -inf
          %v5391 = vsel %vm4893, %v4086, -inf
          %v5392 = vsel %vm4893, %v4087, -inf
          %v5393 = vsel %vm4893, %v4088, -inf
          %v5394 = vsel %vm4893, %v4089, -inf
          %v5395 = vsel %vm4893, %v4090, -inf
          %v5396 = vsel %vm4893, %v4091, -inf
          %v5397 = vsel %vm4893, %v4092, -inf
          %v5398 = vsel %vm4893, %v4093, -inf
          %v5399 = vsel %vm4894, %v4094, -inf
          %v5400 = vsel %vm4894, %v4095, -inf
          %v5401 = vsel %vm4894, %v4096, -inf
          %v5402 = vsel %vm4894, %v4097, -inf
          %v5403 = vsel %vm4894, %v4098, -inf
          %v5404 = vsel %vm4894, %v4099, -inf
          %v5405 = vsel %vm4894, %v4100, -inf
          %v5406 = vsel %vm4894, %v4101, -inf
          %v5407 = vld [vmem:[#allocation2] sm:$0xff]
          %v5408 = vld [vmem:[#allocation2 + $0x8] sm:$0xff]
          %v5409 = vld [vmem:[#allocation2 + $0x10] sm:$0xff]
          %v5410 = vld [vmem:[#allocation2 + $0x18] sm:$0xff]
          %v5411 = vld [vmem:[#allocation2 + $0x20] sm:$0xff]
          %v5412 = vld [vmem:[#allocation2 + $0x28] sm:$0xff]
          %v5413 = vld [vmem:[#allocation2 + $0x30] sm:$0xff]
          %v5414 = vld [vmem:[#allocation2 + $0x38] sm:$0xff]
          %v5415 = vmax.f32 %v4895, %v5151
          %v5416 = vmax.f32 %v4896, %v5152
          %v5417 = vmax.f32 %v4897, %v5153
          %v5418 = vmax.f32 %v4898, %v5154
          %v5419 = vmax.f32 %v4899, %v5155
          %v5420 = vmax.f32 %v4900, %v5156
          %v5421 = vmax.f32 %v4901, %v5157
          %v5422 = vmax.f32 %v4902, %v5158
          %v5423 = vmax.f32 %v4903, %v5159
          %v5424 = vmax.f32 %v4904, %v5160
          %v5425 = vmax.f32 %v4905, %v5161
          %v5426 = vmax.f32 %v4906, %v5162
          %v5427 = vmax.f32 %v4907, %v5163
          %v5428 = vmax.f32 %v4908, %v5164
          %v5429 = vmax.f32 %v4909, %v5165
          %v5430 = vmax.f32 %v4910, %v5166
          %v5431 = vmax.f32 %v4911, %v5167
          %v5432 = vmax.f32 %v4912, %v5168
          %v5433 = vmax.f32 %v4913, %v5169
          %v5434 = vmax.f32 %v4914, %v5170
          %v5435 = vmax.f32 %v4915, %v5171
          %v5436 = vmax.f32 %v4916, %v5172
          %v5437 = vmax.f32 %v4917, %v5173
          %v5438 = vmax.f32 %v4918, %v5174
          %v5439 = vmax.f32 %v4919, %v5175
          %v5440 = vmax.f32 %v4920, %v5176
          %v5441 = vmax.f32 %v4921, %v5177
          %v5442 = vmax.f32 %v4922, %v5178
          %v5443 = vmax.f32 %v4923, %v5179
          %v5444 = vmax.f32 %v4924, %v5180
          %v5445 = vmax.f32 %v4925, %v5181
          %v5446 = vmax.f32 %v4926, %v5182
          %v5447 = vmax.f32 %v4927, %v5183
          %v5448 = vmax.f32 %v4928, %v5184
          %v5449 = vmax.f32 %v4929, %v5185
          %v5450 = vmax.f32 %v4930, %v5186
          %v5451 = vmax.f32 %v4931, %v5187
          %v5452 = vmax.f32 %v4932, %v5188
          %v5453 = vmax.f32 %v4933, %v5189
          %v5454 = vmax.f32 %v4934, %v5190
          %v5455 = vmax.f32 %v4935, %v5191
          %v5456 = vmax.f32 %v4936, %v5192
          %v5457 = vmax.f32 %v4937, %v5193
          %v5458 = vmax.f32 %v4938, %v5194
          %v5459 = vmax.f32 %v4939, %v5195
          %v5460 = vmax.f32 %v4940, %v5196
          %v5461 = vmax.f32 %v4941, %v5197
          %v5462 = vmax.f32 %v4942, %v5198
          %v5463 = vmax.f32 %v4943, %v5199
          %v5464 = vmax.f32 %v4944, %v5200
          %v5465 = vmax.f32 %v4945, %v5201
          %v5466 = vmax.f32 %v4946, %v5202
          %v5467 = vmax.f32 %v4947, %v5203
          %v5468 = vmax.f32 %v4948, %v5204
          %v5469 = vmax.f32 %v4949, %v5205
          %v5470 = vmax.f32 %v4950, %v5206
          %v5471 = vmax.f32 %v4951, %v5207
          %v5472 = vmax.f32 %v4952, %v5208
          %v5473 = vmax.f32 %v4953, %v5209
          %v5474 = vmax.f32 %v4954, %v5210
          %v5475 = vmax.f32 %v4955, %v5211
          %v5476 = vmax.f32 %v4956, %v5212
          %v5477 = vmax.f32 %v4957, %v5213
          %v5478 = vmax.f32 %v4958, %v5214
          %v5479 = vmax.f32 %v4959, %v5215
          %v5480 = vmax.f32 %v4960, %v5216
          %v5481 = vmax.f32 %v4961, %v5217
          %v5482 = vmax.f32 %v4962, %v5218
          %v5483 = vmax.f32 %v4963, %v5219
          %v5484 = vmax.f32 %v4964, %v5220
          %v5485 = vmax.f32 %v4965, %v5221
          %v5486 = vmax.f32 %v4966, %v5222
          %v5487 = vmax.f32 %v4967, %v5223
          %v5488 = vmax.f32 %v4968, %v5224
          %v5489 = vmax.f32 %v4969, %v5225
          %v5490 = vmax.f32 %v4970, %v5226
          %v5491 = vmax.f32 %v4971, %v5227
          %v5492 = vmax.f32 %v4972, %v5228
          %v5493 = vmax.f32 %v4973, %v5229
          %v5494 = vmax.f32 %v4974, %v5230
          %v5495 = vmax.f32 %v4975, %v5231
          %v5496 = vmax.f32 %v4976, %v5232
          %v5497 = vmax.f32 %v4977, %v5233
          %v5498 = vmax.f32 %v4978, %v5234
          %v5499 = vmax.f32 %v4979, %v5235
          %v5500 = vmax.f32 %v4980, %v5236
          %v5501 = vmax.f32 %v4981, %v5237
          %v5502 = vmax.f32 %v4982, %v5238
          %v5503 = vmax.f32 %v4983, %v5239
          %v5504 = vmax.f32 %v4984, %v5240
          %v5505 = vmax.f32 %v4985, %v5241
          %v5506 = vmax.f32 %v4986, %v5242
          %v5507 = vmax.f32 %v4987, %v5243
          %v5508 = vmax.f32 %v4988, %v5244
          %v5509 = vmax.f32 %v4989, %v5245
          %v5510 = vmax.f32 %v4990, %v5246
          %v5511 = vmax.f32 %v4991, %v5247
          %v5512 = vmax.f32 %v4992, %v5248
          %v5513 = vmax.f32 %v4993, %v5249
          %v5514 = vmax.f32 %v4994, %v5250
          %v5515 = vmax.f32 %v4995, %v5251
          %v5516 = vmax.f32 %v4996, %v5252
          %v5517 = vmax.f32 %v4997, %v5253
          %v5518 = vmax.f32 %v4998, %v5254
          %v5519 = vmax.f32 %v4999, %v5255
          %v5520 = vmax.f32 %v5000, %v5256
          %v5521 = vmax.f32 %v5001, %v5257
          %v5522 = vmax.f32 %v5002, %v5258
          %v5523 = vmax.f32 %v5003, %v5259
          %v5524 = vmax.f32 %v5004, %v5260
          %v5525 = vmax.f32 %v5005, %v5261
          %v5526 = vmax.f32 %v5006, %v5262
          %v5527 = vmax.f32 %v5007, %v5263
          %v5528 = vmax.f32 %v5008, %v5264
          %v5529 = vmax.f32 %v5009, %v5265
          %v5530 = vmax.f32 %v5010, %v5266
          %v5531 = vmax.f32 %v5011, %v5267
          %v5532 = vmax.f32 %v5012, %v5268
          %v5533 = vmax.f32 %v5013, %v5269
          %v5534 = vmax.f32 %v5014, %v5270
          %v5535 = vmax.f32 %v5015, %v5271
          %v5536 = vmax.f32 %v5016, %v5272
          %v5537 = vmax.f32 %v5017, %v5273
          %v5538 = vmax.f32 %v5018, %v5274
          %v5539 = vmax.f32 %v5019, %v5275
          %v5540 = vmax.f32 %v5020, %v5276
          %v5541 = vmax.f32 %v5021, %v5277
          %v5542 = vmax.f32 %v5022, %v5278
          %v5543 = vmax.f32 %v5023, %v5279
          %v5544 = vmax.f32 %v5024, %v5280
          %v5545 = vmax.f32 %v5025, %v5281
          %v5546 = vmax.f32 %v5026, %v5282
          %v5547 = vmax.f32 %v5027, %v5283
          %v5548 = vmax.f32 %v5028, %v5284
          %v5549 = vmax.f32 %v5029, %v5285
          %v5550 = vmax.f32 %v5030, %v5286
          %v5551 = vmax.f32 %v5031, %v5287
          %v5552 = vmax.f32 %v5032, %v5288
          %v5553 = vmax.f32 %v5033, %v5289
          %v5554 = vmax.f32 %v5034, %v5290
          %v5555 = vmax.f32 %v5035, %v5291
          %v5556 = vmax.f32 %v5036, %v5292
          %v5557 = vmax.f32 %v5037, %v5293
          %v5558 = vmax.f32 %v5038, %v5294
          %v5559 = vmax.f32 %v5039, %v5295
          %v5560 = vmax.f32 %v5040, %v5296
          %v5561 = vmax.f32 %v5041, %v5297
          %v5562 = vmax.f32 %v5042, %v5298
          %v5563 = vmax.f32 %v5043, %v5299
          %v5564 = vmax.f32 %v5044, %v5300
          %v5565 = vmax.f32 %v5045, %v5301
          %v5566 = vmax.f32 %v5046, %v5302
          %v5567 = vmax.f32 %v5047, %v5303
          %v5568 = vmax.f32 %v5048, %v5304
          %v5569 = vmax.f32 %v5049, %v5305
          %v5570 = vmax.f32 %v5050, %v5306
          %v5571 = vmax.f32 %v5051, %v5307
          %v5572 = vmax.f32 %v5052, %v5308
          %v5573 = vmax.f32 %v5053, %v5309
          %v5574 = vmax.f32 %v5054, %v5310
          %v5575 = vmax.f32 %v5055, %v5311
          %v5576 = vmax.f32 %v5056, %v5312
          %v5577 = vmax.f32 %v5057, %v5313
          %v5578 = vmax.f32 %v5058, %v5314
          %v5579 = vmax.f32 %v5059, %v5315
          %v5580 = vmax.f32 %v5060, %v5316
          %v5581 = vmax.f32 %v5061, %v5317
          %v5582 = vmax.f32 %v5062, %v5318
          %v5583 = vmax.f32 %v5063, %v5319
          %v5584 = vmax.f32 %v5064, %v5320
          %v5585 = vmax.f32 %v5065, %v5321
          %v5586 = vmax.f32 %v5066, %v5322
          %v5587 = vmax.f32 %v5067, %v5323
          %v5588 = vmax.f32 %v5068, %v5324
          %v5589 = vmax.f32 %v5069, %v5325
          %v5590 = vmax.f32 %v5070, %v5326
          %v5591 = vmax.f32 %v5071, %v5327
          %v5592 = vmax.f32 %v5072, %v5328
          %v5593 = vmax.f32 %v5073, %v5329
          %v5594 = vmax.f32 %v5074, %v5330
          %v5595 = vmax.f32 %v5075, %v5331
          %v5596 = vmax.f32 %v5076, %v5332
          %v5597 = vmax.f32 %v5077, %v5333
          %v5598 = vmax.f32 %v5078, %v5334
          %v5599 = vmax.f32 %v5079, %v5335
          %v5600 = vmax.f32 %v5080, %v5336
          %v5601 = vmax.f32 %v5081, %v5337
          %v5602 = vmax.f32 %v5082, %v5338
          %v5603 = vmax.f32 %v5083, %v5339
          %v5604 = vmax.f32 %v5084, %v5340
          %v5605 = vmax.f32 %v5085, %v5341
          %v5606 = vmax.f32 %v5086, %v5342
          %v5607 = vmax.f32 %v5087, %v5343
          %v5608 = vmax.f32 %v5088, %v5344
          %v5609 = vmax.f32 %v5089, %v5345
          %v5610 = vmax.f32 %v5090, %v5346
          %v5611 = vmax.f32 %v5091, %v5347
          %v5612 = vmax.f32 %v5092, %v5348
          %v5613 = vmax.f32 %v5093, %v5349
          %v5614 = vmax.f32 %v5094, %v5350
          %v5615 = vmax.f32 %v5095, %v5351
          %v5616 = vmax.f32 %v5096, %v5352
          %v5617 = vmax.f32 %v5097, %v5353
          %v5618 = vmax.f32 %v5098, %v5354
          %v5619 = vmax.f32 %v5099, %v5355
          %v5620 = vmax.f32 %v5100, %v5356
          %v5621 = vmax.f32 %v5101, %v5357
          %v5622 = vmax.f32 %v5102, %v5358
          %v5623 = vmax.f32 %v5103, %v5359
          %v5624 = vmax.f32 %v5104, %v5360
          %v5625 = vmax.f32 %v5105, %v5361
          %v5626 = vmax.f32 %v5106, %v5362
          %v5627 = vmax.f32 %v5107, %v5363
          %v5628 = vmax.f32 %v5108, %v5364
          %v5629 = vmax.f32 %v5109, %v5365
          %v5630 = vmax.f32 %v5110, %v5366
          %v5631 = vmax.f32 %v5111, %v5367
          %v5632 = vmax.f32 %v5112, %v5368
          %v5633 = vmax.f32 %v5113, %v5369
          %v5634 = vmax.f32 %v5114, %v5370
          %v5635 = vmax.f32 %v5115, %v5371
          %v5636 = vmax.f32 %v5116, %v5372
          %v5637 = vmax.f32 %v5117, %v5373
          %v5638 = vmax.f32 %v5118, %v5374
          %v5639 = vmax.f32 %v5119, %v5375
          %v5640 = vmax.f32 %v5120, %v5376
          %v5641 = vmax.f32 %v5121, %v5377
          %v5642 = vmax.f32 %v5122, %v5378
          %v5643 = vmax.f32 %v5123, %v5379
          %v5644 = vmax.f32 %v5124, %v5380
          %v5645 = vmax.f32 %v5125, %v5381
          %v5646 = vmax.f32 %v5126, %v5382
          %v5647 = vmax.f32 %v5127, %v5383
          %v5648 = vmax.f32 %v5128, %v5384
          %v5649 = vmax.f32 %v5129, %v5385
          %v5650 = vmax.f32 %v5130, %v5386
          %v5651 = vmax.f32 %v5131, %v5387
          %v5652 = vmax.f32 %v5132, %v5388
          %v5653 = vmax.f32 %v5133, %v5389
          %v5654 = vmax.f32 %v5134, %v5390
          %v5655 = vmax.f32 %v5135, %v5391
          %v5656 = vmax.f32 %v5136, %v5392
          %v5657 = vmax.f32 %v5137, %v5393
          %v5658 = vmax.f32 %v5138, %v5394
          %v5659 = vmax.f32 %v5139, %v5395
          %v5660 = vmax.f32 %v5140, %v5396
          %v5661 = vmax.f32 %v5141, %v5397
          %v5662 = vmax.f32 %v5142, %v5398
          %v5663 = vmax.f32 %v5143, %v5399
          %v5664 = vmax.f32 %v5144, %v5400
          %v5665 = vmax.f32 %v5145, %v5401
          %v5666 = vmax.f32 %v5146, %v5402
          %v5667 = vmax.f32 %v5147, %v5403
          %v5668 = vmax.f32 %v5148, %v5404
          %v5669 = vmax.f32 %v5149, %v5405
          %v5670 = vmax.f32 %v5150, %v5406
          %v5671 = vmax.f32 %v5415, %v5543
          %v5672 = vmax.f32 %v5416, %v5544
          %v5673 = vmax.f32 %v5417, %v5545
          %v5674 = vmax.f32 %v5418, %v5546
          %v5675 = vmax.f32 %v5419, %v5547
          %v5676 = vmax.f32 %v5420, %v5548
          %v5677 = vmax.f32 %v5421, %v5549
          %v5678 = vmax.f32 %v5422, %v5550
          %v5679 = vmax.f32 %v5423, %v5551
          %v5680 = vmax.f32 %v5424, %v5552
          %v5681 = vmax.f32 %v5425, %v5553
          %v5682 = vmax.f32 %v5426, %v5554
          %v5683 = vmax.f32 %v5427, %v5555
          %v5684 = vmax.f32 %v5428, %v5556
          %v5685 = vmax.f32 %v5429, %v5557
          %v5686 = vmax.f32 %v5430, %v5558
          %v5687 = vmax.f32 %v5431, %v5559
          %v5688 = vmax.f32 %v5432, %v5560
          %v5689 = vmax.f32 %v5433, %v5561
          %v5690 = vmax.f32 %v5434, %v5562
          %v5691 = vmax.f32 %v5435, %v5563
          %v5692 = vmax.f32 %v5436, %v5564
          %v5693 = vmax.f32 %v5437, %v5565
          %v5694 = vmax.f32 %v5438, %v5566
          %v5695 = vmax.f32 %v5439, %v5567
          %v5696 = vmax.f32 %v5440, %v5568
          %v5697 = vmax.f32 %v5441, %v5569
          %v5698 = vmax.f32 %v5442, %v5570
          %v5699 = vmax.f32 %v5443, %v5571
          %v5700 = vmax.f32 %v5444, %v5572
          %v5701 = vmax.f32 %v5445, %v5573
          %v5702 = vmax.f32 %v5446, %v5574
          %v5703 = vmax.f32 %v5447, %v5575
          %v5704 = vmax.f32 %v5448, %v5576
          %v5705 = vmax.f32 %v5449, %v5577
          %v5706 = vmax.f32 %v5450, %v5578
          %v5707 = vmax.f32 %v5451, %v5579
          %v5708 = vmax.f32 %v5452, %v5580
          %v5709 = vmax.f32 %v5453, %v5581
          %v5710 = vmax.f32 %v5454, %v5582
          %v5711 = vmax.f32 %v5455, %v5583
          %v5712 = vmax.f32 %v5456, %v5584
          %v5713 = vmax.f32 %v5457, %v5585
          %v5714 = vmax.f32 %v5458, %v5586
          %v5715 = vmax.f32 %v5459, %v5587
          %v5716 = vmax.f32 %v5460, %v5588
          %v5717 = vmax.f32 %v5461, %v5589
          %v5718 = vmax.f32 %v5462, %v5590
          %v5719 = vmax.f32 %v5463, %v5591
          %v5720 = vmax.f32 %v5464, %v5592
          %v5721 = vmax.f32 %v5465, %v5593
          %v5722 = vmax.f32 %v5466, %v5594
          %v5723 = vmax.f32 %v5467, %v5595
          %v5724 = vmax.f32 %v5468, %v5596
          %v5725 = vmax.f32 %v5469, %v5597
          %v5726 = vmax.f32 %v5470, %v5598
          %v5727 = vmax.f32 %v5471, %v5599
          %v5728 = vmax.f32 %v5472, %v5600
          %v5729 = vmax.f32 %v5473, %v5601
          %v5730 = vmax.f32 %v5474, %v5602
          %v5731 = vmax.f32 %v5475, %v5603
          %v5732 = vmax.f32 %v5476, %v5604
          %v5733 = vmax.f32 %v5477, %v5605
          %v5734 = vmax.f32 %v5478, %v5606
          %v5735 = vmax.f32 %v5479, %v5607
          %v5736 = vmax.f32 %v5480, %v5608
          %v5737 = vmax.f32 %v5481, %v5609
          %v5738 = vmax.f32 %v5482, %v5610
          %v5739 = vmax.f32 %v5483, %v5611
          %v5740 = vmax.f32 %v5484, %v5612
          %v5741 = vmax.f32 %v5485, %v5613
          %v5742 = vmax.f32 %v5486, %v5614
          %v5743 = vmax.f32 %v5487, %v5615
          %v5744 = vmax.f32 %v5488, %v5616
          %v5745 = vmax.f32 %v5489, %v5617
          %v5746 = vmax.f32 %v5490, %v5618
          %v5747 = vmax.f32 %v5491, %v5619
          %v5748 = vmax.f32 %v5492, %v5620
          %v5749 = vmax.f32 %v5493, %v5621
          %v5750 = vmax.f32 %v5494, %v5622
          %v5751 = vmax.f32 %v5495, %v5623
          %v5752 = vmax.f32 %v5496, %v5624
          %v5753 = vmax.f32 %v5497, %v5625
          %v5754 = vmax.f32 %v5498, %v5626
          %v5755 = vmax.f32 %v5499, %v5627
          %v5756 = vmax.f32 %v5500, %v5628
          %v5757 = vmax.f32 %v5501, %v5629
          %v5758 = vmax.f32 %v5502, %v5630
          %v5759 = vmax.f32 %v5503, %v5631
          %v5760 = vmax.f32 %v5504, %v5632
          %v5761 = vmax.f32 %v5505, %v5633
          %v5762 = vmax.f32 %v5506, %v5634
          %v5763 = vmax.f32 %v5507, %v5635
          %v5764 = vmax.f32 %v5508, %v5636
          %v5765 = vmax.f32 %v5509, %v5637
          %v5766 = vmax.f32 %v5510, %v5638
          %v5767 = vmax.f32 %v5511, %v5639
          %v5768 = vmax.f32 %v5512, %v5640
          %v5769 = vmax.f32 %v5513, %v5641
          %v5770 = vmax.f32 %v5514, %v5642
          %v5771 = vmax.f32 %v5515, %v5643
          %v5772 = vmax.f32 %v5516, %v5644
          %v5773 = vmax.f32 %v5517, %v5645
          %v5774 = vmax.f32 %v5518, %v5646
          %v5775 = vmax.f32 %v5519, %v5647
          %v5776 = vmax.f32 %v5520, %v5648
          %v5777 = vmax.f32 %v5521, %v5649
          %v5778 = vmax.f32 %v5522, %v5650
          %v5779 = vmax.f32 %v5523, %v5651
          %v5780 = vmax.f32 %v5524, %v5652
          %v5781 = vmax.f32 %v5525, %v5653
          %v5782 = vmax.f32 %v5526, %v5654
          %v5783 = vmax.f32 %v5527, %v5655
          %v5784 = vmax.f32 %v5528, %v5656
          %v5785 = vmax.f32 %v5529, %v5657
          %v5786 = vmax.f32 %v5530, %v5658
          %v5787 = vmax.f32 %v5531, %v5659
          %v5788 = vmax.f32 %v5532, %v5660
          %v5789 = vmax.f32 %v5533, %v5661
          %v5790 = vmax.f32 %v5534, %v5662
          %v5791 = vmax.f32 %v5535, %v5663
          %v5792 = vmax.f32 %v5536, %v5664
          %v5793 = vmax.f32 %v5537, %v5665
          %v5794 = vmax.f32 %v5538, %v5666
          %v5795 = vmax.f32 %v5539, %v5667
          %v5796 = vmax.f32 %v5540, %v5668
          %v5797 = vmax.f32 %v5541, %v5669
          %v5798 = vmax.f32 %v5542, %v5670
          %v5799 = vmax.f32 %v5671, %v5735
          %v5800 = vmax.f32 %v5672, %v5736
          %v5801 = vmax.f32 %v5673, %v5737
          %v5802 = vmax.f32 %v5674, %v5738
          %v5803 = vmax.f32 %v5675, %v5739
          %v5804 = vmax.f32 %v5676, %v5740
          %v5805 = vmax.f32 %v5677, %v5741
          %v5806 = vmax.f32 %v5678, %v5742
          %v5807 = vmax.f32 %v5679, %v5743
          %v5808 = vmax.f32 %v5680, %v5744
          %v5809 = vmax.f32 %v5681, %v5745
          %v5810 = vmax.f32 %v5682, %v5746
          %v5811 = vmax.f32 %v5683, %v5747
          %v5812 = vmax.f32 %v5684, %v5748
          %v5813 = vmax.f32 %v5685, %v5749
          %v5814 = vmax.f32 %v5686, %v5750
          %v5815 = vmax.f32 %v5687, %v5751
          %v5816 = vmax.f32 %v5688, %v5752
          %v5817 = vmax.f32 %v5689, %v5753
          %v5818 = vmax.f32 %v5690, %v5754
          %v5819 = vmax.f32 %v5691, %v5755
          %v5820 = vmax.f32 %v5692, %v5756
          %v5821 = vmax.f32 %v5693, %v5757
          %v5822 = vmax.f32 %v5694, %v5758
          %v5823 = vmax.f32 %v5695, %v5759
          %v5824 = vmax.f32 %v5696, %v5760
          %v5825 = vmax.f32 %v5697, %v5761
          %v5826 = vmax.f32 %v5698, %v5762
          %v5827 = vmax.f32 %v5699, %v5763
          %v5828 = vmax.f32 %v5700, %v5764
          %v5829 = vmax.f32 %v5701, %v5765
          %v5830 = vmax.f32 %v5702, %v5766
          %v5831 = vmax.f32 %v5703, %v5767
          %v5832 = vmax.f32 %v5704, %v5768
          %v5833 = vmax.f32 %v5705, %v5769
          %v5834 = vmax.f32 %v5706, %v5770
          %v5835 = vmax.f32 %v5707, %v5771
          %v5836 = vmax.f32 %v5708, %v5772
          %v5837 = vmax.f32 %v5709, %v5773
          %v5838 = vmax.f32 %v5710, %v5774
          %v5839 = vmax.f32 %v5711, %v5775
          %v5840 = vmax.f32 %v5712, %v5776
          %v5841 = vmax.f32 %v5713, %v5777
          %v5842 = vmax.f32 %v5714, %v5778
          %v5843 = vmax.f32 %v5715, %v5779
          %v5844 = vmax.f32 %v5716, %v5780
          %v5845 = vmax.f32 %v5717, %v5781
          %v5846 = vmax.f32 %v5718, %v5782
          %v5847 = vmax.f32 %v5719, %v5783
          %v5848 = vmax.f32 %v5720, %v5784
          %v5849 = vmax.f32 %v5721, %v5785
          %v5850 = vmax.f32 %v5722, %v5786
          %v5851 = vmax.f32 %v5723, %v5787
          %v5852 = vmax.f32 %v5724, %v5788
          %v5853 = vmax.f32 %v5725, %v5789
          %v5854 = vmax.f32 %v5726, %v5790
          %v5855 = vmax.f32 %v5727, %v5791
          %v5856 = vmax.f32 %v5728, %v5792
          %v5857 = vmax.f32 %v5729, %v5793
          %v5858 = vmax.f32 %v5730, %v5794
          %v5859 = vmax.f32 %v5731, %v5795
          %v5860 = vmax.f32 %v5732, %v5796
          %v5861 = vmax.f32 %v5733, %v5797
          %v5862 = vmax.f32 %v5734, %v5798
          %v5863 = vmax.f32 %v5799, %v5831
          %v5864 = vmax.f32 %v5800, %v5832
          %v5865 = vmax.f32 %v5801, %v5833
          %v5866 = vmax.f32 %v5802, %v5834
          %v5867 = vmax.f32 %v5803, %v5835
          %v5868 = vmax.f32 %v5804, %v5836
          %v5869 = vmax.f32 %v5805, %v5837
          %v5870 = vmax.f32 %v5806, %v5838
          %v5871 = vmax.f32 %v5807, %v5839
          %v5872 = vmax.f32 %v5808, %v5840
          %v5873 = vmax.f32 %v5809, %v5841
          %v5874 = vmax.f32 %v5810, %v5842
          %v5875 = vmax.f32 %v5811, %v5843
          %v5876 = vmax.f32 %v5812, %v5844
          %v5877 = vmax.f32 %v5813, %v5845
          %v5878 = vmax.f32 %v5814, %v5846
          %v5879 = vmax.f32 %v5815, %v5847
          %v5880 = vmax.f32 %v5816, %v5848
          %v5881 = vmax.f32 %v5817, %v5849
          %v5882 = vmax.f32 %v5818, %v5850
          %v5883 = vmax.f32 %v5819, %v5851
          %v5884 = vmax.f32 %v5820, %v5852
          %v5885 = vmax.f32 %v5821, %v5853
          %v5886 = vmax.f32 %v5822, %v5854
          %v5887 = vmax.f32 %v5823, %v5855
          %v5888 = vmax.f32 %v5824, %v5856
          %v5889 = vmax.f32 %v5825, %v5857
          %v5890 = vmax.f32 %v5826, %v5858
          %v5891 = vmax.f32 %v5827, %v5859
          %v5892 = vmax.f32 %v5828, %v5860
          %v5893 = vmax.f32 %v5829, %v5861
          %v5894 = vmax.f32 %v5830, %v5862
          %v5895 = vmax.f32 %v5863, %v5879
          %v5896 = vmax.f32 %v5864, %v5880
          %v5897 = vmax.f32 %v5865, %v5881
          %v5898 = vmax.f32 %v5866, %v5882
          %v5899 = vmax.f32 %v5867, %v5883
          %v5900 = vmax.f32 %v5868, %v5884
          %v5901 = vmax.f32 %v5869, %v5885
          %v5902 = vmax.f32 %v5870, %v5886
          %v5903 = vmax.f32 %v5871, %v5887
          %v5904 = vmax.f32 %v5872, %v5888
          %v5905 = vmax.f32 %v5873, %v5889
          %v5906 = vmax.f32 %v5874, %v5890
          %v5907 = vmax.f32 %v5875, %v5891
          %v5908 = vmax.f32 %v5876, %v5892
          %v5909 = vmax.f32 %v5877, %v5893
          %v5910 = vmax.f32 %v5878, %v5894
          %v5911 = vmax.f32 %v5895, %v5903
          %v5912 = vmax.f32 %v5896, %v5904
          %v5913 = vmax.f32 %v5897, %v5905
          %v5914 = vmax.f32 %v5898, %v5906
          %v5915 = vmax.f32 %v5899, %v5907
          %v5916 = vmax.f32 %v5900, %v5908
          %v5917 = vmax.f32 %v5901, %v5909
          %v5918 = vmax.f32 %v5902, %v5910
          %v5919 = vmax.f32 %v5407, %v5911
          %v5920 = vmax.f32 %v5408, %v5912
          %v5921 = vmax.f32 %v5409, %v5913
          %v5922 = vmax.f32 %v5410, %v5914
          %v5923 = vmax.f32 %v5411, %v5915
          %v5924 = vmax.f32 %v5412, %v5916
          %v5925 = vmax.f32 %v5413, %v5917
          %v5926 = vmax.f32 %v5414, %v5918
          %5927 = vst [vmem:[#allocation2] sm:$0xff] %v5919
          %5928 = vst [vmem:[#allocation2 + $0x8] sm:$0xff] %v5920
          %5929 = vst [vmem:[#allocation2 + $0x10] sm:$0xff] %v5921
          %5930 = vst [vmem:[#allocation2 + $0x18] sm:$0xff] %v5922
          %5931 = vst [vmem:[#allocation2 + $0x20] sm:$0xff] %v5923
          %5932 = vst [vmem:[#allocation2 + $0x28] sm:$0xff] %v5924
          %5933 = vst [vmem:[#allocation2 + $0x30] sm:$0xff] %v5925
          %5934 = vst [vmem:[#allocation2 + $0x38] sm:$0xff] %v5926
          %v5935 = vld [vmem:[#allocation2] sm:$0xff]
          %v5936 = vld [vmem:[#allocation2 + $0x8] sm:$0xff]
          %v5937 = vld [vmem:[#allocation2 + $0x10] sm:$0xff]
          %v5938 = vld [vmem:[#allocation2 + $0x18] sm:$0xff]
          %v5939 = vld [vmem:[#allocation2 + $0x20] sm:$0xff]
          %v5940 = vld [vmem:[#allocation2 + $0x28] sm:$0xff]
          %v5941 = vld [vmem:[#allocation2 + $0x30] sm:$0xff]
          %v5942 = vld [vmem:[#allocation2 + $0x38] sm:$0xff]
          %v5943 = vrot.slane %v5935, 4
          %v5944 = vmax.f32 %v5935, %v5943
          %v5945 = vrot.slane %v5944, 2
          %v5946 = vmax.f32 %v5944, %v5945
          %v5947 = vrot.slane %v5946, 1
          %v5948 = vmax.f32 %v5946, %v5947
          %v5949 = vrot.slane %v5936, 4
          %v5950 = vmax.f32 %v5936, %v5949
          %v5951 = vrot.slane %v5950, 2
          %v5952 = vmax.f32 %v5950, %v5951
          %v5953 = vrot.slane %v5952, 1
          %v5954 = vmax.f32 %v5952, %v5953
          %v5955 = vrot.slane %v5937, 4
          %v5956 = vmax.f32 %v5937, %v5955
          %v5957 = vrot.slane %v5956, 2
          %v5958 = vmax.f32 %v5956, %v5957
          %v5959 = vrot.slane %v5958, 1
          %v5960 = vmax.f32 %v5958, %v5959
          %v5961 = vrot.slane %v5938, 4
          %v5962 = vmax.f32 %v5938, %v5961
          %v5963 = vrot.slane %v5962, 2
          %v5964 = vmax.f32 %v5962, %v5963
          %v5965 = vrot.slane %v5964, 1
          %v5966 = vmax.f32 %v5964, %v5965
          %v5967 = vrot.slane %v5939, 4
          %v5968 = vmax.f32 %v5939, %v5967
          %v5969 = vrot.slane %v5968, 2
          %v5970 = vmax.f32 %v5968, %v5969
          %v5971 = vrot.slane %v5970, 1
          %v5972 = vmax.f32 %v5970, %v5971
          %v5973 = vrot.slane %v5940, 4
          %v5974 = vmax.f32 %v5940, %v5973
          %v5975 = vrot.slane %v5974, 2
          %v5976 = vmax.f32 %v5974, %v5975
          %v5977 = vrot.slane %v5976, 1
          %v5978 = vmax.f32 %v5976, %v5977
          %v5979 = vrot.slane %v5941, 4
          %v5980 = vmax.f32 %v5941, %v5979
          %v5981 = vrot.slane %v5980, 2
          %v5982 = vmax.f32 %v5980, %v5981
          %v5983 = vrot.slane %v5982, 1
          %v5984 = vmax.f32 %v5982, %v5983
          %v5985 = vrot.slane %v5942, 4
          %v5986 = vmax.f32 %v5942, %v5985
          %v5987 = vrot.slane %v5986, 2
          %v5988 = vmax.f32 %v5986, %v5987
          %v5989 = vrot.slane %v5988, 1
          %v5990 = vmax.f32 %v5988, %v5989
          %v5991 = vpack.c.bf16 %v5948, %v5948
          %v5992 = vpack.c.bf16 %v5954, %v5954
          %v5993 = vpack.c.bf16 %v5960, %v5960
          %v5994 = vpack.c.bf16 %v5966, %v5966
          %v5995 = vpack.c.bf16 %v5972, %v5972
          %v5996 = vpack.c.bf16 %v5978, %v5978
          %v5997 = vpack.c.bf16 %v5984, %v5984
          %v5998 = vpack.c.bf16 %v5990, %v5990
          %v5999 = vld [vmem:[#allocation3] sm:$0xff]
          %v6000 = vld [vmem:[#allocation3 + $0x8] sm:$0xff]
          %v6001 = vld [vmem:[#allocation3 + $0x10] sm:$0xff]
          %v6002 = vld [vmem:[#allocation3 + $0x18] sm:$0xff]
          %v6003 = vld [vmem:[#allocation3 + $0x20] sm:$0xff]
          %v6004 = vld [vmem:[#allocation3 + $0x28] sm:$0xff]
          %v6005 = vld [vmem:[#allocation3 + $0x30] sm:$0xff]
          %v6006 = vld [vmem:[#allocation3 + $0x38] sm:$0xff]
          %v6007 = vld [vmem:[#allocation3 + $0x40] sm:$0xff]
          %v6008 = vld [vmem:[#allocation3 + $0x48] sm:$0xff]
          %v6009 = vld [vmem:[#allocation3 + $0x50] sm:$0xff]
          %v6010 = vld [vmem:[#allocation3 + $0x58] sm:$0xff]
          %v6011 = vld [vmem:[#allocation3 + $0x60] sm:$0xff]
          %v6012 = vld [vmem:[#allocation3 + $0x68] sm:$0xff]
          %v6013 = vld [vmem:[#allocation3 + $0x70] sm:$0xff]
          %v6014 = vld [vmem:[#allocation3 + $0x78] sm:$0xff]
          %v6015 = vld [vmem:[#allocation3 + $0x80] sm:$0xff]
          %v6016 = vld [vmem:[#allocation3 + $0x88] sm:$0xff]
          %v6017 = vld [vmem:[#allocation3 + $0x90] sm:$0xff]
          %v6018 = vld [vmem:[#allocation3 + $0x98] sm:$0xff]
          %v6019 = vld [vmem:[#allocation3 + $0xa0] sm:$0xff]
          %v6020 = vld [vmem:[#allocation3 + $0xa8] sm:$0xff]
          %v6021 = vld [vmem:[#allocation3 + $0xb0] sm:$0xff]
          %v6022 = vld [vmem:[#allocation3 + $0xb8] sm:$0xff]
          %v6023 = vld [vmem:[#allocation3 + $0xc0] sm:$0xff]
          %v6024 = vld [vmem:[#allocation3 + $0xc8] sm:$0xff]
          %v6025 = vld [vmem:[#allocation3 + $0xd0] sm:$0xff]
          %v6026 = vld [vmem:[#allocation3 + $0xd8] sm:$0xff]
          %v6027 = vld [vmem:[#allocation3 + $0xe0] sm:$0xff]
          %v6028 = vld [vmem:[#allocation3 + $0xe8] sm:$0xff]
          %v6029 = vld [vmem:[#allocation3 + $0xf0] sm:$0xff]
          %v6030 = vld [vmem:[#allocation3 + $0xf8] sm:$0xff]
          %v6031 = vld [vmem:[#allocation3 + $0x100] sm:$0xff]
          %v6032 = vld [vmem:[#allocation3 + $0x108] sm:$0xff]
          %v6033 = vld [vmem:[#allocation3 + $0x110] sm:$0xff]
          %v6034 = vld [vmem:[#allocation3 + $0x118] sm:$0xff]
          %v6035 = vld [vmem:[#allocation3 + $0x120] sm:$0xff]
          %v6036 = vld [vmem:[#allocation3 + $0x128] sm:$0xff]
          %v6037 = vld [vmem:[#allocation3 + $0x130] sm:$0xff]
          %v6038 = vld [vmem:[#allocation3 + $0x138] sm:$0xff]
          %v6039 = vld [vmem:[#allocation3 + $0x140] sm:$0xff]
          %v6040 = vld [vmem:[#allocation3 + $0x148] sm:$0xff]
          %v6041 = vld [vmem:[#allocation3 + $0x150] sm:$0xff]
          %v6042 = vld [vmem:[#allocation3 + $0x158] sm:$0xff]
          %v6043 = vld [vmem:[#allocation3 + $0x160] sm:$0xff]
          %v6044 = vld [vmem:[#allocation3 + $0x168] sm:$0xff]
          %v6045 = vld [vmem:[#allocation3 + $0x170] sm:$0xff]
          %v6046 = vld [vmem:[#allocation3 + $0x178] sm:$0xff]
          %v6047 = vld [vmem:[#allocation3 + $0x180] sm:$0xff]
          %v6048 = vld [vmem:[#allocation3 + $0x188] sm:$0xff]
          %v6049 = vld [vmem:[#allocation3 + $0x190] sm:$0xff]
          %v6050 = vld [vmem:[#allocation3 + $0x198] sm:$0xff]
          %v6051 = vld [vmem:[#allocation3 + $0x1a0] sm:$0xff]
          %v6052 = vld [vmem:[#allocation3 + $0x1a8] sm:$0xff]
          %v6053 = vld [vmem:[#allocation3 + $0x1b0] sm:$0xff]
          %v6054 = vld [vmem:[#allocation3 + $0x1b8] sm:$0xff]
          %v6055 = vld [vmem:[#allocation3 + $0x1c0] sm:$0xff]
          %v6056 = vld [vmem:[#allocation3 + $0x1c8] sm:$0xff]
          %v6057 = vld [vmem:[#allocation3 + $0x1d0] sm:$0xff]
          %v6058 = vld [vmem:[#allocation3 + $0x1d8] sm:$0xff]
          %v6059 = vld [vmem:[#allocation3 + $0x1e0] sm:$0xff]
          %v6060 = vld [vmem:[#allocation3 + $0x1e8] sm:$0xff]
          %v6061 = vld [vmem:[#allocation3 + $0x1f0] sm:$0xff]
          %v6062 = vld [vmem:[#allocation3 + $0x1f8] sm:$0xff]
          %v6063 = vld [vmem:[#allocation3 + $0x200] sm:$0xff]
          %v6064 = vld [vmem:[#allocation3 + $0x208] sm:$0xff]
          %v6065 = vld [vmem:[#allocation3 + $0x210] sm:$0xff]
          %v6066 = vld [vmem:[#allocation3 + $0x218] sm:$0xff]
          %v6067 = vld [vmem:[#allocation3 + $0x220] sm:$0xff]
          %v6068 = vld [vmem:[#allocation3 + $0x228] sm:$0xff]
          %v6069 = vld [vmem:[#allocation3 + $0x230] sm:$0xff]
          %v6070 = vld [vmem:[#allocation3 + $0x238] sm:$0xff]
          %v6071 = vld [vmem:[#allocation3 + $0x240] sm:$0xff]
          %v6072 = vld [vmem:[#allocation3 + $0x248] sm:$0xff]
          %v6073 = vld [vmem:[#allocation3 + $0x250] sm:$0xff]
          %v6074 = vld [vmem:[#allocation3 + $0x258] sm:$0xff]
          %v6075 = vld [vmem:[#allocation3 + $0x260] sm:$0xff]
          %v6076 = vld [vmem:[#allocation3 + $0x268] sm:$0xff]
          %v6077 = vld [vmem:[#allocation3 + $0x270] sm:$0xff]
          %v6078 = vld [vmem:[#allocation3 + $0x278] sm:$0xff]
          %v6079 = vld [vmem:[#allocation3 + $0x280] sm:$0xff]
          %v6080 = vld [vmem:[#allocation3 + $0x288] sm:$0xff]
          %v6081 = vld [vmem:[#allocation3 + $0x290] sm:$0xff]
          %v6082 = vld [vmem:[#allocation3 + $0x298] sm:$0xff]
          %v6083 = vld [vmem:[#allocation3 + $0x2a0] sm:$0xff]
          %v6084 = vld [vmem:[#allocation3 + $0x2a8] sm:$0xff]
          %v6085 = vld [vmem:[#allocation3 + $0x2b0] sm:$0xff]
          %v6086 = vld [vmem:[#allocation3 + $0x2b8] sm:$0xff]
          %v6087 = vld [vmem:[#allocation3 + $0x2c0] sm:$0xff]
          %v6088 = vld [vmem:[#allocation3 + $0x2c8] sm:$0xff]
          %v6089 = vld [vmem:[#allocation3 + $0x2d0] sm:$0xff]
          %v6090 = vld [vmem:[#allocation3 + $0x2d8] sm:$0xff]
          %v6091 = vld [vmem:[#allocation3 + $0x2e0] sm:$0xff]
          %v6092 = vld [vmem:[#allocation3 + $0x2e8] sm:$0xff]
          %v6093 = vld [vmem:[#allocation3 + $0x2f0] sm:$0xff]
          %v6094 = vld [vmem:[#allocation3 + $0x2f8] sm:$0xff]
          %v6095 = vld [vmem:[#allocation3 + $0x300] sm:$0xff]
          %v6096 = vld [vmem:[#allocation3 + $0x308] sm:$0xff]
          %v6097 = vld [vmem:[#allocation3 + $0x310] sm:$0xff]
          %v6098 = vld [vmem:[#allocation3 + $0x318] sm:$0xff]
          %v6099 = vld [vmem:[#allocation3 + $0x320] sm:$0xff]
          %v6100 = vld [vmem:[#allocation3 + $0x328] sm:$0xff]
          %v6101 = vld [vmem:[#allocation3 + $0x330] sm:$0xff]
          %v6102 = vld [vmem:[#allocation3 + $0x338] sm:$0xff]
          %v6103 = vld [vmem:[#allocation3 + $0x340] sm:$0xff]
          %v6104 = vld [vmem:[#allocation3 + $0x348] sm:$0xff]
          %v6105 = vld [vmem:[#allocation3 + $0x350] sm:$0xff]
          %v6106 = vld [vmem:[#allocation3 + $0x358] sm:$0xff]
          %v6107 = vld [vmem:[#allocation3 + $0x360] sm:$0xff]
          %v6108 = vld [vmem:[#allocation3 + $0x368] sm:$0xff]
          %v6109 = vld [vmem:[#allocation3 + $0x370] sm:$0xff]
          %v6110 = vld [vmem:[#allocation3 + $0x378] sm:$0xff]
          %v6111 = vld [vmem:[#allocation3 + $0x380] sm:$0xff]
          %v6112 = vld [vmem:[#allocation3 + $0x388] sm:$0xff]
          %v6113 = vld [vmem:[#allocation3 + $0x390] sm:$0xff]
          %v6114 = vld [vmem:[#allocation3 + $0x398] sm:$0xff]
          %v6115 = vld [vmem:[#allocation3 + $0x3a0] sm:$0xff]
          %v6116 = vld [vmem:[#allocation3 + $0x3a8] sm:$0xff]
          %v6117 = vld [vmem:[#allocation3 + $0x3b0] sm:$0xff]
          %v6118 = vld [vmem:[#allocation3 + $0x3b8] sm:$0xff]
          %v6119 = vld [vmem:[#allocation3 + $0x3c0] sm:$0xff]
          %v6120 = vld [vmem:[#allocation3 + $0x3c8] sm:$0xff]
          %v6121 = vld [vmem:[#allocation3 + $0x3d0] sm:$0xff]
          %v6122 = vld [vmem:[#allocation3 + $0x3d8] sm:$0xff]
          %v6123 = vld [vmem:[#allocation3 + $0x3e0] sm:$0xff]
          %v6124 = vld [vmem:[#allocation3 + $0x3e8] sm:$0xff]
          %v6125 = vld [vmem:[#allocation3 + $0x3f0] sm:$0xff]
          %v6126 = vld [vmem:[#allocation3 + $0x3f8] sm:$0xff]
          %v6127 = vld [vmem:[#allocation3 + $0x400] sm:$0xff]
          %v6128 = vld [vmem:[#allocation3 + $0x408] sm:$0xff]
          %v6129 = vld [vmem:[#allocation3 + $0x410] sm:$0xff]
          %v6130 = vld [vmem:[#allocation3 + $0x418] sm:$0xff]
          %v6131 = vld [vmem:[#allocation3 + $0x420] sm:$0xff]
          %v6132 = vld [vmem:[#allocation3 + $0x428] sm:$0xff]
          %v6133 = vld [vmem:[#allocation3 + $0x430] sm:$0xff]
          %v6134 = vld [vmem:[#allocation3 + $0x438] sm:$0xff]
          %v6135 = vld [vmem:[#allocation3 + $0x440] sm:$0xff]
          %v6136 = vld [vmem:[#allocation3 + $0x448] sm:$0xff]
          %v6137 = vld [vmem:[#allocation3 + $0x450] sm:$0xff]
          %v6138 = vld [vmem:[#allocation3 + $0x458] sm:$0xff]
          %v6139 = vld [vmem:[#allocation3 + $0x460] sm:$0xff]
          %v6140 = vld [vmem:[#allocation3 + $0x468] sm:$0xff]
          %v6141 = vld [vmem:[#allocation3 + $0x470] sm:$0xff]
          %v6142 = vld [vmem:[#allocation3 + $0x478] sm:$0xff]
          %v6143 = vld [vmem:[#allocation3 + $0x480] sm:$0xff]
          %v6144 = vld [vmem:[#allocation3 + $0x488] sm:$0xff]
          %v6145 = vld [vmem:[#allocation3 + $0x490] sm:$0xff]
          %v6146 = vld [vmem:[#allocation3 + $0x498] sm:$0xff]
          %v6147 = vld [vmem:[#allocation3 + $0x4a0] sm:$0xff]
          %v6148 = vld [vmem:[#allocation3 + $0x4a8] sm:$0xff]
          %v6149 = vld [vmem:[#allocation3 + $0x4b0] sm:$0xff]
          %v6150 = vld [vmem:[#allocation3 + $0x4b8] sm:$0xff]
          %v6151 = vld [vmem:[#allocation3 + $0x4c0] sm:$0xff]
          %v6152 = vld [vmem:[#allocation3 + $0x4c8] sm:$0xff]
          %v6153 = vld [vmem:[#allocation3 + $0x4d0] sm:$0xff]
          %v6154 = vld [vmem:[#allocation3 + $0x4d8] sm:$0xff]
          %v6155 = vld [vmem:[#allocation3 + $0x4e0] sm:$0xff]
          %v6156 = vld [vmem:[#allocation3 + $0x4e8] sm:$0xff]
          %v6157 = vld [vmem:[#allocation3 + $0x4f0] sm:$0xff]
          %v6158 = vld [vmem:[#allocation3 + $0x4f8] sm:$0xff]
          %v6159 = vld [vmem:[#allocation3 + $0x500] sm:$0xff]
          %v6160 = vld [vmem:[#allocation3 + $0x508] sm:$0xff]
          %v6161 = vld [vmem:[#allocation3 + $0x510] sm:$0xff]
          %v6162 = vld [vmem:[#allocation3 + $0x518] sm:$0xff]
          %v6163 = vld [vmem:[#allocation3 + $0x520] sm:$0xff]
          %v6164 = vld [vmem:[#allocation3 + $0x528] sm:$0xff]
          %v6165 = vld [vmem:[#allocation3 + $0x530] sm:$0xff]
          %v6166 = vld [vmem:[#allocation3 + $0x538] sm:$0xff]
          %v6167 = vld [vmem:[#allocation3 + $0x540] sm:$0xff]
          %v6168 = vld [vmem:[#allocation3 + $0x548] sm:$0xff]
          %v6169 = vld [vmem:[#allocation3 + $0x550] sm:$0xff]
          %v6170 = vld [vmem:[#allocation3 + $0x558] sm:$0xff]
          %v6171 = vld [vmem:[#allocation3 + $0x560] sm:$0xff]
          %v6172 = vld [vmem:[#allocation3 + $0x568] sm:$0xff]
          %v6173 = vld [vmem:[#allocation3 + $0x570] sm:$0xff]
          %v6174 = vld [vmem:[#allocation3 + $0x578] sm:$0xff]
          %v6175 = vld [vmem:[#allocation3 + $0x580] sm:$0xff]
          %v6176 = vld [vmem:[#allocation3 + $0x588] sm:$0xff]
          %v6177 = vld [vmem:[#allocation3 + $0x590] sm:$0xff]
          %v6178 = vld [vmem:[#allocation3 + $0x598] sm:$0xff]
          %v6179 = vld [vmem:[#allocation3 + $0x5a0] sm:$0xff]
          %v6180 = vld [vmem:[#allocation3 + $0x5a8] sm:$0xff]
          %v6181 = vld [vmem:[#allocation3 + $0x5b0] sm:$0xff]
          %v6182 = vld [vmem:[#allocation3 + $0x5b8] sm:$0xff]
          %v6183 = vld [vmem:[#allocation3 + $0x5c0] sm:$0xff]
          %v6184 = vld [vmem:[#allocation3 + $0x5c8] sm:$0xff]
          %v6185 = vld [vmem:[#allocation3 + $0x5d0] sm:$0xff]
          %v6186 = vld [vmem:[#allocation3 + $0x5d8] sm:$0xff]
          %v6187 = vld [vmem:[#allocation3 + $0x5e0] sm:$0xff]
          %v6188 = vld [vmem:[#allocation3 + $0x5e8] sm:$0xff]
          %v6189 = vld [vmem:[#allocation3 + $0x5f0] sm:$0xff]
          %v6190 = vld [vmem:[#allocation3 + $0x5f8] sm:$0xff]
          %v6191 = vld [vmem:[#allocation3 + $0x600] sm:$0xff]
          %v6192 = vld [vmem:[#allocation3 + $0x608] sm:$0xff]
          %v6193 = vld [vmem:[#allocation3 + $0x610] sm:$0xff]
          %v6194 = vld [vmem:[#allocation3 + $0x618] sm:$0xff]
          %v6195 = vld [vmem:[#allocation3 + $0x620] sm:$0xff]
          %v6196 = vld [vmem:[#allocation3 + $0x628] sm:$0xff]
          %v6197 = vld [vmem:[#allocation3 + $0x630] sm:$0xff]
          %v6198 = vld [vmem:[#allocation3 + $0x638] sm:$0xff]
          %v6199 = vld [vmem:[#allocation3 + $0x640] sm:$0xff]
          %v6200 = vld [vmem:[#allocation3 + $0x648] sm:$0xff]
          %v6201 = vld [vmem:[#allocation3 + $0x650] sm:$0xff]
          %v6202 = vld [vmem:[#allocation3 + $0x658] sm:$0xff]
          %v6203 = vld [vmem:[#allocation3 + $0x660] sm:$0xff]
          %v6204 = vld [vmem:[#allocation3 + $0x668] sm:$0xff]
          %v6205 = vld [vmem:[#allocation3 + $0x670] sm:$0xff]
          %v6206 = vld [vmem:[#allocation3 + $0x678] sm:$0xff]
          %v6207 = vld [vmem:[#allocation3 + $0x680] sm:$0xff]
          %v6208 = vld [vmem:[#allocation3 + $0x688] sm:$0xff]
          %v6209 = vld [vmem:[#allocation3 + $0x690] sm:$0xff]
          %v6210 = vld [vmem:[#allocation3 + $0x698] sm:$0xff]
          %v6211 = vld [vmem:[#allocation3 + $0x6a0] sm:$0xff]
          %v6212 = vld [vmem:[#allocation3 + $0x6a8] sm:$0xff]
          %v6213 = vld [vmem:[#allocation3 + $0x6b0] sm:$0xff]
          %v6214 = vld [vmem:[#allocation3 + $0x6b8] sm:$0xff]
          %v6215 = vld [vmem:[#allocation3 + $0x6c0] sm:$0xff]
          %v6216 = vld [vmem:[#allocation3 + $0x6c8] sm:$0xff]
          %v6217 = vld [vmem:[#allocation3 + $0x6d0] sm:$0xff]
          %v6218 = vld [vmem:[#allocation3 + $0x6d8] sm:$0xff]
          %v6219 = vld [vmem:[#allocation3 + $0x6e0] sm:$0xff]
          %v6220 = vld [vmem:[#allocation3 + $0x6e8] sm:$0xff]
          %v6221 = vld [vmem:[#allocation3 + $0x6f0] sm:$0xff]
          %v6222 = vld [vmem:[#allocation3 + $0x6f8] sm:$0xff]
          %v6223 = vld [vmem:[#allocation3 + $0x700] sm:$0xff]
          %v6224 = vld [vmem:[#allocation3 + $0x708] sm:$0xff]
          %v6225 = vld [vmem:[#allocation3 + $0x710] sm:$0xff]
          %v6226 = vld [vmem:[#allocation3 + $0x718] sm:$0xff]
          %v6227 = vld [vmem:[#allocation3 + $0x720] sm:$0xff]
          %v6228 = vld [vmem:[#allocation3 + $0x728] sm:$0xff]
          %v6229 = vld [vmem:[#allocation3 + $0x730] sm:$0xff]
          %v6230 = vld [vmem:[#allocation3 + $0x738] sm:$0xff]
          %v6231 = vld [vmem:[#allocation3 + $0x740] sm:$0xff]
          %v6232 = vld [vmem:[#allocation3 + $0x748] sm:$0xff]
          %v6233 = vld [vmem:[#allocation3 + $0x750] sm:$0xff]
          %v6234 = vld [vmem:[#allocation3 + $0x758] sm:$0xff]
          %v6235 = vld [vmem:[#allocation3 + $0x760] sm:$0xff]
          %v6236 = vld [vmem:[#allocation3 + $0x768] sm:$0xff]
          %v6237 = vld [vmem:[#allocation3 + $0x770] sm:$0xff]
          %v6238 = vld [vmem:[#allocation3 + $0x778] sm:$0xff]
          %v6239 = vld [vmem:[#allocation3 + $0x780] sm:$0xff]
          %v6240 = vld [vmem:[#allocation3 + $0x788] sm:$0xff]
          %v6241 = vld [vmem:[#allocation3 + $0x790] sm:$0xff]
          %v6242 = vld [vmem:[#allocation3 + $0x798] sm:$0xff]
          %v6243 = vld [vmem:[#allocation3 + $0x7a0] sm:$0xff]
          %v6244 = vld [vmem:[#allocation3 + $0x7a8] sm:$0xff]
          %v6245 = vld [vmem:[#allocation3 + $0x7b0] sm:$0xff]
          %v6246 = vld [vmem:[#allocation3 + $0x7b8] sm:$0xff]
          %v6247 = vld [vmem:[#allocation3 + $0x7c0] sm:$0xff]
          %v6248 = vld [vmem:[#allocation3 + $0x7c8] sm:$0xff]
          %v6249 = vld [vmem:[#allocation3 + $0x7d0] sm:$0xff]
          %v6250 = vld [vmem:[#allocation3 + $0x7d8] sm:$0xff]
          %v6251 = vld [vmem:[#allocation3 + $0x7e0] sm:$0xff]
          %v6252 = vld [vmem:[#allocation3 + $0x7e8] sm:$0xff]
          %v6253 = vld [vmem:[#allocation3 + $0x7f0] sm:$0xff]
          %v6254 = vld [vmem:[#allocation3 + $0x7f8] sm:$0xff]
          %v6255 = vld [vmem:[%s8] sm:$0xf]
          %v6257 = vlaneseq
          %v6258 = vshrl.u32 %v6257, 7
          %v6259 = vsub.s32 0, %v6258
          %v6260 = vrot.slane %v6255, %v6259
          %v6261 = vlaneseq
          %v6262 = vshrl.u32 %v6261, 7
          %v6263 = vsub.s32 1, %v6262
          %v6264 = vrot.slane %v6255, %v6263
          %v6265 = vlaneseq
          %v6266 = vshrl.u32 %v6265, 7
          %v6267 = vsub.s32 2, %v6266
          %v6268 = vrot.slane %v6255, %v6267
          %v6269 = vlaneseq
          %v6270 = vshrl.u32 %v6269, 7
          %v6271 = vsub.s32 3, %v6270
          %v6272 = vrot.slane %v6255, %v6271
          %v6533 = vunpack.c.l.b16 %v5999
          %v6534 = vunpack.c.h.b16 %v5999
          %v6535 = vunpack.c.l.b16 %v6000
          %v6536 = vunpack.c.h.b16 %v6000
          %v6537 = vunpack.c.l.b16 %v6001
          %v6538 = vunpack.c.h.b16 %v6001
          %v6539 = vunpack.c.l.b16 %v6002
          %v6540 = vunpack.c.h.b16 %v6002
          %v6541 = vunpack.c.l.b16 %v6003
          %v6542 = vunpack.c.h.b16 %v6003
          %v6543 = vunpack.c.l.b16 %v6004
          %v6544 = vunpack.c.h.b16 %v6004
          %v6545 = vunpack.c.l.b16 %v6005
          %v6546 = vunpack.c.h.b16 %v6005
          %v6547 = vunpack.c.l.b16 %v6006
          %v6548 = vunpack.c.h.b16 %v6006
          %v6549 = vunpack.c.l.b16 %v6007
          %v6550 = vunpack.c.h.b16 %v6007
          %v6551 = vunpack.c.l.b16 %v6008
          %v6552 = vunpack.c.h.b16 %v6008
          %v6553 = vunpack.c.l.b16 %v6009
          %v6554 = vunpack.c.h.b16 %v6009
          %v6555 = vunpack.c.l.b16 %v6010
          %v6556 = vunpack.c.h.b16 %v6010
          %v6557 = vunpack.c.l.b16 %v6011
          %v6558 = vunpack.c.h.b16 %v6011
          %v6559 = vunpack.c.l.b16 %v6012
          %v6560 = vunpack.c.h.b16 %v6012
          %v6561 = vunpack.c.l.b16 %v6013
          %v6562 = vunpack.c.h.b16 %v6013
          %v6563 = vunpack.c.l.b16 %v6014
          %v6564 = vunpack.c.h.b16 %v6014
          %v6565 = vunpack.c.l.b16 %v6015
          %v6566 = vunpack.c.h.b16 %v6015
          %v6567 = vunpack.c.l.b16 %v6016
          %v6568 = vunpack.c.h.b16 %v6016
          %v6569 = vunpack.c.l.b16 %v6017
          %v6570 = vunpack.c.h.b16 %v6017
          %v6571 = vunpack.c.l.b16 %v6018
          %v6572 = vunpack.c.h.b16 %v6018
          %v6573 = vunpack.c.l.b16 %v6019
          %v6574 = vunpack.c.h.b16 %v6019
          %v6575 = vunpack.c.l.b16 %v6020
          %v6576 = vunpack.c.h.b16 %v6020
          %v6577 = vunpack.c.l.b16 %v6021
          %v6578 = vunpack.c.h.b16 %v6021
          %v6579 = vunpack.c.l.b16 %v6022
          %v6580 = vunpack.c.h.b16 %v6022
          %v6581 = vunpack.c.l.b16 %v6023
          %v6582 = vunpack.c.h.b16 %v6023
          %v6583 = vunpack.c.l.b16 %v6024
          %v6584 = vunpack.c.h.b16 %v6024
          %v6585 = vunpack.c.l.b16 %v6025
          %v6586 = vunpack.c.h.b16 %v6025
          %v6587 = vunpack.c.l.b16 %v6026
          %v6588 = vunpack.c.h.b16 %v6026
          %v6589 = vunpack.c.l.b16 %v6027
          %v6590 = vunpack.c.h.b16 %v6027
          %v6591 = vunpack.c.l.b16 %v6028
          %v6592 = vunpack.c.h.b16 %v6028
          %v6593 = vunpack.c.l.b16 %v6029
          %v6594 = vunpack.c.h.b16 %v6029
          %v6595 = vunpack.c.l.b16 %v6030
          %v6596 = vunpack.c.h.b16 %v6030
          %v6597 = vunpack.c.l.b16 %v6031
          %v6598 = vunpack.c.h.b16 %v6031
          %v6599 = vunpack.c.l.b16 %v6032
          %v6600 = vunpack.c.h.b16 %v6032
          %v6601 = vunpack.c.l.b16 %v6033
          %v6602 = vunpack.c.h.b16 %v6033
          %v6603 = vunpack.c.l.b16 %v6034
          %v6604 = vunpack.c.h.b16 %v6034
          %v6605 = vunpack.c.l.b16 %v6035
          %v6606 = vunpack.c.h.b16 %v6035
          %v6607 = vunpack.c.l.b16 %v6036
          %v6608 = vunpack.c.h.b16 %v6036
          %v6609 = vunpack.c.l.b16 %v6037
          %v6610 = vunpack.c.h.b16 %v6037
          %v6611 = vunpack.c.l.b16 %v6038
          %v6612 = vunpack.c.h.b16 %v6038
          %v6613 = vunpack.c.l.b16 %v6039
          %v6614 = vunpack.c.h.b16 %v6039
          %v6615 = vunpack.c.l.b16 %v6040
          %v6616 = vunpack.c.h.b16 %v6040
          %v6617 = vunpack.c.l.b16 %v6041
          %v6618 = vunpack.c.h.b16 %v6041
          %v6619 = vunpack.c.l.b16 %v6042
          %v6620 = vunpack.c.h.b16 %v6042
          %v6621 = vunpack.c.l.b16 %v6043
          %v6622 = vunpack.c.h.b16 %v6043
          %v6623 = vunpack.c.l.b16 %v6044
          %v6624 = vunpack.c.h.b16 %v6044
          %v6625 = vunpack.c.l.b16 %v6045
          %v6626 = vunpack.c.h.b16 %v6045
          %v6627 = vunpack.c.l.b16 %v6046
          %v6628 = vunpack.c.h.b16 %v6046
          %v6629 = vunpack.c.l.b16 %v6047
          %v6630 = vunpack.c.h.b16 %v6047
          %v6631 = vunpack.c.l.b16 %v6048
          %v6632 = vunpack.c.h.b16 %v6048
          %v6633 = vunpack.c.l.b16 %v6049
          %v6634 = vunpack.c.h.b16 %v6049
          %v6635 = vunpack.c.l.b16 %v6050
          %v6636 = vunpack.c.h.b16 %v6050
          %v6637 = vunpack.c.l.b16 %v6051
          %v6638 = vunpack.c.h.b16 %v6051
          %v6639 = vunpack.c.l.b16 %v6052
          %v6640 = vunpack.c.h.b16 %v6052
          %v6641 = vunpack.c.l.b16 %v6053
          %v6642 = vunpack.c.h.b16 %v6053
          %v6643 = vunpack.c.l.b16 %v6054
          %v6644 = vunpack.c.h.b16 %v6054
          %v6645 = vunpack.c.l.b16 %v6055
          %v6646 = vunpack.c.h.b16 %v6055
          %v6647 = vunpack.c.l.b16 %v6056
          %v6648 = vunpack.c.h.b16 %v6056
          %v6649 = vunpack.c.l.b16 %v6057
          %v6650 = vunpack.c.h.b16 %v6057
          %v6651 = vunpack.c.l.b16 %v6058
          %v6652 = vunpack.c.h.b16 %v6058
          %v6653 = vunpack.c.l.b16 %v6059
          %v6654 = vunpack.c.h.b16 %v6059
          %v6655 = vunpack.c.l.b16 %v6060
          %v6656 = vunpack.c.h.b16 %v6060
          %v6657 = vunpack.c.l.b16 %v6061
          %v6658 = vunpack.c.h.b16 %v6061
          %v6659 = vunpack.c.l.b16 %v6062
          %v6660 = vunpack.c.h.b16 %v6062
          %v6661 = vunpack.c.l.b16 %v6063
          %v6662 = vunpack.c.h.b16 %v6063
          %v6663 = vunpack.c.l.b16 %v6064
          %v6664 = vunpack.c.h.b16 %v6064
          %v6665 = vunpack.c.l.b16 %v6065
          %v6666 = vunpack.c.h.b16 %v6065
          %v6667 = vunpack.c.l.b16 %v6066
          %v6668 = vunpack.c.h.b16 %v6066
          %v6669 = vunpack.c.l.b16 %v6067
          %v6670 = vunpack.c.h.b16 %v6067
          %v6671 = vunpack.c.l.b16 %v6068
          %v6672 = vunpack.c.h.b16 %v6068
          %v6673 = vunpack.c.l.b16 %v6069
          %v6674 = vunpack.c.h.b16 %v6069
          %v6675 = vunpack.c.l.b16 %v6070
          %v6676 = vunpack.c.h.b16 %v6070
          %v6677 = vunpack.c.l.b16 %v6071
          %v6678 = vunpack.c.h.b16 %v6071
          %v6679 = vunpack.c.l.b16 %v6072
          %v6680 = vunpack.c.h.b16 %v6072
          %v6681 = vunpack.c.l.b16 %v6073
          %v6682 = vunpack.c.h.b16 %v6073
          %v6683 = vunpack.c.l.b16 %v6074
          %v6684 = vunpack.c.h.b16 %v6074
          %v6685 = vunpack.c.l.b16 %v6075
          %v6686 = vunpack.c.h.b16 %v6075
          %v6687 = vunpack.c.l.b16 %v6076
          %v6688 = vunpack.c.h.b16 %v6076
          %v6689 = vunpack.c.l.b16 %v6077
          %v6690 = vunpack.c.h.b16 %v6077
          %v6691 = vunpack.c.l.b16 %v6078
          %v6692 = vunpack.c.h.b16 %v6078
          %v6693 = vunpack.c.l.b16 %v6079
          %v6694 = vunpack.c.h.b16 %v6079
          %v6695 = vunpack.c.l.b16 %v6080
          %v6696 = vunpack.c.h.b16 %v6080
          %v6697 = vunpack.c.l.b16 %v6081
          %v6698 = vunpack.c.h.b16 %v6081
          %v6699 = vunpack.c.l.b16 %v6082
          %v6700 = vunpack.c.h.b16 %v6082
          %v6701 = vunpack.c.l.b16 %v6083
          %v6702 = vunpack.c.h.b16 %v6083
          %v6703 = vunpack.c.l.b16 %v6084
          %v6704 = vunpack.c.h.b16 %v6084
          %v6705 = vunpack.c.l.b16 %v6085
          %v6706 = vunpack.c.h.b16 %v6085
          %v6707 = vunpack.c.l.b16 %v6086
          %v6708 = vunpack.c.h.b16 %v6086
          %v6709 = vunpack.c.l.b16 %v6087
          %v6710 = vunpack.c.h.b16 %v6087
          %v6711 = vunpack.c.l.b16 %v6088
          %v6712 = vunpack.c.h.b16 %v6088
          %v6713 = vunpack.c.l.b16 %v6089
          %v6714 = vunpack.c.h.b16 %v6089
          %v6715 = vunpack.c.l.b16 %v6090
          %v6716 = vunpack.c.h.b16 %v6090
          %v6717 = vunpack.c.l.b16 %v6091
          %v6718 = vunpack.c.h.b16 %v6091
          %v6719 = vunpack.c.l.b16 %v6092
          %v6720 = vunpack.c.h.b16 %v6092
          %v6721 = vunpack.c.l.b16 %v6093
          %v6722 = vunpack.c.h.b16 %v6093
          %v6723 = vunpack.c.l.b16 %v6094
          %v6724 = vunpack.c.h.b16 %v6094
          %v6725 = vunpack.c.l.b16 %v6095
          %v6726 = vunpack.c.h.b16 %v6095
          %v6727 = vunpack.c.l.b16 %v6096
          %v6728 = vunpack.c.h.b16 %v6096
          %v6729 = vunpack.c.l.b16 %v6097
          %v6730 = vunpack.c.h.b16 %v6097
          %v6731 = vunpack.c.l.b16 %v6098
          %v6732 = vunpack.c.h.b16 %v6098
          %v6733 = vunpack.c.l.b16 %v6099
          %v6734 = vunpack.c.h.b16 %v6099
          %v6735 = vunpack.c.l.b16 %v6100
          %v6736 = vunpack.c.h.b16 %v6100
          %v6737 = vunpack.c.l.b16 %v6101
          %v6738 = vunpack.c.h.b16 %v6101
          %v6739 = vunpack.c.l.b16 %v6102
          %v6740 = vunpack.c.h.b16 %v6102
          %v6741 = vunpack.c.l.b16 %v6103
          %v6742 = vunpack.c.h.b16 %v6103
          %v6743 = vunpack.c.l.b16 %v6104
          %v6744 = vunpack.c.h.b16 %v6104
          %v6745 = vunpack.c.l.b16 %v6105
          %v6746 = vunpack.c.h.b16 %v6105
          %v6747 = vunpack.c.l.b16 %v6106
          %v6748 = vunpack.c.h.b16 %v6106
          %v6749 = vunpack.c.l.b16 %v6107
          %v6750 = vunpack.c.h.b16 %v6107
          %v6751 = vunpack.c.l.b16 %v6108
          %v6752 = vunpack.c.h.b16 %v6108
          %v6753 = vunpack.c.l.b16 %v6109
          %v6754 = vunpack.c.h.b16 %v6109
          %v6755 = vunpack.c.l.b16 %v6110
          %v6756 = vunpack.c.h.b16 %v6110
          %v6757 = vunpack.c.l.b16 %v6111
          %v6758 = vunpack.c.h.b16 %v6111
          %v6759 = vunpack.c.l.b16 %v6112
          %v6760 = vunpack.c.h.b16 %v6112
          %v6761 = vunpack.c.l.b16 %v6113
          %v6762 = vunpack.c.h.b16 %v6113
          %v6763 = vunpack.c.l.b16 %v6114
          %v6764 = vunpack.c.h.b16 %v6114
          %v6765 = vunpack.c.l.b16 %v6115
          %v6766 = vunpack.c.h.b16 %v6115
          %v6767 = vunpack.c.l.b16 %v6116
          %v6768 = vunpack.c.h.b16 %v6116
          %v6769 = vunpack.c.l.b16 %v6117
          %v6770 = vunpack.c.h.b16 %v6117
          %v6771 = vunpack.c.l.b16 %v6118
          %v6772 = vunpack.c.h.b16 %v6118
          %v6773 = vunpack.c.l.b16 %v6119
          %v6774 = vunpack.c.h.b16 %v6119
          %v6775 = vunpack.c.l.b16 %v6120
          %v6776 = vunpack.c.h.b16 %v6120
          %v6777 = vunpack.c.l.b16 %v6121
          %v6778 = vunpack.c.h.b16 %v6121
          %v6779 = vunpack.c.l.b16 %v6122
          %v6780 = vunpack.c.h.b16 %v6122
          %v6781 = vunpack.c.l.b16 %v6123
          %v6782 = vunpack.c.h.b16 %v6123
          %v6783 = vunpack.c.l.b16 %v6124
          %v6784 = vunpack.c.h.b16 %v6124
          %v6785 = vunpack.c.l.b16 %v6125
          %v6786 = vunpack.c.h.b16 %v6125
          %v6787 = vunpack.c.l.b16 %v6126
          %v6788 = vunpack.c.h.b16 %v6126
          %v6789 = vunpack.c.l.b16 %v6127
          %v6790 = vunpack.c.h.b16 %v6127
          %v6791 = vunpack.c.l.b16 %v6128
          %v6792 = vunpack.c.h.b16 %v6128
          %v6793 = vunpack.c.l.b16 %v6129
          %v6794 = vunpack.c.h.b16 %v6129
          %v6795 = vunpack.c.l.b16 %v6130
          %v6796 = vunpack.c.h.b16 %v6130
          %v6797 = vunpack.c.l.b16 %v6131
          %v6798 = vunpack.c.h.b16 %v6131
          %v6799 = vunpack.c.l.b16 %v6132
          %v6800 = vunpack.c.h.b16 %v6132
          %v6801 = vunpack.c.l.b16 %v6133
          %v6802 = vunpack.c.h.b16 %v6133
          %v6803 = vunpack.c.l.b16 %v6134
          %v6804 = vunpack.c.h.b16 %v6134
          %v6805 = vunpack.c.l.b16 %v6135
          %v6806 = vunpack.c.h.b16 %v6135
          %v6807 = vunpack.c.l.b16 %v6136
          %v6808 = vunpack.c.h.b16 %v6136
          %v6809 = vunpack.c.l.b16 %v6137
          %v6810 = vunpack.c.h.b16 %v6137
          %v6811 = vunpack.c.l.b16 %v6138
          %v6812 = vunpack.c.h.b16 %v6138
          %v6813 = vunpack.c.l.b16 %v6139
          %v6814 = vunpack.c.h.b16 %v6139
          %v6815 = vunpack.c.l.b16 %v6140
          %v6816 = vunpack.c.h.b16 %v6140
          %v6817 = vunpack.c.l.b16 %v6141
          %v6818 = vunpack.c.h.b16 %v6141
          %v6819 = vunpack.c.l.b16 %v6142
          %v6820 = vunpack.c.h.b16 %v6142
          %v6821 = vunpack.c.l.b16 %v6143
          %v6822 = vunpack.c.h.b16 %v6143
          %v6823 = vunpack.c.l.b16 %v6144
          %v6824 = vunpack.c.h.b16 %v6144
          %v6825 = vunpack.c.l.b16 %v6145
          %v6826 = vunpack.c.h.b16 %v6145
          %v6827 = vunpack.c.l.b16 %v6146
          %v6828 = vunpack.c.h.b16 %v6146
          %v6829 = vunpack.c.l.b16 %v6147
          %v6830 = vunpack.c.h.b16 %v6147
          %v6831 = vunpack.c.l.b16 %v6148
          %v6832 = vunpack.c.h.b16 %v6148
          %v6833 = vunpack.c.l.b16 %v6149
          %v6834 = vunpack.c.h.b16 %v6149
          %v6835 = vunpack.c.l.b16 %v6150
          %v6836 = vunpack.c.h.b16 %v6150
          %v6837 = vunpack.c.l.b16 %v6151
          %v6838 = vunpack.c.h.b16 %v6151
          %v6839 = vunpack.c.l.b16 %v6152
          %v6840 = vunpack.c.h.b16 %v6152
          %v6841 = vunpack.c.l.b16 %v6153
          %v6842 = vunpack.c.h.b16 %v6153
          %v6843 = vunpack.c.l.b16 %v6154
          %v6844 = vunpack.c.h.b16 %v6154
          %v6845 = vunpack.c.l.b16 %v6155
          %v6846 = vunpack.c.h.b16 %v6155
          %v6847 = vunpack.c.l.b16 %v6156
          %v6848 = vunpack.c.h.b16 %v6156
          %v6849 = vunpack.c.l.b16 %v6157
          %v6850 = vunpack.c.h.b16 %v6157
          %v6851 = vunpack.c.l.b16 %v6158
          %v6852 = vunpack.c.h.b16 %v6158
          %v6853 = vunpack.c.l.b16 %v6159
          %v6854 = vunpack.c.h.b16 %v6159
          %v6855 = vunpack.c.l.b16 %v6160
          %v6856 = vunpack.c.h.b16 %v6160
          %v6857 = vunpack.c.l.b16 %v6161
          %v6858 = vunpack.c.h.b16 %v6161
          %v6859 = vunpack.c.l.b16 %v6162
          %v6860 = vunpack.c.h.b16 %v6162
          %v6861 = vunpack.c.l.b16 %v6163
          %v6862 = vunpack.c.h.b16 %v6163
          %v6863 = vunpack.c.l.b16 %v6164
          %v6864 = vunpack.c.h.b16 %v6164
          %v6865 = vunpack.c.l.b16 %v6165
          %v6866 = vunpack.c.h.b16 %v6165
          %v6867 = vunpack.c.l.b16 %v6166
          %v6868 = vunpack.c.h.b16 %v6166
          %v6869 = vunpack.c.l.b16 %v6167
          %v6870 = vunpack.c.h.b16 %v6167
          %v6871 = vunpack.c.l.b16 %v6168
          %v6872 = vunpack.c.h.b16 %v6168
          %v6873 = vunpack.c.l.b16 %v6169
          %v6874 = vunpack.c.h.b16 %v6169
          %v6875 = vunpack.c.l.b16 %v6170
          %v6876 = vunpack.c.h.b16 %v6170
          %v6877 = vunpack.c.l.b16 %v6171
          %v6878 = vunpack.c.h.b16 %v6171
          %v6879 = vunpack.c.l.b16 %v6172
          %v6880 = vunpack.c.h.b16 %v6172
          %v6881 = vunpack.c.l.b16 %v6173
          %v6882 = vunpack.c.h.b16 %v6173
          %v6883 = vunpack.c.l.b16 %v6174
          %v6884 = vunpack.c.h.b16 %v6174
          %v6885 = vunpack.c.l.b16 %v6175
          %v6886 = vunpack.c.h.b16 %v6175
          %v6887 = vunpack.c.l.b16 %v6176
          %v6888 = vunpack.c.h.b16 %v6176
          %v6889 = vunpack.c.l.b16 %v6177
          %v6890 = vunpack.c.h.b16 %v6177
          %v6891 = vunpack.c.l.b16 %v6178
          %v6892 = vunpack.c.h.b16 %v6178
          %v6893 = vunpack.c.l.b16 %v6179
          %v6894 = vunpack.c.h.b16 %v6179
          %v6895 = vunpack.c.l.b16 %v6180
          %v6896 = vunpack.c.h.b16 %v6180
          %v6897 = vunpack.c.l.b16 %v6181
          %v6898 = vunpack.c.h.b16 %v6181
          %v6899 = vunpack.c.l.b16 %v6182
          %v6900 = vunpack.c.h.b16 %v6182
          %v6901 = vunpack.c.l.b16 %v6183
          %v6902 = vunpack.c.h.b16 %v6183
          %v6903 = vunpack.c.l.b16 %v6184
          %v6904 = vunpack.c.h.b16 %v6184
          %v6905 = vunpack.c.l.b16 %v6185
          %v6906 = vunpack.c.h.b16 %v6185
          %v6907 = vunpack.c.l.b16 %v6186
          %v6908 = vunpack.c.h.b16 %v6186
          %v6909 = vunpack.c.l.b16 %v6187
          %v6910 = vunpack.c.h.b16 %v6187
          %v6911 = vunpack.c.l.b16 %v6188
          %v6912 = vunpack.c.h.b16 %v6188
          %v6913 = vunpack.c.l.b16 %v6189
          %v6914 = vunpack.c.h.b16 %v6189
          %v6915 = vunpack.c.l.b16 %v6190
          %v6916 = vunpack.c.h.b16 %v6190
          %v6917 = vunpack.c.l.b16 %v6191
          %v6918 = vunpack.c.h.b16 %v6191
          %v6919 = vunpack.c.l.b16 %v6192
          %v6920 = vunpack.c.h.b16 %v6192
          %v6921 = vunpack.c.l.b16 %v6193
          %v6922 = vunpack.c.h.b16 %v6193
          %v6923 = vunpack.c.l.b16 %v6194
          %v6924 = vunpack.c.h.b16 %v6194
          %v6925 = vunpack.c.l.b16 %v6195
          %v6926 = vunpack.c.h.b16 %v6195
          %v6927 = vunpack.c.l.b16 %v6196
          %v6928 = vunpack.c.h.b16 %v6196
          %v6929 = vunpack.c.l.b16 %v6197
          %v6930 = vunpack.c.h.b16 %v6197
          %v6931 = vunpack.c.l.b16 %v6198
          %v6932 = vunpack.c.h.b16 %v6198
          %v6933 = vunpack.c.l.b16 %v6199
          %v6934 = vunpack.c.h.b16 %v6199
          %v6935 = vunpack.c.l.b16 %v6200
          %v6936 = vunpack.c.h.b16 %v6200
          %v6937 = vunpack.c.l.b16 %v6201
          %v6938 = vunpack.c.h.b16 %v6201
          %v6939 = vunpack.c.l.b16 %v6202
          %v6940 = vunpack.c.h.b16 %v6202
          %v6941 = vunpack.c.l.b16 %v6203
          %v6942 = vunpack.c.h.b16 %v6203
          %v6943 = vunpack.c.l.b16 %v6204
          %v6944 = vunpack.c.h.b16 %v6204
          %v6945 = vunpack.c.l.b16 %v6205
          %v6946 = vunpack.c.h.b16 %v6205
          %v6947 = vunpack.c.l.b16 %v6206
          %v6948 = vunpack.c.h.b16 %v6206
          %v6949 = vunpack.c.l.b16 %v6207
          %v6950 = vunpack.c.h.b16 %v6207
          %v6951 = vunpack.c.l.b16 %v6208
          %v6952 = vunpack.c.h.b16 %v6208
          %v6953 = vunpack.c.l.b16 %v6209
          %v6954 = vunpack.c.h.b16 %v6209
          %v6955 = vunpack.c.l.b16 %v6210
          %v6956 = vunpack.c.h.b16 %v6210
          %v6957 = vunpack.c.l.b16 %v6211
          %v6958 = vunpack.c.h.b16 %v6211
          %v6959 = vunpack.c.l.b16 %v6212
          %v6960 = vunpack.c.h.b16 %v6212
          %v6961 = vunpack.c.l.b16 %v6213
          %v6962 = vunpack.c.h.b16 %v6213
          %v6963 = vunpack.c.l.b16 %v6214
          %v6964 = vunpack.c.h.b16 %v6214
          %v6965 = vunpack.c.l.b16 %v6215
          %v6966 = vunpack.c.h.b16 %v6215
          %v6967 = vunpack.c.l.b16 %v6216
          %v6968 = vunpack.c.h.b16 %v6216
          %v6969 = vunpack.c.l.b16 %v6217
          %v6970 = vunpack.c.h.b16 %v6217
          %v6971 = vunpack.c.l.b16 %v6218
          %v6972 = vunpack.c.h.b16 %v6218
          %v6973 = vunpack.c.l.b16 %v6219
          %v6974 = vunpack.c.h.b16 %v6219
          %v6975 = vunpack.c.l.b16 %v6220
          %v6976 = vunpack.c.h.b16 %v6220
          %v6977 = vunpack.c.l.b16 %v6221
          %v6978 = vunpack.c.h.b16 %v6221
          %v6979 = vunpack.c.l.b16 %v6222
          %v6980 = vunpack.c.h.b16 %v6222
          %v6981 = vunpack.c.l.b16 %v6223
          %v6982 = vunpack.c.h.b16 %v6223
          %v6983 = vunpack.c.l.b16 %v6224
          %v6984 = vunpack.c.h.b16 %v6224
          %v6985 = vunpack.c.l.b16 %v6225
          %v6986 = vunpack.c.h.b16 %v6225
          %v6987 = vunpack.c.l.b16 %v6226
          %v6988 = vunpack.c.h.b16 %v6226
          %v6989 = vunpack.c.l.b16 %v6227
          %v6990 = vunpack.c.h.b16 %v6227
          %v6991 = vunpack.c.l.b16 %v6228
          %v6992 = vunpack.c.h.b16 %v6228
          %v6993 = vunpack.c.l.b16 %v6229
          %v6994 = vunpack.c.h.b16 %v6229
          %v6995 = vunpack.c.l.b16 %v6230
          %v6996 = vunpack.c.h.b16 %v6230
          %v6997 = vunpack.c.l.b16 %v6231
          %v6998 = vunpack.c.h.b16 %v6231
          %v6999 = vunpack.c.l.b16 %v6232
          %v7000 = vunpack.c.h.b16 %v6232
          %v7001 = vunpack.c.l.b16 %v6233
          %v7002 = vunpack.c.h.b16 %v6233
          %v7003 = vunpack.c.l.b16 %v6234
          %v7004 = vunpack.c.h.b16 %v6234
          %v7005 = vunpack.c.l.b16 %v6235
          %v7006 = vunpack.c.h.b16 %v6235
          %v7007 = vunpack.c.l.b16 %v6236
          %v7008 = vunpack.c.h.b16 %v6236
          %v7009 = vunpack.c.l.b16 %v6237
          %v7010 = vunpack.c.h.b16 %v6237
          %v7011 = vunpack.c.l.b16 %v6238
          %v7012 = vunpack.c.h.b16 %v6238
          %v7013 = vunpack.c.l.b16 %v6239
          %v7014 = vunpack.c.h.b16 %v6239
          %v7015 = vunpack.c.l.b16 %v6240
          %v7016 = vunpack.c.h.b16 %v6240
          %v7017 = vunpack.c.l.b16 %v6241
          %v7018 = vunpack.c.h.b16 %v6241
          %v7019 = vunpack.c.l.b16 %v6242
          %v7020 = vunpack.c.h.b16 %v6242
          %v7021 = vunpack.c.l.b16 %v6243
          %v7022 = vunpack.c.h.b16 %v6243
          %v7023 = vunpack.c.l.b16 %v6244
          %v7024 = vunpack.c.h.b16 %v6244
          %v7025 = vunpack.c.l.b16 %v6245
          %v7026 = vunpack.c.h.b16 %v6245
          %v7027 = vunpack.c.l.b16 %v6246
          %v7028 = vunpack.c.h.b16 %v6246
          %v7029 = vunpack.c.l.b16 %v6247
          %v7030 = vunpack.c.h.b16 %v6247
          %v7031 = vunpack.c.l.b16 %v6248
          %v7032 = vunpack.c.h.b16 %v6248
          %v7033 = vunpack.c.l.b16 %v6249
          %v7034 = vunpack.c.h.b16 %v6249
          %v7035 = vunpack.c.l.b16 %v6250
          %v7036 = vunpack.c.h.b16 %v6250
          %v7037 = vunpack.c.l.b16 %v6251
          %v7038 = vunpack.c.h.b16 %v6251
          %v7039 = vunpack.c.l.b16 %v6252
          %v7040 = vunpack.c.h.b16 %v6252
          %v7041 = vunpack.c.l.b16 %v6253
          %v7042 = vunpack.c.h.b16 %v6253
          %v7043 = vunpack.c.l.b16 %v6254
          %v7044 = vunpack.c.h.b16 %v6254
          %v7045 = vpack.c.b16 %v6537, %v6533
          %v7046 = vpack.c.b16 %v6538, %v6534
          %v7047 = vpack.c.b16 %v6539, %v6535
          %v7048 = vpack.c.b16 %v6540, %v6536
          %v7049 = vpack.c.b16 %v6545, %v6541
          %v7050 = vpack.c.b16 %v6546, %v6542
          %v7051 = vpack.c.b16 %v6547, %v6543
          %v7052 = vpack.c.b16 %v6548, %v6544
          %v7053 = vpack.c.b16 %v6553, %v6549
          %v7054 = vpack.c.b16 %v6554, %v6550
          %v7055 = vpack.c.b16 %v6555, %v6551
          %v7056 = vpack.c.b16 %v6556, %v6552
          %v7057 = vpack.c.b16 %v6561, %v6557
          %v7058 = vpack.c.b16 %v6562, %v6558
          %v7059 = vpack.c.b16 %v6563, %v6559
          %v7060 = vpack.c.b16 %v6564, %v6560
          %v7061 = vpack.c.b16 %v6569, %v6565
          %v7062 = vpack.c.b16 %v6570, %v6566
          %v7063 = vpack.c.b16 %v6571, %v6567
          %v7064 = vpack.c.b16 %v6572, %v6568
          %v7065 = vpack.c.b16 %v6577, %v6573
          %v7066 = vpack.c.b16 %v6578, %v6574
          %v7067 = vpack.c.b16 %v6579, %v6575
          %v7068 = vpack.c.b16 %v6580, %v6576
          %v7069 = vpack.c.b16 %v6585, %v6581
          %v7070 = vpack.c.b16 %v6586, %v6582
          %v7071 = vpack.c.b16 %v6587, %v6583
          %v7072 = vpack.c.b16 %v6588, %v6584
          %v7073 = vpack.c.b16 %v6593, %v6589
          %v7074 = vpack.c.b16 %v6594, %v6590
          %v7075 = vpack.c.b16 %v6595, %v6591
          %v7076 = vpack.c.b16 %v6596, %v6592
          %v7077 = vpack.c.b16 %v6601, %v6597
          %v7078 = vpack.c.b16 %v6602, %v6598
          %v7079 = vpack.c.b16 %v6603, %v6599
          %v7080 = vpack.c.b16 %v6604, %v6600
          %v7081 = vpack.c.b16 %v6609, %v6605
          %v7082 = vpack.c.b16 %v6610, %v6606
          %v7083 = vpack.c.b16 %v6611, %v6607
          %v7084 = vpack.c.b16 %v6612, %v6608
          %v7085 = vpack.c.b16 %v6617, %v6613
          %v7086 = vpack.c.b16 %v6618, %v6614
          %v7087 = vpack.c.b16 %v6619, %v6615
          %v7088 = vpack.c.b16 %v6620, %v6616
          %v7089 = vpack.c.b16 %v6625, %v6621
          %v7090 = vpack.c.b16 %v6626, %v6622
          %v7091 = vpack.c.b16 %v6627, %v6623
          %v7092 = vpack.c.b16 %v6628, %v6624
          %v7093 = vpack.c.b16 %v6633, %v6629
          %v7094 = vpack.c.b16 %v6634, %v6630
          %v7095 = vpack.c.b16 %v6635, %v6631
          %v7096 = vpack.c.b16 %v6636, %v6632
          %v7097 = vpack.c.b16 %v6641, %v6637
          %v7098 = vpack.c.b16 %v6642, %v6638
          %v7099 = vpack.c.b16 %v6643, %v6639
          %v7100 = vpack.c.b16 %v6644, %v6640
          %v7101 = vpack.c.b16 %v6649, %v6645
          %v7102 = vpack.c.b16 %v6650, %v6646
          %v7103 = vpack.c.b16 %v6651, %v6647
          %v7104 = vpack.c.b16 %v6652, %v6648
          %v7105 = vpack.c.b16 %v6657, %v6653
          %v7106 = vpack.c.b16 %v6658, %v6654
          %v7107 = vpack.c.b16 %v6659, %v6655
          %v7108 = vpack.c.b16 %v6660, %v6656
          %v7109 = vpack.c.b16 %v6665, %v6661
          %v7110 = vpack.c.b16 %v6666, %v6662
          %v7111 = vpack.c.b16 %v6667, %v6663
          %v7112 = vpack.c.b16 %v6668, %v6664
          %v7113 = vpack.c.b16 %v6673, %v6669
          %v7114 = vpack.c.b16 %v6674, %v6670
          %v7115 = vpack.c.b16 %v6675, %v6671
          %v7116 = vpack.c.b16 %v6676, %v6672
          %v7117 = vpack.c.b16 %v6681, %v6677
          %v7118 = vpack.c.b16 %v6682, %v6678
          %v7119 = vpack.c.b16 %v6683, %v6679
          %v7120 = vpack.c.b16 %v6684, %v6680
          %v7121 = vpack.c.b16 %v6689, %v6685
          %v7122 = vpack.c.b16 %v6690, %v6686
          %v7123 = vpack.c.b16 %v6691, %v6687
          %v7124 = vpack.c.b16 %v6692, %v6688
          %v7125 = vpack.c.b16 %v6697, %v6693
          %v7126 = vpack.c.b16 %v6698, %v6694
          %v7127 = vpack.c.b16 %v6699, %v6695
          %v7128 = vpack.c.b16 %v6700, %v6696
          %v7129 = vpack.c.b16 %v6705, %v6701
          %v7130 = vpack.c.b16 %v6706, %v6702
          %v7131 = vpack.c.b16 %v6707, %v6703
          %v7132 = vpack.c.b16 %v6708, %v6704
          %v7133 = vpack.c.b16 %v6713, %v6709
          %v7134 = vpack.c.b16 %v6714, %v6710
          %v7135 = vpack.c.b16 %v6715, %v6711
          %v7136 = vpack.c.b16 %v6716, %v6712
          %v7137 = vpack.c.b16 %v6721, %v6717
          %v7138 = vpack.c.b16 %v6722, %v6718
          %v7139 = vpack.c.b16 %v6723, %v6719
          %v7140 = vpack.c.b16 %v6724, %v6720
          %v7141 = vpack.c.b16 %v6729, %v6725
          %v7142 = vpack.c.b16 %v6730, %v6726
          %v7143 = vpack.c.b16 %v6731, %v6727
          %v7144 = vpack.c.b16 %v6732, %v6728
          %v7145 = vpack.c.b16 %v6737, %v6733
          %v7146 = vpack.c.b16 %v6738, %v6734
          %v7147 = vpack.c.b16 %v6739, %v6735
          %v7148 = vpack.c.b16 %v6740, %v6736
          %v7149 = vpack.c.b16 %v6745, %v6741
          %v7150 = vpack.c.b16 %v6746, %v6742
          %v7151 = vpack.c.b16 %v6747, %v6743
          %v7152 = vpack.c.b16 %v6748, %v6744
          %v7153 = vpack.c.b16 %v6753, %v6749
          %v7154 = vpack.c.b16 %v6754, %v6750
          %v7155 = vpack.c.b16 %v6755, %v6751
          %v7156 = vpack.c.b16 %v6756, %v6752
          %v7157 = vpack.c.b16 %v6761, %v6757
          %v7158 = vpack.c.b16 %v6762, %v6758
          %v7159 = vpack.c.b16 %v6763, %v6759
          %v7160 = vpack.c.b16 %v6764, %v6760
          %v7161 = vpack.c.b16 %v6769, %v6765
          %v7162 = vpack.c.b16 %v6770, %v6766
          %v7163 = vpack.c.b16 %v6771, %v6767
          %v7164 = vpack.c.b16 %v6772, %v6768
          %v7165 = vpack.c.b16 %v6777, %v6773
          %v7166 = vpack.c.b16 %v6778, %v6774
          %v7167 = vpack.c.b16 %v6779, %v6775
          %v7168 = vpack.c.b16 %v6780, %v6776
          %v7169 = vpack.c.b16 %v6785, %v6781
          %v7170 = vpack.c.b16 %v6786, %v6782
          %v7171 = vpack.c.b16 %v6787, %v6783
          %v7172 = vpack.c.b16 %v6788, %v6784
          %v7173 = vpack.c.b16 %v6793, %v6789
          %v7174 = vpack.c.b16 %v6794, %v6790
          %v7175 = vpack.c.b16 %v6795, %v6791
          %v7176 = vpack.c.b16 %v6796, %v6792
          %v7177 = vpack.c.b16 %v6801, %v6797
          %v7178 = vpack.c.b16 %v6802, %v6798
          %v7179 = vpack.c.b16 %v6803, %v6799
          %v7180 = vpack.c.b16 %v6804, %v6800
          %v7181 = vpack.c.b16 %v6809, %v6805
          %v7182 = vpack.c.b16 %v6810, %v6806
          %v7183 = vpack.c.b16 %v6811, %v6807
          %v7184 = vpack.c.b16 %v6812, %v6808
          %v7185 = vpack.c.b16 %v6817, %v6813
          %v7186 = vpack.c.b16 %v6818, %v6814
          %v7187 = vpack.c.b16 %v6819, %v6815
          %v7188 = vpack.c.b16 %v6820, %v6816
          %v7189 = vpack.c.b16 %v6825, %v6821
          %v7190 = vpack.c.b16 %v6826, %v6822
          %v7191 = vpack.c.b16 %v6827, %v6823
          %v7192 = vpack.c.b16 %v6828, %v6824
          %v7193 = vpack.c.b16 %v6833, %v6829
          %v7194 = vpack.c.b16 %v6834, %v6830
          %v7195 = vpack.c.b16 %v6835, %v6831
          %v7196 = vpack.c.b16 %v6836, %v6832
          %v7197 = vpack.c.b16 %v6841, %v6837
          %v7198 = vpack.c.b16 %v6842, %v6838
          %v7199 = vpack.c.b16 %v6843, %v6839
          %v7200 = vpack.c.b16 %v6844, %v6840
          %v7201 = vpack.c.b16 %v6849, %v6845
          %v7202 = vpack.c.b16 %v6850, %v6846
          %v7203 = vpack.c.b16 %v6851, %v6847
          %v7204 = vpack.c.b16 %v6852, %v6848
          %v7205 = vpack.c.b16 %v6857, %v6853
          %v7206 = vpack.c.b16 %v6858, %v6854
          %v7207 = vpack.c.b16 %v6859, %v6855
          %v7208 = vpack.c.b16 %v6860, %v6856
          %v7209 = vpack.c.b16 %v6865, %v6861
          %v7210 = vpack.c.b16 %v6866, %v6862
          %v7211 = vpack.c.b16 %v6867, %v6863
          %v7212 = vpack.c.b16 %v6868, %v6864
          %v7213 = vpack.c.b16 %v6873, %v6869
          %v7214 = vpack.c.b16 %v6874, %v6870
          %v7215 = vpack.c.b16 %v6875, %v6871
          %v7216 = vpack.c.b16 %v6876, %v6872
          %v7217 = vpack.c.b16 %v6881, %v6877
          %v7218 = vpack.c.b16 %v6882, %v6878
          %v7219 = vpack.c.b16 %v6883, %v6879
          %v7220 = vpack.c.b16 %v6884, %v6880
          %v7221 = vpack.c.b16 %v6889, %v6885
          %v7222 = vpack.c.b16 %v6890, %v6886
          %v7223 = vpack.c.b16 %v6891, %v6887
          %v7224 = vpack.c.b16 %v6892, %v6888
          %v7225 = vpack.c.b16 %v6897, %v6893
          %v7226 = vpack.c.b16 %v6898, %v6894
          %v7227 = vpack.c.b16 %v6899, %v6895
          %v7228 = vpack.c.b16 %v6900, %v6896
          %v7229 = vpack.c.b16 %v6905, %v6901
          %v7230 = vpack.c.b16 %v6906, %v6902
          %v7231 = vpack.c.b16 %v6907, %v6903
          %v7232 = vpack.c.b16 %v6908, %v6904
          %v7233 = vpack.c.b16 %v6913, %v6909
          %v7234 = vpack.c.b16 %v6914, %v6910
          %v7235 = vpack.c.b16 %v6915, %v6911
          %v7236 = vpack.c.b16 %v6916, %v6912
          %v7237 = vpack.c.b16 %v6921, %v6917
          %v7238 = vpack.c.b16 %v6922, %v6918
          %v7239 = vpack.c.b16 %v6923, %v6919
          %v7240 = vpack.c.b16 %v6924, %v6920
          %v7241 = vpack.c.b16 %v6929, %v6925
          %v7242 = vpack.c.b16 %v6930, %v6926
          %v7243 = vpack.c.b16 %v6931, %v6927
          %v7244 = vpack.c.b16 %v6932, %v6928
          %v7245 = vpack.c.b16 %v6937, %v6933
          %v7246 = vpack.c.b16 %v6938, %v6934
          %v7247 = vpack.c.b16 %v6939, %v6935
          %v7248 = vpack.c.b16 %v6940, %v6936
          %v7249 = vpack.c.b16 %v6945, %v6941
          %v7250 = vpack.c.b16 %v6946, %v6942
          %v7251 = vpack.c.b16 %v6947, %v6943
          %v7252 = vpack.c.b16 %v6948, %v6944
          %v7253 = vpack.c.b16 %v6953, %v6949
          %v7254 = vpack.c.b16 %v6954, %v6950
          %v7255 = vpack.c.b16 %v6955, %v6951
          %v7256 = vpack.c.b16 %v6956, %v6952
          %v7257 = vpack.c.b16 %v6961, %v6957
          %v7258 = vpack.c.b16 %v6962, %v6958
          %v7259 = vpack.c.b16 %v6963, %v6959
          %v7260 = vpack.c.b16 %v6964, %v6960
          %v7261 = vpack.c.b16 %v6969, %v6965
          %v7262 = vpack.c.b16 %v6970, %v6966
          %v7263 = vpack.c.b16 %v6971, %v6967
          %v7264 = vpack.c.b16 %v6972, %v6968
          %v7265 = vpack.c.b16 %v6977, %v6973
          %v7266 = vpack.c.b16 %v6978, %v6974
          %v7267 = vpack.c.b16 %v6979, %v6975
          %v7268 = vpack.c.b16 %v6980, %v6976
          %v7269 = vpack.c.b16 %v6985, %v6981
          %v7270 = vpack.c.b16 %v6986, %v6982
          %v7271 = vpack.c.b16 %v6987, %v6983
          %v7272 = vpack.c.b16 %v6988, %v6984
          %v7273 = vpack.c.b16 %v6993, %v6989
          %v7274 = vpack.c.b16 %v6994, %v6990
          %v7275 = vpack.c.b16 %v6995, %v6991
          %v7276 = vpack.c.b16 %v6996, %v6992
          %v7277 = vpack.c.b16 %v7001, %v6997
          %v7278 = vpack.c.b16 %v7002, %v6998
          %v7279 = vpack.c.b16 %v7003, %v6999
          %v7280 = vpack.c.b16 %v7004, %v7000
          %v7281 = vpack.c.b16 %v7009, %v7005
          %v7282 = vpack.c.b16 %v7010, %v7006
          %v7283 = vpack.c.b16 %v7011, %v7007
          %v7284 = vpack.c.b16 %v7012, %v7008
          %v7285 = vpack.c.b16 %v7017, %v7013
          %v7286 = vpack.c.b16 %v7018, %v7014
          %v7287 = vpack.c.b16 %v7019, %v7015
          %v7288 = vpack.c.b16 %v7020, %v7016
          %v7289 = vpack.c.b16 %v7025, %v7021
          %v7290 = vpack.c.b16 %v7026, %v7022
          %v7291 = vpack.c.b16 %v7027, %v7023
          %v7292 = vpack.c.b16 %v7028, %v7024
          %v7293 = vpack.c.b16 %v7033, %v7029
          %v7294 = vpack.c.b16 %v7034, %v7030
          %v7295 = vpack.c.b16 %v7035, %v7031
          %v7296 = vpack.c.b16 %v7036, %v7032
          %v7297 = vpack.c.b16 %v7041, %v7037
          %v7298 = vpack.c.b16 %v7042, %v7038
          %v7299 = vpack.c.b16 %v7043, %v7039
          %v7300 = vpack.c.b16 %v7044, %v7040
          %7557 = vmatprep.subr.bf16.mxu0 %v7074
          %7558 = vmatpush1.bf16.msra.mxu0 %v7073
          %7559 = vmatprep.subr.bf16.mxu0 %v7070
          %7560 = vmatpush1.bf16.msra.mxu0 %v7069
          %7561 = vmatprep.subr.bf16.mxu0 %v7066
          %7562 = vmatpush1.bf16.msra.mxu0 %v7065
          %7563 = vmatprep.subr.bf16.mxu0 %v7062
          %7564 = vmatpush1.bf16.msra.mxu0 %v7061
          %7565 = vmatprep.subr.bf16.mxu0 %v7058
          %7566 = vmatpush1.bf16.msra.mxu0 %v7057
          %7567 = vmatprep.subr.bf16.mxu0 %v7054
          %7568 = vmatpush1.bf16.msra.mxu0 %v7053
          %7569 = vmatprep.subr.bf16.mxu0 %v7050
          %7570 = vmatpush1.bf16.msra.mxu0 %v7049
          %7571 = vmatprep.subr.bf16.mxu0 %v7046
          %7572 = vmatpush1.bf16.msra.mxu0 %v7045
          %7573 = vmatprep.subr.bf16.mxu0 %v7106
          %7574 = vmatpush2.bf16.msra.mxu0 %v7105
          %7575 = vmatprep.subr.bf16.mxu0 %v7102
          %7576 = vmatpush2.bf16.msra.mxu0 %v7101
          %7577 = vmatprep.subr.bf16.mxu0 %v7098
          %7578 = vmatpush2.bf16.msra.mxu0 %v7097
          %7579 = vmatprep.subr.bf16.mxu0 %v7094
          %7580 = vmatpush2.bf16.msra.mxu0 %v7093
          %7581 = vmatprep.subr.bf16.mxu0 %v7090
          %7582 = vmatpush2.bf16.msra.mxu0 %v7089
          %7583 = vmatprep.subr.bf16.mxu0 %v7086
          %7584 = vmatpush2.bf16.msra.mxu0 %v7085
          %7585 = vmatprep.subr.bf16.mxu0 %v7082
          %7586 = vmatpush2.bf16.msra.mxu0 %v7081
          %7587 = vmatprep.subr.bf16.mxu0 %v7078
          %7588 = vmatpush2.bf16.msra.mxu0 %v7077
          %7589 = vmatprep.mubr.bf16.mxu0 %v5992
          %7590 = vmatmul.mubr.bf16.gmra.mxu0 %v5991
          %v7591 = vpop.f32.mrf.mxu0
          %v7592 = vadd.f32 %v6260, %v7591
          %v7593 = vpop.f32.mrf.mxu0
          %v7594 = vadd.f32 %v6264, %v7593
          %v7595 = vpop.f32.mrf.mxu0
          %v7596 = vpop.f32.mrf.mxu0
          %7597 = vdwg.mxu0
          %7598 = vmatprep.subr.bf16.mxu0 %v7138
          %7599 = vmatpush1.bf16.msra.mxu0 %v7137
          %7600 = vmatprep.subr.bf16.mxu0 %v7134
          %7601 = vmatpush1.bf16.msra.mxu0 %v7133
          %7602 = vmatprep.subr.bf16.mxu0 %v7130
          %7603 = vmatpush1.bf16.msra.mxu0 %v7129
          %7604 = vmatprep.subr.bf16.mxu0 %v7126
          %7605 = vmatpush1.bf16.msra.mxu0 %v7125
          %7606 = vmatprep.subr.bf16.mxu0 %v7122
          %7607 = vmatpush1.bf16.msra.mxu0 %v7121
          %7608 = vmatprep.subr.bf16.mxu0 %v7118
          %7609 = vmatpush1.bf16.msra.mxu0 %v7117
          %7610 = vmatprep.subr.bf16.mxu0 %v7114
          %7611 = vmatpush1.bf16.msra.mxu0 %v7113
          %7612 = vmatprep.subr.bf16.mxu0 %v7110
          %7613 = vmatpush1.bf16.msra.mxu0 %v7109
          %7614 = vmatprep.subr.bf16.mxu0 %v7170
          %7615 = vmatpush2.bf16.msra.mxu0 %v7169
          %7616 = vmatprep.subr.bf16.mxu0 %v7166
          %7617 = vmatpush2.bf16.msra.mxu0 %v7165
          %7618 = vmatprep.subr.bf16.mxu0 %v7162
          %7619 = vmatpush2.bf16.msra.mxu0 %v7161
          %7620 = vmatprep.subr.bf16.mxu0 %v7158
          %7621 = vmatpush2.bf16.msra.mxu0 %v7157
          %7622 = vmatprep.subr.bf16.mxu0 %v7154
          %7623 = vmatpush2.bf16.msra.mxu0 %v7153
          %7624 = vmatprep.subr.bf16.mxu0 %v7150
          %7625 = vmatpush2.bf16.msra.mxu0 %v7149
          %7626 = vmatprep.subr.bf16.mxu0 %v7146
          %7627 = vmatpush2.bf16.msra.mxu0 %v7145
          %7628 = vmatprep.subr.bf16.mxu0 %v7142
          %7629 = vmatpush2.bf16.msra.mxu0 %v7141
          %7630 = vmatprep.mubr.bf16.mxu0 %v5994
          %7631 = vmatmul.mubr.bf16.gmra.mxu0 %v5993
          %v7632 = vpop.f32.mrf.mxu0
          %v7633 = vadd.f32 %v7592, %v7632
          %v7634 = vpop.f32.mrf.mxu0
          %v7635 = vadd.f32 %v7594, %v7634
          %v7636 = vpop.f32.mrf.mxu0
          %v7637 = vpop.f32.mrf.mxu0
          %7638 = vdwg.mxu0
          %7639 = vmatprep.subr.bf16.mxu0 %v7202
          %7640 = vmatpush1.bf16.msra.mxu0 %v7201
          %7641 = vmatprep.subr.bf16.mxu0 %v7198
          %7642 = vmatpush1.bf16.msra.mxu0 %v7197
          %7643 = vmatprep.subr.bf16.mxu0 %v7194
          %7644 = vmatpush1.bf16.msra.mxu0 %v7193
          %7645 = vmatprep.subr.bf16.mxu0 %v7190
          %7646 = vmatpush1.bf16.msra.mxu0 %v7189
          %7647 = vmatprep.subr.bf16.mxu0 %v7186
          %7648 = vmatpush1.bf16.msra.mxu0 %v7185
          %7649 = vmatprep.subr.bf16.mxu0 %v7182
          %7650 = vmatpush1.bf16.msra.mxu0 %v7181
          %7651 = vmatprep.subr.bf16.mxu0 %v7178
          %7652 = vmatpush1.bf16.msra.mxu0 %v7177
          %7653 = vmatprep.subr.bf16.mxu0 %v7174
          %7654 = vmatpush1.bf16.msra.mxu0 %v7173
          %7655 = vmatprep.subr.bf16.mxu0 %v7234
          %7656 = vmatpush2.bf16.msra.mxu0 %v7233
          %7657 = vmatprep.subr.bf16.mxu0 %v7230
          %7658 = vmatpush2.bf16.msra.mxu0 %v7229
          %7659 = vmatprep.subr.bf16.mxu0 %v7226
          %7660 = vmatpush2.bf16.msra.mxu0 %v7225
          %7661 = vmatprep.subr.bf16.mxu0 %v7222
          %7662 = vmatpush2.bf16.msra.mxu0 %v7221
          %7663 = vmatprep.subr.bf16.mxu0 %v7218
          %7664 = vmatpush2.bf16.msra.mxu0 %v7217
          %7665 = vmatprep.subr.bf16.mxu0 %v7214
          %7666 = vmatpush2.bf16.msra.mxu0 %v7213
          %7667 = vmatprep.subr.bf16.mxu0 %v7210
          %7668 = vmatpush2.bf16.msra.mxu0 %v7209
          %7669 = vmatprep.subr.bf16.mxu0 %v7206
          %7670 = vmatpush2.bf16.msra.mxu0 %v7205
          %7671 = vmatprep.mubr.bf16.mxu0 %v5996
          %7672 = vmatmul.mubr.bf16.gmra.mxu0 %v5995
          %v7673 = vpop.f32.mrf.mxu0
          %v7674 = vadd.f32 %v7633, %v7673
          %v7675 = vpop.f32.mrf.mxu0
          %v7676 = vadd.f32 %v7635, %v7675
          %v7677 = vpop.f32.mrf.mxu0
          %v7678 = vpop.f32.mrf.mxu0
          %7679 = vdwg.mxu0
          %7680 = vmatprep.subr.bf16.mxu0 %v7266
          %7681 = vmatpush1.bf16.msra.mxu0 %v7265
          %7682 = vmatprep.subr.bf16.mxu0 %v7262
          %7683 = vmatpush1.bf16.msra.mxu0 %v7261
          %7684 = vmatprep.subr.bf16.mxu0 %v7258
          %7685 = vmatpush1.bf16.msra.mxu0 %v7257
          %7686 = vmatprep.subr.bf16.mxu0 %v7254
          %7687 = vmatpush1.bf16.msra.mxu0 %v7253
          %7688 = vmatprep.subr.bf16.mxu0 %v7250
          %7689 = vmatpush1.bf16.msra.mxu0 %v7249
          %7690 = vmatprep.subr.bf16.mxu0 %v7246
          %7691 = vmatpush1.bf16.msra.mxu0 %v7245
          %7692 = vmatprep.subr.bf16.mxu0 %v7242
          %7693 = vmatpush1.bf16.msra.mxu0 %v7241
          %7694 = vmatprep.subr.bf16.mxu0 %v7238
          %7695 = vmatpush1.bf16.msra.mxu0 %v7237
          %7696 = vmatprep.subr.bf16.mxu0 %v7298
          %7697 = vmatpush2.bf16.msra.mxu0 %v7297
          %7698 = vmatprep.subr.bf16.mxu0 %v7294
          %7699 = vmatpush2.bf16.msra.mxu0 %v7293
          %7700 = vmatprep.subr.bf16.mxu0 %v7290
          %7701 = vmatpush2.bf16.msra.mxu0 %v7289
          %7702 = vmatprep.subr.bf16.mxu0 %v7286
          %7703 = vmatpush2.bf16.msra.mxu0 %v7285
          %7704 = vmatprep.subr.bf16.mxu0 %v7282
          %7705 = vmatpush2.bf16.msra.mxu0 %v7281
          %7706 = vmatprep.subr.bf16.mxu0 %v7278
          %7707 = vmatpush2.bf16.msra.mxu0 %v7277
          %7708 = vmatprep.subr.bf16.mxu0 %v7274
          %7709 = vmatpush2.bf16.msra.mxu0 %v7273
          %7710 = vmatprep.subr.bf16.mxu0 %v7270
          %7711 = vmatpush2.bf16.msra.mxu0 %v7269
          %7712 = vmatprep.mubr.bf16.mxu0 %v5998
          %7713 = vmatmul.mubr.bf16.gmra.mxu0 %v5997
          %v7714 = vpop.f32.mrf.mxu0
          %v7715 = vadd.f32 %v7674, %v7714
          %v7716 = vpop.f32.mrf.mxu0
          %v7717 = vadd.f32 %v7676, %v7716
          %v7718 = vpop.f32.mrf.mxu0
          %v7719 = vpop.f32.mrf.mxu0
          %7720 = vdwg.mxu0
          %7721 = vmatprep.subr.bf16.mxu0 %v7076
          %7722 = vmatpush1.bf16.msra.mxu0 %v7075
          %7723 = vmatprep.subr.bf16.mxu0 %v7072
          %7724 = vmatpush1.bf16.msra.mxu0 %v7071
          %7725 = vmatprep.subr.bf16.mxu0 %v7068
          %7726 = vmatpush1.bf16.msra.mxu0 %v7067
          %7727 = vmatprep.subr.bf16.mxu0 %v7064
          %7728 = vmatpush1.bf16.msra.mxu0 %v7063
          %7729 = vmatprep.subr.bf16.mxu0 %v7060
          %7730 = vmatpush1.bf16.msra.mxu0 %v7059
          %7731 = vmatprep.subr.bf16.mxu0 %v7056
          %7732 = vmatpush1.bf16.msra.mxu0 %v7055
          %7733 = vmatprep.subr.bf16.mxu0 %v7052
          %7734 = vmatpush1.bf16.msra.mxu0 %v7051
          %7735 = vmatprep.subr.bf16.mxu0 %v7048
          %7736 = vmatpush1.bf16.msra.mxu0 %v7047
          %7737 = vmatprep.subr.bf16.mxu0 %v7108
          %7738 = vmatpush2.bf16.msra.mxu0 %v7107
          %7739 = vmatprep.subr.bf16.mxu0 %v7104
          %7740 = vmatpush2.bf16.msra.mxu0 %v7103
          %7741 = vmatprep.subr.bf16.mxu0 %v7100
          %7742 = vmatpush2.bf16.msra.mxu0 %v7099
          %7743 = vmatprep.subr.bf16.mxu0 %v7096
          %7744 = vmatpush2.bf16.msra.mxu0 %v7095
          %7745 = vmatprep.subr.bf16.mxu0 %v7092
          %7746 = vmatpush2.bf16.msra.mxu0 %v7091
          %7747 = vmatprep.subr.bf16.mxu0 %v7088
          %7748 = vmatpush2.bf16.msra.mxu0 %v7087
          %7749 = vmatprep.subr.bf16.mxu0 %v7084
          %7750 = vmatpush2.bf16.msra.mxu0 %v7083
          %7751 = vmatprep.subr.bf16.mxu0 %v7080
          %7752 = vmatpush2.bf16.msra.mxu0 %v7079
          %7753 = vmatprep.mubr.bf16.mxu0 %v5992
          %7754 = vmatmul.mubr.bf16.gmra.mxu0 %v5991
          %v7755 = vpop.f32.mrf.mxu0
          %v7756 = vadd.f32 %v6268, %v7755
          %v7757 = vpop.f32.mrf.mxu0
          %v7758 = vadd.f32 %v6272, %v7757
          %v7759 = vpop.f32.mrf.mxu0
          %v7760 = vpop.f32.mrf.mxu0
          %7761 = vdwg.mxu0
          %7762 = vmatprep.subr.bf16.mxu0 %v7140
          %7763 = vmatpush1.bf16.msra.mxu0 %v7139
          %7764 = vmatprep.subr.bf16.mxu0 %v7136
          %7765 = vmatpush1.bf16.msra.mxu0 %v7135
          %7766 = vmatprep.subr.bf16.mxu0 %v7132
          %7767 = vmatpush1.bf16.msra.mxu0 %v7131
          %7768 = vmatprep.subr.bf16.mxu0 %v7128
          %7769 = vmatpush1.bf16.msra.mxu0 %v7127
          %7770 = vmatprep.subr.bf16.mxu0 %v7124
          %7771 = vmatpush1.bf16.msra.mxu0 %v7123
          %7772 = vmatprep.subr.bf16.mxu0 %v7120
          %7773 = vmatpush1.bf16.msra.mxu0 %v7119
          %7774 = vmatprep.subr.bf16.mxu0 %v7116
          %7775 = vmatpush1.bf16.msra.mxu0 %v7115
          %7776 = vmatprep.subr.bf16.mxu0 %v7112
          %7777 = vmatpush1.bf16.msra.mxu0 %v7111
          %7778 = vmatprep.subr.bf16.mxu0 %v7172
          %7779 = vmatpush2.bf16.msra.mxu0 %v7171
          %7780 = vmatprep.subr.bf16.mxu0 %v7168
          %7781 = vmatpush2.bf16.msra.mxu0 %v7167
          %7782 = vmatprep.subr.bf16.mxu0 %v7164
          %7783 = vmatpush2.bf16.msra.mxu0 %v7163
          %7784 = vmatprep.subr.bf16.mxu0 %v7160
          %7785 = vmatpush2.bf16.msra.mxu0 %v7159
          %7786 = vmatprep.subr.bf16.mxu0 %v7156
          %7787 = vmatpush2.bf16.msra.mxu0 %v7155
          %7788 = vmatprep.subr.bf16.mxu0 %v7152
          %7789 = vmatpush2.bf16.msra.mxu0 %v7151
          %7790 = vmatprep.subr.bf16.mxu0 %v7148
          %7791 = vmatpush2.bf16.msra.mxu0 %v7147
          %7792 = vmatprep.subr.bf16.mxu0 %v7144
          %7793 = vmatpush2.bf16.msra.mxu0 %v7143
          %7794 = vmatprep.mubr.bf16.mxu0 %v5994
          %7795 = vmatmul.mubr.bf16.gmra.mxu0 %v5993
          %v7796 = vpop.f32.mrf.mxu0
          %v7797 = vadd.f32 %v7756, %v7796
          %v7798 = vpop.f32.mrf.mxu0
          %v7799 = vadd.f32 %v7758, %v7798
          %v7800 = vpop.f32.mrf.mxu0
          %v7801 = vpop.f32.mrf.mxu0
          %7802 = vdwg.mxu0
          %7803 = vmatprep.subr.bf16.mxu0 %v7204
          %7804 = vmatpush1.bf16.msra.mxu0 %v7203
          %7805 = vmatprep.subr.bf16.mxu0 %v7200
          %7806 = vmatpush1.bf16.msra.mxu0 %v7199
          %7807 = vmatprep.subr.bf16.mxu0 %v7196
          %7808 = vmatpush1.bf16.msra.mxu0 %v7195
          %7809 = vmatprep.subr.bf16.mxu0 %v7192
          %7810 = vmatpush1.bf16.msra.mxu0 %v7191
          %7811 = vmatprep.subr.bf16.mxu0 %v7188
          %7812 = vmatpush1.bf16.msra.mxu0 %v7187
          %7813 = vmatprep.subr.bf16.mxu0 %v7184
          %7814 = vmatpush1.bf16.msra.mxu0 %v7183
          %7815 = vmatprep.subr.bf16.mxu0 %v7180
          %7816 = vmatpush1.bf16.msra.mxu0 %v7179
          %7817 = vmatprep.subr.bf16.mxu0 %v7176
          %7818 = vmatpush1.bf16.msra.mxu0 %v7175
          %7819 = vmatprep.subr.bf16.mxu0 %v7236
          %7820 = vmatpush2.bf16.msra.mxu0 %v7235
          %7821 = vmatprep.subr.bf16.mxu0 %v7232
          %7822 = vmatpush2.bf16.msra.mxu0 %v7231
          %7823 = vmatprep.subr.bf16.mxu0 %v7228
          %7824 = vmatpush2.bf16.msra.mxu0 %v7227
          %7825 = vmatprep.subr.bf16.mxu0 %v7224
          %7826 = vmatpush2.bf16.msra.mxu0 %v7223
          %7827 = vmatprep.subr.bf16.mxu0 %v7220
          %7828 = vmatpush2.bf16.msra.mxu0 %v7219
          %7829 = vmatprep.subr.bf16.mxu0 %v7216
          %7830 = vmatpush2.bf16.msra.mxu0 %v7215
          %7831 = vmatprep.subr.bf16.mxu0 %v7212
          %7832 = vmatpush2.bf16.msra.mxu0 %v7211
          %7833 = vmatprep.subr.bf16.mxu0 %v7208
          %7834 = vmatpush2.bf16.msra.mxu0 %v7207
          %7835 = vmatprep.mubr.bf16.mxu0 %v5996
          %7836 = vmatmul.mubr.bf16.gmra.mxu0 %v5995
          %v7837 = vpop.f32.mrf.mxu0
          %v7838 = vadd.f32 %v7797, %v7837
          %v7839 = vpop.f32.mrf.mxu0
          %v7840 = vadd.f32 %v7799, %v7839
          %v7841 = vpop.f32.mrf.mxu0
          %v7842 = vpop.f32.mrf.mxu0
          %7843 = vdwg.mxu0
          %7844 = vmatprep.subr.bf16.mxu0 %v7268
          %7845 = vmatpush1.bf16.msra.mxu0 %v7267
          %7846 = vmatprep.subr.bf16.mxu0 %v7264
          %7847 = vmatpush1.bf16.msra.mxu0 %v7263
          %7848 = vmatprep.subr.bf16.mxu0 %v7260
          %7849 = vmatpush1.bf16.msra.mxu0 %v7259
          %7850 = vmatprep.subr.bf16.mxu0 %v7256
          %7851 = vmatpush1.bf16.msra.mxu0 %v7255
          %7852 = vmatprep.subr.bf16.mxu0 %v7252
          %7853 = vmatpush1.bf16.msra.mxu0 %v7251
          %7854 = vmatprep.subr.bf16.mxu0 %v7248
          %7855 = vmatpush1.bf16.msra.mxu0 %v7247
          %7856 = vmatprep.subr.bf16.mxu0 %v7244
          %7857 = vmatpush1.bf16.msra.mxu0 %v7243
          %7858 = vmatprep.subr.bf16.mxu0 %v7240
          %7859 = vmatpush1.bf16.msra.mxu0 %v7239
          %7860 = vmatprep.subr.bf16.mxu0 %v7300
          %7861 = vmatpush2.bf16.msra.mxu0 %v7299
          %7862 = vmatprep.subr.bf16.mxu0 %v7296
          %7863 = vmatpush2.bf16.msra.mxu0 %v7295
          %7864 = vmatprep.subr.bf16.mxu0 %v7292
          %7865 = vmatpush2.bf16.msra.mxu0 %v7291
          %7866 = vmatprep.subr.bf16.mxu0 %v7288
          %7867 = vmatpush2.bf16.msra.mxu0 %v7287
          %7868 = vmatprep.subr.bf16.mxu0 %v7284
          %7869 = vmatpush2.bf16.msra.mxu0 %v7283
          %7870 = vmatprep.subr.bf16.mxu0 %v7280
          %7871 = vmatpush2.bf16.msra.mxu0 %v7279
          %7872 = vmatprep.subr.bf16.mxu0 %v7276
          %7873 = vmatpush2.bf16.msra.mxu0 %v7275
          %7874 = vmatprep.subr.bf16.mxu0 %v7272
          %7875 = vmatpush2.bf16.msra.mxu0 %v7271
          %7876 = vmatprep.mubr.bf16.mxu0 %v5998
          %7877 = vmatmul.mubr.bf16.gmra.mxu0 %v5997
          %v7878 = vpop.f32.mrf.mxu0
          %v7879 = vadd.f32 %v7838, %v7878
          %v7880 = vpop.f32.mrf.mxu0
          %v7881 = vadd.f32 %v7840, %v7880
          %v7882 = vpop.f32.mrf.mxu0
          %v7883 = vpop.f32.mrf.mxu0
          %7884 = vdwg.mxu0
          %v7885 = vmax.f32 %v7715, 0.0
          %v7886 = vmax.f32 %v7717, 0.0
          %v7887 = vmax.f32 %v7879, 0.0
          %v7888 = vmax.f32 %v7881, 0.0
          %v7889 = vpack.c.bf16 %v7885, %v7885
          %v7890 = vpack.c.bf16 %v7886, %v7886
          %v7891 = vpack.c.bf16 %v7887, %v7887
          %v7892 = vpack.c.bf16 %v7888, %v7888
          %v7893 = vld [vmem:[%s9] sm:$0xff]
          %v7894 = vld [vmem:[%s9 + $0x8] sm:$0xff]
          %v7895 = vld [vmem:[%s9 + $0x10] sm:$0xff]
          %v7896 = vld [vmem:[%s9 + $0x18] sm:$0xff]
          %v7897 = vld [vmem:[%s9 + $0x20] sm:$0xff]
          %v7898 = vld [vmem:[%s9 + $0x28] sm:$0xff]
          %v7899 = vld [vmem:[%s9 + $0x30] sm:$0xff]
          %v7900 = vld [vmem:[%s9 + $0x38] sm:$0xff]
          %v7901 = vld [vmem:[%s9 + $0x40] sm:$0xff]
          %v7902 = vld [vmem:[%s9 + $0x48] sm:$0xff]
          %v7903 = vld [vmem:[%s9 + $0x50] sm:$0xff]
          %v7904 = vld [vmem:[%s9 + $0x58] sm:$0xff]
          %v7905 = vld [vmem:[%s9 + $0x60] sm:$0xff]
          %v7906 = vld [vmem:[%s9 + $0x68] sm:$0xff]
          %v7907 = vld [vmem:[%s9 + $0x70] sm:$0xff]
          %v7908 = vld [vmem:[%s9 + $0x78] sm:$0xff]
          %v7909 = vld [vmem:[%s9 + $0x80] sm:$0xff]
          %v7910 = vld [vmem:[%s9 + $0x88] sm:$0xff]
          %v7911 = vld [vmem:[%s9 + $0x90] sm:$0xff]
          %v7912 = vld [vmem:[%s9 + $0x98] sm:$0xff]
          %v7913 = vld [vmem:[%s9 + $0xa0] sm:$0xff]
          %v7914 = vld [vmem:[%s9 + $0xa8] sm:$0xff]
          %v7915 = vld [vmem:[%s9 + $0xb0] sm:$0xff]
          %v7916 = vld [vmem:[%s9 + $0xb8] sm:$0xff]
          %v7917 = vld [vmem:[%s9 + $0xc0] sm:$0xff]
          %v7918 = vld [vmem:[%s9 + $0xc8] sm:$0xff]
          %v7919 = vld [vmem:[%s9 + $0xd0] sm:$0xff]
          %v7920 = vld [vmem:[%s9 + $0xd8] sm:$0xff]
          %v7921 = vld [vmem:[%s9 + $0xe0] sm:$0xff]
          %v7922 = vld [vmem:[%s9 + $0xe8] sm:$0xff]
          %v7923 = vld [vmem:[%s9 + $0xf0] sm:$0xff]
          %v7924 = vld [vmem:[%s9 + $0xf8] sm:$0xff]
          %v7925 = vld [vmem:[%s9 + $0x100] sm:$0xff]
          %v7926 = vld [vmem:[%s9 + $0x108] sm:$0xff]
          %v7927 = vld [vmem:[%s9 + $0x110] sm:$0xff]
          %v7928 = vld [vmem:[%s9 + $0x118] sm:$0xff]
          %v7929 = vld [vmem:[%s9 + $0x120] sm:$0xff]
          %v7930 = vld [vmem:[%s9 + $0x128] sm:$0xff]
          %v7931 = vld [vmem:[%s9 + $0x130] sm:$0xff]
          %v7932 = vld [vmem:[%s9 + $0x138] sm:$0xff]
          %v7933 = vld [vmem:[%s9 + $0x140] sm:$0xff]
          %v7934 = vld [vmem:[%s9 + $0x148] sm:$0xff]
          %v7935 = vld [vmem:[%s9 + $0x150] sm:$0xff]
          %v7936 = vld [vmem:[%s9 + $0x158] sm:$0xff]
          %v7937 = vld [vmem:[%s9 + $0x160] sm:$0xff]
          %v7938 = vld [vmem:[%s9 + $0x168] sm:$0xff]
          %v7939 = vld [vmem:[%s9 + $0x170] sm:$0xff]
          %v7940 = vld [vmem:[%s9 + $0x178] sm:$0xff]
          %v7941 = vld [vmem:[%s9 + $0x180] sm:$0xff]
          %v7942 = vld [vmem:[%s9 + $0x188] sm:$0xff]
          %v7943 = vld [vmem:[%s9 + $0x190] sm:$0xff]
          %v7944 = vld [vmem:[%s9 + $0x198] sm:$0xff]
          %v7945 = vld [vmem:[%s9 + $0x1a0] sm:$0xff]
          %v7946 = vld [vmem:[%s9 + $0x1a8] sm:$0xff]
          %v7947 = vld [vmem:[%s9 + $0x1b0] sm:$0xff]
          %v7948 = vld [vmem:[%s9 + $0x1b8] sm:$0xff]
          %v7949 = vld [vmem:[%s9 + $0x1c0] sm:$0xff]
          %v7950 = vld [vmem:[%s9 + $0x1c8] sm:$0xff]
          %v7951 = vld [vmem:[%s9 + $0x1d0] sm:$0xff]
          %v7952 = vld [vmem:[%s9 + $0x1d8] sm:$0xff]
          %v7953 = vld [vmem:[%s9 + $0x1e0] sm:$0xff]
          %v7954 = vld [vmem:[%s9 + $0x1e8] sm:$0xff]
          %v7955 = vld [vmem:[%s9 + $0x1f0] sm:$0xff]
          %v7956 = vld [vmem:[%s9 + $0x1f8] sm:$0xff]
          %v7957 = vld [vmem:[%s10] sm:$0x3]
          %v7959 = vlaneseq
          %v7960 = vshrl.u32 %v7959, 7
          %v7961 = vsub.s32 0, %v7960
          %v7962 = vrot.slane %v7957, %v7961
          %v7963 = vlaneseq
          %v7964 = vshrl.u32 %v7963, 7
          %v7965 = vsub.s32 1, %v7964
          %v7966 = vrot.slane %v7957, %v7965
          %v8033 = vunpack.c.l.b16 %v7893
          %v8034 = vunpack.c.h.b16 %v7893
          %v8035 = vunpack.c.l.b16 %v7894
          %v8036 = vunpack.c.h.b16 %v7894
          %v8037 = vunpack.c.l.b16 %v7895
          %v8038 = vunpack.c.h.b16 %v7895
          %v8039 = vunpack.c.l.b16 %v7896
          %v8040 = vunpack.c.h.b16 %v7896
          %v8041 = vunpack.c.l.b16 %v7897
          %v8042 = vunpack.c.h.b16 %v7897
          %v8043 = vunpack.c.l.b16 %v7898
          %v8044 = vunpack.c.h.b16 %v7898
          %v8045 = vunpack.c.l.b16 %v7899
          %v8046 = vunpack.c.h.b16 %v7899
          %v8047 = vunpack.c.l.b16 %v7900
          %v8048 = vunpack.c.h.b16 %v7900
          %v8049 = vunpack.c.l.b16 %v7901
          %v8050 = vunpack.c.h.b16 %v7901
          %v8051 = vunpack.c.l.b16 %v7902
          %v8052 = vunpack.c.h.b16 %v7902
          %v8053 = vunpack.c.l.b16 %v7903
          %v8054 = vunpack.c.h.b16 %v7903
          %v8055 = vunpack.c.l.b16 %v7904
          %v8056 = vunpack.c.h.b16 %v7904
          %v8057 = vunpack.c.l.b16 %v7905
          %v8058 = vunpack.c.h.b16 %v7905
          %v8059 = vunpack.c.l.b16 %v7906
          %v8060 = vunpack.c.h.b16 %v7906
          %v8061 = vunpack.c.l.b16 %v7907
          %v8062 = vunpack.c.h.b16 %v7907
          %v8063 = vunpack.c.l.b16 %v7908
          %v8064 = vunpack.c.h.b16 %v7908
          %v8065 = vunpack.c.l.b16 %v7909
          %v8066 = vunpack.c.h.b16 %v7909
          %v8067 = vunpack.c.l.b16 %v7910
          %v8068 = vunpack.c.h.b16 %v7910
          %v8069 = vunpack.c.l.b16 %v7911
          %v8070 = vunpack.c.h.b16 %v7911
          %v8071 = vunpack.c.l.b16 %v7912
          %v8072 = vunpack.c.h.b16 %v7912
          %v8073 = vunpack.c.l.b16 %v7913
          %v8074 = vunpack.c.h.b16 %v7913
          %v8075 = vunpack.c.l.b16 %v7914
          %v8076 = vunpack.c.h.b16 %v7914
          %v8077 = vunpack.c.l.b16 %v7915
          %v8078 = vunpack.c.h.b16 %v7915
          %v8079 = vunpack.c.l.b16 %v7916
          %v8080 = vunpack.c.h.b16 %v7916
          %v8081 = vunpack.c.l.b16 %v7917
          %v8082 = vunpack.c.h.b16 %v7917
          %v8083 = vunpack.c.l.b16 %v7918
          %v8084 = vunpack.c.h.b16 %v7918
          %v8085 = vunpack.c.l.b16 %v7919
          %v8086 = vunpack.c.h.b16 %v7919
          %v8087 = vunpack.c.l.b16 %v7920
          %v8088 = vunpack.c.h.b16 %v7920
          %v8089 = vunpack.c.l.b16 %v7921
          %v8090 = vunpack.c.h.b16 %v7921
          %v8091 = vunpack.c.l.b16 %v7922
          %v8092 = vunpack.c.h.b16 %v7922
          %v8093 = vunpack.c.l.b16 %v7923
          %v8094 = vunpack.c.h.b16 %v7923
          %v8095 = vunpack.c.l.b16 %v7924
          %v8096 = vunpack.c.h.b16 %v7924
          %v8097 = vunpack.c.l.b16 %v7925
          %v8098 = vunpack.c.h.b16 %v7925
          %v8099 = vunpack.c.l.b16 %v7926
          %v8100 = vunpack.c.h.b16 %v7926
          %v8101 = vunpack.c.l.b16 %v7927
          %v8102 = vunpack.c.h.b16 %v7927
          %v8103 = vunpack.c.l.b16 %v7928
          %v8104 = vunpack.c.h.b16 %v7928
          %v8105 = vunpack.c.l.b16 %v7929
          %v8106 = vunpack.c.h.b16 %v7929
          %v8107 = vunpack.c.l.b16 %v7930
          %v8108 = vunpack.c.h.b16 %v7930
          %v8109 = vunpack.c.l.b16 %v7931
          %v8110 = vunpack.c.h.b16 %v7931
          %v8111 = vunpack.c.l.b16 %v7932
          %v8112 = vunpack.c.h.b16 %v7932
          %v8113 = vunpack.c.l.b16 %v7933
          %v8114 = vunpack.c.h.b16 %v7933
          %v8115 = vunpack.c.l.b16 %v7934
          %v8116 = vunpack.c.h.b16 %v7934
          %v8117 = vunpack.c.l.b16 %v7935
          %v8118 = vunpack.c.h.b16 %v7935
          %v8119 = vunpack.c.l.b16 %v7936
          %v8120 = vunpack.c.h.b16 %v7936
          %v8121 = vunpack.c.l.b16 %v7937
          %v8122 = vunpack.c.h.b16 %v7937
          %v8123 = vunpack.c.l.b16 %v7938
          %v8124 = vunpack.c.h.b16 %v7938
          %v8125 = vunpack.c.l.b16 %v7939
          %v8126 = vunpack.c.h.b16 %v7939
          %v8127 = vunpack.c.l.b16 %v7940
          %v8128 = vunpack.c.h.b16 %v7940
          %v8129 = vunpack.c.l.b16 %v7941
          %v8130 = vunpack.c.h.b16 %v7941
          %v8131 = vunpack.c.l.b16 %v7942
          %v8132 = vunpack.c.h.b16 %v7942
          %v8133 = vunpack.c.l.b16 %v7943
          %v8134 = vunpack.c.h.b16 %v7943
          %v8135 = vunpack.c.l.b16 %v7944
          %v8136 = vunpack.c.h.b16 %v7944
          %v8137 = vunpack.c.l.b16 %v7945
          %v8138 = vunpack.c.h.b16 %v7945
          %v8139 = vunpack.c.l.b16 %v7946
          %v8140 = vunpack.c.h.b16 %v7946
          %v8141 = vunpack.c.l.b16 %v7947
          %v8142 = vunpack.c.h.b16 %v7947
          %v8143 = vunpack.c.l.b16 %v7948
          %v8144 = vunpack.c.h.b16 %v7948
          %v8145 = vunpack.c.l.b16 %v7949
          %v8146 = vunpack.c.h.b16 %v7949
          %v8147 = vunpack.c.l.b16 %v7950
          %v8148 = vunpack.c.h.b16 %v7950
          %v8149 = vunpack.c.l.b16 %v7951
          %v8150 = vunpack.c.h.b16 %v7951
          %v8151 = vunpack.c.l.b16 %v7952
          %v8152 = vunpack.c.h.b16 %v7952
          %v8153 = vunpack.c.l.b16 %v7953
          %v8154 = vunpack.c.h.b16 %v7953
          %v8155 = vunpack.c.l.b16 %v7954
          %v8156 = vunpack.c.h.b16 %v7954
          %v8157 = vunpack.c.l.b16 %v7955
          %v8158 = vunpack.c.h.b16 %v7955
          %v8159 = vunpack.c.l.b16 %v7956
          %v8160 = vunpack.c.h.b16 %v7956
          %v8161 = vpack.c.b16 %v8035, %v8033
          %v8162 = vpack.c.b16 %v8036, %v8034
          %v8163 = vpack.c.b16 %v8039, %v8037
          %v8164 = vpack.c.b16 %v8040, %v8038
          %v8165 = vpack.c.b16 %v8043, %v8041
          %v8166 = vpack.c.b16 %v8044, %v8042
          %v8167 = vpack.c.b16 %v8047, %v8045
          %v8168 = vpack.c.b16 %v8048, %v8046
          %v8169 = vpack.c.b16 %v8051, %v8049
          %v8170 = vpack.c.b16 %v8052, %v8050
          %v8171 = vpack.c.b16 %v8055, %v8053
          %v8172 = vpack.c.b16 %v8056, %v8054
          %v8173 = vpack.c.b16 %v8059, %v8057
          %v8174 = vpack.c.b16 %v8060, %v8058
          %v8175 = vpack.c.b16 %v8063, %v8061
          %v8176 = vpack.c.b16 %v8064, %v8062
          %v8177 = vpack.c.b16 %v8067, %v8065
          %v8178 = vpack.c.b16 %v8068, %v8066
          %v8179 = vpack.c.b16 %v8071, %v8069
          %v8180 = vpack.c.b16 %v8072, %v8070
          %v8181 = vpack.c.b16 %v8075, %v8073
          %v8182 = vpack.c.b16 %v8076, %v8074
          %v8183 = vpack.c.b16 %v8079, %v8077
          %v8184 = vpack.c.b16 %v8080, %v8078
          %v8185 = vpack.c.b16 %v8083, %v8081
          %v8186 = vpack.c.b16 %v8084, %v8082
          %v8187 = vpack.c.b16 %v8087, %v8085
          %v8188 = vpack.c.b16 %v8088, %v8086
          %v8189 = vpack.c.b16 %v8091, %v8089
          %v8190 = vpack.c.b16 %v8092, %v8090
          %v8191 = vpack.c.b16 %v8095, %v8093
          %v8192 = vpack.c.b16 %v8096, %v8094
          %v8193 = vpack.c.b16 %v8099, %v8097
          %v8194 = vpack.c.b16 %v8100, %v8098
          %v8195 = vpack.c.b16 %v8103, %v8101
          %v8196 = vpack.c.b16 %v8104, %v8102
          %v8197 = vpack.c.b16 %v8107, %v8105
          %v8198 = vpack.c.b16 %v8108, %v8106
          %v8199 = vpack.c.b16 %v8111, %v8109
          %v8200 = vpack.c.b16 %v8112, %v8110
          %v8201 = vpack.c.b16 %v8115, %v8113
          %v8202 = vpack.c.b16 %v8116, %v8114
          %v8203 = vpack.c.b16 %v8119, %v8117
          %v8204 = vpack.c.b16 %v8120, %v8118
          %v8205 = vpack.c.b16 %v8123, %v8121
          %v8206 = vpack.c.b16 %v8124, %v8122
          %v8207 = vpack.c.b16 %v8127, %v8125
          %v8208 = vpack.c.b16 %v8128, %v8126
          %v8209 = vpack.c.b16 %v8131, %v8129
          %v8210 = vpack.c.b16 %v8132, %v8130
          %v8211 = vpack.c.b16 %v8135, %v8133
          %v8212 = vpack.c.b16 %v8136, %v8134
          %v8213 = vpack.c.b16 %v8139, %v8137
          %v8214 = vpack.c.b16 %v8140, %v8138
          %v8215 = vpack.c.b16 %v8143, %v8141
          %v8216 = vpack.c.b16 %v8144, %v8142
          %v8217 = vpack.c.b16 %v8147, %v8145
          %v8218 = vpack.c.b16 %v8148, %v8146
          %v8219 = vpack.c.b16 %v8151, %v8149
          %v8220 = vpack.c.b16 %v8152, %v8150
          %v8221 = vpack.c.b16 %v8155, %v8153
          %v8222 = vpack.c.b16 %v8156, %v8154
          %v8223 = vpack.c.b16 %v8159, %v8157
          %v8224 = vpack.c.b16 %v8160, %v8158
          %8289 = vmatprep.subr.bf16.mxu0 %v8176
          %8290 = vmatpush1.bf16.msra.mxu0 %v8175
          %8291 = vmatprep.subr.bf16.mxu0 %v8174
          %8292 = vmatpush1.bf16.msra.mxu0 %v8173
          %8293 = vmatprep.subr.bf16.mxu0 %v8172
          %8294 = vmatpush1.bf16.msra.mxu0 %v8171
          %8295 = vmatprep.subr.bf16.mxu0 %v8170
          %8296 = vmatpush1.bf16.msra.mxu0 %v8169
          %8297 = vmatprep.subr.bf16.mxu0 %v8168
          %8298 = vmatpush1.bf16.msra.mxu0 %v8167
          %8299 = vmatprep.subr.bf16.mxu0 %v8166
          %8300 = vmatpush1.bf16.msra.mxu0 %v8165
          %8301 = vmatprep.subr.bf16.mxu0 %v8164
          %8302 = vmatpush1.bf16.msra.mxu0 %v8163
          %8303 = vmatprep.subr.bf16.mxu0 %v8162
          %8304 = vmatpush1.bf16.msra.mxu0 %v8161
          %8305 = vmatprep.subr.bf16.mxu0 %v8192
          %8306 = vmatpush2.bf16.msra.mxu0 %v8191
          %8307 = vmatprep.subr.bf16.mxu0 %v8190
          %8308 = vmatpush2.bf16.msra.mxu0 %v8189
          %8309 = vmatprep.subr.bf16.mxu0 %v8188
          %8310 = vmatpush2.bf16.msra.mxu0 %v8187
          %8311 = vmatprep.subr.bf16.mxu0 %v8186
          %8312 = vmatpush2.bf16.msra.mxu0 %v8185
          %8313 = vmatprep.subr.bf16.mxu0 %v8184
          %8314 = vmatpush2.bf16.msra.mxu0 %v8183
          %8315 = vmatprep.subr.bf16.mxu0 %v8182
          %8316 = vmatpush2.bf16.msra.mxu0 %v8181
          %8317 = vmatprep.subr.bf16.mxu0 %v8180
          %8318 = vmatpush2.bf16.msra.mxu0 %v8179
          %8319 = vmatprep.subr.bf16.mxu0 %v8178
          %8320 = vmatpush2.bf16.msra.mxu0 %v8177
          %8321 = vmatprep.mubr.bf16.mxu0 %v7890
          %8322 = vmatmul.mubr.bf16.gmra.mxu0 %v7889
          %v8323 = vpop.f32.mrf.mxu0
          %v8324 = vadd.f32 %v7962, %v8323
          %v8325 = vpop.f32.mrf.mxu0
          %v8326 = vadd.f32 %v7966, %v8325
          %v8327 = vpop.f32.mrf.mxu0
          %v8328 = vpop.f32.mrf.mxu0
          %8329 = vdwg.mxu0
          %8330 = vmatprep.subr.bf16.mxu0 %v8208
          %8331 = vmatpush1.bf16.msra.mxu0 %v8207
          %8332 = vmatprep.subr.bf16.mxu0 %v8206
          %8333 = vmatpush1.bf16.msra.mxu0 %v8205
          %8334 = vmatprep.subr.bf16.mxu0 %v8204
          %8335 = vmatpush1.bf16.msra.mxu0 %v8203
          %8336 = vmatprep.subr.bf16.mxu0 %v8202
          %8337 = vmatpush1.bf16.msra.mxu0 %v8201
          %8338 = vmatprep.subr.bf16.mxu0 %v8200
          %8339 = vmatpush1.bf16.msra.mxu0 %v8199
          %8340 = vmatprep.subr.bf16.mxu0 %v8198
          %8341 = vmatpush1.bf16.msra.mxu0 %v8197
          %8342 = vmatprep.subr.bf16.mxu0 %v8196
          %8343 = vmatpush1.bf16.msra.mxu0 %v8195
          %8344 = vmatprep.subr.bf16.mxu0 %v8194
          %8345 = vmatpush1.bf16.msra.mxu0 %v8193
          %8346 = vmatprep.subr.bf16.mxu0 %v8224
          %8347 = vmatpush2.bf16.msra.mxu0 %v8223
          %8348 = vmatprep.subr.bf16.mxu0 %v8222
          %8349 = vmatpush2.bf16.msra.mxu0 %v8221
          %8350 = vmatprep.subr.bf16.mxu0 %v8220
          %8351 = vmatpush2.bf16.msra.mxu0 %v8219
          %8352 = vmatprep.subr.bf16.mxu0 %v8218
          %8353 = vmatpush2.bf16.msra.mxu0 %v8217
          %8354 = vmatprep.subr.bf16.mxu0 %v8216
          %8355 = vmatpush2.bf16.msra.mxu0 %v8215
          %8356 = vmatprep.subr.bf16.mxu0 %v8214
          %8357 = vmatpush2.bf16.msra.mxu0 %v8213
          %8358 = vmatprep.subr.bf16.mxu0 %v8212
          %8359 = vmatpush2.bf16.msra.mxu0 %v8211
          %8360 = vmatprep.subr.bf16.mxu0 %v8210
          %8361 = vmatpush2.bf16.msra.mxu0 %v8209
          %8362 = vmatprep.mubr.bf16.mxu0 %v7892
          %8363 = vmatmul.mubr.bf16.gmra.mxu0 %v7891
          %v8364 = vpop.f32.mrf.mxu0
          %v8365 = vadd.f32 %v8324, %v8364
          %v8366 = vpop.f32.mrf.mxu0
          %v8367 = vadd.f32 %v8326, %v8366
          %v8368 = vpop.f32.mrf.mxu0
          %v8369 = vpop.f32.mrf.mxu0
          %8370 = vdwg.mxu0
          %v8371 = vmax.f32 %v8365, 0.0
          %v8372 = vmax.f32 %v8367, 0.0
          %v8373 = vpack.c.bf16 %v8371, %v8371
          %v8374 = vpack.c.bf16 %v8372, %v8372
          %v8375 = vld [vmem:[%s11] sm:$0xf]
          %v8376 = vld [vmem:[%s11 + $0x4] sm:$0xf]
          %v8377 = vld [vmem:[%s11 + $0x8] sm:$0xf]
          %v8378 = vld [vmem:[%s11 + $0xc] sm:$0xf]
          %v8379 = vld [vmem:[%s11 + $0x10] sm:$0xf]
          %v8380 = vld [vmem:[%s11 + $0x14] sm:$0xf]
          %v8381 = vld [vmem:[%s11 + $0x18] sm:$0xf]
          %v8382 = vld [vmem:[%s11 + $0x1c] sm:$0xf]
          %v8383 = vld [vmem:[%s11 + $0x20] sm:$0xf]
          %v8384 = vld [vmem:[%s11 + $0x24] sm:$0xf]
          %v8385 = vld [vmem:[%s11 + $0x28] sm:$0xf]
          %v8386 = vld [vmem:[%s11 + $0x2c] sm:$0xf]
          %v8387 = vld [vmem:[%s11 + $0x30] sm:$0xf]
          %v8388 = vld [vmem:[%s11 + $0x34] sm:$0xf]
          %v8389 = vld [vmem:[%s11 + $0x38] sm:$0xf]
          %v8390 = vld [vmem:[%s11 + $0x3c] sm:$0xf]
          %v8391 = vld [vmem:[%s11 + $0x40] sm:$0xf]
          %v8392 = vld [vmem:[%s11 + $0x44] sm:$0xf]
          %v8393 = vld [vmem:[%s11 + $0x48] sm:$0xf]
          %v8394 = vld [vmem:[%s11 + $0x4c] sm:$0xf]
          %v8395 = vld [vmem:[%s11 + $0x50] sm:$0xf]
          %v8396 = vld [vmem:[%s11 + $0x54] sm:$0xf]
          %v8397 = vld [vmem:[%s11 + $0x58] sm:$0xf]
          %v8398 = vld [vmem:[%s11 + $0x5c] sm:$0xf]
          %v8399 = vld [vmem:[%s11 + $0x60] sm:$0xf]
          %v8400 = vld [vmem:[%s11 + $0x64] sm:$0xf]
          %v8401 = vld [vmem:[%s11 + $0x68] sm:$0xf]
          %v8402 = vld [vmem:[%s11 + $0x6c] sm:$0xf]
          %v8403 = vld [vmem:[%s11 + $0x70] sm:$0xf]
          %v8404 = vld [vmem:[%s11 + $0x74] sm:$0xf]
          %v8405 = vld [vmem:[%s11 + $0x78] sm:$0xf]
          %v8406 = vld [vmem:[%s11 + $0x7c] sm:$0xf]
          %v8439 = vunpack.c.l.b16 %v8375
          %v8440 = vunpack.c.l.b16 %v8376
          %v8441 = vunpack.c.l.b16 %v8377
          %v8442 = vunpack.c.l.b16 %v8378
          %v8443 = vunpack.c.l.b16 %v8379
          %v8444 = vunpack.c.l.b16 %v8380
          %v8445 = vunpack.c.l.b16 %v8381
          %v8446 = vunpack.c.l.b16 %v8382
          %v8447 = vunpack.c.l.b16 %v8383
          %v8448 = vunpack.c.l.b16 %v8384
          %v8449 = vunpack.c.l.b16 %v8385
          %v8450 = vunpack.c.l.b16 %v8386
          %v8451 = vunpack.c.l.b16 %v8387
          %v8452 = vunpack.c.l.b16 %v8388
          %v8453 = vunpack.c.l.b16 %v8389
          %v8454 = vunpack.c.l.b16 %v8390
          %v8455 = vunpack.c.l.b16 %v8391
          %v8456 = vunpack.c.l.b16 %v8392
          %v8457 = vunpack.c.l.b16 %v8393
          %v8458 = vunpack.c.l.b16 %v8394
          %v8459 = vunpack.c.l.b16 %v8395
          %v8460 = vunpack.c.l.b16 %v8396
          %v8461 = vunpack.c.l.b16 %v8397
          %v8462 = vunpack.c.l.b16 %v8398
          %v8463 = vunpack.c.l.b16 %v8399
          %v8464 = vunpack.c.l.b16 %v8400
          %v8465 = vunpack.c.l.b16 %v8401
          %v8466 = vunpack.c.l.b16 %v8402
          %v8467 = vunpack.c.l.b16 %v8403
          %v8468 = vunpack.c.l.b16 %v8404
          %v8469 = vunpack.c.l.b16 %v8405
          %v8470 = vunpack.c.l.b16 %v8406
          %v8471 = vpack.c.b16 %v8440, %v8439
          %v8472 = vpack.c.b16 %v8442, %v8441
          %v8473 = vpack.c.b16 %v8444, %v8443
          %v8474 = vpack.c.b16 %v8446, %v8445
          %v8475 = vpack.c.b16 %v8448, %v8447
          %v8476 = vpack.c.b16 %v8450, %v8449
          %v8477 = vpack.c.b16 %v8452, %v8451
          %v8478 = vpack.c.b16 %v8454, %v8453
          %v8479 = vpack.c.b16 %v8456, %v8455
          %v8480 = vpack.c.b16 %v8458, %v8457
          %v8481 = vpack.c.b16 %v8460, %v8459
          %v8482 = vpack.c.b16 %v8462, %v8461
          %v8483 = vpack.c.b16 %v8464, %v8463
          %v8484 = vpack.c.b16 %v8466, %v8465
          %v8485 = vpack.c.b16 %v8468, %v8467
          %v8486 = vpack.c.b16 %v8470, %v8469
          %8503 = vmatprep.subr.bf16.mxu0 0
          %8504 = vmatpush1.bf16.msra.mxu0 %v8478
          %8505 = vmatprep.subr.bf16.mxu0 0
          %8506 = vmatpush1.bf16.msra.mxu0 %v8477
          %8507 = vmatprep.subr.bf16.mxu0 0
          %8508 = vmatpush1.bf16.msra.mxu0 %v8476
          %8509 = vmatprep.subr.bf16.mxu0 0
          %8510 = vmatpush1.bf16.msra.mxu0 %v8475
          %8511 = vmatprep.subr.bf16.mxu0 0
          %8512 = vmatpush1.bf16.msra.mxu0 %v8474
          %8513 = vmatprep.subr.bf16.mxu0 0
          %8514 = vmatpush1.bf16.msra.mxu0 %v8473
          %8515 = vmatprep.subr.bf16.mxu0 0
          %8516 = vmatpush1.bf16.msra.mxu0 %v8472
          %8517 = vmatprep.subr.bf16.mxu0 0
          %8518 = vmatpush1.bf16.msra.mxu0 %v8471
          %8519 = vmatprep.subr.bf16.mxu0 0
          %8520 = vmatpush2.bf16.msra.mxu0 %v8486
          %8521 = vmatprep.subr.bf16.mxu0 0
          %8522 = vmatpush2.bf16.msra.mxu0 %v8485
          %8523 = vmatprep.subr.bf16.mxu0 0
          %8524 = vmatpush2.bf16.msra.mxu0 %v8484
          %8525 = vmatprep.subr.bf16.mxu0 0
          %8526 = vmatpush2.bf16.msra.mxu0 %v8483
          %8527 = vmatprep.subr.bf16.mxu0 0
          %8528 = vmatpush2.bf16.msra.mxu0 %v8482
          %8529 = vmatprep.subr.bf16.mxu0 0
          %8530 = vmatpush2.bf16.msra.mxu0 %v8481
          %8531 = vmatprep.subr.bf16.mxu0 0
          %8532 = vmatpush2.bf16.msra.mxu0 %v8480
          %8533 = vmatprep.subr.bf16.mxu0 0
          %8534 = vmatpush2.bf16.msra.mxu0 %v8479
          %8535 = vmatprep.mubr.bf16.mxu0 %v8374
          %8536 = vmatmul.mubr.bf16.gmra.mxu0 %v8373
          %v8537 = vpop.f32.mrf.mxu0
          %v8538 = vadd.f32 0.0, %v8537
          %v8539 = vpop.f32.mrf.mxu0
          %v8540 = vpop.f32.mrf.mxu0
          %v8541 = vpop.f32.mrf.mxu0
          %8542 = vdwg.mxu0
          %v8543 = vld [vmem:[%s12] sm:$0x1]
          %v8544 = vadd.f32 %v8538, %v8543
          %8545 = vst [vmem:[%s499] sm:$0x1] %v8544
        $region88: #{stn3d_forward.1} parent=71 // pred_fallthru
          _
        %p8546 = scmp.lt.s32.totalorder %s29, 1
        %s8547 = scalar_select %p8546, %s29, 1
        %s8548 = scalar_lea.vmem %s13, %s8547
        // Predicated region
        $region89: #{stn3d_forward.1} parent=71 // pred_check
          %p8549 = pneg %p335
        $region90: #{stn3d_forward.1} parent=71 // pred_check_branch
          %8551 = sbr.rel (%p8549) target = $region92
        $region91: #{stn3d_forward.1} parent=71 // pred_region
          _
        $region92: #{stn3d_forward.1} parent=71 // pred_fallthru
          _
      $region72: #{stn3d_forward.1} parent=5 // pred_fallthru
        _
      %p8552 = scmp.le.s32.totalorder 2, %s20
      // Predicated region
      $region93: #{stn3d_forward.1} parent=5 // pred_check
        %p8553 = pneg %p8552
      $region94: #{stn3d_forward.1} parent=5 // pred_check_branch
        %8555 = sbr.rel (%p8553) target = $region96
      $region95: #{stn3d_forward.1} parent=5 // pred_region
        %s8556 = ssub.s32 %s20, 2
        // Predicated region
        $region97: #{stn3d_forward.1} parent=95 // pred_check
          %p8557 = pneg %p341
        $region98: #{stn3d_forward.1} parent=95 // pred_check_branch
          %8559 = sbr.rel (%p8557) target = $region100
        $region99: #{stn3d_forward.1} parent=95 // pred_region
          %p8560 = scmp.lt.s32.totalorder %s31, 1
          %s8561 = scalar_select %p8560, %s31, 1
          %s8562 = scalar_lea.vmem %s13, %s8561
        $region100: #{stn3d_forward.1} parent=95 // pred_fallthru
          _
      $region96: #{stn3d_forward.1} parent=5 // pred_fallthru
        _
    $region6: #{stn3d_forward.1} parent=1 // loop_footer
      %s24 = sadd.s32 1, %s20
    $region7: #{stn3d_forward.1} parent=1 // loop_footer_branch
      %19 = sbr.rel target = $region3
    $region8: #{stn3d_forward.1} parent=1 // loop_exit
      _
    %8563 = vsyncpa [#allocation4], 1
    %s8564 = scalar_lea.sflag [#allocation4], 1
    %8565 = vsyncpa %s8564, 1

</llo_original>
